<compile_context>
chip_gen: v7x
topology: tpu7x:2x2x1
jax: 0.10.0
libtpu: 0.0.40
codegen_flags: <defaults>
</compile_context>

<pallas_src>
import jax
import jax.numpy as jnp
from jax.experimental import pallas as pl
from jax.experimental.pallas import tpu as pltpu

EPS = 1e-5  # nn.BatchNorm2d default eps


# ----------------------------- kernel helpers -------------------------------
def _bn_relu_pool(acc, gamma, beta, n, h, w, c):
    """Train-mode BatchNorm (one-pass batch stats) + ReLU + 2x2/2 maxpool.

    acc  : (n*h*w, c) f32 conv output (bias-free: the conv bias cancels
           exactly under train-mode BN mean subtraction).
    gamma, beta: (1, c)
    returns (n, h//2, w//2, c) f32.
    """
    m = n * h * w
    inv_m = 1.0 / float(m)
    s = jnp.sum(acc, axis=0, keepdims=True)
    sq = jnp.sum(acc * acc, axis=0, keepdims=True)
    mean = s * inv_m
    var = jnp.maximum(sq * inv_m - mean * mean, 0.0)   # biased (train) variance
    scale = gamma * jax.lax.rsqrt(var + EPS)           # rsqrt -> EUP slot
    offset = beta - mean * scale
    y = jnp.maximum(acc * scale + offset, 0.0)         # fused BN affine + ReLU
    # 2x2 max pooling, stride 2 (row index of acc is ((n_i*h)+h_i)*w + w_i).
    y = y.reshape(n, h // 2, 2, w // 2, 2, c)
    y = jnp.max(y, axis=4)
    y = jnp.max(y, axis=2)
    return y


def _conv3x3_im2col(x, col_ref, w_ref):
    """3x3 same-padding convolution as ONE im2col matmul.

    x      : (n, h, w, cin) activation value (already on-chip)
    col_ref: (n, h, w, 9*cin) VMEM scratch for the im2col matrix
    w_ref  : (9*cin, cout) packed conv weights
    returns (n*h*w, cout) f32.
    """
    n, h, w, cin = x.shape
    # Zero once: out-of-bounds taps (the pad=1 halo) simply stay zero, so the
    # padding is done entirely on-chip with no extra padded buffer.
    col_ref[...] = jnp.zeros(col_ref.shape, jnp.float32)
    for tap in range(9):
        dh, dw = tap // 3, tap % 3
        h0, h1 = max(0, 1 - dh), min(h, h + 1 - dh)
        w0, w1 = max(0, 1 - dw), min(w, w + 1 - dw)
        col_ref[:, h0:h1, w0:w1, tap * cin:(tap + 1) * cin] = (
            x[:, h0 + dh - 1:h1 + dh - 1, w0 + dw - 1:w1 + dw - 1, :])
    col = col_ref[...].reshape(n * h * w, 9 * cin)
    return jnp.dot(col, w_ref[...], preferred_element_type=jnp.float32)


def _make_fused_kernel(n, h0, w0):
    """Whole-network kernel: 4 conv blocks, activations resident in VMEM."""
    h1, w1 = h0 // 2, w0 // 2
    h2, w2 = h1 // 2, w1 // 2
    h3, w3 = h2 // 2, w2 // 2

    def kernel(col1_ref, wc1_ref, wc2_ref, wc3_ref, wc4_ref,
               gb1_ref, gb2_ref, gb3_ref, gb4_ref,
               o_ref, col2_ref, col3_ref, col4_ref):
        # ---- block 1 (Cin=1): im2col (M, K1) supplied by the wrapper -------
        acc = jnp.dot(col1_ref[...], wc1_ref[...],
                      preferred_element_type=jnp.float32)
        x = _bn_relu_pool(acc, gb1_ref[0:1, :], gb1_ref[1:2, :],
                          n, h0, w0, wc1_ref.shape[1])
        # ---- blocks 2..4: in-kernel pad + im2col + one matmul each ---------
        for wc_ref, gb_ref, col_ref, (bh, bw) in (
                (wc2_ref, gb2_ref, col2_ref, (h1, w1)),
                (wc3_ref, gb3_ref, col3_ref, (h2, w2)),
                (wc4_ref, gb4_ref, col4_ref, (h3, w3))):
            acc = _conv3x3_im2col(x, col_ref, wc_ref)
            x = _bn_relu_pool(acc, gb_ref[0:1, :], gb_ref[1:2, :],
                              n, bh, bw, wc_ref.shape[1])
        o_ref[...] = x      # (n, h0//16, w0//16, cout), NHWC

    return kernel


# ------------------------------- host wrapper --------------------------------
def pack_params(params):
    """One-time packing of PyTorch-layout params for the fused kernel.

    Conv weight (3,3,Cin,Cout) -> (9*Cin, Cout) im2col matrix; gamma/beta
    stacked to (2, Cout).  The conv bias is dropped: it cancels exactly under
    train-mode BatchNorm.
    """
    packed = []
    for i, (w, _b, g, bt) in enumerate(params):
        cin, cout = w.shape[2], w.shape[3]
        wcol = jnp.asarray(w, jnp.float32).reshape(9 * cin, cout)
        if i == 0 and wcol.shape[0] % 8:
            # Round block-1's tiny K (Cin=1 -> K=9) up to a sublane multiple;
            # the wrapper zero-pads its im2col to match.
            wcol = jnp.pad(wcol, ((0, 8 - wcol.shape[0] % 8), (0, 0)))
        gb = jnp.stack([jnp.asarray(g, jnp.float32),
                        jnp.asarray(bt, jnp.float32)], axis=0)
        packed.append((wcol, gb))
    return tuple(packed)


def _im2col_input(x_nhwc):
    """im2col of the network input (one cheap XLA op on a tiny tensor)."""
    n, h, w, cin = x_nhwc.shape
    xp = jnp.pad(x_nhwc, ((0, 0), (1, 1), (1, 1), (0, 0)))
    cols = [xp[:, dh:dh + h, dw:dw + w, :]
            for dh in range(3) for dw in range(3)]
    return jnp.concatenate(cols, axis=-1).reshape(n * h * w, 9 * cin)


@jax.jit
def prototypical_network(x_nchw, packed):
    """Forward pass matching PrototypicalNetwork.forward (train-mode BN)."""
    (wc1, gb1), (wc2, gb2), (wc3, gb3), (wc4, gb4) = packed
    n, _cin, h0, w0 = x_nchw.shape
    assert h0 % 16 == 0 and w0 % 16 == 0, "need 4 rounds of 2x2 pooling"
    c1, c2, c3, c4 = (wc.shape[1] for wc in (wc1, wc2, wc3, wc4))
    h1, w1 = h0 // 2, w0 // 2
    h2, w2 = h1 // 2, w1 // 2
    h3, w3 = h2 // 2, w2 // 2
    h4, w4 = h3 // 2, w3 // 2

    x_nhwc = jnp.transpose(x_nchw, (0, 2, 3, 1)).astype(jnp.float32)
    col1 = _im2col_input(x_nhwc)                       # (n*h0*w0, 9*cin)
    if col1.shape[1] != wc1.shape[0]:                  # match padded K1
        col1 = jnp.pad(col1, ((0, 0), (0, wc1.shape[0] - col1.shape[1])))

    vmem = pl.BlockSpec(memory_space=pltpu.MemorySpace.VMEM)
    out = pl.pallas_call(
        _make_fused_kernel(n, h0, w0),
        out_shape=jax.ShapeDtypeStruct((n, h4, w4, c4), jnp.float32),
        in_specs=[vmem] * 9,
        out_specs=vmem,
        scratch_shapes=[
            pltpu.VMEM((n, h1, w1, 9 * c1), jnp.float32),   # block-2 im2col
            pltpu.VMEM((n, h2, w2, 9 * c2), jnp.float32),   # block-3 im2col
            pltpu.VMEM((n, h3, w3, 9 * c3), jnp.float32),   # block-4 im2col
        ],
    )(col1, wc1, wc2, wc3, wc4, gb1, gb2, gb3, gb4)

    # NCHW flatten order, exactly like `input.view(input.size(0), -1)`.
    return jnp.transpose(out, (0, 3, 1, 2)).reshape(n, -1)


def init_params(key, input_channel_num=1, hidden_channel_num=64,
                output_channel_num=64):
    """Deterministic synthetic parameters (4 blocks, shapes from __init__)."""
    chans = [input_channel_num, hidden_channel_num, hidden_channel_num,
             hidden_channel_num, output_channel_num]
    params = []
    for i in range(4):
        ci, co = chans[i], chans[i + 1]
        key, k1, k2, k3, k4 = jax.random.split(key, 5)
        w = jax.random.normal(k1, (3, 3, ci, co), jnp.float32) / jnp.sqrt(9.0 * ci)
        b = 0.1 * jax.random.normal(k2, (co,), jnp.float32)
        gamma = 1.0 + 0.1 * jax.random.normal(k3, (co,), jnp.float32)
        beta = 0.1 * jax.random.normal(k4, (co,), jnp.float32)
        params.append((w, b, gamma, beta))
    return params


# ---------------- pure-JAX reference (for correctness check) ----------------
def _ref_block(x, w, b, g, bt):
    y = jax.lax.conv_general_dilated(
        x, w, window_strides=(1, 1), padding="SAME",
        dimension_numbers=("NHWC", "HWIO", "NHWC")) + b
    mean = jnp.mean(y, axis=(0, 1, 2), keepdims=True)
    var = jnp.mean((y - mean) ** 2, axis=(0, 1, 2), keepdims=True)
    y = (y - mean) * (g * jax.lax.rsqrt(var + EPS)) + bt
    y = jnp.maximum(y, 0.0)
    n, h, w_, c = y.shape
    return y.reshape(n, h // 2, 2, w_ // 2, 2, c).max(axis=(2, 4))


def _ref_network(x_nchw, params):
    x = jnp.transpose(x_nchw, (0, 2, 3, 1))
    for (w, b, g, bt) in params:
        x = _ref_block(x, w, b, g, bt)
    x = jnp.transpose(x, (0, 3, 1, 2))
    return x.reshape(x.shape[0], -1)


if __name__ == "__main__":
    key = jax.random.PRNGKey(0)
    key, kx = jax.random.split(key)

    # Module defaults: Cin=1, hidden=out=64.  16x16 input -> 4 maxpools
    # (16 -> 8 -> 4 -> 2 -> 1) -> flattened embedding of size 64.
    x = jax.random.normal(kx, (2, 1, 16, 16), jnp.float32)
    params = init_params(key, input_channel_num=1, hidden_channel_num=64,
                         output_channel_num=64)
    packed = pack_params(params)          # one-time packing (outside forward)

    out = prototypical_network(x, packed)
    out = jax.block_until_ready(out)

    ref = _ref_network(x, params)
    assert out.shape == (2, 64), out.shape
    assert jnp.allclose(out, ref, rtol=1e-3, atol=1e-3), (
        f"max abs err {jnp.max(jnp.abs(out - ref))}")

    print("KERNEL_OK")
</pallas_src>

<mosaic_0001>
module attributes {stable_mosaic.version = 11 : i64} {
  func.func @kernel(%arg0: memref<512x16xf32, #tpu.memory_space<vmem>>, %arg1: memref<16x64xf32, #tpu.memory_space<vmem>>, %arg2: memref<576x64xf32, #tpu.memory_space<vmem>>, %arg3: memref<576x64xf32, #tpu.memory_space<vmem>>, %arg4: memref<576x64xf32, #tpu.memory_space<vmem>>, %arg5: memref<2x64xf32, #tpu.memory_space<vmem>>, %arg6: memref<2x64xf32, #tpu.memory_space<vmem>>, %arg7: memref<2x64xf32, #tpu.memory_space<vmem>>, %arg8: memref<2x64xf32, #tpu.memory_space<vmem>>, %arg9: memref<2x1x1x64xf32, #tpu.memory_space<vmem>>, %arg10: memref<2x8x8x576xf32, #tpu.memory_space<vmem>>, %arg11: memref<2x4x4x576xf32, #tpu.memory_space<vmem>>, %arg12: memref<2x2x2x576xf32, #tpu.memory_space<vmem>>) attributes {dimension_semantics = [], scalar_prefetch = 0 : i64, scratch_operands = 3 : i64, tpu.core_type = #tpu.core_type<tc>} {
    %c0 = arith.constant 0 : index
    %c0_0 = arith.constant 0 : index
    %0 = vector.load %arg0[%c0, %c0_0] : memref<512x16xf32, #tpu.memory_space<vmem>>, vector<512x16xf32>
    %c0_1 = arith.constant 0 : index
    %c0_2 = arith.constant 0 : index
    %1 = vector.load %arg1[%c0_1, %c0_2] : memref<16x64xf32, #tpu.memory_space<vmem>>, vector<16x64xf32>
    %cst = arith.constant dense<0.000000e+00> : vector<512x64xf32>
    %2 = tpu.matmul %0, %1, %cst {dimension_numbers = #tpu.dot_dimension_numbers<[1], [0], [0], [1], [0, 0, 1, 1], [], []>} : vector<512x16xf32>, vector<16x64xf32>, vector<512x64xf32> -> vector<512x64xf32>
    %c0_3 = arith.constant 0 : index
    %c0_4 = arith.constant 0 : index
    %3 = vector.load %arg5[%c0_3, %c0_4] : memref<2x64xf32, #tpu.memory_space<vmem>>, vector<1x64xf32>
    %c1 = arith.constant 1 : index
    %c0_5 = arith.constant 0 : index
    %4 = vector.load %arg5[%c1, %c0_5] : memref<2x64xf32, #tpu.memory_space<vmem>>, vector<1x64xf32>
    %cst_6 = arith.constant dense<0.000000e+00> : vector<64xf32>
    %5 = vector.multi_reduction <add>, %2, %cst_6 [0] : vector<512x64xf32> to vector<64xf32>
    %6 = vector.shape_cast %5 : vector<64xf32> to vector<1x64xf32>
    %7 = arith.mulf %2, %2 : vector<512x64xf32>
    %cst_7 = arith.constant dense<0.000000e+00> : vector<64xf32>
    %8 = vector.multi_reduction <add>, %7, %cst_7 [0] : vector<512x64xf32> to vector<64xf32>
    %9 = vector.shape_cast %8 : vector<64xf32> to vector<1x64xf32>
    %cst_8 = arith.constant 0.001953125 : f32
    %10 = vector.broadcast %cst_8 : f32 to vector<1x64xf32>
    %11 = arith.mulf %6, %10 : vector<1x64xf32>
    %cst_9 = arith.constant 0.001953125 : f32
    %12 = vector.broadcast %cst_9 : f32 to vector<1x64xf32>
    %13 = arith.mulf %9, %12 : vector<1x64xf32>
    %14 = arith.mulf %11, %11 : vector<1x64xf32>
    %15 = arith.subf %13, %14 : vector<1x64xf32>
    %cst_10 = arith.constant 0.000000e+00 : f32
    %16 = vector.broadcast %cst_10 : f32 to vector<1x64xf32>
    %17 = arith.maximumf %15, %16 : vector<1x64xf32>
    %cst_11 = arith.constant 9.99999974E-6 : f32
    %18 = vector.broadcast %cst_11 : f32 to vector<1x64xf32>
    %19 = arith.addf %17, %18 : vector<1x64xf32>
    %20 = math.rsqrt %19 : vector<1x64xf32>
    %21 = arith.mulf %3, %20 : vector<1x64xf32>
    %22 = arith.mulf %11, %21 : vector<1x64xf32>
    %23 = arith.subf %4, %22 : vector<1x64xf32>
    %24 = vector.broadcast %21 : vector<1x64xf32> to vector<512x64xf32>
    %25 = arith.mulf %2, %24 : vector<512x64xf32>
    %26 = vector.broadcast %23 : vector<1x64xf32> to vector<512x64xf32>
    %27 = arith.addf %25, %26 : vector<512x64xf32>
    %cst_12 = arith.constant 0.000000e+00 : f32
    %28 = vector.broadcast %cst_12 : f32 to vector<512x64xf32>
    %29 = arith.maximumf %27, %28 : vector<512x64xf32>
    %30 = vector.shape_cast %29 : vector<512x64xf32> to vector<2x8x2x8x2x64xf32>
    %cst_13 = arith.constant dense<0xFF800000> : vector<2x8x2x8x64xf32>
    %31 = vector.multi_reduction <maximumf>, %30, %cst_13 [4] : vector<2x8x2x8x2x64xf32> to vector<2x8x2x8x64xf32>
    %cst_14 = arith.constant dense<0xFF800000> : vector<2x8x8x64xf32>
    %32 = vector.multi_reduction <maximumf>, %31, %cst_14 [2] : vector<2x8x2x8x64xf32> to vector<2x8x8x64xf32>
    %cst_15 = arith.constant 0.000000e+00 : f32
    %33 = vector.broadcast %cst_15 : f32 to vector<2x8x8x576xf32>
    %c0_16 = arith.constant 0 : index
    %c0_17 = arith.constant 0 : index
    %c0_18 = arith.constant 0 : index
    %c0_19 = arith.constant 0 : index
    %34 = vector.load %arg10[%c0_16, %c0_17, %c0_18, %c0_19] : memref<2x8x8x576xf32, #tpu.memory_space<vmem>>, vector<2x8x8x576xf32>
    tpu.vector_store %arg10[%c0_16, %c0_17, %c0_18, %c0_19], %33 {strides = array<i32>} : memref<2x8x8x576xf32, #tpu.memory_space<vmem>>, vector<2x8x8x576xf32>,
    %35 = vector.extract_strided_slice %32 {offsets = [0, 0, 0, 0], sizes = [2, 7, 7, 64], strides = [1, 1, 1, 1]} : vector<2x8x8x64xf32> to vector<2x7x7x64xf32>
    %c0_20 = arith.constant 0 : index
    %c1_21 = arith.constant 1 : index
    %c1_22 = arith.constant 1 : index
    %c0_23 = arith.constant 0 : index
    %36 = vector.load %arg10[%c0_20, %c1_21, %c1_22, %c0_23] : memref<2x8x8x576xf32, #tpu.memory_space<vmem>>, vector<2x7x7x64xf32>
    tpu.vector_store %arg10[%c0_20, %c1_21, %c1_22, %c0_23], %35 {strides = array<i32>} : memref<2x8x8x576xf32, #tpu.memory_space<vmem>>, vector<2x7x7x64xf32>,
    %37 = vector.extract_strided_slice %32 {offsets = [0, 0, 0, 0], sizes = [2, 7, 8, 64], strides = [1, 1, 1, 1]} : vector<2x8x8x64xf32> to vector<2x7x8x64xf32>
    %c0_24 = arith.constant 0 : index
    %c1_25 = arith.constant 1 : index
    %c0_26 = arith.constant 0 : index
    %c64 = arith.constant 64 : index
    %38 = vector.load %arg10[%c0_24, %c1_25, %c0_26, %c64] : memref<2x8x8x576xf32, #tpu.memory_space<vmem>>, vector<2x7x8x64xf32>
    tpu.vector_store %arg10[%c0_24, %c1_25, %c0_26, %c64], %37 {strides = array<i32>} : memref<2x8x8x576xf32, #tpu.memory_space<vmem>>, vector<2x7x8x64xf32>,
    %39 = vector.extract_strided_slice %32 {offsets = [0, 0, 1, 0], sizes = [2, 7, 7, 64], strides = [1, 1, 1, 1]} : vector<2x8x8x64xf32> to vector<2x7x7x64xf32>
    %c0_27 = arith.constant 0 : index
    %c1_28 = arith.constant 1 : index
    %c0_29 = arith.constant 0 : index
    %c128 = arith.constant 128 : index
    %40 = vector.load %arg10[%c0_27, %c1_28, %c0_29, %c128] : memref<2x8x8x576xf32, #tpu.memory_space<vmem>>, vector<2x7x7x64xf32>
    tpu.vector_store %arg10[%c0_27, %c1_28, %c0_29, %c128], %39 {strides = array<i32>} : memref<2x8x8x576xf32, #tpu.memory_space<vmem>>, vector<2x7x7x64xf32>,
    %41 = vector.extract_strided_slice %32 {offsets = [0, 0, 0, 0], sizes = [2, 8, 7, 64], strides = [1, 1, 1, 1]} : vector<2x8x8x64xf32> to vector<2x8x7x64xf32>
    %c0_30 = arith.constant 0 : index
    %c0_31 = arith.constant 0 : index
    %c1_32 = arith.constant 1 : index
    %c192 = arith.constant 192 : index
    %42 = vector.load %arg10[%c0_30, %c0_31, %c1_32, %c192] : memref<2x8x8x576xf32, #tpu.memory_space<vmem>>, vector<2x8x7x64xf32>
    tpu.vector_store %arg10[%c0_30, %c0_31, %c1_32, %c192], %41 {strides = array<i32>} : memref<2x8x8x576xf32, #tpu.memory_space<vmem>>, vector<2x8x7x64xf32>,
    %c0_33 = arith.constant 0 : index
    %c0_34 = arith.constant 0 : index
    %c0_35 = arith.constant 0 : index
    %c256 = arith.constant 256 : index
    %43 = vector.load %arg10[%c0_33, %c0_34, %c0_35, %c256] : memref<2x8x8x576xf32, #tpu.memory_space<vmem>>, vector<2x8x8x64xf32>
    tpu.vector_store %arg10[%c0_33, %c0_34, %c0_35, %c256], %32 {strides = array<i32>} : memref<2x8x8x576xf32, #tpu.memory_space<vmem>>, vector<2x8x8x64xf32>,
    %44 = vector.extract_strided_slice %32 {offsets = [0, 0, 1, 0], sizes = [2, 8, 7, 64], strides = [1, 1, 1, 1]} : vector<2x8x8x64xf32> to vector<2x8x7x64xf32>
    %c0_36 = arith.constant 0 : index
    %c0_37 = arith.constant 0 : index
    %c0_38 = arith.constant 0 : index
    %c320 = arith.constant 320 : index
    %45 = vector.load %arg10[%c0_36, %c0_37, %c0_38, %c320] : memref<2x8x8x576xf32, #tpu.memory_space<vmem>>, vector<2x8x7x64xf32>
    tpu.vector_store %arg10[%c0_36, %c0_37, %c0_38, %c320], %44 {strides = array<i32>} : memref<2x8x8x576xf32, #tpu.memory_space<vmem>>, vector<2x8x7x64xf32>,
    %46 = vector.extract_strided_slice %32 {offsets = [0, 1, 0, 0], sizes = [2, 7, 7, 64], strides = [1, 1, 1, 1]} : vector<2x8x8x64xf32> to vector<2x7x7x64xf32>
    %c0_39 = arith.constant 0 : index
    %c0_40 = arith.constant 0 : index
    %c1_41 = arith.constant 1 : index
    %c384 = arith.constant 384 : index
    %47 = vector.load %arg10[%c0_39, %c0_40, %c1_41, %c384] : memref<2x8x8x576xf32, #tpu.memory_space<vmem>>, vector<2x7x7x64xf32>
    tpu.vector_store %arg10[%c0_39, %c0_40, %c1_41, %c384], %46 {strides = array<i32>} : memref<2x8x8x576xf32, #tpu.memory_space<vmem>>, vector<2x7x7x64xf32>,
    %48 = vector.extract_strided_slice %32 {offsets = [0, 1, 0, 0], sizes = [2, 7, 8, 64], strides = [1, 1, 1, 1]} : vector<2x8x8x64xf32> to vector<2x7x8x64xf32>
    %c0_42 = arith.constant 0 : index
    %c0_43 = arith.constant 0 : index
    %c0_44 = arith.constant 0 : index
    %c448 = arith.constant 448 : index
    %49 = vector.load %arg10[%c0_42, %c0_43, %c0_44, %c448] : memref<2x8x8x576xf32, #tpu.memory_space<vmem>>, vector<2x7x8x64xf32>
    tpu.vector_store %arg10[%c0_42, %c0_43, %c0_44, %c448], %48 {strides = array<i32>} : memref<2x8x8x576xf32, #tpu.memory_space<vmem>>, vector<2x7x8x64xf32>,
    %50 = vector.extract_strided_slice %32 {offsets = [0, 1, 1, 0], sizes = [2, 7, 7, 64], strides = [1, 1, 1, 1]} : vector<2x8x8x64xf32> to vector<2x7x7x64xf32>
    %c0_45 = arith.constant 0 : index
    %c0_46 = arith.constant 0 : index
    %c0_47 = arith.constant 0 : index
    %c512 = arith.constant 512 : index
    %51 = vector.load %arg10[%c0_45, %c0_46, %c0_47, %c512] : memref<2x8x8x576xf32, #tpu.memory_space<vmem>>, vector<2x7x7x64xf32>
    tpu.vector_store %arg10[%c0_45, %c0_46, %c0_47, %c512], %50 {strides = array<i32>} : memref<2x8x8x576xf32, #tpu.memory_space<vmem>>, vector<2x7x7x64xf32>,
    %c0_48 = arith.constant 0 : index
    %c0_49 = arith.constant 0 : index
    %c0_50 = arith.constant 0 : index
    %c0_51 = arith.constant 0 : index
    %52 = vector.load %arg10[%c0_48, %c0_49, %c0_50, %c0_51] : memref<2x8x8x576xf32, #tpu.memory_space<vmem>>, vector<2x8x8x576xf32>
    %53 = vector.shape_cast %52 : vector<2x8x8x576xf32> to vector<128x576xf32>
    %c0_52 = arith.constant 0 : index
    %c0_53 = arith.constant 0 : index
    %54 = vector.load %arg2[%c0_52, %c0_53] : memref<576x64xf32, #tpu.memory_space<vmem>>, vector<576x64xf32>
    %cst_54 = arith.constant dense<0.000000e+00> : vector<128x64xf32>
    %55 = tpu.matmul %53, %54, %cst_54 {dimension_numbers = #tpu.dot_dimension_numbers<[1], [0], [0], [1], [0, 0, 1, 1], [], []>} : vector<128x576xf32>, vector<576x64xf32>, vector<128x64xf32> -> vector<128x64xf32>
    %c0_55 = arith.constant 0 : index
    %c0_56 = arith.constant 0 : index
    %56 = vector.load %arg6[%c0_55, %c0_56] : memref<2x64xf32, #tpu.memory_space<vmem>>, vector<1x64xf32>
    %c1_57 = arith.constant 1 : index
    %c0_58 = arith.constant 0 : index
    %57 = vector.load %arg6[%c1_57, %c0_58] : memref<2x64xf32, #tpu.memory_space<vmem>>, vector<1x64xf32>
    %cst_59 = arith.constant dense<0.000000e+00> : vector<64xf32>
    %58 = vector.multi_reduction <add>, %55, %cst_59 [0] : vector<128x64xf32> to vector<64xf32>
    %59 = vector.shape_cast %58 : vector<64xf32> to vector<1x64xf32>
    %60 = arith.mulf %55, %55 : vector<128x64xf32>
    %cst_60 = arith.constant dense<0.000000e+00> : vector<64xf32>
    %61 = vector.multi_reduction <add>, %60, %cst_60 [0] : vector<128x64xf32> to vector<64xf32>
    %62 = vector.shape_cast %61 : vector<64xf32> to vector<1x64xf32>
    %cst_61 = arith.constant 7.812500e-03 : f32
    %63 = vector.broadcast %cst_61 : f32 to vector<1x64xf32>
    %64 = arith.mulf %59, %63 : vector<1x64xf32>
    %cst_62 = arith.constant 7.812500e-03 : f32
    %65 = vector.broadcast %cst_62 : f32 to vector<1x64xf32>
    %66 = arith.mulf %62, %65 : vector<1x64xf32>
    %67 = arith.mulf %64, %64 : vector<1x64xf32>
    %68 = arith.subf %66, %67 : vector<1x64xf32>
    %cst_63 = arith.constant 0.000000e+00 : f32
    %69 = vector.broadcast %cst_63 : f32 to vector<1x64xf32>
    %70 = arith.maximumf %68, %69 : vector<1x64xf32>
    %cst_64 = arith.constant 9.99999974E-6 : f32
    %71 = vector.broadcast %cst_64 : f32 to vector<1x64xf32>
    %72 = arith.addf %70, %71 : vector<1x64xf32>
    %73 = math.rsqrt %72 : vector<1x64xf32>
    %74 = arith.mulf %56, %73 : vector<1x64xf32>
    %75 = arith.mulf %64, %74 : vector<1x64xf32>
    %76 = arith.subf %57, %75 : vector<1x64xf32>
    %77 = vector.broadcast %74 : vector<1x64xf32> to vector<128x64xf32>
    %78 = arith.mulf %55, %77 : vector<128x64xf32>
    %79 = vector.broadcast %76 : vector<1x64xf32> to vector<128x64xf32>
    %80 = arith.addf %78, %79 : vector<128x64xf32>
    %cst_65 = arith.constant 0.000000e+00 : f32
    %81 = vector.broadcast %cst_65 : f32 to vector<128x64xf32>
    %82 = arith.maximumf %80, %81 : vector<128x64xf32>
    %83 = vector.shape_cast %82 : vector<128x64xf32> to vector<2x4x2x4x2x64xf32>
    %cst_66 = arith.constant dense<0xFF800000> : vector<2x4x2x4x64xf32>
    %84 = vector.multi_reduction <maximumf>, %83, %cst_66 [4] : vector<2x4x2x4x2x64xf32> to vector<2x4x2x4x64xf32>
    %cst_67 = arith.constant dense<0xFF800000> : vector<2x4x4x64xf32>
    %85 = vector.multi_reduction <maximumf>, %84, %cst_67 [2] : vector<2x4x2x4x64xf32> to vector<2x4x4x64xf32>
    %cst_68 = arith.constant 0.000000e+00 : f32
    %86 = vector.broadcast %cst_68 : f32 to vector<2x4x4x576xf32>
    %c0_69 = arith.constant 0 : index
    %c0_70 = arith.constant 0 : index
    %c0_71 = arith.constant 0 : index
    %c0_72 = arith.constant 0 : index
    %87 = vector.load %arg11[%c0_69, %c0_70, %c0_71, %c0_72] : memref<2x4x4x576xf32, #tpu.memory_space<vmem>>, vector<2x4x4x576xf32>
    tpu.vector_store %arg11[%c0_69, %c0_70, %c0_71, %c0_72], %86 {strides = array<i32>} : memref<2x4x4x576xf32, #tpu.memory_space<vmem>>, vector<2x4x4x576xf32>,
    %88 = vector.extract_strided_slice %85 {offsets = [0, 0, 0, 0], sizes = [2, 3, 3, 64], strides = [1, 1, 1, 1]} : vector<2x4x4x64xf32> to vector<2x3x3x64xf32>
    %c0_73 = arith.constant 0 : index
    %c1_74 = arith.constant 1 : index
    %c1_75 = arith.constant 1 : index
    %c0_76 = arith.constant 0 : index
    %89 = vector.load %arg11[%c0_73, %c1_74, %c1_75, %c0_76] : memref<2x4x4x576xf32, #tpu.memory_space<vmem>>, vector<2x3x3x64xf32>
    tpu.vector_store %arg11[%c0_73, %c1_74, %c1_75, %c0_76], %88 {strides = array<i32>} : memref<2x4x4x576xf32, #tpu.memory_space<vmem>>, vector<2x3x3x64xf32>,
    %90 = vector.extract_strided_slice %85 {offsets = [0, 0, 0, 0], sizes = [2, 3, 4, 64], strides = [1, 1, 1, 1]} : vector<2x4x4x64xf32> to vector<2x3x4x64xf32>
    %c0_77 = arith.constant 0 : index
    %c1_78 = arith.constant 1 : index
    %c0_79 = arith.constant 0 : index
    %c64_80 = arith.constant 64 : index
    %91 = vector.load %arg11[%c0_77, %c1_78, %c0_79, %c64_80] : memref<2x4x4x576xf32, #tpu.memory_space<vmem>>, vector<2x3x4x64xf32>
    tpu.vector_store %arg11[%c0_77, %c1_78, %c0_79, %c64_80], %90 {strides = array<i32>} : memref<2x4x4x576xf32, #tpu.memory_space<vmem>>, vector<2x3x4x64xf32>,
    %92 = vector.extract_strided_slice %85 {offsets = [0, 0, 1, 0], sizes = [2, 3, 3, 64], strides = [1, 1, 1, 1]} : vector<2x4x4x64xf32> to vector<2x3x3x64xf32>
    %c0_81 = arith.constant 0 : index
    %c1_82 = arith.constant 1 : index
    %c0_83 = arith.constant 0 : index
    %c128_84 = arith.constant 128 : index
    %93 = vector.load %arg11[%c0_81, %c1_82, %c0_83, %c128_84] : memref<2x4x4x576xf32, #tpu.memory_space<vmem>>, vector<2x3x3x64xf32>
    tpu.vector_store %arg11[%c0_81, %c1_82, %c0_83, %c128_84], %92 {strides = array<i32>} : memref<2x4x4x576xf32, #tpu.memory_space<vmem>>, vector<2x3x3x64xf32>,
    %94 = vector.extract_strided_slice %85 {offsets = [0, 0, 0, 0], sizes = [2, 4, 3, 64], strides = [1, 1, 1, 1]} : vector<2x4x4x64xf32> to vector<2x4x3x64xf32>
    %c0_85 = arith.constant 0 : index
    %c0_86 = arith.constant 0 : index
    %c1_87 = arith.constant 1 : index
    %c192_88 = arith.constant 192 : index
    %95 = vector.load %arg11[%c0_85, %c0_86, %c1_87, %c192_88] : memref<2x4x4x576xf32, #tpu.memory_space<vmem>>, vector<2x4x3x64xf32>
    tpu.vector_store %arg11[%c0_85, %c0_86, %c1_87, %c192_88], %94 {strides = array<i32>} : memref<2x4x4x576xf32, #tpu.memory_space<vmem>>, vector<2x4x3x64xf32>,
    %c0_89 = arith.constant 0 : index
    %c0_90 = arith.constant 0 : index
    %c0_91 = arith.constant 0 : index
    %c256_92 = arith.constant 256 : index
    %96 = vector.load %arg11[%c0_89, %c0_90, %c0_91, %c256_92] : memref<2x4x4x576xf32, #tpu.memory_space<vmem>>, vector<2x4x4x64xf32>
    tpu.vector_store %arg11[%c0_89, %c0_90, %c0_91, %c256_92], %85 {strides = array<i32>} : memref<2x4x4x576xf32, #tpu.memory_space<vmem>>, vector<2x4x4x64xf32>,
    %97 = vector.extract_strided_slice %85 {offsets = [0, 0, 1, 0], sizes = [2, 4, 3, 64], strides = [1, 1, 1, 1]} : vector<2x4x4x64xf32> to vector<2x4x3x64xf32>
    %c0_93 = arith.constant 0 : index
    %c0_94 = arith.constant 0 : index
    %c0_95 = arith.constant 0 : index
    %c320_96 = arith.constant 320 : index
    %98 = vector.load %arg11[%c0_93, %c0_94, %c0_95, %c320_96] : memref<2x4x4x576xf32, #tpu.memory_space<vmem>>, vector<2x4x3x64xf32>
    tpu.vector_store %arg11[%c0_93, %c0_94, %c0_95, %c320_96], %97 {strides = array<i32>} : memref<2x4x4x576xf32, #tpu.memory_space<vmem>>, vector<2x4x3x64xf32>,
    %99 = vector.extract_strided_slice %85 {offsets = [0, 1, 0, 0], sizes = [2, 3, 3, 64], strides = [1, 1, 1, 1]} : vector<2x4x4x64xf32> to vector<2x3x3x64xf32>
    %c0_97 = arith.constant 0 : index
    %c0_98 = arith.constant 0 : index
    %c1_99 = arith.constant 1 : index
    %c384_100 = arith.constant 384 : index
    %100 = vector.load %arg11[%c0_97, %c0_98, %c1_99, %c384_100] : memref<2x4x4x576xf32, #tpu.memory_space<vmem>>, vector<2x3x3x64xf32>
    tpu.vector_store %arg11[%c0_97, %c0_98, %c1_99, %c384_100], %99 {strides = array<i32>} : memref<2x4x4x576xf32, #tpu.memory_space<vmem>>, vector<2x3x3x64xf32>,
    %101 = vector.extract_strided_slice %85 {offsets = [0, 1, 0, 0], sizes = [2, 3, 4, 64], strides = [1, 1, 1, 1]} : vector<2x4x4x64xf32> to vector<2x3x4x64xf32>
    %c0_101 = arith.constant 0 : index
    %c0_102 = arith.constant 0 : index
    %c0_103 = arith.constant 0 : index
    %c448_104 = arith.constant 448 : index
    %102 = vector.load %arg11[%c0_101, %c0_102, %c0_103, %c448_104] : memref<2x4x4x576xf32, #tpu.memory_space<vmem>>, vector<2x3x4x64xf32>
    tpu.vector_store %arg11[%c0_101, %c0_102, %c0_103, %c448_104], %101 {strides = array<i32>} : memref<2x4x4x576xf32, #tpu.memory_space<vmem>>, vector<2x3x4x64xf32>,
    %103 = vector.extract_strided_slice %85 {offsets = [0, 1, 1, 0], sizes = [2, 3, 3, 64], strides = [1, 1, 1, 1]} : vector<2x4x4x64xf32> to vector<2x3x3x64xf32>
    %c0_105 = arith.constant 0 : index
    %c0_106 = arith.constant 0 : index
    %c0_107 = arith.constant 0 : index
    %c512_108 = arith.constant 512 : index
    %104 = vector.load %arg11[%c0_105, %c0_106, %c0_107, %c512_108] : memref<2x4x4x576xf32, #tpu.memory_space<vmem>>, vector<2x3x3x64xf32>
    tpu.vector_store %arg11[%c0_105, %c0_106, %c0_107, %c512_108], %103 {strides = array<i32>} : memref<2x4x4x576xf32, #tpu.memory_space<vmem>>, vector<2x3x3x64xf32>,
    %c0_109 = arith.constant 0 : index
    %c0_110 = arith.constant 0 : index
    %c0_111 = arith.constant 0 : index
    %c0_112 = arith.constant 0 : index
    %105 = vector.load %arg11[%c0_109, %c0_110, %c0_111, %c0_112] : memref<2x4x4x576xf32, #tpu.memory_space<vmem>>, vector<2x4x4x576xf32>
    %106 = vector.shape_cast %105 : vector<2x4x4x576xf32> to vector<32x576xf32>
    %c0_113 = arith.constant 0 : index
    %c0_114 = arith.constant 0 : index
    %107 = vector.load %arg3[%c0_113, %c0_114] : memref<576x64xf32, #tpu.memory_space<vmem>>, vector<576x64xf32>
    %cst_115 = arith.constant dense<0.000000e+00> : vector<32x64xf32>
    %108 = tpu.matmul %106, %107, %cst_115 {dimension_numbers = #tpu.dot_dimension_numbers<[1], [0], [0], [1], [0, 0, 1, 1], [], []>} : vector<32x576xf32>, vector<576x64xf32>, vector<32x64xf32> -> vector<32x64xf32>
    %c0_116 = arith.constant 0 : index
    %c0_117 = arith.constant 0 : index
    %109 = vector.load %arg7[%c0_116, %c0_117] : memref<2x64xf32, #tpu.memory_space<vmem>>, vector<1x64xf32>
    %c1_118 = arith.constant 1 : index
    %c0_119 = arith.constant 0 : index
    %110 = vector.load %arg7[%c1_118, %c0_119] : memref<2x64xf32, #tpu.memory_space<vmem>>, vector<1x64xf32>
    %cst_120 = arith.constant dense<0.000000e+00> : vector<64xf32>
    %111 = vector.multi_reduction <add>, %108, %cst_120 [0] : vector<32x64xf32> to vector<64xf32>
    %112 = vector.shape_cast %111 : vector<64xf32> to vector<1x64xf32>
    %113 = arith.mulf %108, %108 : vector<32x64xf32>
    %cst_121 = arith.constant dense<0.000000e+00> : vector<64xf32>
    %114 = vector.multi_reduction <add>, %113, %cst_121 [0] : vector<32x64xf32> to vector<64xf32>
    %115 = vector.shape_cast %114 : vector<64xf32> to vector<1x64xf32>
    %cst_122 = arith.constant 3.125000e-02 : f32
    %116 = vector.broadcast %cst_122 : f32 to vector<1x64xf32>
    %117 = arith.mulf %112, %116 : vector<1x64xf32>
    %cst_123 = arith.constant 3.125000e-02 : f32
    %118 = vector.broadcast %cst_123 : f32 to vector<1x64xf32>
    %119 = arith.mulf %115, %118 : vector<1x64xf32>
    %120 = arith.mulf %117, %117 : vector<1x64xf32>
    %121 = arith.subf %119, %120 : vector<1x64xf32>
    %cst_124 = arith.constant 0.000000e+00 : f32
    %122 = vector.broadcast %cst_124 : f32 to vector<1x64xf32>
    %123 = arith.maximumf %121, %122 : vector<1x64xf32>
    %cst_125 = arith.constant 9.99999974E-6 : f32
    %124 = vector.broadcast %cst_125 : f32 to vector<1x64xf32>
    %125 = arith.addf %123, %124 : vector<1x64xf32>
    %126 = math.rsqrt %125 : vector<1x64xf32>
    %127 = arith.mulf %109, %126 : vector<1x64xf32>
    %128 = arith.mulf %117, %127 : vector<1x64xf32>
    %129 = arith.subf %110, %128 : vector<1x64xf32>
    %130 = vector.broadcast %127 : vector<1x64xf32> to vector<32x64xf32>
    %131 = arith.mulf %108, %130 : vector<32x64xf32>
    %132 = vector.broadcast %129 : vector<1x64xf32> to vector<32x64xf32>
    %133 = arith.addf %131, %132 : vector<32x64xf32>
    %cst_126 = arith.constant 0.000000e+00 : f32
    %134 = vector.broadcast %cst_126 : f32 to vector<32x64xf32>
    %135 = arith.maximumf %133, %134 : vector<32x64xf32>
    %136 = vector.shape_cast %135 : vector<32x64xf32> to vector<2x2x2x2x2x64xf32>
    %cst_127 = arith.constant dense<0xFF800000> : vector<2x2x2x2x64xf32>
    %137 = vector.multi_reduction <maximumf>, %136, %cst_127 [4] : vector<2x2x2x2x2x64xf32> to vector<2x2x2x2x64xf32>
    %cst_128 = arith.constant dense<0xFF800000> : vector<2x2x2x64xf32>
    %138 = vector.multi_reduction <maximumf>, %137, %cst_128 [2] : vector<2x2x2x2x64xf32> to vector<2x2x2x64xf32>
    %cst_129 = arith.constant 0.000000e+00 : f32
    %139 = vector.broadcast %cst_129 : f32 to vector<2x2x2x576xf32>
    %c0_130 = arith.constant 0 : index
    %c0_131 = arith.constant 0 : index
    %c0_132 = arith.constant 0 : index
    %c0_133 = arith.constant 0 : index
    %140 = vector.load %arg12[%c0_130, %c0_131, %c0_132, %c0_133] : memref<2x2x2x576xf32, #tpu.memory_space<vmem>>, vector<2x2x2x576xf32>
    tpu.vector_store %arg12[%c0_130, %c0_131, %c0_132, %c0_133], %139 {strides = array<i32>} : memref<2x2x2x576xf32, #tpu.memory_space<vmem>>, vector<2x2x2x576xf32>,
    %141 = vector.extract_strided_slice %138 {offsets = [0, 0, 0, 0], sizes = [2, 1, 1, 64], strides = [1, 1, 1, 1]} : vector<2x2x2x64xf32> to vector<2x1x1x64xf32>
    %c0_134 = arith.constant 0 : index
    %c1_135 = arith.constant 1 : index
    %c1_136 = arith.constant 1 : index
    %c0_137 = arith.constant 0 : index
    %142 = vector.load %arg12[%c0_134, %c1_135, %c1_136, %c0_137] : memref<2x2x2x576xf32, #tpu.memory_space<vmem>>, vector<2x1x1x64xf32>
    tpu.vector_store %arg12[%c0_134, %c1_135, %c1_136, %c0_137], %141 {strides = array<i32>} : memref<2x2x2x576xf32, #tpu.memory_space<vmem>>, vector<2x1x1x64xf32>,
    %143 = vector.extract_strided_slice %138 {offsets = [0, 0, 0, 0], sizes = [2, 1, 2, 64], strides = [1, 1, 1, 1]} : vector<2x2x2x64xf32> to vector<2x1x2x64xf32>
    %c0_138 = arith.constant 0 : index
    %c1_139 = arith.constant 1 : index
    %c0_140 = arith.constant 0 : index
    %c64_141 = arith.constant 64 : index
    %144 = vector.load %arg12[%c0_138, %c1_139, %c0_140, %c64_141] : memref<2x2x2x576xf32, #tpu.memory_space<vmem>>, vector<2x1x2x64xf32>
    tpu.vector_store %arg12[%c0_138, %c1_139, %c0_140, %c64_141], %143 {strides = array<i32>} : memref<2x2x2x576xf32, #tpu.memory_space<vmem>>, vector<2x1x2x64xf32>,
    %145 = vector.extract_strided_slice %138 {offsets = [0, 0, 1, 0], sizes = [2, 1, 1, 64], strides = [1, 1, 1, 1]} : vector<2x2x2x64xf32> to vector<2x1x1x64xf32>
    %c0_142 = arith.constant 0 : index
    %c1_143 = arith.constant 1 : index
    %c0_144 = arith.constant 0 : index
    %c128_145 = arith.constant 128 : index
    %146 = vector.load %arg12[%c0_142, %c1_143, %c0_144, %c128_145] : memref<2x2x2x576xf32, #tpu.memory_space<vmem>>, vector<2x1x1x64xf32>
    tpu.vector_store %arg12[%c0_142, %c1_143, %c0_144, %c128_145], %145 {strides = array<i32>} : memref<2x2x2x576xf32, #tpu.memory_space<vmem>>, vector<2x1x1x64xf32>,
    %147 = vector.extract_strided_slice %138 {offsets = [0, 0, 0, 0], sizes = [2, 2, 1, 64], strides = [1, 1, 1, 1]} : vector<2x2x2x64xf32> to vector<2x2x1x64xf32>
    %c0_146 = arith.constant 0 : index
    %c0_147 = arith.constant 0 : index
    %c1_148 = arith.constant 1 : index
    %c192_149 = arith.constant 192 : index
    %148 = vector.load %arg12[%c0_146, %c0_147, %c1_148, %c192_149] : memref<2x2x2x576xf32, #tpu.memory_space<vmem>>, vector<2x2x1x64xf32>
    tpu.vector_store %arg12[%c0_146, %c0_147, %c1_148, %c192_149], %147 {strides = array<i32>} : memref<2x2x2x576xf32, #tpu.memory_space<vmem>>, vector<2x2x1x64xf32>,
    %c0_150 = arith.constant 0 : index
    %c0_151 = arith.constant 0 : index
    %c0_152 = arith.constant 0 : index
    %c256_153 = arith.constant 256 : index
    %149 = vector.load %arg12[%c0_150, %c0_151, %c0_152, %c256_153] : memref<2x2x2x576xf32, #tpu.memory_space<vmem>>, vector<2x2x2x64xf32>
    tpu.vector_store %arg12[%c0_150, %c0_151, %c0_152, %c256_153], %138 {strides = array<i32>} : memref<2x2x2x576xf32, #tpu.memory_space<vmem>>, vector<2x2x2x64xf32>,
    %150 = vector.extract_strided_slice %138 {offsets = [0, 0, 1, 0], sizes = [2, 2, 1, 64], strides = [1, 1, 1, 1]} : vector<2x2x2x64xf32> to vector<2x2x1x64xf32>
    %c0_154 = arith.constant 0 : index
    %c0_155 = arith.constant 0 : index
    %c0_156 = arith.constant 0 : index
    %c320_157 = arith.constant 320 : index
    %151 = vector.load %arg12[%c0_154, %c0_155, %c0_156, %c320_157] : memref<2x2x2x576xf32, #tpu.memory_space<vmem>>, vector<2x2x1x64xf32>
    tpu.vector_store %arg12[%c0_154, %c0_155, %c0_156, %c320_157], %150 {strides = array<i32>} : memref<2x2x2x576xf32, #tpu.memory_space<vmem>>, vector<2x2x1x64xf32>,
    %152 = vector.extract_strided_slice %138 {offsets = [0, 1, 0, 0], sizes = [2, 1, 1, 64], strides = [1, 1, 1, 1]} : vector<2x2x2x64xf32> to vector<2x1x1x64xf32>
    %c0_158 = arith.constant 0 : index
    %c0_159 = arith.constant 0 : index
    %c1_160 = arith.constant 1 : index
    %c384_161 = arith.constant 384 : index
    %153 = vector.load %arg12[%c0_158, %c0_159, %c1_160, %c384_161] : memref<2x2x2x576xf32, #tpu.memory_space<vmem>>, vector<2x1x1x64xf32>
    tpu.vector_store %arg12[%c0_158, %c0_159, %c1_160, %c384_161], %152 {strides = array<i32>} : memref<2x2x2x576xf32, #tpu.memory_space<vmem>>, vector<2x1x1x64xf32>,
    %154 = vector.extract_strided_slice %138 {offsets = [0, 1, 0, 0], sizes = [2, 1, 2, 64], strides = [1, 1, 1, 1]} : vector<2x2x2x64xf32> to vector<2x1x2x64xf32>
    %c0_162 = arith.constant 0 : index
    %c0_163 = arith.constant 0 : index
    %c0_164 = arith.constant 0 : index
    %c448_165 = arith.constant 448 : index
    %155 = vector.load %arg12[%c0_162, %c0_163, %c0_164, %c448_165] : memref<2x2x2x576xf32, #tpu.memory_space<vmem>>, vector<2x1x2x64xf32>
    tpu.vector_store %arg12[%c0_162, %c0_163, %c0_164, %c448_165], %154 {strides = array<i32>} : memref<2x2x2x576xf32, #tpu.memory_space<vmem>>, vector<2x1x2x64xf32>,
    %156 = vector.extract_strided_slice %138 {offsets = [0, 1, 1, 0], sizes = [2, 1, 1, 64], strides = [1, 1, 1, 1]} : vector<2x2x2x64xf32> to vector<2x1x1x64xf32>
    %c0_166 = arith.constant 0 : index
    %c0_167 = arith.constant 0 : index
    %c0_168 = arith.constant 0 : index
    %c512_169 = arith.constant 512 : index
    %157 = vector.load %arg12[%c0_166, %c0_167, %c0_168, %c512_169] : memref<2x2x2x576xf32, #tpu.memory_space<vmem>>, vector<2x1x1x64xf32>
    tpu.vector_store %arg12[%c0_166, %c0_167, %c0_168, %c512_169], %156 {strides = array<i32>} : memref<2x2x2x576xf32, #tpu.memory_space<vmem>>, vector<2x1x1x64xf32>,
    %c0_170 = arith.constant 0 : index
    %c0_171 = arith.constant 0 : index
    %c0_172 = arith.constant 0 : index
    %c0_173 = arith.constant 0 : index
    %158 = vector.load %arg12[%c0_170, %c0_171, %c0_172, %c0_173] : memref<2x2x2x576xf32, #tpu.memory_space<vmem>>, vector<2x2x2x576xf32>
    %159 = vector.shape_cast %158 : vector<2x2x2x576xf32> to vector<8x576xf32>
    %c0_174 = arith.constant 0 : index
    %c0_175 = arith.constant 0 : index
    %160 = vector.load %arg4[%c0_174, %c0_175] : memref<576x64xf32, #tpu.memory_space<vmem>>, vector<576x64xf32>
    %cst_176 = arith.constant dense<0.000000e+00> : vector<8x64xf32>
    %161 = tpu.matmul %159, %160, %cst_176 {dimension_numbers = #tpu.dot_dimension_numbers<[1], [0], [0], [1], [0, 0, 1, 1], [], []>} : vector<8x576xf32>, vector<576x64xf32>, vector<8x64xf32> -> vector<8x64xf32>
    %c0_177 = arith.constant 0 : index
    %c0_178 = arith.constant 0 : index
    %162 = vector.load %arg8[%c0_177, %c0_178] : memref<2x64xf32, #tpu.memory_space<vmem>>, vector<1x64xf32>
    %c1_179 = arith.constant 1 : index
    %c0_180 = arith.constant 0 : index
    %163 = vector.load %arg8[%c1_179, %c0_180] : memref<2x64xf32, #tpu.memory_space<vmem>>, vector<1x64xf32>
    %cst_181 = arith.constant dense<0.000000e+00> : vector<64xf32>
    %164 = vector.multi_reduction <add>, %161, %cst_181 [0] : vector<8x64xf32> to vector<64xf32>
    %165 = vector.shape_cast %164 : vector<64xf32> to vector<1x64xf32>
    %166 = arith.mulf %161, %161 : vector<8x64xf32>
    %cst_182 = arith.constant dense<0.000000e+00> : vector<64xf32>
    %167 = vector.multi_reduction <add>, %166, %cst_182 [0] : vector<8x64xf32> to vector<64xf32>
    %168 = vector.shape_cast %167 : vector<64xf32> to vector<1x64xf32>
    %cst_183 = arith.constant 1.250000e-01 : f32
    %169 = vector.broadcast %cst_183 : f32 to vector<1x64xf32>
    %170 = arith.mulf %165, %169 : vector<1x64xf32>
    %cst_184 = arith.constant 1.250000e-01 : f32
    %171 = vector.broadcast %cst_184 : f32 to vector<1x64xf32>
    %172 = arith.mulf %168, %171 : vector<1x64xf32>
    %173 = arith.mulf %170, %170 : vector<1x64xf32>
    %174 = arith.subf %172, %173 : vector<1x64xf32>
    %cst_185 = arith.constant 0.000000e+00 : f32
    %175 = vector.broadcast %cst_185 : f32 to vector<1x64xf32>
    %176 = arith.maximumf %174, %175 : vector<1x64xf32>
    %cst_186 = arith.constant 9.99999974E-6 : f32
    %177 = vector.broadcast %cst_186 : f32 to vector<1x64xf32>
    %178 = arith.addf %176, %177 : vector<1x64xf32>
    %179 = math.rsqrt %178 : vector<1x64xf32>
    %180 = arith.mulf %162, %179 : vector<1x64xf32>
    %181 = arith.mulf %170, %180 : vector<1x64xf32>
    %182 = arith.subf %163, %181 : vector<1x64xf32>
    %183 = vector.broadcast %180 : vector<1x64xf32> to vector<8x64xf32>
    %184 = arith.mulf %161, %183 : vector<8x64xf32>
    %185 = vector.broadcast %182 : vector<1x64xf32> to vector<8x64xf32>
    %186 = arith.addf %184, %185 : vector<8x64xf32>
    %cst_187 = arith.constant 0.000000e+00 : f32
    %187 = vector.broadcast %cst_187 : f32 to vector<8x64xf32>
    %188 = arith.maximumf %186, %187 : vector<8x64xf32>
    %189 = vector.shape_cast %188 : vector<8x64xf32> to vector<2x1x2x1x2x64xf32>
    %cst_188 = arith.constant dense<0xFF800000> : vector<2x1x2x1x64xf32>
    %190 = vector.multi_reduction <maximumf>, %189, %cst_188 [4] : vector<2x1x2x1x2x64xf32> to vector<2x1x2x1x64xf32>
    %cst_189 = arith.constant dense<0xFF800000> : vector<2x1x1x64xf32>
    %191 = vector.multi_reduction <maximumf>, %190, %cst_189 [2] : vector<2x1x2x1x64xf32> to vector<2x1x1x64xf32>
    %c0_190 = arith.constant 0 : index
    %c0_191 = arith.constant 0 : index
    %c0_192 = arith.constant 0 : index
    %c0_193 = arith.constant 0 : index
    %192 = vector.load %arg9[%c0_190, %c0_191, %c0_192, %c0_193] : memref<2x1x1x64xf32, #tpu.memory_space<vmem>>, vector<2x1x1x64xf32>
    tpu.vector_store %arg9[%c0_190, %c0_191, %c0_192, %c0_193], %191 {strides = array<i32>} : memref<2x1x1x64xf32, #tpu.memory_space<vmem>>, vector<2x1x1x64xf32>,
    return
  }
}

</mosaic_0001>

<llo_original>
// kernel: prototypical_network.1
$region0: #{prototypical_network.1}
  #allocation0 [shape = 'u32[]', space=smem, size = 0x4, offset = 0x4, fixed_abs, tag = 'smem constant byte address 0x4 - core index']
  #allocation1 [shape = 'u32[144,128]{1,0:T(1,128)}', space=vmem, size = 0x12000, scoped, tag = 'internal scratch']
  #allocation2 [shape = 'f32[2,8,8,576]{3,2,1,0:T(8,128)}', space=vmem, size = 0x50000, scoped, tag = 'scratch operand']
  #allocation3 [shape = 'f32[2,4,4,576]{3,2,1,0:T(4,128)}', space=vmem, size = 0x14000, scoped, tag = 'scratch operand']
  #allocation4 [shape = 'f32[2,2,2,576]{3,2,1,0:T(2,128)}', space=vmem, size = 0x5000, scoped, tag = 'scratch operand']
  %s0 = inlined_call_operand.vmem [shape: f32[512,16], index: 0, kind: input, shape index: {}]
  %s1 = inlined_call_operand.vmem [shape: f32[16,64], index: 1, kind: input, shape index: {}]
  %s2 = inlined_call_operand.vmem [shape: f32[576,64], index: 2, kind: input, shape index: {}]
  %s3 = inlined_call_operand.vmem [shape: f32[576,64], index: 3, kind: input, shape index: {}]
  %s4 = inlined_call_operand.vmem [shape: f32[576,64], index: 4, kind: input, shape index: {}]
  %s5 = inlined_call_operand.vmem [shape: f32[2,64], index: 5, kind: input, shape index: {}]
  %s6 = inlined_call_operand.vmem [shape: f32[2,64], index: 6, kind: input, shape index: {}]
  %s7 = inlined_call_operand.vmem [shape: f32[2,64], index: 7, kind: input, shape index: {}]
  %s8 = inlined_call_operand.vmem [shape: f32[2,64], index: 8, kind: input, shape index: {}]
  %s9 = inlined_call_operand.hbm [shape: f32[2,1,1,64], index: 9, kind: output, shape index: {}]
  %s10 = sld [smem:[#allocation0]]
  $region46: #{prototypical_network.1} parent=0
    _
  %s12 = ssub.s32 1, %s10
  %s13 = scalar_select 0, %s12, %s10
  $region1: #{prototypical_network.1} parent=0
    #allocation5 [shape = 'u8[1024]{0}', space=vmem, size = 0x400, scoped, tag = 'output window, operand 0, single buffered']
    #allocation6 [shape = 's32[1]{0}', space=sflag, size = 0x4, scoped, tag = 'scoped memory for prototypical_network.1']
    %14 = vsyncpa [#allocation6], 0
    // Predicated region
    $region2: #{prototypical_network.1} parent=1 // pred_check
      _
    $region3: #{prototypical_network.1} parent=1 // pred_check_branch
      %16 = sbr.rel (0) target = $region5
    $region4: #{prototypical_network.1} parent=1 // pred_region
      _
    $region5: #{prototypical_network.1} parent=1 // pred_fallthru
      _
    // Predicated region
    $region6: #{prototypical_network.1} parent=1 // pred_check
      _
    $region7: #{prototypical_network.1} parent=1 // pred_check_branch
      %18 = sbr.rel (0) target = $region9
    $region8: #{prototypical_network.1} parent=1 // pred_region
      _
    $region9: #{prototypical_network.1} parent=1 // pred_fallthru
      _
    // Predicated region
    $region10: #{prototypical_network.1} parent=1 // pred_check
      _
    $region11: #{prototypical_network.1} parent=1 // pred_check_branch
      %20 = sbr.rel (0) target = $region13
    $region12: #{prototypical_network.1} parent=1 // pred_region
      _
    $region13: #{prototypical_network.1} parent=1 // pred_fallthru
      _
    // Predicated region
    $region14: #{prototypical_network.1} parent=1 // pred_check
      _
    $region15: #{prototypical_network.1} parent=1 // pred_check_branch
      %22 = sbr.rel (0) target = $region17
    $region16: #{prototypical_network.1} parent=1 // pred_region
      _
    $region17: #{prototypical_network.1} parent=1 // pred_fallthru
      _
    // Predicated region
    $region18: #{prototypical_network.1} parent=1 // pred_check
      _
    $region19: #{prototypical_network.1} parent=1 // pred_check_branch
      %24 = sbr.rel (0) target = $region21
    $region20: #{prototypical_network.1} parent=1 // pred_region
      _
    $region21: #{prototypical_network.1} parent=1 // pred_fallthru
      _
    // Predicated region
    $region22: #{prototypical_network.1} parent=1 // pred_check
      _
    $region23: #{prototypical_network.1} parent=1 // pred_check_branch
      %26 = sbr.rel (0) target = $region25
    $region24: #{prototypical_network.1} parent=1 // pred_region
      _
    $region25: #{prototypical_network.1} parent=1 // pred_fallthru
      _
    // Predicated region
    $region26: #{prototypical_network.1} parent=1 // pred_check
      _
    $region27: #{prototypical_network.1} parent=1 // pred_check_branch
      %28 = sbr.rel (0) target = $region29
    $region28: #{prototypical_network.1} parent=1 // pred_region
      _
    $region29: #{prototypical_network.1} parent=1 // pred_fallthru
      _
    // Predicated region
    $region30: #{prototypical_network.1} parent=1 // pred_check
      _
    $region31: #{prototypical_network.1} parent=1 // pred_check_branch
      %30 = sbr.rel (0) target = $region33
    $region32: #{prototypical_network.1} parent=1 // pred_region
      _
    $region33: #{prototypical_network.1} parent=1 // pred_fallthru
      _
    // Predicated region
    $region34: #{prototypical_network.1} parent=1 // pred_check
      _
    $region35: #{prototypical_network.1} parent=1 // pred_check_branch
      %32 = sbr.rel (0) target = $region37
    $region36: #{prototypical_network.1} parent=1 // pred_region
      _
    $region37: #{prototypical_network.1} parent=1 // pred_fallthru
      _
    %v33 = vld [vmem:[%s0] sm:$0xff]
    %v34 = vld [vmem:[%s0 + $0x8] sm:$0xff]
    %v35 = vld [vmem:[%s0 + $0x10] sm:$0xff]
    %v36 = vld [vmem:[%s0 + $0x18] sm:$0xff]
    %v37 = vld [vmem:[%s0 + $0x20] sm:$0xff]
    %v38 = vld [vmem:[%s0 + $0x28] sm:$0xff]
    %v39 = vld [vmem:[%s0 + $0x30] sm:$0xff]
    %v40 = vld [vmem:[%s0 + $0x38] sm:$0xff]
    %v41 = vld [vmem:[%s0 + $0x40] sm:$0xff]
    %v42 = vld [vmem:[%s0 + $0x48] sm:$0xff]
    %v43 = vld [vmem:[%s0 + $0x50] sm:$0xff]
    %v44 = vld [vmem:[%s0 + $0x58] sm:$0xff]
    %v45 = vld [vmem:[%s0 + $0x60] sm:$0xff]
    %v46 = vld [vmem:[%s0 + $0x68] sm:$0xff]
    %v47 = vld [vmem:[%s0 + $0x70] sm:$0xff]
    %v48 = vld [vmem:[%s0 + $0x78] sm:$0xff]
    %v49 = vld [vmem:[%s0 + $0x80] sm:$0xff]
    %v50 = vld [vmem:[%s0 + $0x88] sm:$0xff]
    %v51 = vld [vmem:[%s0 + $0x90] sm:$0xff]
    %v52 = vld [vmem:[%s0 + $0x98] sm:$0xff]
    %v53 = vld [vmem:[%s0 + $0xa0] sm:$0xff]
    %v54 = vld [vmem:[%s0 + $0xa8] sm:$0xff]
    %v55 = vld [vmem:[%s0 + $0xb0] sm:$0xff]
    %v56 = vld [vmem:[%s0 + $0xb8] sm:$0xff]
    %v57 = vld [vmem:[%s0 + $0xc0] sm:$0xff]
    %v58 = vld [vmem:[%s0 + $0xc8] sm:$0xff]
    %v59 = vld [vmem:[%s0 + $0xd0] sm:$0xff]
    %v60 = vld [vmem:[%s0 + $0xd8] sm:$0xff]
    %v61 = vld [vmem:[%s0 + $0xe0] sm:$0xff]
    %v62 = vld [vmem:[%s0 + $0xe8] sm:$0xff]
    %v63 = vld [vmem:[%s0 + $0xf0] sm:$0xff]
    %v64 = vld [vmem:[%s0 + $0xf8] sm:$0xff]
    %v65 = vld [vmem:[%s0 + $0x100] sm:$0xff]
    %v66 = vld [vmem:[%s0 + $0x108] sm:$0xff]
    %v67 = vld [vmem:[%s0 + $0x110] sm:$0xff]
    %v68 = vld [vmem:[%s0 + $0x118] sm:$0xff]
    %v69 = vld [vmem:[%s0 + $0x120] sm:$0xff]
    %v70 = vld [vmem:[%s0 + $0x128] sm:$0xff]
    %v71 = vld [vmem:[%s0 + $0x130] sm:$0xff]
    %v72 = vld [vmem:[%s0 + $0x138] sm:$0xff]
    %v73 = vld [vmem:[%s0 + $0x140] sm:$0xff]
    %v74 = vld [vmem:[%s0 + $0x148] sm:$0xff]
    %v75 = vld [vmem:[%s0 + $0x150] sm:$0xff]
    %v76 = vld [vmem:[%s0 + $0x158] sm:$0xff]
    %v77 = vld [vmem:[%s0 + $0x160] sm:$0xff]
    %v78 = vld [vmem:[%s0 + $0x168] sm:$0xff]
    %v79 = vld [vmem:[%s0 + $0x170] sm:$0xff]
    %v80 = vld [vmem:[%s0 + $0x178] sm:$0xff]
    %v81 = vld [vmem:[%s0 + $0x180] sm:$0xff]
    %v82 = vld [vmem:[%s0 + $0x188] sm:$0xff]
    %v83 = vld [vmem:[%s0 + $0x190] sm:$0xff]
    %v84 = vld [vmem:[%s0 + $0x198] sm:$0xff]
    %v85 = vld [vmem:[%s0 + $0x1a0] sm:$0xff]
    %v86 = vld [vmem:[%s0 + $0x1a8] sm:$0xff]
    %v87 = vld [vmem:[%s0 + $0x1b0] sm:$0xff]
    %v88 = vld [vmem:[%s0 + $0x1b8] sm:$0xff]
    %v89 = vld [vmem:[%s0 + $0x1c0] sm:$0xff]
    %v90 = vld [vmem:[%s0 + $0x1c8] sm:$0xff]
    %v91 = vld [vmem:[%s0 + $0x1d0] sm:$0xff]
    %v92 = vld [vmem:[%s0 + $0x1d8] sm:$0xff]
    %v93 = vld [vmem:[%s0 + $0x1e0] sm:$0xff]
    %v94 = vld [vmem:[%s0 + $0x1e8] sm:$0xff]
    %v95 = vld [vmem:[%s0 + $0x1f0] sm:$0xff]
    %v96 = vld [vmem:[%s0 + $0x1f8] sm:$0xff]
    %v97 = vld [vmem:[%s1] sm:$0xff]
    %v98 = vld [vmem:[%s1 + $0x8] sm:$0xff]
    %vm99 = vcmask 130048
    %v101 = vsel %vm99, %v33, 0
    %v104 = vsel %vm99, %v34, 0
    %v107 = vsel %vm99, %v35, 0
    %v110 = vsel %vm99, %v36, 0
    %v113 = vsel %vm99, %v37, 0
    %v116 = vsel %vm99, %v38, 0
    %v119 = vsel %vm99, %v39, 0
    %v122 = vsel %vm99, %v40, 0
    %v125 = vsel %vm99, %v41, 0
    %v128 = vsel %vm99, %v42, 0
    %v131 = vsel %vm99, %v43, 0
    %v134 = vsel %vm99, %v44, 0
    %v137 = vsel %vm99, %v45, 0
    %v140 = vsel %vm99, %v46, 0
    %v143 = vsel %vm99, %v47, 0
    %v146 = vsel %vm99, %v48, 0
    %v149 = vsel %vm99, %v49, 0
    %v152 = vsel %vm99, %v50, 0
    %v155 = vsel %vm99, %v51, 0
    %v158 = vsel %vm99, %v52, 0
    %v161 = vsel %vm99, %v53, 0
    %v164 = vsel %vm99, %v54, 0
    %v167 = vsel %vm99, %v55, 0
    %v170 = vsel %vm99, %v56, 0
    %v173 = vsel %vm99, %v57, 0
    %v176 = vsel %vm99, %v58, 0
    %v179 = vsel %vm99, %v59, 0
    %v182 = vsel %vm99, %v60, 0
    %v185 = vsel %vm99, %v61, 0
    %v188 = vsel %vm99, %v62, 0
    %v191 = vsel %vm99, %v63, 0
    %v194 = vsel %vm99, %v64, 0
    %v197 = vsel %vm99, %v65, 0
    %v200 = vsel %vm99, %v66, 0
    %v203 = vsel %vm99, %v67, 0
    %v206 = vsel %vm99, %v68, 0
    %v209 = vsel %vm99, %v69, 0
    %v212 = vsel %vm99, %v70, 0
    %v215 = vsel %vm99, %v71, 0
    %v218 = vsel %vm99, %v72, 0
    %v221 = vsel %vm99, %v73, 0
    %v224 = vsel %vm99, %v74, 0
    %v227 = vsel %vm99, %v75, 0
    %v230 = vsel %vm99, %v76, 0
    %v233 = vsel %vm99, %v77, 0
    %v236 = vsel %vm99, %v78, 0
    %v239 = vsel %vm99, %v79, 0
    %v242 = vsel %vm99, %v80, 0
    %v245 = vsel %vm99, %v81, 0
    %v248 = vsel %vm99, %v82, 0
    %v251 = vsel %vm99, %v83, 0
    %v254 = vsel %vm99, %v84, 0
    %v257 = vsel %vm99, %v85, 0
    %v260 = vsel %vm99, %v86, 0
    %v263 = vsel %vm99, %v87, 0
    %v266 = vsel %vm99, %v88, 0
    %v269 = vsel %vm99, %v89, 0
    %v272 = vsel %vm99, %v90, 0
    %v275 = vsel %vm99, %v91, 0
    %v278 = vsel %vm99, %v92, 0
    %v281 = vsel %vm99, %v93, 0
    %v284 = vsel %vm99, %v94, 0
    %v287 = vsel %vm99, %v95, 0
    %v290 = vsel %vm99, %v96, 0
    %292 = vmatprep.subr.mxu0 0.0
    %293 = vmatpush1.msra.mxu0 %v97
    %294 = vmatprep.subr.mxu0 0.0
    %295 = vmatpush1.msra.mxu0 %v98
    %296 = vmatprep.subr.mxu0 0.0
    %297 = vmatpush1.msra.mxu0 0.0
    %298 = vmatprep.subr.mxu0 0.0
    %299 = vmatpush1.msra.mxu0 0.0
    %300 = vmatprep.subr.mxu0 0.0
    %301 = vmatpush1.msra.mxu0 0.0
    %302 = vmatprep.subr.mxu0 0.0
    %303 = vmatpush1.msra.mxu0 0.0
    %304 = vmatprep.subr.mxu0 0.0
    %305 = vmatpush1.msra.mxu0 0.0
    %306 = vmatprep.subr.mxu0 0.0
    %307 = vmatpush1.msra.mxu0 0.0
    %308 = vmatprep.subr.mxu0 0.0
    %309 = vmatpush1.msra.mxu0 0.0
    %310 = vmatprep.subr.mxu0 0.0
    %311 = vmatpush1.msra.mxu0 0.0
    %312 = vmatprep.subr.mxu0 0.0
    %313 = vmatpush1.msra.mxu0 0.0
    %314 = vmatprep.subr.mxu0 0.0
    %315 = vmatpush1.msra.mxu0 0.0
    %316 = vmatprep.subr.mxu0 0.0
    %317 = vmatpush1.msra.mxu0 0.0
    %318 = vmatprep.subr.mxu0 0.0
    %319 = vmatpush1.msra.mxu0 0.0
    %320 = vmatprep.subr.mxu0 0.0
    %321 = vmatpush1.msra.mxu0 0.0
    %322 = vmatprep.subr.mxu0 0.0
    %323 = vmatpush1.msra.mxu0 0.0
    %324 = vmatprep.subr.mxu0 0.0
    %325 = vmatpush1.msra.mxu0 0.0
    %326 = vmatprep.subr.mxu0 0.0
    %327 = vmatpush1.msra.mxu0 0.0
    %328 = vmatprep.subr.mxu0 0.0
    %329 = vmatpush1.msra.mxu0 0.0
    %330 = vmatprep.subr.mxu0 0.0
    %331 = vmatpush1.msra.mxu0 0.0
    %332 = vmatprep.subr.mxu0 0.0
    %333 = vmatpush1.msra.mxu0 0.0
    %334 = vmatprep.subr.mxu0 0.0
    %335 = vmatpush1.msra.mxu0 0.0
    %336 = vmatprep.subr.mxu0 0.0
    %337 = vmatpush1.msra.mxu0 0.0
    %338 = vmatprep.subr.mxu0 0.0
    %339 = vmatpush1.msra.mxu0 0.0
    %340 = vmatprep.subr.mxu0 0.0
    %341 = vmatpush1.msra.mxu0 0.0
    %342 = vmatprep.subr.mxu0 0.0
    %343 = vmatpush1.msra.mxu0 0.0
    %344 = vmatprep.subr.mxu0 0.0
    %345 = vmatpush1.msra.mxu0 0.0
    %346 = vmatprep.subr.mxu0 0.0
    %347 = vmatpush1.msra.mxu0 0.0
    %348 = vmatprep.subr.mxu0 0.0
    %349 = vmatpush1.msra.mxu0 0.0
    %350 = vmatprep.subr.mxu0 0.0
    %351 = vmatpush1.msra.mxu0 0.0
    %352 = vmatprep.subr.mxu0 0.0
    %353 = vmatpush1.msra.mxu0 0.0
    %354 = vmatprep.subr.mxu0 0.0
    %355 = vmatpush1.msra.mxu0 0.0
    %356 = vmatprep.mubr.f32.mxu0 0.0
    %357 = vmatmul.mubr.f32.gmra.mrb[0].mxu0 %v101
    %v358 = vpop.f32.mrb[0].mxu0
    %v359 = vadd.f32 0.0, %v358
    %v360 = vpop.f32.mrb[0].mxu0
    %361 = vmatprep.mubr.f32.mxu0 0.0
    %362 = vmatmul.mubr.f32.gmra.mrb[0].mxu0 %v104
    %v363 = vpop.f32.mrb[0].mxu0
    %v364 = vadd.f32 0.0, %v363
    %v365 = vpop.f32.mrb[0].mxu0
    %366 = vmatprep.mubr.f32.mxu0 0.0
    %367 = vmatmul.mubr.f32.gmra.mrb[0].mxu0 %v107
    %v368 = vpop.f32.mrb[0].mxu0
    %v369 = vadd.f32 0.0, %v368
    %v370 = vpop.f32.mrb[0].mxu0
    %371 = vmatprep.mubr.f32.mxu0 0.0
    %372 = vmatmul.mubr.f32.gmra.mrb[0].mxu0 %v110
    %v373 = vpop.f32.mrb[0].mxu0
    %v374 = vadd.f32 0.0, %v373
    %v375 = vpop.f32.mrb[0].mxu0
    %376 = vmatprep.mubr.f32.mxu0 0.0
    %377 = vmatmul.mubr.f32.gmra.mrb[0].mxu0 %v113
    %v378 = vpop.f32.mrb[0].mxu0
    %v379 = vadd.f32 0.0, %v378
    %v380 = vpop.f32.mrb[0].mxu0
    %381 = vmatprep.mubr.f32.mxu0 0.0
    %382 = vmatmul.mubr.f32.gmra.mrb[0].mxu0 %v116
    %v383 = vpop.f32.mrb[0].mxu0
    %v384 = vadd.f32 0.0, %v383
    %v385 = vpop.f32.mrb[0].mxu0
    %386 = vmatprep.mubr.f32.mxu0 0.0
    %387 = vmatmul.mubr.f32.gmra.mrb[0].mxu0 %v119
    %v388 = vpop.f32.mrb[0].mxu0
    %v389 = vadd.f32 0.0, %v388
    %v390 = vpop.f32.mrb[0].mxu0
    %391 = vmatprep.mubr.f32.mxu0 0.0
    %392 = vmatmul.mubr.f32.gmra.mrb[0].mxu0 %v122
    %v393 = vpop.f32.mrb[0].mxu0
    %v394 = vadd.f32 0.0, %v393
    %v395 = vpop.f32.mrb[0].mxu0
    %396 = vmatprep.mubr.f32.mxu0 0.0
    %397 = vmatmul.mubr.f32.gmra.mrb[0].mxu0 %v125
    %v398 = vpop.f32.mrb[0].mxu0
    %v399 = vadd.f32 0.0, %v398
    %v400 = vpop.f32.mrb[0].mxu0
    %401 = vmatprep.mubr.f32.mxu0 0.0
    %402 = vmatmul.mubr.f32.gmra.mrb[0].mxu0 %v128
    %v403 = vpop.f32.mrb[0].mxu0
    %v404 = vadd.f32 0.0, %v403
    %v405 = vpop.f32.mrb[0].mxu0
    %406 = vmatprep.mubr.f32.mxu0 0.0
    %407 = vmatmul.mubr.f32.gmra.mrb[0].mxu0 %v131
    %v408 = vpop.f32.mrb[0].mxu0
    %v409 = vadd.f32 0.0, %v408
    %v410 = vpop.f32.mrb[0].mxu0
    %411 = vmatprep.mubr.f32.mxu0 0.0
    %412 = vmatmul.mubr.f32.gmra.mrb[0].mxu0 %v134
    %v413 = vpop.f32.mrb[0].mxu0
    %v414 = vadd.f32 0.0, %v413
    %v415 = vpop.f32.mrb[0].mxu0
    %416 = vmatprep.mubr.f32.mxu0 0.0
    %417 = vmatmul.mubr.f32.gmra.mrb[0].mxu0 %v137
    %v418 = vpop.f32.mrb[0].mxu0
    %v419 = vadd.f32 0.0, %v418
    %v420 = vpop.f32.mrb[0].mxu0
    %421 = vmatprep.mubr.f32.mxu0 0.0
    %422 = vmatmul.mubr.f32.gmra.mrb[0].mxu0 %v140
    %v423 = vpop.f32.mrb[0].mxu0
    %v424 = vadd.f32 0.0, %v423
    %v425 = vpop.f32.mrb[0].mxu0
    %426 = vmatprep.mubr.f32.mxu0 0.0
    %427 = vmatmul.mubr.f32.gmra.mrb[0].mxu0 %v143
    %v428 = vpop.f32.mrb[0].mxu0
    %v429 = vadd.f32 0.0, %v428
    %v430 = vpop.f32.mrb[0].mxu0
    %431 = vmatprep.mubr.f32.mxu0 0.0
    %432 = vmatmul.mubr.f32.gmra.mrb[0].mxu0 %v146
    %v433 = vpop.f32.mrb[0].mxu0
    %v434 = vadd.f32 0.0, %v433
    %v435 = vpop.f32.mrb[0].mxu0
    %436 = vmatprep.mubr.f32.mxu0 0.0
    %437 = vmatmul.mubr.f32.gmra.mrb[0].mxu0 %v149
    %v438 = vpop.f32.mrb[0].mxu0
    %v439 = vadd.f32 0.0, %v438
    %v440 = vpop.f32.mrb[0].mxu0
    %441 = vmatprep.mubr.f32.mxu0 0.0
    %442 = vmatmul.mubr.f32.gmra.mrb[0].mxu0 %v152
    %v443 = vpop.f32.mrb[0].mxu0
    %v444 = vadd.f32 0.0, %v443
    %v445 = vpop.f32.mrb[0].mxu0
    %446 = vmatprep.mubr.f32.mxu0 0.0
    %447 = vmatmul.mubr.f32.gmra.mrb[0].mxu0 %v155
    %v448 = vpop.f32.mrb[0].mxu0
    %v449 = vadd.f32 0.0, %v448
    %v450 = vpop.f32.mrb[0].mxu0
    %451 = vmatprep.mubr.f32.mxu0 0.0
    %452 = vmatmul.mubr.f32.gmra.mrb[0].mxu0 %v158
    %v453 = vpop.f32.mrb[0].mxu0
    %v454 = vadd.f32 0.0, %v453
    %v455 = vpop.f32.mrb[0].mxu0
    %456 = vmatprep.mubr.f32.mxu0 0.0
    %457 = vmatmul.mubr.f32.gmra.mrb[0].mxu0 %v161
    %v458 = vpop.f32.mrb[0].mxu0
    %v459 = vadd.f32 0.0, %v458
    %v460 = vpop.f32.mrb[0].mxu0
    %461 = vmatprep.mubr.f32.mxu0 0.0
    %462 = vmatmul.mubr.f32.gmra.mrb[0].mxu0 %v164
    %v463 = vpop.f32.mrb[0].mxu0
    %v464 = vadd.f32 0.0, %v463
    %v465 = vpop.f32.mrb[0].mxu0
    %466 = vmatprep.mubr.f32.mxu0 0.0
    %467 = vmatmul.mubr.f32.gmra.mrb[0].mxu0 %v167
    %v468 = vpop.f32.mrb[0].mxu0
    %v469 = vadd.f32 0.0, %v468
    %v470 = vpop.f32.mrb[0].mxu0
    %471 = vmatprep.mubr.f32.mxu0 0.0
    %472 = vmatmul.mubr.f32.gmra.mrb[0].mxu0 %v170
    %v473 = vpop.f32.mrb[0].mxu0
    %v474 = vadd.f32 0.0, %v473
    %v475 = vpop.f32.mrb[0].mxu0
    %476 = vmatprep.mubr.f32.mxu0 0.0
    %477 = vmatmul.mubr.f32.gmra.mrb[0].mxu0 %v173
    %v478 = vpop.f32.mrb[0].mxu0
    %v479 = vadd.f32 0.0, %v478
    %v480 = vpop.f32.mrb[0].mxu0
    %481 = vmatprep.mubr.f32.mxu0 0.0
    %482 = vmatmul.mubr.f32.gmra.mrb[0].mxu0 %v176
    %v483 = vpop.f32.mrb[0].mxu0
    %v484 = vadd.f32 0.0, %v483
    %v485 = vpop.f32.mrb[0].mxu0
    %486 = vmatprep.mubr.f32.mxu0 0.0
    %487 = vmatmul.mubr.f32.gmra.mrb[0].mxu0 %v179
    %v488 = vpop.f32.mrb[0].mxu0
    %v489 = vadd.f32 0.0, %v488
    %v490 = vpop.f32.mrb[0].mxu0
    %491 = vmatprep.mubr.f32.mxu0 0.0
    %492 = vmatmul.mubr.f32.gmra.mrb[0].mxu0 %v182
    %v493 = vpop.f32.mrb[0].mxu0
    %v494 = vadd.f32 0.0, %v493
    %v495 = vpop.f32.mrb[0].mxu0
    %496 = vmatprep.mubr.f32.mxu0 0.0
    %497 = vmatmul.mubr.f32.gmra.mrb[0].mxu0 %v185
    %v498 = vpop.f32.mrb[0].mxu0
    %v499 = vadd.f32 0.0, %v498
    %v500 = vpop.f32.mrb[0].mxu0
    %501 = vmatprep.mubr.f32.mxu0 0.0
    %502 = vmatmul.mubr.f32.gmra.mrb[0].mxu0 %v188
    %v503 = vpop.f32.mrb[0].mxu0
    %v504 = vadd.f32 0.0, %v503
    %v505 = vpop.f32.mrb[0].mxu0
    %506 = vmatprep.mubr.f32.mxu0 0.0
    %507 = vmatmul.mubr.f32.gmra.mrb[0].mxu0 %v191
    %v508 = vpop.f32.mrb[0].mxu0
    %v509 = vadd.f32 0.0, %v508
    %v510 = vpop.f32.mrb[0].mxu0
    %511 = vmatprep.mubr.f32.mxu0 0.0
    %512 = vmatmul.mubr.f32.gmra.mrb[0].mxu0 %v194
    %v513 = vpop.f32.mrb[0].mxu0
    %v514 = vadd.f32 0.0, %v513
    %v515 = vpop.f32.mrb[0].mxu0
    %516 = vmatprep.mubr.f32.mxu0 0.0
    %517 = vmatmul.mubr.f32.gmra.mrb[0].mxu0 %v197
    %v518 = vpop.f32.mrb[0].mxu0
    %v519 = vadd.f32 0.0, %v518
    %v520 = vpop.f32.mrb[0].mxu0
    %521 = vmatprep.mubr.f32.mxu0 0.0
    %522 = vmatmul.mubr.f32.gmra.mrb[0].mxu0 %v200
    %v523 = vpop.f32.mrb[0].mxu0
    %v524 = vadd.f32 0.0, %v523
    %v525 = vpop.f32.mrb[0].mxu0
    %526 = vmatprep.mubr.f32.mxu0 0.0
    %527 = vmatmul.mubr.f32.gmra.mrb[0].mxu0 %v203
    %v528 = vpop.f32.mrb[0].mxu0
    %v529 = vadd.f32 0.0, %v528
    %v530 = vpop.f32.mrb[0].mxu0
    %531 = vmatprep.mubr.f32.mxu0 0.0
    %532 = vmatmul.mubr.f32.gmra.mrb[0].mxu0 %v206
    %v533 = vpop.f32.mrb[0].mxu0
    %v534 = vadd.f32 0.0, %v533
    %v535 = vpop.f32.mrb[0].mxu0
    %536 = vmatprep.mubr.f32.mxu0 0.0
    %537 = vmatmul.mubr.f32.gmra.mrb[0].mxu0 %v209
    %v538 = vpop.f32.mrb[0].mxu0
    %v539 = vadd.f32 0.0, %v538
    %v540 = vpop.f32.mrb[0].mxu0
    %541 = vmatprep.mubr.f32.mxu0 0.0
    %542 = vmatmul.mubr.f32.gmra.mrb[0].mxu0 %v212
    %v543 = vpop.f32.mrb[0].mxu0
    %v544 = vadd.f32 0.0, %v543
    %v545 = vpop.f32.mrb[0].mxu0
    %546 = vmatprep.mubr.f32.mxu0 0.0
    %547 = vmatmul.mubr.f32.gmra.mrb[0].mxu0 %v215
    %v548 = vpop.f32.mrb[0].mxu0
    %v549 = vadd.f32 0.0, %v548
    %v550 = vpop.f32.mrb[0].mxu0
    %551 = vmatprep.mubr.f32.mxu0 0.0
    %552 = vmatmul.mubr.f32.gmra.mrb[0].mxu0 %v218
    %v553 = vpop.f32.mrb[0].mxu0
    %v554 = vadd.f32 0.0, %v553
    %v555 = vpop.f32.mrb[0].mxu0
    %556 = vmatprep.mubr.f32.mxu0 0.0
    %557 = vmatmul.mubr.f32.gmra.mrb[0].mxu0 %v221
    %v558 = vpop.f32.mrb[0].mxu0
    %v559 = vadd.f32 0.0, %v558
    %v560 = vpop.f32.mrb[0].mxu0
    %561 = vmatprep.mubr.f32.mxu0 0.0
    %562 = vmatmul.mubr.f32.gmra.mrb[0].mxu0 %v224
    %v563 = vpop.f32.mrb[0].mxu0
    %v564 = vadd.f32 0.0, %v563
    %v565 = vpop.f32.mrb[0].mxu0
    %566 = vmatprep.mubr.f32.mxu0 0.0
    %567 = vmatmul.mubr.f32.gmra.mrb[0].mxu0 %v227
    %v568 = vpop.f32.mrb[0].mxu0
    %v569 = vadd.f32 0.0, %v568
    %v570 = vpop.f32.mrb[0].mxu0
    %571 = vmatprep.mubr.f32.mxu0 0.0
    %572 = vmatmul.mubr.f32.gmra.mrb[0].mxu0 %v230
    %v573 = vpop.f32.mrb[0].mxu0
    %v574 = vadd.f32 0.0, %v573
    %v575 = vpop.f32.mrb[0].mxu0
    %576 = vmatprep.mubr.f32.mxu0 0.0
    %577 = vmatmul.mubr.f32.gmra.mrb[0].mxu0 %v233
    %v578 = vpop.f32.mrb[0].mxu0
    %v579 = vadd.f32 0.0, %v578
    %v580 = vpop.f32.mrb[0].mxu0
    %581 = vmatprep.mubr.f32.mxu0 0.0
    %582 = vmatmul.mubr.f32.gmra.mrb[0].mxu0 %v236
    %v583 = vpop.f32.mrb[0].mxu0
    %v584 = vadd.f32 0.0, %v583
    %v585 = vpop.f32.mrb[0].mxu0
    %586 = vmatprep.mubr.f32.mxu0 0.0
    %587 = vmatmul.mubr.f32.gmra.mrb[0].mxu0 %v239
    %v588 = vpop.f32.mrb[0].mxu0
    %v589 = vadd.f32 0.0, %v588
    %v590 = vpop.f32.mrb[0].mxu0
    %591 = vmatprep.mubr.f32.mxu0 0.0
    %592 = vmatmul.mubr.f32.gmra.mrb[0].mxu0 %v242
    %v593 = vpop.f32.mrb[0].mxu0
    %v594 = vadd.f32 0.0, %v593
    %v595 = vpop.f32.mrb[0].mxu0
    %596 = vmatprep.mubr.f32.mxu0 0.0
    %597 = vmatmul.mubr.f32.gmra.mrb[0].mxu0 %v245
    %v598 = vpop.f32.mrb[0].mxu0
    %v599 = vadd.f32 0.0, %v598
    %v600 = vpop.f32.mrb[0].mxu0
    %601 = vmatprep.mubr.f32.mxu0 0.0
    %602 = vmatmul.mubr.f32.gmra.mrb[0].mxu0 %v248
    %v603 = vpop.f32.mrb[0].mxu0
    %v604 = vadd.f32 0.0, %v603
    %v605 = vpop.f32.mrb[0].mxu0
    %606 = vmatprep.mubr.f32.mxu0 0.0
    %607 = vmatmul.mubr.f32.gmra.mrb[0].mxu0 %v251
    %v608 = vpop.f32.mrb[0].mxu0
    %v609 = vadd.f32 0.0, %v608
    %v610 = vpop.f32.mrb[0].mxu0
    %611 = vmatprep.mubr.f32.mxu0 0.0
    %612 = vmatmul.mubr.f32.gmra.mrb[0].mxu0 %v254
    %v613 = vpop.f32.mrb[0].mxu0
    %v614 = vadd.f32 0.0, %v613
    %v615 = vpop.f32.mrb[0].mxu0
    %616 = vmatprep.mubr.f32.mxu0 0.0
    %617 = vmatmul.mubr.f32.gmra.mrb[0].mxu0 %v257
    %v618 = vpop.f32.mrb[0].mxu0
    %v619 = vadd.f32 0.0, %v618
    %v620 = vpop.f32.mrb[0].mxu0
    %621 = vmatprep.mubr.f32.mxu0 0.0
    %622 = vmatmul.mubr.f32.gmra.mrb[0].mxu0 %v260
    %v623 = vpop.f32.mrb[0].mxu0
    %v624 = vadd.f32 0.0, %v623
    %v625 = vpop.f32.mrb[0].mxu0
    %626 = vmatprep.mubr.f32.mxu0 0.0
    %627 = vmatmul.mubr.f32.gmra.mrb[0].mxu0 %v263
    %v628 = vpop.f32.mrb[0].mxu0
    %v629 = vadd.f32 0.0, %v628
    %v630 = vpop.f32.mrb[0].mxu0
    %631 = vmatprep.mubr.f32.mxu0 0.0
    %632 = vmatmul.mubr.f32.gmra.mrb[0].mxu0 %v266
    %v633 = vpop.f32.mrb[0].mxu0
    %v634 = vadd.f32 0.0, %v633
    %v635 = vpop.f32.mrb[0].mxu0
    %636 = vmatprep.mubr.f32.mxu0 0.0
    %637 = vmatmul.mubr.f32.gmra.mrb[0].mxu0 %v269
    %v638 = vpop.f32.mrb[0].mxu0
    %v639 = vadd.f32 0.0, %v638
    %v640 = vpop.f32.mrb[0].mxu0
    %641 = vmatprep.mubr.f32.mxu0 0.0
    %642 = vmatmul.mubr.f32.gmra.mrb[0].mxu0 %v272
    %v643 = vpop.f32.mrb[0].mxu0
    %v644 = vadd.f32 0.0, %v643
    %v645 = vpop.f32.mrb[0].mxu0
    %646 = vmatprep.mubr.f32.mxu0 0.0
    %647 = vmatmul.mubr.f32.gmra.mrb[0].mxu0 %v275
    %v648 = vpop.f32.mrb[0].mxu0
    %v649 = vadd.f32 0.0, %v648
    %v650 = vpop.f32.mrb[0].mxu0
    %651 = vmatprep.mubr.f32.mxu0 0.0
    %652 = vmatmul.mubr.f32.gmra.mrb[0].mxu0 %v278
    %v653 = vpop.f32.mrb[0].mxu0
    %v654 = vadd.f32 0.0, %v653
    %v655 = vpop.f32.mrb[0].mxu0
    %656 = vmatprep.mubr.f32.mxu0 0.0
    %657 = vmatmul.mubr.f32.gmra.mrb[0].mxu0 %v281
    %v658 = vpop.f32.mrb[0].mxu0
    %v659 = vadd.f32 0.0, %v658
    %v660 = vpop.f32.mrb[0].mxu0
    %661 = vmatprep.mubr.f32.mxu0 0.0
    %662 = vmatmul.mubr.f32.gmra.mrb[0].mxu0 %v284
    %v663 = vpop.f32.mrb[0].mxu0
    %v664 = vadd.f32 0.0, %v663
    %v665 = vpop.f32.mrb[0].mxu0
    %666 = vmatprep.mubr.f32.mxu0 0.0
    %667 = vmatmul.mubr.f32.gmra.mrb[0].mxu0 %v287
    %v668 = vpop.f32.mrb[0].mxu0
    %v669 = vadd.f32 0.0, %v668
    %v670 = vpop.f32.mrb[0].mxu0
    %671 = vmatprep.mubr.f32.mxu0 0.0
    %672 = vmatmul.mubr.f32.gmra.mrb[0].mxu0 %v290
    %v673 = vpop.f32.mrb[0].mxu0
    %v674 = vadd.f32 0.0, %v673
    %v675 = vpop.f32.mrb[0].mxu0
    %676 = vdwg.mxu0
    %v677 = vld [vmem:[%s5] sm:$0x1]
    %v678 = vld [vmem:[%s5 + $0x1] sm:$0x1]
    %vm679 = vcmask 523264
    %v680 = vsel %vm679, %v359, 0.0
    %v681 = vsel %vm679, %v364, 0.0
    %v682 = vadd.f32 %v680, %v681
    %v683 = vsel %vm679, %v369, 0.0
    %v684 = vadd.f32 %v682, %v683
    %v685 = vsel %vm679, %v374, 0.0
    %v686 = vadd.f32 %v684, %v685
    %v687 = vsel %vm679, %v379, 0.0
    %v688 = vadd.f32 %v686, %v687
    %v689 = vsel %vm679, %v384, 0.0
    %v690 = vadd.f32 %v688, %v689
    %v691 = vsel %vm679, %v389, 0.0
    %v692 = vadd.f32 %v690, %v691
    %v693 = vsel %vm679, %v394, 0.0
    %v694 = vadd.f32 %v692, %v693
    %v695 = vsel %vm679, %v399, 0.0
    %v696 = vadd.f32 %v694, %v695
    %v697 = vsel %vm679, %v404, 0.0
    %v698 = vadd.f32 %v696, %v697
    %v699 = vsel %vm679, %v409, 0.0
    %v700 = vadd.f32 %v698, %v699
    %v701 = vsel %vm679, %v414, 0.0
    %v702 = vadd.f32 %v700, %v701
    %v703 = vsel %vm679, %v419, 0.0
    %v704 = vadd.f32 %v702, %v703
    %v705 = vsel %vm679, %v424, 0.0
    %v706 = vadd.f32 %v704, %v705
    %v707 = vsel %vm679, %v429, 0.0
    %v708 = vadd.f32 %v706, %v707
    %v709 = vsel %vm679, %v434, 0.0
    %v710 = vadd.f32 %v708, %v709
    %v711 = vsel %vm679, %v439, 0.0
    %v712 = vadd.f32 %v710, %v711
    %v713 = vsel %vm679, %v444, 0.0
    %v714 = vadd.f32 %v712, %v713
    %v715 = vsel %vm679, %v449, 0.0
    %v716 = vadd.f32 %v714, %v715
    %v717 = vsel %vm679, %v454, 0.0
    %v718 = vadd.f32 %v716, %v717
    %v719 = vsel %vm679, %v459, 0.0
    %v720 = vadd.f32 %v718, %v719
    %v721 = vsel %vm679, %v464, 0.0
    %v722 = vadd.f32 %v720, %v721
    %v723 = vsel %vm679, %v469, 0.0
    %v724 = vadd.f32 %v722, %v723
    %v725 = vsel %vm679, %v474, 0.0
    %v726 = vadd.f32 %v724, %v725
    %v727 = vsel %vm679, %v479, 0.0
    %v728 = vadd.f32 %v726, %v727
    %v729 = vsel %vm679, %v484, 0.0
    %v730 = vadd.f32 %v728, %v729
    %v731 = vsel %vm679, %v489, 0.0
    %v732 = vadd.f32 %v730, %v731
    %v733 = vsel %vm679, %v494, 0.0
    %v734 = vadd.f32 %v732, %v733
    %v735 = vsel %vm679, %v499, 0.0
    %v736 = vadd.f32 %v734, %v735
    %v737 = vsel %vm679, %v504, 0.0
    %v738 = vadd.f32 %v736, %v737
    %v739 = vsel %vm679, %v509, 0.0
    %v740 = vadd.f32 %v738, %v739
    %v741 = vsel %vm679, %v514, 0.0
    %v742 = vadd.f32 %v740, %v741
    %v743 = vsel %vm679, %v519, 0.0
    %v744 = vadd.f32 %v742, %v743
    %v745 = vsel %vm679, %v524, 0.0
    %v746 = vadd.f32 %v744, %v745
    %v747 = vsel %vm679, %v529, 0.0
    %v748 = vadd.f32 %v746, %v747
    %v749 = vsel %vm679, %v534, 0.0
    %v750 = vadd.f32 %v748, %v749
    %v751 = vsel %vm679, %v539, 0.0
    %v752 = vadd.f32 %v750, %v751
    %v753 = vsel %vm679, %v544, 0.0
    %v754 = vadd.f32 %v752, %v753
    %v755 = vsel %vm679, %v549, 0.0
    %v756 = vadd.f32 %v754, %v755
    %v757 = vsel %vm679, %v554, 0.0
    %v758 = vadd.f32 %v756, %v757
    %v759 = vsel %vm679, %v559, 0.0
    %v760 = vadd.f32 %v758, %v759
    %v761 = vsel %vm679, %v564, 0.0
    %v762 = vadd.f32 %v760, %v761
    %v763 = vsel %vm679, %v569, 0.0
    %v764 = vadd.f32 %v762, %v763
    %v765 = vsel %vm679, %v574, 0.0
    %v766 = vadd.f32 %v764, %v765
    %v767 = vsel %vm679, %v579, 0.0
    %v768 = vadd.f32 %v766, %v767
    %v769 = vsel %vm679, %v584, 0.0
    %v770 = vadd.f32 %v768, %v769
    %v771 = vsel %vm679, %v589, 0.0
    %v772 = vadd.f32 %v770, %v771
    %v773 = vsel %vm679, %v594, 0.0
    %v774 = vadd.f32 %v772, %v773
    %v775 = vsel %vm679, %v599, 0.0
    %v776 = vadd.f32 %v774, %v775
    %v777 = vsel %vm679, %v604, 0.0
    %v778 = vadd.f32 %v776, %v777
    %v779 = vsel %vm679, %v609, 0.0
    %v780 = vadd.f32 %v778, %v779
    %v781 = vsel %vm679, %v614, 0.0
    %v782 = vadd.f32 %v780, %v781
    %v783 = vsel %vm679, %v619, 0.0
    %v784 = vadd.f32 %v782, %v783
    %v785 = vsel %vm679, %v624, 0.0
    %v786 = vadd.f32 %v784, %v785
    %v787 = vsel %vm679, %v629, 0.0
    %v788 = vadd.f32 %v786, %v787
    %v789 = vsel %vm679, %v634, 0.0
    %v790 = vadd.f32 %v788, %v789
    %v791 = vsel %vm679, %v639, 0.0
    %v792 = vadd.f32 %v790, %v791
    %v793 = vsel %vm679, %v644, 0.0
    %v794 = vadd.f32 %v792, %v793
    %v795 = vsel %vm679, %v649, 0.0
    %v796 = vadd.f32 %v794, %v795
    %v797 = vsel %vm679, %v654, 0.0
    %v798 = vadd.f32 %v796, %v797
    %v799 = vsel %vm679, %v659, 0.0
    %v800 = vadd.f32 %v798, %v799
    %v801 = vsel %vm679, %v664, 0.0
    %v802 = vadd.f32 %v800, %v801
    %v803 = vsel %vm679, %v669, 0.0
    %v804 = vadd.f32 %v802, %v803
    %v805 = vsel %vm679, %v674, 0.0
    %v806 = vadd.f32 %v804, %v805
    %v807 = vrot.slane %v806, 4
    %v808 = vadd.f32 %v806, %v807
    %v809 = vrot.slane %v808, 2
    %v810 = vadd.f32 %v808, %v809
    %v811 = vrot.slane %v810, 1
    %v812 = vadd.f32 %v810, %v811
    %v813 = vmul.f32 %v359, %v359
    %v814 = vmul.f32 %v364, %v364
    %v815 = vmul.f32 %v369, %v369
    %v816 = vmul.f32 %v374, %v374
    %v817 = vmul.f32 %v379, %v379
    %v818 = vmul.f32 %v384, %v384
    %v819 = vmul.f32 %v389, %v389
    %v820 = vmul.f32 %v394, %v394
    %v821 = vmul.f32 %v399, %v399
    %v822 = vmul.f32 %v404, %v404
    %v823 = vmul.f32 %v409, %v409
    %v824 = vmul.f32 %v414, %v414
    %v825 = vmul.f32 %v419, %v419
    %v826 = vmul.f32 %v424, %v424
    %v827 = vmul.f32 %v429, %v429
    %v828 = vmul.f32 %v434, %v434
    %v829 = vmul.f32 %v439, %v439
    %v830 = vmul.f32 %v444, %v444
    %v831 = vmul.f32 %v449, %v449
    %v832 = vmul.f32 %v454, %v454
    %v833 = vmul.f32 %v459, %v459
    %v834 = vmul.f32 %v464, %v464
    %v835 = vmul.f32 %v469, %v469
    %v836 = vmul.f32 %v474, %v474
    %v837 = vmul.f32 %v479, %v479
    %v838 = vmul.f32 %v484, %v484
    %v839 = vmul.f32 %v489, %v489
    %v840 = vmul.f32 %v494, %v494
    %v841 = vmul.f32 %v499, %v499
    %v842 = vmul.f32 %v504, %v504
    %v843 = vmul.f32 %v509, %v509
    %v844 = vmul.f32 %v514, %v514
    %v845 = vmul.f32 %v519, %v519
    %v846 = vmul.f32 %v524, %v524
    %v847 = vmul.f32 %v529, %v529
    %v848 = vmul.f32 %v534, %v534
    %v849 = vmul.f32 %v539, %v539
    %v850 = vmul.f32 %v544, %v544
    %v851 = vmul.f32 %v549, %v549
    %v852 = vmul.f32 %v554, %v554
    %v853 = vmul.f32 %v559, %v559
    %v854 = vmul.f32 %v564, %v564
    %v855 = vmul.f32 %v569, %v569
    %v856 = vmul.f32 %v574, %v574
    %v857 = vmul.f32 %v579, %v579
    %v858 = vmul.f32 %v584, %v584
    %v859 = vmul.f32 %v589, %v589
    %v860 = vmul.f32 %v594, %v594
    %v861 = vmul.f32 %v599, %v599
    %v862 = vmul.f32 %v604, %v604
    %v863 = vmul.f32 %v609, %v609
    %v864 = vmul.f32 %v614, %v614
    %v865 = vmul.f32 %v619, %v619
    %v866 = vmul.f32 %v624, %v624
    %v867 = vmul.f32 %v629, %v629
    %v868 = vmul.f32 %v634, %v634
    %v869 = vmul.f32 %v639, %v639
    %v870 = vmul.f32 %v644, %v644
    %v871 = vmul.f32 %v649, %v649
    %v872 = vmul.f32 %v654, %v654
    %v873 = vmul.f32 %v659, %v659
    %v874 = vmul.f32 %v664, %v664
    %v875 = vmul.f32 %v669, %v669
    %v876 = vmul.f32 %v674, %v674
    %v877 = vsel %vm679, %v813, 0.0
    %v878 = vsel %vm679, %v814, 0.0
    %v879 = vadd.f32 %v877, %v878
    %v880 = vsel %vm679, %v815, 0.0
    %v881 = vadd.f32 %v879, %v880
    %v882 = vsel %vm679, %v816, 0.0
    %v883 = vadd.f32 %v881, %v882
    %v884 = vsel %vm679, %v817, 0.0
    %v885 = vadd.f32 %v883, %v884
    %v886 = vsel %vm679, %v818, 0.0
    %v887 = vadd.f32 %v885, %v886
    %v888 = vsel %vm679, %v819, 0.0
    %v889 = vadd.f32 %v887, %v888
    %v890 = vsel %vm679, %v820, 0.0
    %v891 = vadd.f32 %v889, %v890
    %v892 = vsel %vm679, %v821, 0.0
    %v893 = vadd.f32 %v891, %v892
    %v894 = vsel %vm679, %v822, 0.0
    %v895 = vadd.f32 %v893, %v894
    %v896 = vsel %vm679, %v823, 0.0
    %v897 = vadd.f32 %v895, %v896
    %v898 = vsel %vm679, %v824, 0.0
    %v899 = vadd.f32 %v897, %v898
    %v900 = vsel %vm679, %v825, 0.0
    %v901 = vadd.f32 %v899, %v900
    %v902 = vsel %vm679, %v826, 0.0
    %v903 = vadd.f32 %v901, %v902
    %v904 = vsel %vm679, %v827, 0.0
    %v905 = vadd.f32 %v903, %v904
    %v906 = vsel %vm679, %v828, 0.0
    %v907 = vadd.f32 %v905, %v906
    %v908 = vsel %vm679, %v829, 0.0
    %v909 = vadd.f32 %v907, %v908
    %v910 = vsel %vm679, %v830, 0.0
    %v911 = vadd.f32 %v909, %v910
    %v912 = vsel %vm679, %v831, 0.0
    %v913 = vadd.f32 %v911, %v912
    %v914 = vsel %vm679, %v832, 0.0
    %v915 = vadd.f32 %v913, %v914
    %v916 = vsel %vm679, %v833, 0.0
    %v917 = vadd.f32 %v915, %v916
    %v918 = vsel %vm679, %v834, 0.0
    %v919 = vadd.f32 %v917, %v918
    %v920 = vsel %vm679, %v835, 0.0
    %v921 = vadd.f32 %v919, %v920
    %v922 = vsel %vm679, %v836, 0.0
    %v923 = vadd.f32 %v921, %v922
    %v924 = vsel %vm679, %v837, 0.0
    %v925 = vadd.f32 %v923, %v924
    %v926 = vsel %vm679, %v838, 0.0
    %v927 = vadd.f32 %v925, %v926
    %v928 = vsel %vm679, %v839, 0.0
    %v929 = vadd.f32 %v927, %v928
    %v930 = vsel %vm679, %v840, 0.0
    %v931 = vadd.f32 %v929, %v930
    %v932 = vsel %vm679, %v841, 0.0
    %v933 = vadd.f32 %v931, %v932
    %v934 = vsel %vm679, %v842, 0.0
    %v935 = vadd.f32 %v933, %v934
    %v936 = vsel %vm679, %v843, 0.0
    %v937 = vadd.f32 %v935, %v936
    %v938 = vsel %vm679, %v844, 0.0
    %v939 = vadd.f32 %v937, %v938
    %v940 = vsel %vm679, %v845, 0.0
    %v941 = vadd.f32 %v939, %v940
    %v942 = vsel %vm679, %v846, 0.0
    %v943 = vadd.f32 %v941, %v942
    %v944 = vsel %vm679, %v847, 0.0
    %v945 = vadd.f32 %v943, %v944
    %v946 = vsel %vm679, %v848, 0.0
    %v947 = vadd.f32 %v945, %v946
    %v948 = vsel %vm679, %v849, 0.0
    %v949 = vadd.f32 %v947, %v948
    %v950 = vsel %vm679, %v850, 0.0
    %v951 = vadd.f32 %v949, %v950
    %v952 = vsel %vm679, %v851, 0.0
    %v953 = vadd.f32 %v951, %v952
    %v954 = vsel %vm679, %v852, 0.0
    %v955 = vadd.f32 %v953, %v954
    %v956 = vsel %vm679, %v853, 0.0
    %v957 = vadd.f32 %v955, %v956
    %v958 = vsel %vm679, %v854, 0.0
    %v959 = vadd.f32 %v957, %v958
    %v960 = vsel %vm679, %v855, 0.0
    %v961 = vadd.f32 %v959, %v960
    %v962 = vsel %vm679, %v856, 0.0
    %v963 = vadd.f32 %v961, %v962
    %v964 = vsel %vm679, %v857, 0.0
    %v965 = vadd.f32 %v963, %v964
    %v966 = vsel %vm679, %v858, 0.0
    %v967 = vadd.f32 %v965, %v966
    %v968 = vsel %vm679, %v859, 0.0
    %v969 = vadd.f32 %v967, %v968
    %v970 = vsel %vm679, %v860, 0.0
    %v971 = vadd.f32 %v969, %v970
    %v972 = vsel %vm679, %v861, 0.0
    %v973 = vadd.f32 %v971, %v972
    %v974 = vsel %vm679, %v862, 0.0
    %v975 = vadd.f32 %v973, %v974
    %v976 = vsel %vm679, %v863, 0.0
    %v977 = vadd.f32 %v975, %v976
    %v978 = vsel %vm679, %v864, 0.0
    %v979 = vadd.f32 %v977, %v978
    %v980 = vsel %vm679, %v865, 0.0
    %v981 = vadd.f32 %v979, %v980
    %v982 = vsel %vm679, %v866, 0.0
    %v983 = vadd.f32 %v981, %v982
    %v984 = vsel %vm679, %v867, 0.0
    %v985 = vadd.f32 %v983, %v984
    %v986 = vsel %vm679, %v868, 0.0
    %v987 = vadd.f32 %v985, %v986
    %v988 = vsel %vm679, %v869, 0.0
    %v989 = vadd.f32 %v987, %v988
    %v990 = vsel %vm679, %v870, 0.0
    %v991 = vadd.f32 %v989, %v990
    %v992 = vsel %vm679, %v871, 0.0
    %v993 = vadd.f32 %v991, %v992
    %v994 = vsel %vm679, %v872, 0.0
    %v995 = vadd.f32 %v993, %v994
    %v996 = vsel %vm679, %v873, 0.0
    %v997 = vadd.f32 %v995, %v996
    %v998 = vsel %vm679, %v874, 0.0
    %v999 = vadd.f32 %v997, %v998
    %v1000 = vsel %vm679, %v875, 0.0
    %v1001 = vadd.f32 %v999, %v1000
    %v1002 = vsel %vm679, %v876, 0.0
    %v1003 = vadd.f32 %v1001, %v1002
    %v1004 = vrot.slane %v1003, 4
    %v1005 = vadd.f32 %v1003, %v1004
    %v1006 = vrot.slane %v1005, 2
    %v1007 = vadd.f32 %v1005, %v1006
    %v1008 = vrot.slane %v1007, 1
    %v1009 = vadd.f32 %v1007, %v1008
    %v1010 = vmul.f32 %v812, 0.001953125
    %v1011 = vmul.f32 %v1009, 0.001953125
    %v1012 = vmul.f32 %v1010, %v1010
    %v1013 = vsub.f32 %v1011, %v1012
    %v1014 = vmax.f32 %v1013, 0.0
    %v1015 = vadd.f32 %v1014, 1e-05
    %v1016 = vrsqrt.pop %v1015
    %v1017 = vmul.f32 %v677, %v1016
    %v1018 = vmul.f32 %v1010, %v1017
    %v1019 = vsub.f32 %v678, %v1018
    %v1020 = vlaneseq
    %v1021 = vshrl.u32 %v1020, 7
    %v1022 = vsub.s32 0, %v1021
    %v1023 = vrot.slane %v1017, %v1022
    %v1024 = vmul.f32 %v359, %v1023
    %v1025 = vmul.f32 %v364, %v1023
    %v1026 = vmul.f32 %v369, %v1023
    %v1027 = vmul.f32 %v374, %v1023
    %v1028 = vmul.f32 %v379, %v1023
    %v1029 = vmul.f32 %v384, %v1023
    %v1030 = vmul.f32 %v389, %v1023
    %v1031 = vmul.f32 %v394, %v1023
    %v1032 = vmul.f32 %v399, %v1023
    %v1033 = vmul.f32 %v404, %v1023
    %v1034 = vmul.f32 %v409, %v1023
    %v1035 = vmul.f32 %v414, %v1023
    %v1036 = vmul.f32 %v419, %v1023
    %v1037 = vmul.f32 %v424, %v1023
    %v1038 = vmul.f32 %v429, %v1023
    %v1039 = vmul.f32 %v434, %v1023
    %v1040 = vmul.f32 %v439, %v1023
    %v1041 = vmul.f32 %v444, %v1023
    %v1042 = vmul.f32 %v449, %v1023
    %v1043 = vmul.f32 %v454, %v1023
    %v1044 = vmul.f32 %v459, %v1023
    %v1045 = vmul.f32 %v464, %v1023
    %v1046 = vmul.f32 %v469, %v1023
    %v1047 = vmul.f32 %v474, %v1023
    %v1048 = vmul.f32 %v479, %v1023
    %v1049 = vmul.f32 %v484, %v1023
    %v1050 = vmul.f32 %v489, %v1023
    %v1051 = vmul.f32 %v494, %v1023
    %v1052 = vmul.f32 %v499, %v1023
    %v1053 = vmul.f32 %v504, %v1023
    %v1054 = vmul.f32 %v509, %v1023
    %v1055 = vmul.f32 %v514, %v1023
    %v1056 = vmul.f32 %v519, %v1023
    %v1057 = vmul.f32 %v524, %v1023
    %v1058 = vmul.f32 %v529, %v1023
    %v1059 = vmul.f32 %v534, %v1023
    %v1060 = vmul.f32 %v539, %v1023
    %v1061 = vmul.f32 %v544, %v1023
    %v1062 = vmul.f32 %v549, %v1023
    %v1063 = vmul.f32 %v554, %v1023
    %v1064 = vmul.f32 %v559, %v1023
    %v1065 = vmul.f32 %v564, %v1023
    %v1066 = vmul.f32 %v569, %v1023
    %v1067 = vmul.f32 %v574, %v1023
    %v1068 = vmul.f32 %v579, %v1023
    %v1069 = vmul.f32 %v584, %v1023
    %v1070 = vmul.f32 %v589, %v1023
    %v1071 = vmul.f32 %v594, %v1023
    %v1072 = vmul.f32 %v599, %v1023
    %v1073 = vmul.f32 %v604, %v1023
    %v1074 = vmul.f32 %v609, %v1023
    %v1075 = vmul.f32 %v614, %v1023
    %v1076 = vmul.f32 %v619, %v1023
    %v1077 = vmul.f32 %v624, %v1023
    %v1078 = vmul.f32 %v629, %v1023
    %v1079 = vmul.f32 %v634, %v1023
    %v1080 = vmul.f32 %v639, %v1023
    %v1081 = vmul.f32 %v644, %v1023
    %v1082 = vmul.f32 %v649, %v1023
    %v1083 = vmul.f32 %v654, %v1023
    %v1084 = vmul.f32 %v659, %v1023
    %v1085 = vmul.f32 %v664, %v1023
    %v1086 = vmul.f32 %v669, %v1023
    %v1087 = vmul.f32 %v674, %v1023
    %v1088 = vlaneseq
    %v1089 = vshrl.u32 %v1088, 7
    %v1090 = vsub.s32 0, %v1089
    %v1091 = vrot.slane %v1019, %v1090
    %v1092 = vadd.f32 %v1024, %v1091
    %v1093 = vadd.f32 %v1025, %v1091
    %v1094 = vadd.f32 %v1026, %v1091
    %v1095 = vadd.f32 %v1027, %v1091
    %v1096 = vadd.f32 %v1028, %v1091
    %v1097 = vadd.f32 %v1029, %v1091
    %v1098 = vadd.f32 %v1030, %v1091
    %v1099 = vadd.f32 %v1031, %v1091
    %v1100 = vadd.f32 %v1032, %v1091
    %v1101 = vadd.f32 %v1033, %v1091
    %v1102 = vadd.f32 %v1034, %v1091
    %v1103 = vadd.f32 %v1035, %v1091
    %v1104 = vadd.f32 %v1036, %v1091
    %v1105 = vadd.f32 %v1037, %v1091
    %v1106 = vadd.f32 %v1038, %v1091
    %v1107 = vadd.f32 %v1039, %v1091
    %v1108 = vadd.f32 %v1040, %v1091
    %v1109 = vadd.f32 %v1041, %v1091
    %v1110 = vadd.f32 %v1042, %v1091
    %v1111 = vadd.f32 %v1043, %v1091
    %v1112 = vadd.f32 %v1044, %v1091
    %v1113 = vadd.f32 %v1045, %v1091
    %v1114 = vadd.f32 %v1046, %v1091
    %v1115 = vadd.f32 %v1047, %v1091
    %v1116 = vadd.f32 %v1048, %v1091
    %v1117 = vadd.f32 %v1049, %v1091
    %v1118 = vadd.f32 %v1050, %v1091
    %v1119 = vadd.f32 %v1051, %v1091
    %v1120 = vadd.f32 %v1052, %v1091
    %v1121 = vadd.f32 %v1053, %v1091
    %v1122 = vadd.f32 %v1054, %v1091
    %v1123 = vadd.f32 %v1055, %v1091
    %v1124 = vadd.f32 %v1056, %v1091
    %v1125 = vadd.f32 %v1057, %v1091
    %v1126 = vadd.f32 %v1058, %v1091
    %v1127 = vadd.f32 %v1059, %v1091
    %v1128 = vadd.f32 %v1060, %v1091
    %v1129 = vadd.f32 %v1061, %v1091
    %v1130 = vadd.f32 %v1062, %v1091
    %v1131 = vadd.f32 %v1063, %v1091
    %v1132 = vadd.f32 %v1064, %v1091
    %v1133 = vadd.f32 %v1065, %v1091
    %v1134 = vadd.f32 %v1066, %v1091
    %v1135 = vadd.f32 %v1067, %v1091
    %v1136 = vadd.f32 %v1068, %v1091
    %v1137 = vadd.f32 %v1069, %v1091
    %v1138 = vadd.f32 %v1070, %v1091
    %v1139 = vadd.f32 %v1071, %v1091
    %v1140 = vadd.f32 %v1072, %v1091
    %v1141 = vadd.f32 %v1073, %v1091
    %v1142 = vadd.f32 %v1074, %v1091
    %v1143 = vadd.f32 %v1075, %v1091
    %v1144 = vadd.f32 %v1076, %v1091
    %v1145 = vadd.f32 %v1077, %v1091
    %v1146 = vadd.f32 %v1078, %v1091
    %v1147 = vadd.f32 %v1079, %v1091
    %v1148 = vadd.f32 %v1080, %v1091
    %v1149 = vadd.f32 %v1081, %v1091
    %v1150 = vadd.f32 %v1082, %v1091
    %v1151 = vadd.f32 %v1083, %v1091
    %v1152 = vadd.f32 %v1084, %v1091
    %v1153 = vadd.f32 %v1085, %v1091
    %v1154 = vadd.f32 %v1086, %v1091
    %v1155 = vadd.f32 %v1087, %v1091
    %v1156 = vmax.f32 %v1092, 0.0
    %v1157 = vmax.f32 %v1093, 0.0
    %v1158 = vmax.f32 %v1094, 0.0
    %v1159 = vmax.f32 %v1095, 0.0
    %v1160 = vmax.f32 %v1096, 0.0
    %v1161 = vmax.f32 %v1097, 0.0
    %v1162 = vmax.f32 %v1098, 0.0
    %v1163 = vmax.f32 %v1099, 0.0
    %v1164 = vmax.f32 %v1100, 0.0
    %v1165 = vmax.f32 %v1101, 0.0
    %v1166 = vmax.f32 %v1102, 0.0
    %v1167 = vmax.f32 %v1103, 0.0
    %v1168 = vmax.f32 %v1104, 0.0
    %v1169 = vmax.f32 %v1105, 0.0
    %v1170 = vmax.f32 %v1106, 0.0
    %v1171 = vmax.f32 %v1107, 0.0
    %v1172 = vmax.f32 %v1108, 0.0
    %v1173 = vmax.f32 %v1109, 0.0
    %v1174 = vmax.f32 %v1110, 0.0
    %v1175 = vmax.f32 %v1111, 0.0
    %v1176 = vmax.f32 %v1112, 0.0
    %v1177 = vmax.f32 %v1113, 0.0
    %v1178 = vmax.f32 %v1114, 0.0
    %v1179 = vmax.f32 %v1115, 0.0
    %v1180 = vmax.f32 %v1116, 0.0
    %v1181 = vmax.f32 %v1117, 0.0
    %v1182 = vmax.f32 %v1118, 0.0
    %v1183 = vmax.f32 %v1119, 0.0
    %v1184 = vmax.f32 %v1120, 0.0
    %v1185 = vmax.f32 %v1121, 0.0
    %v1186 = vmax.f32 %v1122, 0.0
    %v1187 = vmax.f32 %v1123, 0.0
    %v1188 = vmax.f32 %v1124, 0.0
    %v1189 = vmax.f32 %v1125, 0.0
    %v1190 = vmax.f32 %v1126, 0.0
    %v1191 = vmax.f32 %v1127, 0.0
    %v1192 = vmax.f32 %v1128, 0.0
    %v1193 = vmax.f32 %v1129, 0.0
    %v1194 = vmax.f32 %v1130, 0.0
    %v1195 = vmax.f32 %v1131, 0.0
    %v1196 = vmax.f32 %v1132, 0.0
    %v1197 = vmax.f32 %v1133, 0.0
    %v1198 = vmax.f32 %v1134, 0.0
    %v1199 = vmax.f32 %v1135, 0.0
    %v1200 = vmax.f32 %v1136, 0.0
    %v1201 = vmax.f32 %v1137, 0.0
    %v1202 = vmax.f32 %v1138, 0.0
    %v1203 = vmax.f32 %v1139, 0.0
    %v1204 = vmax.f32 %v1140, 0.0
    %v1205 = vmax.f32 %v1141, 0.0
    %v1206 = vmax.f32 %v1142, 0.0
    %v1207 = vmax.f32 %v1143, 0.0
    %v1208 = vmax.f32 %v1144, 0.0
    %v1209 = vmax.f32 %v1145, 0.0
    %v1210 = vmax.f32 %v1146, 0.0
    %v1211 = vmax.f32 %v1147, 0.0
    %v1212 = vmax.f32 %v1148, 0.0
    %v1213 = vmax.f32 %v1149, 0.0
    %v1214 = vmax.f32 %v1150, 0.0
    %v1215 = vmax.f32 %v1151, 0.0
    %v1216 = vmax.f32 %v1152, 0.0
    %v1217 = vmax.f32 %v1153, 0.0
    %v1218 = vmax.f32 %v1154, 0.0
    %v1219 = vmax.f32 %v1155, 0.0
    %v1284 = vcombine.high %v1156, %v1156
    %v1286 = vunpack.c.l.s4 1983009808
    %v1287 = vunpack.c.0.s8 %v1286
    %v1288 = vlaneseq
    %v1289 = vshrl.u32 %v1288, 7
    %v1290 = vsub.s32 %v1287, %v1289
    %v1291 = vrot.slane %v1156, %v1290
    %v1293 = vunpack.c.l.s4 1983009808
    %v1294 = vunpack.c.0.s8 %v1293
    %v1295 = vlaneseq
    %v1296 = vshrl.u32 %v1295, 7
    %v1297 = vsub.s32 %v1294, %v1296
    %v1298 = vrot.slane %v1284, %v1297
    %v1299 = vcombine.high %v1291, %v1291
    %v1300 = vcombine.high %v1298, %v1298
    %v1301 = vcombine.high %v1157, %v1157
    %v1303 = vunpack.c.l.s4 1983009808
    %v1304 = vunpack.c.0.s8 %v1303
    %v1305 = vlaneseq
    %v1306 = vshrl.u32 %v1305, 7
    %v1307 = vsub.s32 %v1304, %v1306
    %v1308 = vrot.slane %v1157, %v1307
    %v1310 = vunpack.c.l.s4 1983009808
    %v1311 = vunpack.c.0.s8 %v1310
    %v1312 = vlaneseq
    %v1313 = vshrl.u32 %v1312, 7
    %v1314 = vsub.s32 %v1311, %v1313
    %v1315 = vrot.slane %v1301, %v1314
    %v1316 = vcombine.high %v1308, %v1308
    %v1317 = vcombine.high %v1315, %v1315
    %v1318 = vcombine.high %v1158, %v1158
    %v1320 = vunpack.c.l.s4 1983009808
    %v1321 = vunpack.c.0.s8 %v1320
    %v1322 = vlaneseq
    %v1323 = vshrl.u32 %v1322, 7
    %v1324 = vsub.s32 %v1321, %v1323
    %v1325 = vrot.slane %v1158, %v1324
    %v1327 = vunpack.c.l.s4 1983009808
    %v1328 = vunpack.c.0.s8 %v1327
    %v1329 = vlaneseq
    %v1330 = vshrl.u32 %v1329, 7
    %v1331 = vsub.s32 %v1328, %v1330
    %v1332 = vrot.slane %v1318, %v1331
    %v1333 = vcombine.high %v1325, %v1325
    %v1334 = vcombine.high %v1332, %v1332
    %v1335 = vcombine.high %v1159, %v1159
    %v1337 = vunpack.c.l.s4 1983009808
    %v1338 = vunpack.c.0.s8 %v1337
    %v1339 = vlaneseq
    %v1340 = vshrl.u32 %v1339, 7
    %v1341 = vsub.s32 %v1338, %v1340
    %v1342 = vrot.slane %v1159, %v1341
    %v1344 = vunpack.c.l.s4 1983009808
    %v1345 = vunpack.c.0.s8 %v1344
    %v1346 = vlaneseq
    %v1347 = vshrl.u32 %v1346, 7
    %v1348 = vsub.s32 %v1345, %v1347
    %v1349 = vrot.slane %v1335, %v1348
    %v1350 = vcombine.high %v1342, %v1342
    %v1351 = vcombine.high %v1349, %v1349
    %v1352 = vcombine.high %v1160, %v1160
    %v1354 = vunpack.c.l.s4 1983009808
    %v1355 = vunpack.c.0.s8 %v1354
    %v1356 = vlaneseq
    %v1357 = vshrl.u32 %v1356, 7
    %v1358 = vsub.s32 %v1355, %v1357
    %v1359 = vrot.slane %v1160, %v1358
    %v1361 = vunpack.c.l.s4 1983009808
    %v1362 = vunpack.c.0.s8 %v1361
    %v1363 = vlaneseq
    %v1364 = vshrl.u32 %v1363, 7
    %v1365 = vsub.s32 %v1362, %v1364
    %v1366 = vrot.slane %v1352, %v1365
    %v1367 = vcombine.high %v1359, %v1359
    %v1368 = vcombine.high %v1366, %v1366
    %v1369 = vcombine.high %v1161, %v1161
    %v1371 = vunpack.c.l.s4 1983009808
    %v1372 = vunpack.c.0.s8 %v1371
    %v1373 = vlaneseq
    %v1374 = vshrl.u32 %v1373, 7
    %v1375 = vsub.s32 %v1372, %v1374
    %v1376 = vrot.slane %v1161, %v1375
    %v1378 = vunpack.c.l.s4 1983009808
    %v1379 = vunpack.c.0.s8 %v1378
    %v1380 = vlaneseq
    %v1381 = vshrl.u32 %v1380, 7
    %v1382 = vsub.s32 %v1379, %v1381
    %v1383 = vrot.slane %v1369, %v1382
    %v1384 = vcombine.high %v1376, %v1376
    %v1385 = vcombine.high %v1383, %v1383
    %v1386 = vcombine.high %v1162, %v1162
    %v1388 = vunpack.c.l.s4 1983009808
    %v1389 = vunpack.c.0.s8 %v1388
    %v1390 = vlaneseq
    %v1391 = vshrl.u32 %v1390, 7
    %v1392 = vsub.s32 %v1389, %v1391
    %v1393 = vrot.slane %v1162, %v1392
    %v1395 = vunpack.c.l.s4 1983009808
    %v1396 = vunpack.c.0.s8 %v1395
    %v1397 = vlaneseq
    %v1398 = vshrl.u32 %v1397, 7
    %v1399 = vsub.s32 %v1396, %v1398
    %v1400 = vrot.slane %v1386, %v1399
    %v1401 = vcombine.high %v1393, %v1393
    %v1402 = vcombine.high %v1400, %v1400
    %v1403 = vcombine.high %v1163, %v1163
    %v1405 = vunpack.c.l.s4 1983009808
    %v1406 = vunpack.c.0.s8 %v1405
    %v1407 = vlaneseq
    %v1408 = vshrl.u32 %v1407, 7
    %v1409 = vsub.s32 %v1406, %v1408
    %v1410 = vrot.slane %v1163, %v1409
    %v1412 = vunpack.c.l.s4 1983009808
    %v1413 = vunpack.c.0.s8 %v1412
    %v1414 = vlaneseq
    %v1415 = vshrl.u32 %v1414, 7
    %v1416 = vsub.s32 %v1413, %v1415
    %v1417 = vrot.slane %v1403, %v1416
    %v1418 = vcombine.high %v1410, %v1410
    %v1419 = vcombine.high %v1417, %v1417
    %v1420 = vcombine.high %v1164, %v1164
    %v1422 = vunpack.c.l.s4 1983009808
    %v1423 = vunpack.c.0.s8 %v1422
    %v1424 = vlaneseq
    %v1425 = vshrl.u32 %v1424, 7
    %v1426 = vsub.s32 %v1423, %v1425
    %v1427 = vrot.slane %v1164, %v1426
    %v1429 = vunpack.c.l.s4 1983009808
    %v1430 = vunpack.c.0.s8 %v1429
    %v1431 = vlaneseq
    %v1432 = vshrl.u32 %v1431, 7
    %v1433 = vsub.s32 %v1430, %v1432
    %v1434 = vrot.slane %v1420, %v1433
    %v1435 = vcombine.high %v1427, %v1427
    %v1436 = vcombine.high %v1434, %v1434
    %v1437 = vcombine.high %v1165, %v1165
    %v1439 = vunpack.c.l.s4 1983009808
    %v1440 = vunpack.c.0.s8 %v1439
    %v1441 = vlaneseq
    %v1442 = vshrl.u32 %v1441, 7
    %v1443 = vsub.s32 %v1440, %v1442
    %v1444 = vrot.slane %v1165, %v1443
    %v1446 = vunpack.c.l.s4 1983009808
    %v1447 = vunpack.c.0.s8 %v1446
    %v1448 = vlaneseq
    %v1449 = vshrl.u32 %v1448, 7
    %v1450 = vsub.s32 %v1447, %v1449
    %v1451 = vrot.slane %v1437, %v1450
    %v1452 = vcombine.high %v1444, %v1444
    %v1453 = vcombine.high %v1451, %v1451
    %v1454 = vcombine.high %v1166, %v1166
    %v1456 = vunpack.c.l.s4 1983009808
    %v1457 = vunpack.c.0.s8 %v1456
    %v1458 = vlaneseq
    %v1459 = vshrl.u32 %v1458, 7
    %v1460 = vsub.s32 %v1457, %v1459
    %v1461 = vrot.slane %v1166, %v1460
    %v1463 = vunpack.c.l.s4 1983009808
    %v1464 = vunpack.c.0.s8 %v1463
    %v1465 = vlaneseq
    %v1466 = vshrl.u32 %v1465, 7
    %v1467 = vsub.s32 %v1464, %v1466
    %v1468 = vrot.slane %v1454, %v1467
    %v1469 = vcombine.high %v1461, %v1461
    %v1470 = vcombine.high %v1468, %v1468
    %v1471 = vcombine.high %v1167, %v1167
    %v1473 = vunpack.c.l.s4 1983009808
    %v1474 = vunpack.c.0.s8 %v1473
    %v1475 = vlaneseq
    %v1476 = vshrl.u32 %v1475, 7
    %v1477 = vsub.s32 %v1474, %v1476
    %v1478 = vrot.slane %v1167, %v1477
    %v1480 = vunpack.c.l.s4 1983009808
    %v1481 = vunpack.c.0.s8 %v1480
    %v1482 = vlaneseq
    %v1483 = vshrl.u32 %v1482, 7
    %v1484 = vsub.s32 %v1481, %v1483
    %v1485 = vrot.slane %v1471, %v1484
    %v1486 = vcombine.high %v1478, %v1478
    %v1487 = vcombine.high %v1485, %v1485
    %v1488 = vcombine.high %v1168, %v1168
    %v1490 = vunpack.c.l.s4 1983009808
    %v1491 = vunpack.c.0.s8 %v1490
    %v1492 = vlaneseq
    %v1493 = vshrl.u32 %v1492, 7
    %v1494 = vsub.s32 %v1491, %v1493
    %v1495 = vrot.slane %v1168, %v1494
    %v1497 = vunpack.c.l.s4 1983009808
    %v1498 = vunpack.c.0.s8 %v1497
    %v1499 = vlaneseq
    %v1500 = vshrl.u32 %v1499, 7
    %v1501 = vsub.s32 %v1498, %v1500
    %v1502 = vrot.slane %v1488, %v1501
    %v1503 = vcombine.high %v1495, %v1495
    %v1504 = vcombine.high %v1502, %v1502
    %v1505 = vcombine.high %v1169, %v1169
    %v1507 = vunpack.c.l.s4 1983009808
    %v1508 = vunpack.c.0.s8 %v1507
    %v1509 = vlaneseq
    %v1510 = vshrl.u32 %v1509, 7
    %v1511 = vsub.s32 %v1508, %v1510
    %v1512 = vrot.slane %v1169, %v1511
    %v1514 = vunpack.c.l.s4 1983009808
    %v1515 = vunpack.c.0.s8 %v1514
    %v1516 = vlaneseq
    %v1517 = vshrl.u32 %v1516, 7
    %v1518 = vsub.s32 %v1515, %v1517
    %v1519 = vrot.slane %v1505, %v1518
    %v1520 = vcombine.high %v1512, %v1512
    %v1521 = vcombine.high %v1519, %v1519
    %v1522 = vcombine.high %v1170, %v1170
    %v1524 = vunpack.c.l.s4 1983009808
    %v1525 = vunpack.c.0.s8 %v1524
    %v1526 = vlaneseq
    %v1527 = vshrl.u32 %v1526, 7
    %v1528 = vsub.s32 %v1525, %v1527
    %v1529 = vrot.slane %v1170, %v1528
    %v1531 = vunpack.c.l.s4 1983009808
    %v1532 = vunpack.c.0.s8 %v1531
    %v1533 = vlaneseq
    %v1534 = vshrl.u32 %v1533, 7
    %v1535 = vsub.s32 %v1532, %v1534
    %v1536 = vrot.slane %v1522, %v1535
    %v1537 = vcombine.high %v1529, %v1529
    %v1538 = vcombine.high %v1536, %v1536
    %v1539 = vcombine.high %v1171, %v1171
    %v1541 = vunpack.c.l.s4 1983009808
    %v1542 = vunpack.c.0.s8 %v1541
    %v1543 = vlaneseq
    %v1544 = vshrl.u32 %v1543, 7
    %v1545 = vsub.s32 %v1542, %v1544
    %v1546 = vrot.slane %v1171, %v1545
    %v1548 = vunpack.c.l.s4 1983009808
    %v1549 = vunpack.c.0.s8 %v1548
    %v1550 = vlaneseq
    %v1551 = vshrl.u32 %v1550, 7
    %v1552 = vsub.s32 %v1549, %v1551
    %v1553 = vrot.slane %v1539, %v1552
    %v1554 = vcombine.high %v1546, %v1546
    %v1555 = vcombine.high %v1553, %v1553
    %v1556 = vcombine.high %v1172, %v1172
    %v1558 = vunpack.c.l.s4 1983009808
    %v1559 = vunpack.c.0.s8 %v1558
    %v1560 = vlaneseq
    %v1561 = vshrl.u32 %v1560, 7
    %v1562 = vsub.s32 %v1559, %v1561
    %v1563 = vrot.slane %v1172, %v1562
    %v1565 = vunpack.c.l.s4 1983009808
    %v1566 = vunpack.c.0.s8 %v1565
    %v1567 = vlaneseq
    %v1568 = vshrl.u32 %v1567, 7
    %v1569 = vsub.s32 %v1566, %v1568
    %v1570 = vrot.slane %v1556, %v1569
    %v1571 = vcombine.high %v1563, %v1563
    %v1572 = vcombine.high %v1570, %v1570
    %v1573 = vcombine.high %v1173, %v1173
    %v1575 = vunpack.c.l.s4 1983009808
    %v1576 = vunpack.c.0.s8 %v1575
    %v1577 = vlaneseq
    %v1578 = vshrl.u32 %v1577, 7
    %v1579 = vsub.s32 %v1576, %v1578
    %v1580 = vrot.slane %v1173, %v1579
    %v1582 = vunpack.c.l.s4 1983009808
    %v1583 = vunpack.c.0.s8 %v1582
    %v1584 = vlaneseq
    %v1585 = vshrl.u32 %v1584, 7
    %v1586 = vsub.s32 %v1583, %v1585
    %v1587 = vrot.slane %v1573, %v1586
    %v1588 = vcombine.high %v1580, %v1580
    %v1589 = vcombine.high %v1587, %v1587
    %v1590 = vcombine.high %v1174, %v1174
    %v1592 = vunpack.c.l.s4 1983009808
    %v1593 = vunpack.c.0.s8 %v1592
    %v1594 = vlaneseq
    %v1595 = vshrl.u32 %v1594, 7
    %v1596 = vsub.s32 %v1593, %v1595
    %v1597 = vrot.slane %v1174, %v1596
    %v1599 = vunpack.c.l.s4 1983009808
    %v1600 = vunpack.c.0.s8 %v1599
    %v1601 = vlaneseq
    %v1602 = vshrl.u32 %v1601, 7
    %v1603 = vsub.s32 %v1600, %v1602
    %v1604 = vrot.slane %v1590, %v1603
    %v1605 = vcombine.high %v1597, %v1597
    %v1606 = vcombine.high %v1604, %v1604
    %v1607 = vcombine.high %v1175, %v1175
    %v1609 = vunpack.c.l.s4 1983009808
    %v1610 = vunpack.c.0.s8 %v1609
    %v1611 = vlaneseq
    %v1612 = vshrl.u32 %v1611, 7
    %v1613 = vsub.s32 %v1610, %v1612
    %v1614 = vrot.slane %v1175, %v1613
    %v1616 = vunpack.c.l.s4 1983009808
    %v1617 = vunpack.c.0.s8 %v1616
    %v1618 = vlaneseq
    %v1619 = vshrl.u32 %v1618, 7
    %v1620 = vsub.s32 %v1617, %v1619
    %v1621 = vrot.slane %v1607, %v1620
    %v1622 = vcombine.high %v1614, %v1614
    %v1623 = vcombine.high %v1621, %v1621
    %v1624 = vcombine.high %v1176, %v1176
    %v1626 = vunpack.c.l.s4 1983009808
    %v1627 = vunpack.c.0.s8 %v1626
    %v1628 = vlaneseq
    %v1629 = vshrl.u32 %v1628, 7
    %v1630 = vsub.s32 %v1627, %v1629
    %v1631 = vrot.slane %v1176, %v1630
    %v1633 = vunpack.c.l.s4 1983009808
    %v1634 = vunpack.c.0.s8 %v1633
    %v1635 = vlaneseq
    %v1636 = vshrl.u32 %v1635, 7
    %v1637 = vsub.s32 %v1634, %v1636
    %v1638 = vrot.slane %v1624, %v1637
    %v1639 = vcombine.high %v1631, %v1631
    %v1640 = vcombine.high %v1638, %v1638
    %v1641 = vcombine.high %v1177, %v1177
    %v1643 = vunpack.c.l.s4 1983009808
    %v1644 = vunpack.c.0.s8 %v1643
    %v1645 = vlaneseq
    %v1646 = vshrl.u32 %v1645, 7
    %v1647 = vsub.s32 %v1644, %v1646
    %v1648 = vrot.slane %v1177, %v1647
    %v1650 = vunpack.c.l.s4 1983009808
    %v1651 = vunpack.c.0.s8 %v1650
    %v1652 = vlaneseq
    %v1653 = vshrl.u32 %v1652, 7
    %v1654 = vsub.s32 %v1651, %v1653
    %v1655 = vrot.slane %v1641, %v1654
    %v1656 = vcombine.high %v1648, %v1648
    %v1657 = vcombine.high %v1655, %v1655
    %v1658 = vcombine.high %v1178, %v1178
    %v1660 = vunpack.c.l.s4 1983009808
    %v1661 = vunpack.c.0.s8 %v1660
    %v1662 = vlaneseq
    %v1663 = vshrl.u32 %v1662, 7
    %v1664 = vsub.s32 %v1661, %v1663
    %v1665 = vrot.slane %v1178, %v1664
    %v1667 = vunpack.c.l.s4 1983009808
    %v1668 = vunpack.c.0.s8 %v1667
    %v1669 = vlaneseq
    %v1670 = vshrl.u32 %v1669, 7
    %v1671 = vsub.s32 %v1668, %v1670
    %v1672 = vrot.slane %v1658, %v1671
    %v1673 = vcombine.high %v1665, %v1665
    %v1674 = vcombine.high %v1672, %v1672
    %v1675 = vcombine.high %v1179, %v1179
    %v1677 = vunpack.c.l.s4 1983009808
    %v1678 = vunpack.c.0.s8 %v1677
    %v1679 = vlaneseq
    %v1680 = vshrl.u32 %v1679, 7
    %v1681 = vsub.s32 %v1678, %v1680
    %v1682 = vrot.slane %v1179, %v1681
    %v1684 = vunpack.c.l.s4 1983009808
    %v1685 = vunpack.c.0.s8 %v1684
    %v1686 = vlaneseq
    %v1687 = vshrl.u32 %v1686, 7
    %v1688 = vsub.s32 %v1685, %v1687
    %v1689 = vrot.slane %v1675, %v1688
    %v1690 = vcombine.high %v1682, %v1682
    %v1691 = vcombine.high %v1689, %v1689
    %v1692 = vcombine.high %v1180, %v1180
    %v1694 = vunpack.c.l.s4 1983009808
    %v1695 = vunpack.c.0.s8 %v1694
    %v1696 = vlaneseq
    %v1697 = vshrl.u32 %v1696, 7
    %v1698 = vsub.s32 %v1695, %v1697
    %v1699 = vrot.slane %v1180, %v1698
    %v1701 = vunpack.c.l.s4 1983009808
    %v1702 = vunpack.c.0.s8 %v1701
    %v1703 = vlaneseq
    %v1704 = vshrl.u32 %v1703, 7
    %v1705 = vsub.s32 %v1702, %v1704
    %v1706 = vrot.slane %v1692, %v1705
    %v1707 = vcombine.high %v1699, %v1699
    %v1708 = vcombine.high %v1706, %v1706
    %v1709 = vcombine.high %v1181, %v1181
    %v1711 = vunpack.c.l.s4 1983009808
    %v1712 = vunpack.c.0.s8 %v1711
    %v1713 = vlaneseq
    %v1714 = vshrl.u32 %v1713, 7
    %v1715 = vsub.s32 %v1712, %v1714
    %v1716 = vrot.slane %v1181, %v1715
    %v1718 = vunpack.c.l.s4 1983009808
    %v1719 = vunpack.c.0.s8 %v1718
    %v1720 = vlaneseq
    %v1721 = vshrl.u32 %v1720, 7
    %v1722 = vsub.s32 %v1719, %v1721
    %v1723 = vrot.slane %v1709, %v1722
    %v1724 = vcombine.high %v1716, %v1716
    %v1725 = vcombine.high %v1723, %v1723
    %v1726 = vcombine.high %v1182, %v1182
    %v1728 = vunpack.c.l.s4 1983009808
    %v1729 = vunpack.c.0.s8 %v1728
    %v1730 = vlaneseq
    %v1731 = vshrl.u32 %v1730, 7
    %v1732 = vsub.s32 %v1729, %v1731
    %v1733 = vrot.slane %v1182, %v1732
    %v1735 = vunpack.c.l.s4 1983009808
    %v1736 = vunpack.c.0.s8 %v1735
    %v1737 = vlaneseq
    %v1738 = vshrl.u32 %v1737, 7
    %v1739 = vsub.s32 %v1736, %v1738
    %v1740 = vrot.slane %v1726, %v1739
    %v1741 = vcombine.high %v1733, %v1733
    %v1742 = vcombine.high %v1740, %v1740
    %v1743 = vcombine.high %v1183, %v1183
    %v1745 = vunpack.c.l.s4 1983009808
    %v1746 = vunpack.c.0.s8 %v1745
    %v1747 = vlaneseq
    %v1748 = vshrl.u32 %v1747, 7
    %v1749 = vsub.s32 %v1746, %v1748
    %v1750 = vrot.slane %v1183, %v1749
    %v1752 = vunpack.c.l.s4 1983009808
    %v1753 = vunpack.c.0.s8 %v1752
    %v1754 = vlaneseq
    %v1755 = vshrl.u32 %v1754, 7
    %v1756 = vsub.s32 %v1753, %v1755
    %v1757 = vrot.slane %v1743, %v1756
    %v1758 = vcombine.high %v1750, %v1750
    %v1759 = vcombine.high %v1757, %v1757
    %v1760 = vcombine.high %v1184, %v1184
    %v1762 = vunpack.c.l.s4 1983009808
    %v1763 = vunpack.c.0.s8 %v1762
    %v1764 = vlaneseq
    %v1765 = vshrl.u32 %v1764, 7
    %v1766 = vsub.s32 %v1763, %v1765
    %v1767 = vrot.slane %v1184, %v1766
    %v1769 = vunpack.c.l.s4 1983009808
    %v1770 = vunpack.c.0.s8 %v1769
    %v1771 = vlaneseq
    %v1772 = vshrl.u32 %v1771, 7
    %v1773 = vsub.s32 %v1770, %v1772
    %v1774 = vrot.slane %v1760, %v1773
    %v1775 = vcombine.high %v1767, %v1767
    %v1776 = vcombine.high %v1774, %v1774
    %v1777 = vcombine.high %v1185, %v1185
    %v1779 = vunpack.c.l.s4 1983009808
    %v1780 = vunpack.c.0.s8 %v1779
    %v1781 = vlaneseq
    %v1782 = vshrl.u32 %v1781, 7
    %v1783 = vsub.s32 %v1780, %v1782
    %v1784 = vrot.slane %v1185, %v1783
    %v1786 = vunpack.c.l.s4 1983009808
    %v1787 = vunpack.c.0.s8 %v1786
    %v1788 = vlaneseq
    %v1789 = vshrl.u32 %v1788, 7
    %v1790 = vsub.s32 %v1787, %v1789
    %v1791 = vrot.slane %v1777, %v1790
    %v1792 = vcombine.high %v1784, %v1784
    %v1793 = vcombine.high %v1791, %v1791
    %v1794 = vcombine.high %v1186, %v1186
    %v1796 = vunpack.c.l.s4 1983009808
    %v1797 = vunpack.c.0.s8 %v1796
    %v1798 = vlaneseq
    %v1799 = vshrl.u32 %v1798, 7
    %v1800 = vsub.s32 %v1797, %v1799
    %v1801 = vrot.slane %v1186, %v1800
    %v1803 = vunpack.c.l.s4 1983009808
    %v1804 = vunpack.c.0.s8 %v1803
    %v1805 = vlaneseq
    %v1806 = vshrl.u32 %v1805, 7
    %v1807 = vsub.s32 %v1804, %v1806
    %v1808 = vrot.slane %v1794, %v1807
    %v1809 = vcombine.high %v1801, %v1801
    %v1810 = vcombine.high %v1808, %v1808
    %v1811 = vcombine.high %v1187, %v1187
    %v1813 = vunpack.c.l.s4 1983009808
    %v1814 = vunpack.c.0.s8 %v1813
    %v1815 = vlaneseq
    %v1816 = vshrl.u32 %v1815, 7
    %v1817 = vsub.s32 %v1814, %v1816
    %v1818 = vrot.slane %v1187, %v1817
    %v1820 = vunpack.c.l.s4 1983009808
    %v1821 = vunpack.c.0.s8 %v1820
    %v1822 = vlaneseq
    %v1823 = vshrl.u32 %v1822, 7
    %v1824 = vsub.s32 %v1821, %v1823
    %v1825 = vrot.slane %v1811, %v1824
    %v1826 = vcombine.high %v1818, %v1818
    %v1827 = vcombine.high %v1825, %v1825
    %v1828 = vcombine.high %v1188, %v1188
    %v1830 = vunpack.c.l.s4 1983009808
    %v1831 = vunpack.c.0.s8 %v1830
    %v1832 = vlaneseq
    %v1833 = vshrl.u32 %v1832, 7
    %v1834 = vsub.s32 %v1831, %v1833
    %v1835 = vrot.slane %v1188, %v1834
    %v1837 = vunpack.c.l.s4 1983009808
    %v1838 = vunpack.c.0.s8 %v1837
    %v1839 = vlaneseq
    %v1840 = vshrl.u32 %v1839, 7
    %v1841 = vsub.s32 %v1838, %v1840
    %v1842 = vrot.slane %v1828, %v1841
    %v1843 = vcombine.high %v1835, %v1835
    %v1844 = vcombine.high %v1842, %v1842
    %v1845 = vcombine.high %v1189, %v1189
    %v1847 = vunpack.c.l.s4 1983009808
    %v1848 = vunpack.c.0.s8 %v1847
    %v1849 = vlaneseq
    %v1850 = vshrl.u32 %v1849, 7
    %v1851 = vsub.s32 %v1848, %v1850
    %v1852 = vrot.slane %v1189, %v1851
    %v1854 = vunpack.c.l.s4 1983009808
    %v1855 = vunpack.c.0.s8 %v1854
    %v1856 = vlaneseq
    %v1857 = vshrl.u32 %v1856, 7
    %v1858 = vsub.s32 %v1855, %v1857
    %v1859 = vrot.slane %v1845, %v1858
    %v1860 = vcombine.high %v1852, %v1852
    %v1861 = vcombine.high %v1859, %v1859
    %v1862 = vcombine.high %v1190, %v1190
    %v1864 = vunpack.c.l.s4 1983009808
    %v1865 = vunpack.c.0.s8 %v1864
    %v1866 = vlaneseq
    %v1867 = vshrl.u32 %v1866, 7
    %v1868 = vsub.s32 %v1865, %v1867
    %v1869 = vrot.slane %v1190, %v1868
    %v1871 = vunpack.c.l.s4 1983009808
    %v1872 = vunpack.c.0.s8 %v1871
    %v1873 = vlaneseq
    %v1874 = vshrl.u32 %v1873, 7
    %v1875 = vsub.s32 %v1872, %v1874
    %v1876 = vrot.slane %v1862, %v1875
    %v1877 = vcombine.high %v1869, %v1869
    %v1878 = vcombine.high %v1876, %v1876
    %v1879 = vcombine.high %v1191, %v1191
    %v1881 = vunpack.c.l.s4 1983009808
    %v1882 = vunpack.c.0.s8 %v1881
    %v1883 = vlaneseq
    %v1884 = vshrl.u32 %v1883, 7
    %v1885 = vsub.s32 %v1882, %v1884
    %v1886 = vrot.slane %v1191, %v1885
    %v1888 = vunpack.c.l.s4 1983009808
    %v1889 = vunpack.c.0.s8 %v1888
    %v1890 = vlaneseq
    %v1891 = vshrl.u32 %v1890, 7
    %v1892 = vsub.s32 %v1889, %v1891
    %v1893 = vrot.slane %v1879, %v1892
    %v1894 = vcombine.high %v1886, %v1886
    %v1895 = vcombine.high %v1893, %v1893
    %v1896 = vcombine.high %v1192, %v1192
    %v1898 = vunpack.c.l.s4 1983009808
    %v1899 = vunpack.c.0.s8 %v1898
    %v1900 = vlaneseq
    %v1901 = vshrl.u32 %v1900, 7
    %v1902 = vsub.s32 %v1899, %v1901
    %v1903 = vrot.slane %v1192, %v1902
    %v1905 = vunpack.c.l.s4 1983009808
    %v1906 = vunpack.c.0.s8 %v1905
    %v1907 = vlaneseq
    %v1908 = vshrl.u32 %v1907, 7
    %v1909 = vsub.s32 %v1906, %v1908
    %v1910 = vrot.slane %v1896, %v1909
    %v1911 = vcombine.high %v1903, %v1903
    %v1912 = vcombine.high %v1910, %v1910
    %v1913 = vcombine.high %v1193, %v1193
    %v1915 = vunpack.c.l.s4 1983009808
    %v1916 = vunpack.c.0.s8 %v1915
    %v1917 = vlaneseq
    %v1918 = vshrl.u32 %v1917, 7
    %v1919 = vsub.s32 %v1916, %v1918
    %v1920 = vrot.slane %v1193, %v1919
    %v1922 = vunpack.c.l.s4 1983009808
    %v1923 = vunpack.c.0.s8 %v1922
    %v1924 = vlaneseq
    %v1925 = vshrl.u32 %v1924, 7
    %v1926 = vsub.s32 %v1923, %v1925
    %v1927 = vrot.slane %v1913, %v1926
    %v1928 = vcombine.high %v1920, %v1920
    %v1929 = vcombine.high %v1927, %v1927
    %v1930 = vcombine.high %v1194, %v1194
    %v1932 = vunpack.c.l.s4 1983009808
    %v1933 = vunpack.c.0.s8 %v1932
    %v1934 = vlaneseq
    %v1935 = vshrl.u32 %v1934, 7
    %v1936 = vsub.s32 %v1933, %v1935
    %v1937 = vrot.slane %v1194, %v1936
    %v1939 = vunpack.c.l.s4 1983009808
    %v1940 = vunpack.c.0.s8 %v1939
    %v1941 = vlaneseq
    %v1942 = vshrl.u32 %v1941, 7
    %v1943 = vsub.s32 %v1940, %v1942
    %v1944 = vrot.slane %v1930, %v1943
    %v1945 = vcombine.high %v1937, %v1937
    %v1946 = vcombine.high %v1944, %v1944
    %v1947 = vcombine.high %v1195, %v1195
    %v1949 = vunpack.c.l.s4 1983009808
    %v1950 = vunpack.c.0.s8 %v1949
    %v1951 = vlaneseq
    %v1952 = vshrl.u32 %v1951, 7
    %v1953 = vsub.s32 %v1950, %v1952
    %v1954 = vrot.slane %v1195, %v1953
    %v1956 = vunpack.c.l.s4 1983009808
    %v1957 = vunpack.c.0.s8 %v1956
    %v1958 = vlaneseq
    %v1959 = vshrl.u32 %v1958, 7
    %v1960 = vsub.s32 %v1957, %v1959
    %v1961 = vrot.slane %v1947, %v1960
    %v1962 = vcombine.high %v1954, %v1954
    %v1963 = vcombine.high %v1961, %v1961
    %v1964 = vcombine.high %v1196, %v1196
    %v1966 = vunpack.c.l.s4 1983009808
    %v1967 = vunpack.c.0.s8 %v1966
    %v1968 = vlaneseq
    %v1969 = vshrl.u32 %v1968, 7
    %v1970 = vsub.s32 %v1967, %v1969
    %v1971 = vrot.slane %v1196, %v1970
    %v1973 = vunpack.c.l.s4 1983009808
    %v1974 = vunpack.c.0.s8 %v1973
    %v1975 = vlaneseq
    %v1976 = vshrl.u32 %v1975, 7
    %v1977 = vsub.s32 %v1974, %v1976
    %v1978 = vrot.slane %v1964, %v1977
    %v1979 = vcombine.high %v1971, %v1971
    %v1980 = vcombine.high %v1978, %v1978
    %v1981 = vcombine.high %v1197, %v1197
    %v1983 = vunpack.c.l.s4 1983009808
    %v1984 = vunpack.c.0.s8 %v1983
    %v1985 = vlaneseq
    %v1986 = vshrl.u32 %v1985, 7
    %v1987 = vsub.s32 %v1984, %v1986
    %v1988 = vrot.slane %v1197, %v1987
    %v1990 = vunpack.c.l.s4 1983009808
    %v1991 = vunpack.c.0.s8 %v1990
    %v1992 = vlaneseq
    %v1993 = vshrl.u32 %v1992, 7
    %v1994 = vsub.s32 %v1991, %v1993
    %v1995 = vrot.slane %v1981, %v1994
    %v1996 = vcombine.high %v1988, %v1988
    %v1997 = vcombine.high %v1995, %v1995
    %v1998 = vcombine.high %v1198, %v1198
    %v2000 = vunpack.c.l.s4 1983009808
    %v2001 = vunpack.c.0.s8 %v2000
    %v2002 = vlaneseq
    %v2003 = vshrl.u32 %v2002, 7
    %v2004 = vsub.s32 %v2001, %v2003
    %v2005 = vrot.slane %v1198, %v2004
    %v2007 = vunpack.c.l.s4 1983009808
    %v2008 = vunpack.c.0.s8 %v2007
    %v2009 = vlaneseq
    %v2010 = vshrl.u32 %v2009, 7
    %v2011 = vsub.s32 %v2008, %v2010
    %v2012 = vrot.slane %v1998, %v2011
    %v2013 = vcombine.high %v2005, %v2005
    %v2014 = vcombine.high %v2012, %v2012
    %v2015 = vcombine.high %v1199, %v1199
    %v2017 = vunpack.c.l.s4 1983009808
    %v2018 = vunpack.c.0.s8 %v2017
    %v2019 = vlaneseq
    %v2020 = vshrl.u32 %v2019, 7
    %v2021 = vsub.s32 %v2018, %v2020
    %v2022 = vrot.slane %v1199, %v2021
    %v2024 = vunpack.c.l.s4 1983009808
    %v2025 = vunpack.c.0.s8 %v2024
    %v2026 = vlaneseq
    %v2027 = vshrl.u32 %v2026, 7
    %v2028 = vsub.s32 %v2025, %v2027
    %v2029 = vrot.slane %v2015, %v2028
    %v2030 = vcombine.high %v2022, %v2022
    %v2031 = vcombine.high %v2029, %v2029
    %v2032 = vcombine.high %v1200, %v1200
    %v2034 = vunpack.c.l.s4 1983009808
    %v2035 = vunpack.c.0.s8 %v2034
    %v2036 = vlaneseq
    %v2037 = vshrl.u32 %v2036, 7
    %v2038 = vsub.s32 %v2035, %v2037
    %v2039 = vrot.slane %v1200, %v2038
    %v2041 = vunpack.c.l.s4 1983009808
    %v2042 = vunpack.c.0.s8 %v2041
    %v2043 = vlaneseq
    %v2044 = vshrl.u32 %v2043, 7
    %v2045 = vsub.s32 %v2042, %v2044
    %v2046 = vrot.slane %v2032, %v2045
    %v2047 = vcombine.high %v2039, %v2039
    %v2048 = vcombine.high %v2046, %v2046
    %v2049 = vcombine.high %v1201, %v1201
    %v2051 = vunpack.c.l.s4 1983009808
    %v2052 = vunpack.c.0.s8 %v2051
    %v2053 = vlaneseq
    %v2054 = vshrl.u32 %v2053, 7
    %v2055 = vsub.s32 %v2052, %v2054
    %v2056 = vrot.slane %v1201, %v2055
    %v2058 = vunpack.c.l.s4 1983009808
    %v2059 = vunpack.c.0.s8 %v2058
    %v2060 = vlaneseq
    %v2061 = vshrl.u32 %v2060, 7
    %v2062 = vsub.s32 %v2059, %v2061
    %v2063 = vrot.slane %v2049, %v2062
    %v2064 = vcombine.high %v2056, %v2056
    %v2065 = vcombine.high %v2063, %v2063
    %v2066 = vcombine.high %v1202, %v1202
    %v2068 = vunpack.c.l.s4 1983009808
    %v2069 = vunpack.c.0.s8 %v2068
    %v2070 = vlaneseq
    %v2071 = vshrl.u32 %v2070, 7
    %v2072 = vsub.s32 %v2069, %v2071
    %v2073 = vrot.slane %v1202, %v2072
    %v2075 = vunpack.c.l.s4 1983009808
    %v2076 = vunpack.c.0.s8 %v2075
    %v2077 = vlaneseq
    %v2078 = vshrl.u32 %v2077, 7
    %v2079 = vsub.s32 %v2076, %v2078
    %v2080 = vrot.slane %v2066, %v2079
    %v2081 = vcombine.high %v2073, %v2073
    %v2082 = vcombine.high %v2080, %v2080
    %v2083 = vcombine.high %v1203, %v1203
    %v2085 = vunpack.c.l.s4 1983009808
    %v2086 = vunpack.c.0.s8 %v2085
    %v2087 = vlaneseq
    %v2088 = vshrl.u32 %v2087, 7
    %v2089 = vsub.s32 %v2086, %v2088
    %v2090 = vrot.slane %v1203, %v2089
    %v2092 = vunpack.c.l.s4 1983009808
    %v2093 = vunpack.c.0.s8 %v2092
    %v2094 = vlaneseq
    %v2095 = vshrl.u32 %v2094, 7
    %v2096 = vsub.s32 %v2093, %v2095
    %v2097 = vrot.slane %v2083, %v2096
    %v2098 = vcombine.high %v2090, %v2090
    %v2099 = vcombine.high %v2097, %v2097
    %v2100 = vcombine.high %v1204, %v1204
    %v2102 = vunpack.c.l.s4 1983009808
    %v2103 = vunpack.c.0.s8 %v2102
    %v2104 = vlaneseq
    %v2105 = vshrl.u32 %v2104, 7
    %v2106 = vsub.s32 %v2103, %v2105
    %v2107 = vrot.slane %v1204, %v2106
    %v2109 = vunpack.c.l.s4 1983009808
    %v2110 = vunpack.c.0.s8 %v2109
    %v2111 = vlaneseq
    %v2112 = vshrl.u32 %v2111, 7
    %v2113 = vsub.s32 %v2110, %v2112
    %v2114 = vrot.slane %v2100, %v2113
    %v2115 = vcombine.high %v2107, %v2107
    %v2116 = vcombine.high %v2114, %v2114
    %v2117 = vcombine.high %v1205, %v1205
    %v2119 = vunpack.c.l.s4 1983009808
    %v2120 = vunpack.c.0.s8 %v2119
    %v2121 = vlaneseq
    %v2122 = vshrl.u32 %v2121, 7
    %v2123 = vsub.s32 %v2120, %v2122
    %v2124 = vrot.slane %v1205, %v2123
    %v2126 = vunpack.c.l.s4 1983009808
    %v2127 = vunpack.c.0.s8 %v2126
    %v2128 = vlaneseq
    %v2129 = vshrl.u32 %v2128, 7
    %v2130 = vsub.s32 %v2127, %v2129
    %v2131 = vrot.slane %v2117, %v2130
    %v2132 = vcombine.high %v2124, %v2124
    %v2133 = vcombine.high %v2131, %v2131
    %v2134 = vcombine.high %v1206, %v1206
    %v2136 = vunpack.c.l.s4 1983009808
    %v2137 = vunpack.c.0.s8 %v2136
    %v2138 = vlaneseq
    %v2139 = vshrl.u32 %v2138, 7
    %v2140 = vsub.s32 %v2137, %v2139
    %v2141 = vrot.slane %v1206, %v2140
    %v2143 = vunpack.c.l.s4 1983009808
    %v2144 = vunpack.c.0.s8 %v2143
    %v2145 = vlaneseq
    %v2146 = vshrl.u32 %v2145, 7
    %v2147 = vsub.s32 %v2144, %v2146
    %v2148 = vrot.slane %v2134, %v2147
    %v2149 = vcombine.high %v2141, %v2141
    %v2150 = vcombine.high %v2148, %v2148
    %v2151 = vcombine.high %v1207, %v1207
    %v2153 = vunpack.c.l.s4 1983009808
    %v2154 = vunpack.c.0.s8 %v2153
    %v2155 = vlaneseq
    %v2156 = vshrl.u32 %v2155, 7
    %v2157 = vsub.s32 %v2154, %v2156
    %v2158 = vrot.slane %v1207, %v2157
    %v2160 = vunpack.c.l.s4 1983009808
    %v2161 = vunpack.c.0.s8 %v2160
    %v2162 = vlaneseq
    %v2163 = vshrl.u32 %v2162, 7
    %v2164 = vsub.s32 %v2161, %v2163
    %v2165 = vrot.slane %v2151, %v2164
    %v2166 = vcombine.high %v2158, %v2158
    %v2167 = vcombine.high %v2165, %v2165
    %v2168 = vcombine.high %v1208, %v1208
    %v2170 = vunpack.c.l.s4 1983009808
    %v2171 = vunpack.c.0.s8 %v2170
    %v2172 = vlaneseq
    %v2173 = vshrl.u32 %v2172, 7
    %v2174 = vsub.s32 %v2171, %v2173
    %v2175 = vrot.slane %v1208, %v2174
    %v2177 = vunpack.c.l.s4 1983009808
    %v2178 = vunpack.c.0.s8 %v2177
    %v2179 = vlaneseq
    %v2180 = vshrl.u32 %v2179, 7
    %v2181 = vsub.s32 %v2178, %v2180
    %v2182 = vrot.slane %v2168, %v2181
    %v2183 = vcombine.high %v2175, %v2175
    %v2184 = vcombine.high %v2182, %v2182
    %v2185 = vcombine.high %v1209, %v1209
    %v2187 = vunpack.c.l.s4 1983009808
    %v2188 = vunpack.c.0.s8 %v2187
    %v2189 = vlaneseq
    %v2190 = vshrl.u32 %v2189, 7
    %v2191 = vsub.s32 %v2188, %v2190
    %v2192 = vrot.slane %v1209, %v2191
    %v2194 = vunpack.c.l.s4 1983009808
    %v2195 = vunpack.c.0.s8 %v2194
    %v2196 = vlaneseq
    %v2197 = vshrl.u32 %v2196, 7
    %v2198 = vsub.s32 %v2195, %v2197
    %v2199 = vrot.slane %v2185, %v2198
    %v2200 = vcombine.high %v2192, %v2192
    %v2201 = vcombine.high %v2199, %v2199
    %v2202 = vcombine.high %v1210, %v1210
    %v2204 = vunpack.c.l.s4 1983009808
    %v2205 = vunpack.c.0.s8 %v2204
    %v2206 = vlaneseq
    %v2207 = vshrl.u32 %v2206, 7
    %v2208 = vsub.s32 %v2205, %v2207
    %v2209 = vrot.slane %v1210, %v2208
    %v2211 = vunpack.c.l.s4 1983009808
    %v2212 = vunpack.c.0.s8 %v2211
    %v2213 = vlaneseq
    %v2214 = vshrl.u32 %v2213, 7
    %v2215 = vsub.s32 %v2212, %v2214
    %v2216 = vrot.slane %v2202, %v2215
    %v2217 = vcombine.high %v2209, %v2209
    %v2218 = vcombine.high %v2216, %v2216
    %v2219 = vcombine.high %v1211, %v1211
    %v2221 = vunpack.c.l.s4 1983009808
    %v2222 = vunpack.c.0.s8 %v2221
    %v2223 = vlaneseq
    %v2224 = vshrl.u32 %v2223, 7
    %v2225 = vsub.s32 %v2222, %v2224
    %v2226 = vrot.slane %v1211, %v2225
    %v2228 = vunpack.c.l.s4 1983009808
    %v2229 = vunpack.c.0.s8 %v2228
    %v2230 = vlaneseq
    %v2231 = vshrl.u32 %v2230, 7
    %v2232 = vsub.s32 %v2229, %v2231
    %v2233 = vrot.slane %v2219, %v2232
    %v2234 = vcombine.high %v2226, %v2226
    %v2235 = vcombine.high %v2233, %v2233
    %v2236 = vcombine.high %v1212, %v1212
    %v2238 = vunpack.c.l.s4 1983009808
    %v2239 = vunpack.c.0.s8 %v2238
    %v2240 = vlaneseq
    %v2241 = vshrl.u32 %v2240, 7
    %v2242 = vsub.s32 %v2239, %v2241
    %v2243 = vrot.slane %v1212, %v2242
    %v2245 = vunpack.c.l.s4 1983009808
    %v2246 = vunpack.c.0.s8 %v2245
    %v2247 = vlaneseq
    %v2248 = vshrl.u32 %v2247, 7
    %v2249 = vsub.s32 %v2246, %v2248
    %v2250 = vrot.slane %v2236, %v2249
    %v2251 = vcombine.high %v2243, %v2243
    %v2252 = vcombine.high %v2250, %v2250
    %v2253 = vcombine.high %v1213, %v1213
    %v2255 = vunpack.c.l.s4 1983009808
    %v2256 = vunpack.c.0.s8 %v2255
    %v2257 = vlaneseq
    %v2258 = vshrl.u32 %v2257, 7
    %v2259 = vsub.s32 %v2256, %v2258
    %v2260 = vrot.slane %v1213, %v2259
    %v2262 = vunpack.c.l.s4 1983009808
    %v2263 = vunpack.c.0.s8 %v2262
    %v2264 = vlaneseq
    %v2265 = vshrl.u32 %v2264, 7
    %v2266 = vsub.s32 %v2263, %v2265
    %v2267 = vrot.slane %v2253, %v2266
    %v2268 = vcombine.high %v2260, %v2260
    %v2269 = vcombine.high %v2267, %v2267
    %v2270 = vcombine.high %v1214, %v1214
    %v2272 = vunpack.c.l.s4 1983009808
    %v2273 = vunpack.c.0.s8 %v2272
    %v2274 = vlaneseq
    %v2275 = vshrl.u32 %v2274, 7
    %v2276 = vsub.s32 %v2273, %v2275
    %v2277 = vrot.slane %v1214, %v2276
    %v2279 = vunpack.c.l.s4 1983009808
    %v2280 = vunpack.c.0.s8 %v2279
    %v2281 = vlaneseq
    %v2282 = vshrl.u32 %v2281, 7
    %v2283 = vsub.s32 %v2280, %v2282
    %v2284 = vrot.slane %v2270, %v2283
    %v2285 = vcombine.high %v2277, %v2277
    %v2286 = vcombine.high %v2284, %v2284
    %v2287 = vcombine.high %v1215, %v1215
    %v2289 = vunpack.c.l.s4 1983009808
    %v2290 = vunpack.c.0.s8 %v2289
    %v2291 = vlaneseq
    %v2292 = vshrl.u32 %v2291, 7
    %v2293 = vsub.s32 %v2290, %v2292
    %v2294 = vrot.slane %v1215, %v2293
    %v2296 = vunpack.c.l.s4 1983009808
    %v2297 = vunpack.c.0.s8 %v2296
    %v2298 = vlaneseq
    %v2299 = vshrl.u32 %v2298, 7
    %v2300 = vsub.s32 %v2297, %v2299
    %v2301 = vrot.slane %v2287, %v2300
    %v2302 = vcombine.high %v2294, %v2294
    %v2303 = vcombine.high %v2301, %v2301
    %v2304 = vcombine.high %v1216, %v1216
    %v2306 = vunpack.c.l.s4 1983009808
    %v2307 = vunpack.c.0.s8 %v2306
    %v2308 = vlaneseq
    %v2309 = vshrl.u32 %v2308, 7
    %v2310 = vsub.s32 %v2307, %v2309
    %v2311 = vrot.slane %v1216, %v2310
    %v2313 = vunpack.c.l.s4 1983009808
    %v2314 = vunpack.c.0.s8 %v2313
    %v2315 = vlaneseq
    %v2316 = vshrl.u32 %v2315, 7
    %v2317 = vsub.s32 %v2314, %v2316
    %v2318 = vrot.slane %v2304, %v2317
    %v2319 = vcombine.high %v2311, %v2311
    %v2320 = vcombine.high %v2318, %v2318
    %v2321 = vcombine.high %v1217, %v1217
    %v2323 = vunpack.c.l.s4 1983009808
    %v2324 = vunpack.c.0.s8 %v2323
    %v2325 = vlaneseq
    %v2326 = vshrl.u32 %v2325, 7
    %v2327 = vsub.s32 %v2324, %v2326
    %v2328 = vrot.slane %v1217, %v2327
    %v2330 = vunpack.c.l.s4 1983009808
    %v2331 = vunpack.c.0.s8 %v2330
    %v2332 = vlaneseq
    %v2333 = vshrl.u32 %v2332, 7
    %v2334 = vsub.s32 %v2331, %v2333
    %v2335 = vrot.slane %v2321, %v2334
    %v2336 = vcombine.high %v2328, %v2328
    %v2337 = vcombine.high %v2335, %v2335
    %v2338 = vcombine.high %v1218, %v1218
    %v2340 = vunpack.c.l.s4 1983009808
    %v2341 = vunpack.c.0.s8 %v2340
    %v2342 = vlaneseq
    %v2343 = vshrl.u32 %v2342, 7
    %v2344 = vsub.s32 %v2341, %v2343
    %v2345 = vrot.slane %v1218, %v2344
    %v2347 = vunpack.c.l.s4 1983009808
    %v2348 = vunpack.c.0.s8 %v2347
    %v2349 = vlaneseq
    %v2350 = vshrl.u32 %v2349, 7
    %v2351 = vsub.s32 %v2348, %v2350
    %v2352 = vrot.slane %v2338, %v2351
    %v2353 = vcombine.high %v2345, %v2345
    %v2354 = vcombine.high %v2352, %v2352
    %v2355 = vcombine.high %v1219, %v1219
    %v2357 = vunpack.c.l.s4 1983009808
    %v2358 = vunpack.c.0.s8 %v2357
    %v2359 = vlaneseq
    %v2360 = vshrl.u32 %v2359, 7
    %v2361 = vsub.s32 %v2358, %v2360
    %v2362 = vrot.slane %v1219, %v2361
    %v2364 = vunpack.c.l.s4 1983009808
    %v2365 = vunpack.c.0.s8 %v2364
    %v2366 = vlaneseq
    %v2367 = vshrl.u32 %v2366, 7
    %v2368 = vsub.s32 %v2365, %v2367
    %v2369 = vrot.slane %v2355, %v2368
    %v2370 = vcombine.high %v2362, %v2362
    %v2371 = vcombine.high %v2369, %v2369
    %vm2628 = vcmask 517120
    %v2629 = vsel %vm2628, %v1291, -inf
    %v2630 = vrot.slane %v2629, 4
    %v2631 = vmax.f32 %v2629, %v2630
    %v2632 = vrot.slane %v2631, 2
    %v2633 = vmax.f32 %v2631, %v2632
    %v2634 = vrot.slane %v2633, 1
    %v2635 = vmax.f32 %v2633, %v2634
    %v2636 = vsel %vm2628, %v1299, -inf
    %v2637 = vrot.slane %v2636, 4
    %v2638 = vmax.f32 %v2636, %v2637
    %v2639 = vrot.slane %v2638, 2
    %v2640 = vmax.f32 %v2638, %v2639
    %v2641 = vrot.slane %v2640, 1
    %v2642 = vmax.f32 %v2640, %v2641
    %v2643 = vsel %vm2628, %v1298, -inf
    %v2644 = vrot.slane %v2643, 4
    %v2645 = vmax.f32 %v2643, %v2644
    %v2646 = vrot.slane %v2645, 2
    %v2647 = vmax.f32 %v2645, %v2646
    %v2648 = vrot.slane %v2647, 1
    %v2649 = vmax.f32 %v2647, %v2648
    %v2650 = vsel %vm2628, %v1300, -inf
    %v2651 = vrot.slane %v2650, 4
    %v2652 = vmax.f32 %v2650, %v2651
    %v2653 = vrot.slane %v2652, 2
    %v2654 = vmax.f32 %v2652, %v2653
    %v2655 = vrot.slane %v2654, 1
    %v2656 = vmax.f32 %v2654, %v2655
    %v2657 = vsel %vm2628, %v1308, -inf
    %v2658 = vrot.slane %v2657, 4
    %v2659 = vmax.f32 %v2657, %v2658
    %v2660 = vrot.slane %v2659, 2
    %v2661 = vmax.f32 %v2659, %v2660
    %v2662 = vrot.slane %v2661, 1
    %v2663 = vmax.f32 %v2661, %v2662
    %v2664 = vsel %vm2628, %v1316, -inf
    %v2665 = vrot.slane %v2664, 4
    %v2666 = vmax.f32 %v2664, %v2665
    %v2667 = vrot.slane %v2666, 2
    %v2668 = vmax.f32 %v2666, %v2667
    %v2669 = vrot.slane %v2668, 1
    %v2670 = vmax.f32 %v2668, %v2669
    %v2671 = vsel %vm2628, %v1315, -inf
    %v2672 = vrot.slane %v2671, 4
    %v2673 = vmax.f32 %v2671, %v2672
    %v2674 = vrot.slane %v2673, 2
    %v2675 = vmax.f32 %v2673, %v2674
    %v2676 = vrot.slane %v2675, 1
    %v2677 = vmax.f32 %v2675, %v2676
    %v2678 = vsel %vm2628, %v1317, -inf
    %v2679 = vrot.slane %v2678, 4
    %v2680 = vmax.f32 %v2678, %v2679
    %v2681 = vrot.slane %v2680, 2
    %v2682 = vmax.f32 %v2680, %v2681
    %v2683 = vrot.slane %v2682, 1
    %v2684 = vmax.f32 %v2682, %v2683
    %v2685 = vsel %vm2628, %v1325, -inf
    %v2686 = vrot.slane %v2685, 4
    %v2687 = vmax.f32 %v2685, %v2686
    %v2688 = vrot.slane %v2687, 2
    %v2689 = vmax.f32 %v2687, %v2688
    %v2690 = vrot.slane %v2689, 1
    %v2691 = vmax.f32 %v2689, %v2690
    %v2692 = vsel %vm2628, %v1333, -inf
    %v2693 = vrot.slane %v2692, 4
    %v2694 = vmax.f32 %v2692, %v2693
    %v2695 = vrot.slane %v2694, 2
    %v2696 = vmax.f32 %v2694, %v2695
    %v2697 = vrot.slane %v2696, 1
    %v2698 = vmax.f32 %v2696, %v2697
    %v2699 = vsel %vm2628, %v1332, -inf
    %v2700 = vrot.slane %v2699, 4
    %v2701 = vmax.f32 %v2699, %v2700
    %v2702 = vrot.slane %v2701, 2
    %v2703 = vmax.f32 %v2701, %v2702
    %v2704 = vrot.slane %v2703, 1
    %v2705 = vmax.f32 %v2703, %v2704
    %v2706 = vsel %vm2628, %v1334, -inf
    %v2707 = vrot.slane %v2706, 4
    %v2708 = vmax.f32 %v2706, %v2707
    %v2709 = vrot.slane %v2708, 2
    %v2710 = vmax.f32 %v2708, %v2709
    %v2711 = vrot.slane %v2710, 1
    %v2712 = vmax.f32 %v2710, %v2711
    %v2713 = vsel %vm2628, %v1342, -inf
    %v2714 = vrot.slane %v2713, 4
    %v2715 = vmax.f32 %v2713, %v2714
    %v2716 = vrot.slane %v2715, 2
    %v2717 = vmax.f32 %v2715, %v2716
    %v2718 = vrot.slane %v2717, 1
    %v2719 = vmax.f32 %v2717, %v2718
    %v2720 = vsel %vm2628, %v1350, -inf
    %v2721 = vrot.slane %v2720, 4
    %v2722 = vmax.f32 %v2720, %v2721
    %v2723 = vrot.slane %v2722, 2
    %v2724 = vmax.f32 %v2722, %v2723
    %v2725 = vrot.slane %v2724, 1
    %v2726 = vmax.f32 %v2724, %v2725
    %v2727 = vsel %vm2628, %v1349, -inf
    %v2728 = vrot.slane %v2727, 4
    %v2729 = vmax.f32 %v2727, %v2728
    %v2730 = vrot.slane %v2729, 2
    %v2731 = vmax.f32 %v2729, %v2730
    %v2732 = vrot.slane %v2731, 1
    %v2733 = vmax.f32 %v2731, %v2732
    %v2734 = vsel %vm2628, %v1351, -inf
    %v2735 = vrot.slane %v2734, 4
    %v2736 = vmax.f32 %v2734, %v2735
    %v2737 = vrot.slane %v2736, 2
    %v2738 = vmax.f32 %v2736, %v2737
    %v2739 = vrot.slane %v2738, 1
    %v2740 = vmax.f32 %v2738, %v2739
    %v2741 = vsel %vm2628, %v1359, -inf
    %v2742 = vrot.slane %v2741, 4
    %v2743 = vmax.f32 %v2741, %v2742
    %v2744 = vrot.slane %v2743, 2
    %v2745 = vmax.f32 %v2743, %v2744
    %v2746 = vrot.slane %v2745, 1
    %v2747 = vmax.f32 %v2745, %v2746
    %v2748 = vsel %vm2628, %v1367, -inf
    %v2749 = vrot.slane %v2748, 4
    %v2750 = vmax.f32 %v2748, %v2749
    %v2751 = vrot.slane %v2750, 2
    %v2752 = vmax.f32 %v2750, %v2751
    %v2753 = vrot.slane %v2752, 1
    %v2754 = vmax.f32 %v2752, %v2753
    %v2755 = vsel %vm2628, %v1366, -inf
    %v2756 = vrot.slane %v2755, 4
    %v2757 = vmax.f32 %v2755, %v2756
    %v2758 = vrot.slane %v2757, 2
    %v2759 = vmax.f32 %v2757, %v2758
    %v2760 = vrot.slane %v2759, 1
    %v2761 = vmax.f32 %v2759, %v2760
    %v2762 = vsel %vm2628, %v1368, -inf
    %v2763 = vrot.slane %v2762, 4
    %v2764 = vmax.f32 %v2762, %v2763
    %v2765 = vrot.slane %v2764, 2
    %v2766 = vmax.f32 %v2764, %v2765
    %v2767 = vrot.slane %v2766, 1
    %v2768 = vmax.f32 %v2766, %v2767
    %v2769 = vsel %vm2628, %v1376, -inf
    %v2770 = vrot.slane %v2769, 4
    %v2771 = vmax.f32 %v2769, %v2770
    %v2772 = vrot.slane %v2771, 2
    %v2773 = vmax.f32 %v2771, %v2772
    %v2774 = vrot.slane %v2773, 1
    %v2775 = vmax.f32 %v2773, %v2774
    %v2776 = vsel %vm2628, %v1384, -inf
    %v2777 = vrot.slane %v2776, 4
    %v2778 = vmax.f32 %v2776, %v2777
    %v2779 = vrot.slane %v2778, 2
    %v2780 = vmax.f32 %v2778, %v2779
    %v2781 = vrot.slane %v2780, 1
    %v2782 = vmax.f32 %v2780, %v2781
    %v2783 = vsel %vm2628, %v1383, -inf
    %v2784 = vrot.slane %v2783, 4
    %v2785 = vmax.f32 %v2783, %v2784
    %v2786 = vrot.slane %v2785, 2
    %v2787 = vmax.f32 %v2785, %v2786
    %v2788 = vrot.slane %v2787, 1
    %v2789 = vmax.f32 %v2787, %v2788
    %v2790 = vsel %vm2628, %v1385, -inf
    %v2791 = vrot.slane %v2790, 4
    %v2792 = vmax.f32 %v2790, %v2791
    %v2793 = vrot.slane %v2792, 2
    %v2794 = vmax.f32 %v2792, %v2793
    %v2795 = vrot.slane %v2794, 1
    %v2796 = vmax.f32 %v2794, %v2795
    %v2797 = vsel %vm2628, %v1393, -inf
    %v2798 = vrot.slane %v2797, 4
    %v2799 = vmax.f32 %v2797, %v2798
    %v2800 = vrot.slane %v2799, 2
    %v2801 = vmax.f32 %v2799, %v2800
    %v2802 = vrot.slane %v2801, 1
    %v2803 = vmax.f32 %v2801, %v2802
    %v2804 = vsel %vm2628, %v1401, -inf
    %v2805 = vrot.slane %v2804, 4
    %v2806 = vmax.f32 %v2804, %v2805
    %v2807 = vrot.slane %v2806, 2
    %v2808 = vmax.f32 %v2806, %v2807
    %v2809 = vrot.slane %v2808, 1
    %v2810 = vmax.f32 %v2808, %v2809
    %v2811 = vsel %vm2628, %v1400, -inf
    %v2812 = vrot.slane %v2811, 4
    %v2813 = vmax.f32 %v2811, %v2812
    %v2814 = vrot.slane %v2813, 2
    %v2815 = vmax.f32 %v2813, %v2814
    %v2816 = vrot.slane %v2815, 1
    %v2817 = vmax.f32 %v2815, %v2816
    %v2818 = vsel %vm2628, %v1402, -inf
    %v2819 = vrot.slane %v2818, 4
    %v2820 = vmax.f32 %v2818, %v2819
    %v2821 = vrot.slane %v2820, 2
    %v2822 = vmax.f32 %v2820, %v2821
    %v2823 = vrot.slane %v2822, 1
    %v2824 = vmax.f32 %v2822, %v2823
    %v2825 = vsel %vm2628, %v1410, -inf
    %v2826 = vrot.slane %v2825, 4
    %v2827 = vmax.f32 %v2825, %v2826
    %v2828 = vrot.slane %v2827, 2
    %v2829 = vmax.f32 %v2827, %v2828
    %v2830 = vrot.slane %v2829, 1
    %v2831 = vmax.f32 %v2829, %v2830
    %v2832 = vsel %vm2628, %v1418, -inf
    %v2833 = vrot.slane %v2832, 4
    %v2834 = vmax.f32 %v2832, %v2833
    %v2835 = vrot.slane %v2834, 2
    %v2836 = vmax.f32 %v2834, %v2835
    %v2837 = vrot.slane %v2836, 1
    %v2838 = vmax.f32 %v2836, %v2837
    %v2839 = vsel %vm2628, %v1417, -inf
    %v2840 = vrot.slane %v2839, 4
    %v2841 = vmax.f32 %v2839, %v2840
    %v2842 = vrot.slane %v2841, 2
    %v2843 = vmax.f32 %v2841, %v2842
    %v2844 = vrot.slane %v2843, 1
    %v2845 = vmax.f32 %v2843, %v2844
    %v2846 = vsel %vm2628, %v1419, -inf
    %v2847 = vrot.slane %v2846, 4
    %v2848 = vmax.f32 %v2846, %v2847
    %v2849 = vrot.slane %v2848, 2
    %v2850 = vmax.f32 %v2848, %v2849
    %v2851 = vrot.slane %v2850, 1
    %v2852 = vmax.f32 %v2850, %v2851
    %v2853 = vsel %vm2628, %v1427, -inf
    %v2854 = vrot.slane %v2853, 4
    %v2855 = vmax.f32 %v2853, %v2854
    %v2856 = vrot.slane %v2855, 2
    %v2857 = vmax.f32 %v2855, %v2856
    %v2858 = vrot.slane %v2857, 1
    %v2859 = vmax.f32 %v2857, %v2858
    %v2860 = vsel %vm2628, %v1435, -inf
    %v2861 = vrot.slane %v2860, 4
    %v2862 = vmax.f32 %v2860, %v2861
    %v2863 = vrot.slane %v2862, 2
    %v2864 = vmax.f32 %v2862, %v2863
    %v2865 = vrot.slane %v2864, 1
    %v2866 = vmax.f32 %v2864, %v2865
    %v2867 = vsel %vm2628, %v1434, -inf
    %v2868 = vrot.slane %v2867, 4
    %v2869 = vmax.f32 %v2867, %v2868
    %v2870 = vrot.slane %v2869, 2
    %v2871 = vmax.f32 %v2869, %v2870
    %v2872 = vrot.slane %v2871, 1
    %v2873 = vmax.f32 %v2871, %v2872
    %v2874 = vsel %vm2628, %v1436, -inf
    %v2875 = vrot.slane %v2874, 4
    %v2876 = vmax.f32 %v2874, %v2875
    %v2877 = vrot.slane %v2876, 2
    %v2878 = vmax.f32 %v2876, %v2877
    %v2879 = vrot.slane %v2878, 1
    %v2880 = vmax.f32 %v2878, %v2879
    %v2881 = vsel %vm2628, %v1444, -inf
    %v2882 = vrot.slane %v2881, 4
    %v2883 = vmax.f32 %v2881, %v2882
    %v2884 = vrot.slane %v2883, 2
    %v2885 = vmax.f32 %v2883, %v2884
    %v2886 = vrot.slane %v2885, 1
    %v2887 = vmax.f32 %v2885, %v2886
    %v2888 = vsel %vm2628, %v1452, -inf
    %v2889 = vrot.slane %v2888, 4
    %v2890 = vmax.f32 %v2888, %v2889
    %v2891 = vrot.slane %v2890, 2
    %v2892 = vmax.f32 %v2890, %v2891
    %v2893 = vrot.slane %v2892, 1
    %v2894 = vmax.f32 %v2892, %v2893
    %v2895 = vsel %vm2628, %v1451, -inf
    %v2896 = vrot.slane %v2895, 4
    %v2897 = vmax.f32 %v2895, %v2896
    %v2898 = vrot.slane %v2897, 2
    %v2899 = vmax.f32 %v2897, %v2898
    %v2900 = vrot.slane %v2899, 1
    %v2901 = vmax.f32 %v2899, %v2900
    %v2902 = vsel %vm2628, %v1453, -inf
    %v2903 = vrot.slane %v2902, 4
    %v2904 = vmax.f32 %v2902, %v2903
    %v2905 = vrot.slane %v2904, 2
    %v2906 = vmax.f32 %v2904, %v2905
    %v2907 = vrot.slane %v2906, 1
    %v2908 = vmax.f32 %v2906, %v2907
    %v2909 = vsel %vm2628, %v1461, -inf
    %v2910 = vrot.slane %v2909, 4
    %v2911 = vmax.f32 %v2909, %v2910
    %v2912 = vrot.slane %v2911, 2
    %v2913 = vmax.f32 %v2911, %v2912
    %v2914 = vrot.slane %v2913, 1
    %v2915 = vmax.f32 %v2913, %v2914
    %v2916 = vsel %vm2628, %v1469, -inf
    %v2917 = vrot.slane %v2916, 4
    %v2918 = vmax.f32 %v2916, %v2917
    %v2919 = vrot.slane %v2918, 2
    %v2920 = vmax.f32 %v2918, %v2919
    %v2921 = vrot.slane %v2920, 1
    %v2922 = vmax.f32 %v2920, %v2921
    %v2923 = vsel %vm2628, %v1468, -inf
    %v2924 = vrot.slane %v2923, 4
    %v2925 = vmax.f32 %v2923, %v2924
    %v2926 = vrot.slane %v2925, 2
    %v2927 = vmax.f32 %v2925, %v2926
    %v2928 = vrot.slane %v2927, 1
    %v2929 = vmax.f32 %v2927, %v2928
    %v2930 = vsel %vm2628, %v1470, -inf
    %v2931 = vrot.slane %v2930, 4
    %v2932 = vmax.f32 %v2930, %v2931
    %v2933 = vrot.slane %v2932, 2
    %v2934 = vmax.f32 %v2932, %v2933
    %v2935 = vrot.slane %v2934, 1
    %v2936 = vmax.f32 %v2934, %v2935
    %v2937 = vsel %vm2628, %v1478, -inf
    %v2938 = vrot.slane %v2937, 4
    %v2939 = vmax.f32 %v2937, %v2938
    %v2940 = vrot.slane %v2939, 2
    %v2941 = vmax.f32 %v2939, %v2940
    %v2942 = vrot.slane %v2941, 1
    %v2943 = vmax.f32 %v2941, %v2942
    %v2944 = vsel %vm2628, %v1486, -inf
    %v2945 = vrot.slane %v2944, 4
    %v2946 = vmax.f32 %v2944, %v2945
    %v2947 = vrot.slane %v2946, 2
    %v2948 = vmax.f32 %v2946, %v2947
    %v2949 = vrot.slane %v2948, 1
    %v2950 = vmax.f32 %v2948, %v2949
    %v2951 = vsel %vm2628, %v1485, -inf
    %v2952 = vrot.slane %v2951, 4
    %v2953 = vmax.f32 %v2951, %v2952
    %v2954 = vrot.slane %v2953, 2
    %v2955 = vmax.f32 %v2953, %v2954
    %v2956 = vrot.slane %v2955, 1
    %v2957 = vmax.f32 %v2955, %v2956
    %v2958 = vsel %vm2628, %v1487, -inf
    %v2959 = vrot.slane %v2958, 4
    %v2960 = vmax.f32 %v2958, %v2959
    %v2961 = vrot.slane %v2960, 2
    %v2962 = vmax.f32 %v2960, %v2961
    %v2963 = vrot.slane %v2962, 1
    %v2964 = vmax.f32 %v2962, %v2963
    %v2965 = vsel %vm2628, %v1495, -inf
    %v2966 = vrot.slane %v2965, 4
    %v2967 = vmax.f32 %v2965, %v2966
    %v2968 = vrot.slane %v2967, 2
    %v2969 = vmax.f32 %v2967, %v2968
    %v2970 = vrot.slane %v2969, 1
    %v2971 = vmax.f32 %v2969, %v2970
    %v2972 = vsel %vm2628, %v1503, -inf
    %v2973 = vrot.slane %v2972, 4
    %v2974 = vmax.f32 %v2972, %v2973
    %v2975 = vrot.slane %v2974, 2
    %v2976 = vmax.f32 %v2974, %v2975
    %v2977 = vrot.slane %v2976, 1
    %v2978 = vmax.f32 %v2976, %v2977
    %v2979 = vsel %vm2628, %v1502, -inf
    %v2980 = vrot.slane %v2979, 4
    %v2981 = vmax.f32 %v2979, %v2980
    %v2982 = vrot.slane %v2981, 2
    %v2983 = vmax.f32 %v2981, %v2982
    %v2984 = vrot.slane %v2983, 1
    %v2985 = vmax.f32 %v2983, %v2984
    %v2986 = vsel %vm2628, %v1504, -inf
    %v2987 = vrot.slane %v2986, 4
    %v2988 = vmax.f32 %v2986, %v2987
    %v2989 = vrot.slane %v2988, 2
    %v2990 = vmax.f32 %v2988, %v2989
    %v2991 = vrot.slane %v2990, 1
    %v2992 = vmax.f32 %v2990, %v2991
    %v2993 = vsel %vm2628, %v1512, -inf
    %v2994 = vrot.slane %v2993, 4
    %v2995 = vmax.f32 %v2993, %v2994
    %v2996 = vrot.slane %v2995, 2
    %v2997 = vmax.f32 %v2995, %v2996
    %v2998 = vrot.slane %v2997, 1
    %v2999 = vmax.f32 %v2997, %v2998
    %v3000 = vsel %vm2628, %v1520, -inf
    %v3001 = vrot.slane %v3000, 4
    %v3002 = vmax.f32 %v3000, %v3001
    %v3003 = vrot.slane %v3002, 2
    %v3004 = vmax.f32 %v3002, %v3003
    %v3005 = vrot.slane %v3004, 1
    %v3006 = vmax.f32 %v3004, %v3005
    %v3007 = vsel %vm2628, %v1519, -inf
    %v3008 = vrot.slane %v3007, 4
    %v3009 = vmax.f32 %v3007, %v3008
    %v3010 = vrot.slane %v3009, 2
    %v3011 = vmax.f32 %v3009, %v3010
    %v3012 = vrot.slane %v3011, 1
    %v3013 = vmax.f32 %v3011, %v3012
    %v3014 = vsel %vm2628, %v1521, -inf
    %v3015 = vrot.slane %v3014, 4
    %v3016 = vmax.f32 %v3014, %v3015
    %v3017 = vrot.slane %v3016, 2
    %v3018 = vmax.f32 %v3016, %v3017
    %v3019 = vrot.slane %v3018, 1
    %v3020 = vmax.f32 %v3018, %v3019
    %v3021 = vsel %vm2628, %v1529, -inf
    %v3022 = vrot.slane %v3021, 4
    %v3023 = vmax.f32 %v3021, %v3022
    %v3024 = vrot.slane %v3023, 2
    %v3025 = vmax.f32 %v3023, %v3024
    %v3026 = vrot.slane %v3025, 1
    %v3027 = vmax.f32 %v3025, %v3026
    %v3028 = vsel %vm2628, %v1537, -inf
    %v3029 = vrot.slane %v3028, 4
    %v3030 = vmax.f32 %v3028, %v3029
    %v3031 = vrot.slane %v3030, 2
    %v3032 = vmax.f32 %v3030, %v3031
    %v3033 = vrot.slane %v3032, 1
    %v3034 = vmax.f32 %v3032, %v3033
    %v3035 = vsel %vm2628, %v1536, -inf
    %v3036 = vrot.slane %v3035, 4
    %v3037 = vmax.f32 %v3035, %v3036
    %v3038 = vrot.slane %v3037, 2
    %v3039 = vmax.f32 %v3037, %v3038
    %v3040 = vrot.slane %v3039, 1
    %v3041 = vmax.f32 %v3039, %v3040
    %v3042 = vsel %vm2628, %v1538, -inf
    %v3043 = vrot.slane %v3042, 4
    %v3044 = vmax.f32 %v3042, %v3043
    %v3045 = vrot.slane %v3044, 2
    %v3046 = vmax.f32 %v3044, %v3045
    %v3047 = vrot.slane %v3046, 1
    %v3048 = vmax.f32 %v3046, %v3047
    %v3049 = vsel %vm2628, %v1546, -inf
    %v3050 = vrot.slane %v3049, 4
    %v3051 = vmax.f32 %v3049, %v3050
    %v3052 = vrot.slane %v3051, 2
    %v3053 = vmax.f32 %v3051, %v3052
    %v3054 = vrot.slane %v3053, 1
    %v3055 = vmax.f32 %v3053, %v3054
    %v3056 = vsel %vm2628, %v1554, -inf
    %v3057 = vrot.slane %v3056, 4
    %v3058 = vmax.f32 %v3056, %v3057
    %v3059 = vrot.slane %v3058, 2
    %v3060 = vmax.f32 %v3058, %v3059
    %v3061 = vrot.slane %v3060, 1
    %v3062 = vmax.f32 %v3060, %v3061
    %v3063 = vsel %vm2628, %v1553, -inf
    %v3064 = vrot.slane %v3063, 4
    %v3065 = vmax.f32 %v3063, %v3064
    %v3066 = vrot.slane %v3065, 2
    %v3067 = vmax.f32 %v3065, %v3066
    %v3068 = vrot.slane %v3067, 1
    %v3069 = vmax.f32 %v3067, %v3068
    %v3070 = vsel %vm2628, %v1555, -inf
    %v3071 = vrot.slane %v3070, 4
    %v3072 = vmax.f32 %v3070, %v3071
    %v3073 = vrot.slane %v3072, 2
    %v3074 = vmax.f32 %v3072, %v3073
    %v3075 = vrot.slane %v3074, 1
    %v3076 = vmax.f32 %v3074, %v3075
    %v3077 = vsel %vm2628, %v1563, -inf
    %v3078 = vrot.slane %v3077, 4
    %v3079 = vmax.f32 %v3077, %v3078
    %v3080 = vrot.slane %v3079, 2
    %v3081 = vmax.f32 %v3079, %v3080
    %v3082 = vrot.slane %v3081, 1
    %v3083 = vmax.f32 %v3081, %v3082
    %v3084 = vsel %vm2628, %v1571, -inf
    %v3085 = vrot.slane %v3084, 4
    %v3086 = vmax.f32 %v3084, %v3085
    %v3087 = vrot.slane %v3086, 2
    %v3088 = vmax.f32 %v3086, %v3087
    %v3089 = vrot.slane %v3088, 1
    %v3090 = vmax.f32 %v3088, %v3089
    %v3091 = vsel %vm2628, %v1570, -inf
    %v3092 = vrot.slane %v3091, 4
    %v3093 = vmax.f32 %v3091, %v3092
    %v3094 = vrot.slane %v3093, 2
    %v3095 = vmax.f32 %v3093, %v3094
    %v3096 = vrot.slane %v3095, 1
    %v3097 = vmax.f32 %v3095, %v3096
    %v3098 = vsel %vm2628, %v1572, -inf
    %v3099 = vrot.slane %v3098, 4
    %v3100 = vmax.f32 %v3098, %v3099
    %v3101 = vrot.slane %v3100, 2
    %v3102 = vmax.f32 %v3100, %v3101
    %v3103 = vrot.slane %v3102, 1
    %v3104 = vmax.f32 %v3102, %v3103
    %v3105 = vsel %vm2628, %v1580, -inf
    %v3106 = vrot.slane %v3105, 4
    %v3107 = vmax.f32 %v3105, %v3106
    %v3108 = vrot.slane %v3107, 2
    %v3109 = vmax.f32 %v3107, %v3108
    %v3110 = vrot.slane %v3109, 1
    %v3111 = vmax.f32 %v3109, %v3110
    %v3112 = vsel %vm2628, %v1588, -inf
    %v3113 = vrot.slane %v3112, 4
    %v3114 = vmax.f32 %v3112, %v3113
    %v3115 = vrot.slane %v3114, 2
    %v3116 = vmax.f32 %v3114, %v3115
    %v3117 = vrot.slane %v3116, 1
    %v3118 = vmax.f32 %v3116, %v3117
    %v3119 = vsel %vm2628, %v1587, -inf
    %v3120 = vrot.slane %v3119, 4
    %v3121 = vmax.f32 %v3119, %v3120
    %v3122 = vrot.slane %v3121, 2
    %v3123 = vmax.f32 %v3121, %v3122
    %v3124 = vrot.slane %v3123, 1
    %v3125 = vmax.f32 %v3123, %v3124
    %v3126 = vsel %vm2628, %v1589, -inf
    %v3127 = vrot.slane %v3126, 4
    %v3128 = vmax.f32 %v3126, %v3127
    %v3129 = vrot.slane %v3128, 2
    %v3130 = vmax.f32 %v3128, %v3129
    %v3131 = vrot.slane %v3130, 1
    %v3132 = vmax.f32 %v3130, %v3131
    %v3133 = vsel %vm2628, %v1597, -inf
    %v3134 = vrot.slane %v3133, 4
    %v3135 = vmax.f32 %v3133, %v3134
    %v3136 = vrot.slane %v3135, 2
    %v3137 = vmax.f32 %v3135, %v3136
    %v3138 = vrot.slane %v3137, 1
    %v3139 = vmax.f32 %v3137, %v3138
    %v3140 = vsel %vm2628, %v1605, -inf
    %v3141 = vrot.slane %v3140, 4
    %v3142 = vmax.f32 %v3140, %v3141
    %v3143 = vrot.slane %v3142, 2
    %v3144 = vmax.f32 %v3142, %v3143
    %v3145 = vrot.slane %v3144, 1
    %v3146 = vmax.f32 %v3144, %v3145
    %v3147 = vsel %vm2628, %v1604, -inf
    %v3148 = vrot.slane %v3147, 4
    %v3149 = vmax.f32 %v3147, %v3148
    %v3150 = vrot.slane %v3149, 2
    %v3151 = vmax.f32 %v3149, %v3150
    %v3152 = vrot.slane %v3151, 1
    %v3153 = vmax.f32 %v3151, %v3152
    %v3154 = vsel %vm2628, %v1606, -inf
    %v3155 = vrot.slane %v3154, 4
    %v3156 = vmax.f32 %v3154, %v3155
    %v3157 = vrot.slane %v3156, 2
    %v3158 = vmax.f32 %v3156, %v3157
    %v3159 = vrot.slane %v3158, 1
    %v3160 = vmax.f32 %v3158, %v3159
    %v3161 = vsel %vm2628, %v1614, -inf
    %v3162 = vrot.slane %v3161, 4
    %v3163 = vmax.f32 %v3161, %v3162
    %v3164 = vrot.slane %v3163, 2
    %v3165 = vmax.f32 %v3163, %v3164
    %v3166 = vrot.slane %v3165, 1
    %v3167 = vmax.f32 %v3165, %v3166
    %v3168 = vsel %vm2628, %v1622, -inf
    %v3169 = vrot.slane %v3168, 4
    %v3170 = vmax.f32 %v3168, %v3169
    %v3171 = vrot.slane %v3170, 2
    %v3172 = vmax.f32 %v3170, %v3171
    %v3173 = vrot.slane %v3172, 1
    %v3174 = vmax.f32 %v3172, %v3173
    %v3175 = vsel %vm2628, %v1621, -inf
    %v3176 = vrot.slane %v3175, 4
    %v3177 = vmax.f32 %v3175, %v3176
    %v3178 = vrot.slane %v3177, 2
    %v3179 = vmax.f32 %v3177, %v3178
    %v3180 = vrot.slane %v3179, 1
    %v3181 = vmax.f32 %v3179, %v3180
    %v3182 = vsel %vm2628, %v1623, -inf
    %v3183 = vrot.slane %v3182, 4
    %v3184 = vmax.f32 %v3182, %v3183
    %v3185 = vrot.slane %v3184, 2
    %v3186 = vmax.f32 %v3184, %v3185
    %v3187 = vrot.slane %v3186, 1
    %v3188 = vmax.f32 %v3186, %v3187
    %v3189 = vsel %vm2628, %v1631, -inf
    %v3190 = vrot.slane %v3189, 4
    %v3191 = vmax.f32 %v3189, %v3190
    %v3192 = vrot.slane %v3191, 2
    %v3193 = vmax.f32 %v3191, %v3192
    %v3194 = vrot.slane %v3193, 1
    %v3195 = vmax.f32 %v3193, %v3194
    %v3196 = vsel %vm2628, %v1639, -inf
    %v3197 = vrot.slane %v3196, 4
    %v3198 = vmax.f32 %v3196, %v3197
    %v3199 = vrot.slane %v3198, 2
    %v3200 = vmax.f32 %v3198, %v3199
    %v3201 = vrot.slane %v3200, 1
    %v3202 = vmax.f32 %v3200, %v3201
    %v3203 = vsel %vm2628, %v1638, -inf
    %v3204 = vrot.slane %v3203, 4
    %v3205 = vmax.f32 %v3203, %v3204
    %v3206 = vrot.slane %v3205, 2
    %v3207 = vmax.f32 %v3205, %v3206
    %v3208 = vrot.slane %v3207, 1
    %v3209 = vmax.f32 %v3207, %v3208
    %v3210 = vsel %vm2628, %v1640, -inf
    %v3211 = vrot.slane %v3210, 4
    %v3212 = vmax.f32 %v3210, %v3211
    %v3213 = vrot.slane %v3212, 2
    %v3214 = vmax.f32 %v3212, %v3213
    %v3215 = vrot.slane %v3214, 1
    %v3216 = vmax.f32 %v3214, %v3215
    %v3217 = vsel %vm2628, %v1648, -inf
    %v3218 = vrot.slane %v3217, 4
    %v3219 = vmax.f32 %v3217, %v3218
    %v3220 = vrot.slane %v3219, 2
    %v3221 = vmax.f32 %v3219, %v3220
    %v3222 = vrot.slane %v3221, 1
    %v3223 = vmax.f32 %v3221, %v3222
    %v3224 = vsel %vm2628, %v1656, -inf
    %v3225 = vrot.slane %v3224, 4
    %v3226 = vmax.f32 %v3224, %v3225
    %v3227 = vrot.slane %v3226, 2
    %v3228 = vmax.f32 %v3226, %v3227
    %v3229 = vrot.slane %v3228, 1
    %v3230 = vmax.f32 %v3228, %v3229
    %v3231 = vsel %vm2628, %v1655, -inf
    %v3232 = vrot.slane %v3231, 4
    %v3233 = vmax.f32 %v3231, %v3232
    %v3234 = vrot.slane %v3233, 2
    %v3235 = vmax.f32 %v3233, %v3234
    %v3236 = vrot.slane %v3235, 1
    %v3237 = vmax.f32 %v3235, %v3236
    %v3238 = vsel %vm2628, %v1657, -inf
    %v3239 = vrot.slane %v3238, 4
    %v3240 = vmax.f32 %v3238, %v3239
    %v3241 = vrot.slane %v3240, 2
    %v3242 = vmax.f32 %v3240, %v3241
    %v3243 = vrot.slane %v3242, 1
    %v3244 = vmax.f32 %v3242, %v3243
    %v3245 = vsel %vm2628, %v1665, -inf
    %v3246 = vrot.slane %v3245, 4
    %v3247 = vmax.f32 %v3245, %v3246
    %v3248 = vrot.slane %v3247, 2
    %v3249 = vmax.f32 %v3247, %v3248
    %v3250 = vrot.slane %v3249, 1
    %v3251 = vmax.f32 %v3249, %v3250
    %v3252 = vsel %vm2628, %v1673, -inf
    %v3253 = vrot.slane %v3252, 4
    %v3254 = vmax.f32 %v3252, %v3253
    %v3255 = vrot.slane %v3254, 2
    %v3256 = vmax.f32 %v3254, %v3255
    %v3257 = vrot.slane %v3256, 1
    %v3258 = vmax.f32 %v3256, %v3257
    %v3259 = vsel %vm2628, %v1672, -inf
    %v3260 = vrot.slane %v3259, 4
    %v3261 = vmax.f32 %v3259, %v3260
    %v3262 = vrot.slane %v3261, 2
    %v3263 = vmax.f32 %v3261, %v3262
    %v3264 = vrot.slane %v3263, 1
    %v3265 = vmax.f32 %v3263, %v3264
    %v3266 = vsel %vm2628, %v1674, -inf
    %v3267 = vrot.slane %v3266, 4
    %v3268 = vmax.f32 %v3266, %v3267
    %v3269 = vrot.slane %v3268, 2
    %v3270 = vmax.f32 %v3268, %v3269
    %v3271 = vrot.slane %v3270, 1
    %v3272 = vmax.f32 %v3270, %v3271
    %v3273 = vsel %vm2628, %v1682, -inf
    %v3274 = vrot.slane %v3273, 4
    %v3275 = vmax.f32 %v3273, %v3274
    %v3276 = vrot.slane %v3275, 2
    %v3277 = vmax.f32 %v3275, %v3276
    %v3278 = vrot.slane %v3277, 1
    %v3279 = vmax.f32 %v3277, %v3278
    %v3280 = vsel %vm2628, %v1690, -inf
    %v3281 = vrot.slane %v3280, 4
    %v3282 = vmax.f32 %v3280, %v3281
    %v3283 = vrot.slane %v3282, 2
    %v3284 = vmax.f32 %v3282, %v3283
    %v3285 = vrot.slane %v3284, 1
    %v3286 = vmax.f32 %v3284, %v3285
    %v3287 = vsel %vm2628, %v1689, -inf
    %v3288 = vrot.slane %v3287, 4
    %v3289 = vmax.f32 %v3287, %v3288
    %v3290 = vrot.slane %v3289, 2
    %v3291 = vmax.f32 %v3289, %v3290
    %v3292 = vrot.slane %v3291, 1
    %v3293 = vmax.f32 %v3291, %v3292
    %v3294 = vsel %vm2628, %v1691, -inf
    %v3295 = vrot.slane %v3294, 4
    %v3296 = vmax.f32 %v3294, %v3295
    %v3297 = vrot.slane %v3296, 2
    %v3298 = vmax.f32 %v3296, %v3297
    %v3299 = vrot.slane %v3298, 1
    %v3300 = vmax.f32 %v3298, %v3299
    %v3301 = vsel %vm2628, %v1699, -inf
    %v3302 = vrot.slane %v3301, 4
    %v3303 = vmax.f32 %v3301, %v3302
    %v3304 = vrot.slane %v3303, 2
    %v3305 = vmax.f32 %v3303, %v3304
    %v3306 = vrot.slane %v3305, 1
    %v3307 = vmax.f32 %v3305, %v3306
    %v3308 = vsel %vm2628, %v1707, -inf
    %v3309 = vrot.slane %v3308, 4
    %v3310 = vmax.f32 %v3308, %v3309
    %v3311 = vrot.slane %v3310, 2
    %v3312 = vmax.f32 %v3310, %v3311
    %v3313 = vrot.slane %v3312, 1
    %v3314 = vmax.f32 %v3312, %v3313
    %v3315 = vsel %vm2628, %v1706, -inf
    %v3316 = vrot.slane %v3315, 4
    %v3317 = vmax.f32 %v3315, %v3316
    %v3318 = vrot.slane %v3317, 2
    %v3319 = vmax.f32 %v3317, %v3318
    %v3320 = vrot.slane %v3319, 1
    %v3321 = vmax.f32 %v3319, %v3320
    %v3322 = vsel %vm2628, %v1708, -inf
    %v3323 = vrot.slane %v3322, 4
    %v3324 = vmax.f32 %v3322, %v3323
    %v3325 = vrot.slane %v3324, 2
    %v3326 = vmax.f32 %v3324, %v3325
    %v3327 = vrot.slane %v3326, 1
    %v3328 = vmax.f32 %v3326, %v3327
    %v3329 = vsel %vm2628, %v1716, -inf
    %v3330 = vrot.slane %v3329, 4
    %v3331 = vmax.f32 %v3329, %v3330
    %v3332 = vrot.slane %v3331, 2
    %v3333 = vmax.f32 %v3331, %v3332
    %v3334 = vrot.slane %v3333, 1
    %v3335 = vmax.f32 %v3333, %v3334
    %v3336 = vsel %vm2628, %v1724, -inf
    %v3337 = vrot.slane %v3336, 4
    %v3338 = vmax.f32 %v3336, %v3337
    %v3339 = vrot.slane %v3338, 2
    %v3340 = vmax.f32 %v3338, %v3339
    %v3341 = vrot.slane %v3340, 1
    %v3342 = vmax.f32 %v3340, %v3341
    %v3343 = vsel %vm2628, %v1723, -inf
    %v3344 = vrot.slane %v3343, 4
    %v3345 = vmax.f32 %v3343, %v3344
    %v3346 = vrot.slane %v3345, 2
    %v3347 = vmax.f32 %v3345, %v3346
    %v3348 = vrot.slane %v3347, 1
    %v3349 = vmax.f32 %v3347, %v3348
    %v3350 = vsel %vm2628, %v1725, -inf
    %v3351 = vrot.slane %v3350, 4
    %v3352 = vmax.f32 %v3350, %v3351
    %v3353 = vrot.slane %v3352, 2
    %v3354 = vmax.f32 %v3352, %v3353
    %v3355 = vrot.slane %v3354, 1
    %v3356 = vmax.f32 %v3354, %v3355
    %v3357 = vsel %vm2628, %v1733, -inf
    %v3358 = vrot.slane %v3357, 4
    %v3359 = vmax.f32 %v3357, %v3358
    %v3360 = vrot.slane %v3359, 2
    %v3361 = vmax.f32 %v3359, %v3360
    %v3362 = vrot.slane %v3361, 1
    %v3363 = vmax.f32 %v3361, %v3362
    %v3364 = vsel %vm2628, %v1741, -inf
    %v3365 = vrot.slane %v3364, 4
    %v3366 = vmax.f32 %v3364, %v3365
    %v3367 = vrot.slane %v3366, 2
    %v3368 = vmax.f32 %v3366, %v3367
    %v3369 = vrot.slane %v3368, 1
    %v3370 = vmax.f32 %v3368, %v3369
    %v3371 = vsel %vm2628, %v1740, -inf
    %v3372 = vrot.slane %v3371, 4
    %v3373 = vmax.f32 %v3371, %v3372
    %v3374 = vrot.slane %v3373, 2
    %v3375 = vmax.f32 %v3373, %v3374
    %v3376 = vrot.slane %v3375, 1
    %v3377 = vmax.f32 %v3375, %v3376
    %v3378 = vsel %vm2628, %v1742, -inf
    %v3379 = vrot.slane %v3378, 4
    %v3380 = vmax.f32 %v3378, %v3379
    %v3381 = vrot.slane %v3380, 2
    %v3382 = vmax.f32 %v3380, %v3381
    %v3383 = vrot.slane %v3382, 1
    %v3384 = vmax.f32 %v3382, %v3383
    %v3385 = vsel %vm2628, %v1750, -inf
    %v3386 = vrot.slane %v3385, 4
    %v3387 = vmax.f32 %v3385, %v3386
    %v3388 = vrot.slane %v3387, 2
    %v3389 = vmax.f32 %v3387, %v3388
    %v3390 = vrot.slane %v3389, 1
    %v3391 = vmax.f32 %v3389, %v3390
    %v3392 = vsel %vm2628, %v1758, -inf
    %v3393 = vrot.slane %v3392, 4
    %v3394 = vmax.f32 %v3392, %v3393
    %v3395 = vrot.slane %v3394, 2
    %v3396 = vmax.f32 %v3394, %v3395
    %v3397 = vrot.slane %v3396, 1
    %v3398 = vmax.f32 %v3396, %v3397
    %v3399 = vsel %vm2628, %v1757, -inf
    %v3400 = vrot.slane %v3399, 4
    %v3401 = vmax.f32 %v3399, %v3400
    %v3402 = vrot.slane %v3401, 2
    %v3403 = vmax.f32 %v3401, %v3402
    %v3404 = vrot.slane %v3403, 1
    %v3405 = vmax.f32 %v3403, %v3404
    %v3406 = vsel %vm2628, %v1759, -inf
    %v3407 = vrot.slane %v3406, 4
    %v3408 = vmax.f32 %v3406, %v3407
    %v3409 = vrot.slane %v3408, 2
    %v3410 = vmax.f32 %v3408, %v3409
    %v3411 = vrot.slane %v3410, 1
    %v3412 = vmax.f32 %v3410, %v3411
    %v3413 = vsel %vm2628, %v1767, -inf
    %v3414 = vrot.slane %v3413, 4
    %v3415 = vmax.f32 %v3413, %v3414
    %v3416 = vrot.slane %v3415, 2
    %v3417 = vmax.f32 %v3415, %v3416
    %v3418 = vrot.slane %v3417, 1
    %v3419 = vmax.f32 %v3417, %v3418
    %v3420 = vsel %vm2628, %v1775, -inf
    %v3421 = vrot.slane %v3420, 4
    %v3422 = vmax.f32 %v3420, %v3421
    %v3423 = vrot.slane %v3422, 2
    %v3424 = vmax.f32 %v3422, %v3423
    %v3425 = vrot.slane %v3424, 1
    %v3426 = vmax.f32 %v3424, %v3425
    %v3427 = vsel %vm2628, %v1774, -inf
    %v3428 = vrot.slane %v3427, 4
    %v3429 = vmax.f32 %v3427, %v3428
    %v3430 = vrot.slane %v3429, 2
    %v3431 = vmax.f32 %v3429, %v3430
    %v3432 = vrot.slane %v3431, 1
    %v3433 = vmax.f32 %v3431, %v3432
    %v3434 = vsel %vm2628, %v1776, -inf
    %v3435 = vrot.slane %v3434, 4
    %v3436 = vmax.f32 %v3434, %v3435
    %v3437 = vrot.slane %v3436, 2
    %v3438 = vmax.f32 %v3436, %v3437
    %v3439 = vrot.slane %v3438, 1
    %v3440 = vmax.f32 %v3438, %v3439
    %v3441 = vsel %vm2628, %v1784, -inf
    %v3442 = vrot.slane %v3441, 4
    %v3443 = vmax.f32 %v3441, %v3442
    %v3444 = vrot.slane %v3443, 2
    %v3445 = vmax.f32 %v3443, %v3444
    %v3446 = vrot.slane %v3445, 1
    %v3447 = vmax.f32 %v3445, %v3446
    %v3448 = vsel %vm2628, %v1792, -inf
    %v3449 = vrot.slane %v3448, 4
    %v3450 = vmax.f32 %v3448, %v3449
    %v3451 = vrot.slane %v3450, 2
    %v3452 = vmax.f32 %v3450, %v3451
    %v3453 = vrot.slane %v3452, 1
    %v3454 = vmax.f32 %v3452, %v3453
    %v3455 = vsel %vm2628, %v1791, -inf
    %v3456 = vrot.slane %v3455, 4
    %v3457 = vmax.f32 %v3455, %v3456
    %v3458 = vrot.slane %v3457, 2
    %v3459 = vmax.f32 %v3457, %v3458
    %v3460 = vrot.slane %v3459, 1
    %v3461 = vmax.f32 %v3459, %v3460
    %v3462 = vsel %vm2628, %v1793, -inf
    %v3463 = vrot.slane %v3462, 4
    %v3464 = vmax.f32 %v3462, %v3463
    %v3465 = vrot.slane %v3464, 2
    %v3466 = vmax.f32 %v3464, %v3465
    %v3467 = vrot.slane %v3466, 1
    %v3468 = vmax.f32 %v3466, %v3467
    %v3469 = vsel %vm2628, %v1801, -inf
    %v3470 = vrot.slane %v3469, 4
    %v3471 = vmax.f32 %v3469, %v3470
    %v3472 = vrot.slane %v3471, 2
    %v3473 = vmax.f32 %v3471, %v3472
    %v3474 = vrot.slane %v3473, 1
    %v3475 = vmax.f32 %v3473, %v3474
    %v3476 = vsel %vm2628, %v1809, -inf
    %v3477 = vrot.slane %v3476, 4
    %v3478 = vmax.f32 %v3476, %v3477
    %v3479 = vrot.slane %v3478, 2
    %v3480 = vmax.f32 %v3478, %v3479
    %v3481 = vrot.slane %v3480, 1
    %v3482 = vmax.f32 %v3480, %v3481
    %v3483 = vsel %vm2628, %v1808, -inf
    %v3484 = vrot.slane %v3483, 4
    %v3485 = vmax.f32 %v3483, %v3484
    %v3486 = vrot.slane %v3485, 2
    %v3487 = vmax.f32 %v3485, %v3486
    %v3488 = vrot.slane %v3487, 1
    %v3489 = vmax.f32 %v3487, %v3488
    %v3490 = vsel %vm2628, %v1810, -inf
    %v3491 = vrot.slane %v3490, 4
    %v3492 = vmax.f32 %v3490, %v3491
    %v3493 = vrot.slane %v3492, 2
    %v3494 = vmax.f32 %v3492, %v3493
    %v3495 = vrot.slane %v3494, 1
    %v3496 = vmax.f32 %v3494, %v3495
    %v3497 = vsel %vm2628, %v1818, -inf
    %v3498 = vrot.slane %v3497, 4
    %v3499 = vmax.f32 %v3497, %v3498
    %v3500 = vrot.slane %v3499, 2
    %v3501 = vmax.f32 %v3499, %v3500
    %v3502 = vrot.slane %v3501, 1
    %v3503 = vmax.f32 %v3501, %v3502
    %v3504 = vsel %vm2628, %v1826, -inf
    %v3505 = vrot.slane %v3504, 4
    %v3506 = vmax.f32 %v3504, %v3505
    %v3507 = vrot.slane %v3506, 2
    %v3508 = vmax.f32 %v3506, %v3507
    %v3509 = vrot.slane %v3508, 1
    %v3510 = vmax.f32 %v3508, %v3509
    %v3511 = vsel %vm2628, %v1825, -inf
    %v3512 = vrot.slane %v3511, 4
    %v3513 = vmax.f32 %v3511, %v3512
    %v3514 = vrot.slane %v3513, 2
    %v3515 = vmax.f32 %v3513, %v3514
    %v3516 = vrot.slane %v3515, 1
    %v3517 = vmax.f32 %v3515, %v3516
    %v3518 = vsel %vm2628, %v1827, -inf
    %v3519 = vrot.slane %v3518, 4
    %v3520 = vmax.f32 %v3518, %v3519
    %v3521 = vrot.slane %v3520, 2
    %v3522 = vmax.f32 %v3520, %v3521
    %v3523 = vrot.slane %v3522, 1
    %v3524 = vmax.f32 %v3522, %v3523
    %v3525 = vsel %vm2628, %v1835, -inf
    %v3526 = vrot.slane %v3525, 4
    %v3527 = vmax.f32 %v3525, %v3526
    %v3528 = vrot.slane %v3527, 2
    %v3529 = vmax.f32 %v3527, %v3528
    %v3530 = vrot.slane %v3529, 1
    %v3531 = vmax.f32 %v3529, %v3530
    %v3532 = vsel %vm2628, %v1843, -inf
    %v3533 = vrot.slane %v3532, 4
    %v3534 = vmax.f32 %v3532, %v3533
    %v3535 = vrot.slane %v3534, 2
    %v3536 = vmax.f32 %v3534, %v3535
    %v3537 = vrot.slane %v3536, 1
    %v3538 = vmax.f32 %v3536, %v3537
    %v3539 = vsel %vm2628, %v1842, -inf
    %v3540 = vrot.slane %v3539, 4
    %v3541 = vmax.f32 %v3539, %v3540
    %v3542 = vrot.slane %v3541, 2
    %v3543 = vmax.f32 %v3541, %v3542
    %v3544 = vrot.slane %v3543, 1
    %v3545 = vmax.f32 %v3543, %v3544
    %v3546 = vsel %vm2628, %v1844, -inf
    %v3547 = vrot.slane %v3546, 4
    %v3548 = vmax.f32 %v3546, %v3547
    %v3549 = vrot.slane %v3548, 2
    %v3550 = vmax.f32 %v3548, %v3549
    %v3551 = vrot.slane %v3550, 1
    %v3552 = vmax.f32 %v3550, %v3551
    %v3553 = vsel %vm2628, %v1852, -inf
    %v3554 = vrot.slane %v3553, 4
    %v3555 = vmax.f32 %v3553, %v3554
    %v3556 = vrot.slane %v3555, 2
    %v3557 = vmax.f32 %v3555, %v3556
    %v3558 = vrot.slane %v3557, 1
    %v3559 = vmax.f32 %v3557, %v3558
    %v3560 = vsel %vm2628, %v1860, -inf
    %v3561 = vrot.slane %v3560, 4
    %v3562 = vmax.f32 %v3560, %v3561
    %v3563 = vrot.slane %v3562, 2
    %v3564 = vmax.f32 %v3562, %v3563
    %v3565 = vrot.slane %v3564, 1
    %v3566 = vmax.f32 %v3564, %v3565
    %v3567 = vsel %vm2628, %v1859, -inf
    %v3568 = vrot.slane %v3567, 4
    %v3569 = vmax.f32 %v3567, %v3568
    %v3570 = vrot.slane %v3569, 2
    %v3571 = vmax.f32 %v3569, %v3570
    %v3572 = vrot.slane %v3571, 1
    %v3573 = vmax.f32 %v3571, %v3572
    %v3574 = vsel %vm2628, %v1861, -inf
    %v3575 = vrot.slane %v3574, 4
    %v3576 = vmax.f32 %v3574, %v3575
    %v3577 = vrot.slane %v3576, 2
    %v3578 = vmax.f32 %v3576, %v3577
    %v3579 = vrot.slane %v3578, 1
    %v3580 = vmax.f32 %v3578, %v3579
    %v3581 = vsel %vm2628, %v1869, -inf
    %v3582 = vrot.slane %v3581, 4
    %v3583 = vmax.f32 %v3581, %v3582
    %v3584 = vrot.slane %v3583, 2
    %v3585 = vmax.f32 %v3583, %v3584
    %v3586 = vrot.slane %v3585, 1
    %v3587 = vmax.f32 %v3585, %v3586
    %v3588 = vsel %vm2628, %v1877, -inf
    %v3589 = vrot.slane %v3588, 4
    %v3590 = vmax.f32 %v3588, %v3589
    %v3591 = vrot.slane %v3590, 2
    %v3592 = vmax.f32 %v3590, %v3591
    %v3593 = vrot.slane %v3592, 1
    %v3594 = vmax.f32 %v3592, %v3593
    %v3595 = vsel %vm2628, %v1876, -inf
    %v3596 = vrot.slane %v3595, 4
    %v3597 = vmax.f32 %v3595, %v3596
    %v3598 = vrot.slane %v3597, 2
    %v3599 = vmax.f32 %v3597, %v3598
    %v3600 = vrot.slane %v3599, 1
    %v3601 = vmax.f32 %v3599, %v3600
    %v3602 = vsel %vm2628, %v1878, -inf
    %v3603 = vrot.slane %v3602, 4
    %v3604 = vmax.f32 %v3602, %v3603
    %v3605 = vrot.slane %v3604, 2
    %v3606 = vmax.f32 %v3604, %v3605
    %v3607 = vrot.slane %v3606, 1
    %v3608 = vmax.f32 %v3606, %v3607
    %v3609 = vsel %vm2628, %v1886, -inf
    %v3610 = vrot.slane %v3609, 4
    %v3611 = vmax.f32 %v3609, %v3610
    %v3612 = vrot.slane %v3611, 2
    %v3613 = vmax.f32 %v3611, %v3612
    %v3614 = vrot.slane %v3613, 1
    %v3615 = vmax.f32 %v3613, %v3614
    %v3616 = vsel %vm2628, %v1894, -inf
    %v3617 = vrot.slane %v3616, 4
    %v3618 = vmax.f32 %v3616, %v3617
    %v3619 = vrot.slane %v3618, 2
    %v3620 = vmax.f32 %v3618, %v3619
    %v3621 = vrot.slane %v3620, 1
    %v3622 = vmax.f32 %v3620, %v3621
    %v3623 = vsel %vm2628, %v1893, -inf
    %v3624 = vrot.slane %v3623, 4
    %v3625 = vmax.f32 %v3623, %v3624
    %v3626 = vrot.slane %v3625, 2
    %v3627 = vmax.f32 %v3625, %v3626
    %v3628 = vrot.slane %v3627, 1
    %v3629 = vmax.f32 %v3627, %v3628
    %v3630 = vsel %vm2628, %v1895, -inf
    %v3631 = vrot.slane %v3630, 4
    %v3632 = vmax.f32 %v3630, %v3631
    %v3633 = vrot.slane %v3632, 2
    %v3634 = vmax.f32 %v3632, %v3633
    %v3635 = vrot.slane %v3634, 1
    %v3636 = vmax.f32 %v3634, %v3635
    %v3637 = vsel %vm2628, %v1903, -inf
    %v3638 = vrot.slane %v3637, 4
    %v3639 = vmax.f32 %v3637, %v3638
    %v3640 = vrot.slane %v3639, 2
    %v3641 = vmax.f32 %v3639, %v3640
    %v3642 = vrot.slane %v3641, 1
    %v3643 = vmax.f32 %v3641, %v3642
    %v3644 = vsel %vm2628, %v1911, -inf
    %v3645 = vrot.slane %v3644, 4
    %v3646 = vmax.f32 %v3644, %v3645
    %v3647 = vrot.slane %v3646, 2
    %v3648 = vmax.f32 %v3646, %v3647
    %v3649 = vrot.slane %v3648, 1
    %v3650 = vmax.f32 %v3648, %v3649
    %v3651 = vsel %vm2628, %v1910, -inf
    %v3652 = vrot.slane %v3651, 4
    %v3653 = vmax.f32 %v3651, %v3652
    %v3654 = vrot.slane %v3653, 2
    %v3655 = vmax.f32 %v3653, %v3654
    %v3656 = vrot.slane %v3655, 1
    %v3657 = vmax.f32 %v3655, %v3656
    %v3658 = vsel %vm2628, %v1912, -inf
    %v3659 = vrot.slane %v3658, 4
    %v3660 = vmax.f32 %v3658, %v3659
    %v3661 = vrot.slane %v3660, 2
    %v3662 = vmax.f32 %v3660, %v3661
    %v3663 = vrot.slane %v3662, 1
    %v3664 = vmax.f32 %v3662, %v3663
    %v3665 = vsel %vm2628, %v1920, -inf
    %v3666 = vrot.slane %v3665, 4
    %v3667 = vmax.f32 %v3665, %v3666
    %v3668 = vrot.slane %v3667, 2
    %v3669 = vmax.f32 %v3667, %v3668
    %v3670 = vrot.slane %v3669, 1
    %v3671 = vmax.f32 %v3669, %v3670
    %v3672 = vsel %vm2628, %v1928, -inf
    %v3673 = vrot.slane %v3672, 4
    %v3674 = vmax.f32 %v3672, %v3673
    %v3675 = vrot.slane %v3674, 2
    %v3676 = vmax.f32 %v3674, %v3675
    %v3677 = vrot.slane %v3676, 1
    %v3678 = vmax.f32 %v3676, %v3677
    %v3679 = vsel %vm2628, %v1927, -inf
    %v3680 = vrot.slane %v3679, 4
    %v3681 = vmax.f32 %v3679, %v3680
    %v3682 = vrot.slane %v3681, 2
    %v3683 = vmax.f32 %v3681, %v3682
    %v3684 = vrot.slane %v3683, 1
    %v3685 = vmax.f32 %v3683, %v3684
    %v3686 = vsel %vm2628, %v1929, -inf
    %v3687 = vrot.slane %v3686, 4
    %v3688 = vmax.f32 %v3686, %v3687
    %v3689 = vrot.slane %v3688, 2
    %v3690 = vmax.f32 %v3688, %v3689
    %v3691 = vrot.slane %v3690, 1
    %v3692 = vmax.f32 %v3690, %v3691
    %v3693 = vsel %vm2628, %v1937, -inf
    %v3694 = vrot.slane %v3693, 4
    %v3695 = vmax.f32 %v3693, %v3694
    %v3696 = vrot.slane %v3695, 2
    %v3697 = vmax.f32 %v3695, %v3696
    %v3698 = vrot.slane %v3697, 1
    %v3699 = vmax.f32 %v3697, %v3698
    %v3700 = vsel %vm2628, %v1945, -inf
    %v3701 = vrot.slane %v3700, 4
    %v3702 = vmax.f32 %v3700, %v3701
    %v3703 = vrot.slane %v3702, 2
    %v3704 = vmax.f32 %v3702, %v3703
    %v3705 = vrot.slane %v3704, 1
    %v3706 = vmax.f32 %v3704, %v3705
    %v3707 = vsel %vm2628, %v1944, -inf
    %v3708 = vrot.slane %v3707, 4
    %v3709 = vmax.f32 %v3707, %v3708
    %v3710 = vrot.slane %v3709, 2
    %v3711 = vmax.f32 %v3709, %v3710
    %v3712 = vrot.slane %v3711, 1
    %v3713 = vmax.f32 %v3711, %v3712
    %v3714 = vsel %vm2628, %v1946, -inf
    %v3715 = vrot.slane %v3714, 4
    %v3716 = vmax.f32 %v3714, %v3715
    %v3717 = vrot.slane %v3716, 2
    %v3718 = vmax.f32 %v3716, %v3717
    %v3719 = vrot.slane %v3718, 1
    %v3720 = vmax.f32 %v3718, %v3719
    %v3721 = vsel %vm2628, %v1954, -inf
    %v3722 = vrot.slane %v3721, 4
    %v3723 = vmax.f32 %v3721, %v3722
    %v3724 = vrot.slane %v3723, 2
    %v3725 = vmax.f32 %v3723, %v3724
    %v3726 = vrot.slane %v3725, 1
    %v3727 = vmax.f32 %v3725, %v3726
    %v3728 = vsel %vm2628, %v1962, -inf
    %v3729 = vrot.slane %v3728, 4
    %v3730 = vmax.f32 %v3728, %v3729
    %v3731 = vrot.slane %v3730, 2
    %v3732 = vmax.f32 %v3730, %v3731
    %v3733 = vrot.slane %v3732, 1
    %v3734 = vmax.f32 %v3732, %v3733
    %v3735 = vsel %vm2628, %v1961, -inf
    %v3736 = vrot.slane %v3735, 4
    %v3737 = vmax.f32 %v3735, %v3736
    %v3738 = vrot.slane %v3737, 2
    %v3739 = vmax.f32 %v3737, %v3738
    %v3740 = vrot.slane %v3739, 1
    %v3741 = vmax.f32 %v3739, %v3740
    %v3742 = vsel %vm2628, %v1963, -inf
    %v3743 = vrot.slane %v3742, 4
    %v3744 = vmax.f32 %v3742, %v3743
    %v3745 = vrot.slane %v3744, 2
    %v3746 = vmax.f32 %v3744, %v3745
    %v3747 = vrot.slane %v3746, 1
    %v3748 = vmax.f32 %v3746, %v3747
    %v3749 = vsel %vm2628, %v1971, -inf
    %v3750 = vrot.slane %v3749, 4
    %v3751 = vmax.f32 %v3749, %v3750
    %v3752 = vrot.slane %v3751, 2
    %v3753 = vmax.f32 %v3751, %v3752
    %v3754 = vrot.slane %v3753, 1
    %v3755 = vmax.f32 %v3753, %v3754
    %v3756 = vsel %vm2628, %v1979, -inf
    %v3757 = vrot.slane %v3756, 4
    %v3758 = vmax.f32 %v3756, %v3757
    %v3759 = vrot.slane %v3758, 2
    %v3760 = vmax.f32 %v3758, %v3759
    %v3761 = vrot.slane %v3760, 1
    %v3762 = vmax.f32 %v3760, %v3761
    %v3763 = vsel %vm2628, %v1978, -inf
    %v3764 = vrot.slane %v3763, 4
    %v3765 = vmax.f32 %v3763, %v3764
    %v3766 = vrot.slane %v3765, 2
    %v3767 = vmax.f32 %v3765, %v3766
    %v3768 = vrot.slane %v3767, 1
    %v3769 = vmax.f32 %v3767, %v3768
    %v3770 = vsel %vm2628, %v1980, -inf
    %v3771 = vrot.slane %v3770, 4
    %v3772 = vmax.f32 %v3770, %v3771
    %v3773 = vrot.slane %v3772, 2
    %v3774 = vmax.f32 %v3772, %v3773
    %v3775 = vrot.slane %v3774, 1
    %v3776 = vmax.f32 %v3774, %v3775
    %v3777 = vsel %vm2628, %v1988, -inf
    %v3778 = vrot.slane %v3777, 4
    %v3779 = vmax.f32 %v3777, %v3778
    %v3780 = vrot.slane %v3779, 2
    %v3781 = vmax.f32 %v3779, %v3780
    %v3782 = vrot.slane %v3781, 1
    %v3783 = vmax.f32 %v3781, %v3782
    %v3784 = vsel %vm2628, %v1996, -inf
    %v3785 = vrot.slane %v3784, 4
    %v3786 = vmax.f32 %v3784, %v3785
    %v3787 = vrot.slane %v3786, 2
    %v3788 = vmax.f32 %v3786, %v3787
    %v3789 = vrot.slane %v3788, 1
    %v3790 = vmax.f32 %v3788, %v3789
    %v3791 = vsel %vm2628, %v1995, -inf
    %v3792 = vrot.slane %v3791, 4
    %v3793 = vmax.f32 %v3791, %v3792
    %v3794 = vrot.slane %v3793, 2
    %v3795 = vmax.f32 %v3793, %v3794
    %v3796 = vrot.slane %v3795, 1
    %v3797 = vmax.f32 %v3795, %v3796
    %v3798 = vsel %vm2628, %v1997, -inf
    %v3799 = vrot.slane %v3798, 4
    %v3800 = vmax.f32 %v3798, %v3799
    %v3801 = vrot.slane %v3800, 2
    %v3802 = vmax.f32 %v3800, %v3801
    %v3803 = vrot.slane %v3802, 1
    %v3804 = vmax.f32 %v3802, %v3803
    %v3805 = vsel %vm2628, %v2005, -inf
    %v3806 = vrot.slane %v3805, 4
    %v3807 = vmax.f32 %v3805, %v3806
    %v3808 = vrot.slane %v3807, 2
    %v3809 = vmax.f32 %v3807, %v3808
    %v3810 = vrot.slane %v3809, 1
    %v3811 = vmax.f32 %v3809, %v3810
    %v3812 = vsel %vm2628, %v2013, -inf
    %v3813 = vrot.slane %v3812, 4
    %v3814 = vmax.f32 %v3812, %v3813
    %v3815 = vrot.slane %v3814, 2
    %v3816 = vmax.f32 %v3814, %v3815
    %v3817 = vrot.slane %v3816, 1
    %v3818 = vmax.f32 %v3816, %v3817
    %v3819 = vsel %vm2628, %v2012, -inf
    %v3820 = vrot.slane %v3819, 4
    %v3821 = vmax.f32 %v3819, %v3820
    %v3822 = vrot.slane %v3821, 2
    %v3823 = vmax.f32 %v3821, %v3822
    %v3824 = vrot.slane %v3823, 1
    %v3825 = vmax.f32 %v3823, %v3824
    %v3826 = vsel %vm2628, %v2014, -inf
    %v3827 = vrot.slane %v3826, 4
    %v3828 = vmax.f32 %v3826, %v3827
    %v3829 = vrot.slane %v3828, 2
    %v3830 = vmax.f32 %v3828, %v3829
    %v3831 = vrot.slane %v3830, 1
    %v3832 = vmax.f32 %v3830, %v3831
    %v3833 = vsel %vm2628, %v2022, -inf
    %v3834 = vrot.slane %v3833, 4
    %v3835 = vmax.f32 %v3833, %v3834
    %v3836 = vrot.slane %v3835, 2
    %v3837 = vmax.f32 %v3835, %v3836
    %v3838 = vrot.slane %v3837, 1
    %v3839 = vmax.f32 %v3837, %v3838
    %v3840 = vsel %vm2628, %v2030, -inf
    %v3841 = vrot.slane %v3840, 4
    %v3842 = vmax.f32 %v3840, %v3841
    %v3843 = vrot.slane %v3842, 2
    %v3844 = vmax.f32 %v3842, %v3843
    %v3845 = vrot.slane %v3844, 1
    %v3846 = vmax.f32 %v3844, %v3845
    %v3847 = vsel %vm2628, %v2029, -inf
    %v3848 = vrot.slane %v3847, 4
    %v3849 = vmax.f32 %v3847, %v3848
    %v3850 = vrot.slane %v3849, 2
    %v3851 = vmax.f32 %v3849, %v3850
    %v3852 = vrot.slane %v3851, 1
    %v3853 = vmax.f32 %v3851, %v3852
    %v3854 = vsel %vm2628, %v2031, -inf
    %v3855 = vrot.slane %v3854, 4
    %v3856 = vmax.f32 %v3854, %v3855
    %v3857 = vrot.slane %v3856, 2
    %v3858 = vmax.f32 %v3856, %v3857
    %v3859 = vrot.slane %v3858, 1
    %v3860 = vmax.f32 %v3858, %v3859
    %v3861 = vsel %vm2628, %v2039, -inf
    %v3862 = vrot.slane %v3861, 4
    %v3863 = vmax.f32 %v3861, %v3862
    %v3864 = vrot.slane %v3863, 2
    %v3865 = vmax.f32 %v3863, %v3864
    %v3866 = vrot.slane %v3865, 1
    %v3867 = vmax.f32 %v3865, %v3866
    %v3868 = vsel %vm2628, %v2047, -inf
    %v3869 = vrot.slane %v3868, 4
    %v3870 = vmax.f32 %v3868, %v3869
    %v3871 = vrot.slane %v3870, 2
    %v3872 = vmax.f32 %v3870, %v3871
    %v3873 = vrot.slane %v3872, 1
    %v3874 = vmax.f32 %v3872, %v3873
    %v3875 = vsel %vm2628, %v2046, -inf
    %v3876 = vrot.slane %v3875, 4
    %v3877 = vmax.f32 %v3875, %v3876
    %v3878 = vrot.slane %v3877, 2
    %v3879 = vmax.f32 %v3877, %v3878
    %v3880 = vrot.slane %v3879, 1
    %v3881 = vmax.f32 %v3879, %v3880
    %v3882 = vsel %vm2628, %v2048, -inf
    %v3883 = vrot.slane %v3882, 4
    %v3884 = vmax.f32 %v3882, %v3883
    %v3885 = vrot.slane %v3884, 2
    %v3886 = vmax.f32 %v3884, %v3885
    %v3887 = vrot.slane %v3886, 1
    %v3888 = vmax.f32 %v3886, %v3887
    %v3889 = vsel %vm2628, %v2056, -inf
    %v3890 = vrot.slane %v3889, 4
    %v3891 = vmax.f32 %v3889, %v3890
    %v3892 = vrot.slane %v3891, 2
    %v3893 = vmax.f32 %v3891, %v3892
    %v3894 = vrot.slane %v3893, 1
    %v3895 = vmax.f32 %v3893, %v3894
    %v3896 = vsel %vm2628, %v2064, -inf
    %v3897 = vrot.slane %v3896, 4
    %v3898 = vmax.f32 %v3896, %v3897
    %v3899 = vrot.slane %v3898, 2
    %v3900 = vmax.f32 %v3898, %v3899
    %v3901 = vrot.slane %v3900, 1
    %v3902 = vmax.f32 %v3900, %v3901
    %v3903 = vsel %vm2628, %v2063, -inf
    %v3904 = vrot.slane %v3903, 4
    %v3905 = vmax.f32 %v3903, %v3904
    %v3906 = vrot.slane %v3905, 2
    %v3907 = vmax.f32 %v3905, %v3906
    %v3908 = vrot.slane %v3907, 1
    %v3909 = vmax.f32 %v3907, %v3908
    %v3910 = vsel %vm2628, %v2065, -inf
    %v3911 = vrot.slane %v3910, 4
    %v3912 = vmax.f32 %v3910, %v3911
    %v3913 = vrot.slane %v3912, 2
    %v3914 = vmax.f32 %v3912, %v3913
    %v3915 = vrot.slane %v3914, 1
    %v3916 = vmax.f32 %v3914, %v3915
    %v3917 = vsel %vm2628, %v2073, -inf
    %v3918 = vrot.slane %v3917, 4
    %v3919 = vmax.f32 %v3917, %v3918
    %v3920 = vrot.slane %v3919, 2
    %v3921 = vmax.f32 %v3919, %v3920
    %v3922 = vrot.slane %v3921, 1
    %v3923 = vmax.f32 %v3921, %v3922
    %v3924 = vsel %vm2628, %v2081, -inf
    %v3925 = vrot.slane %v3924, 4
    %v3926 = vmax.f32 %v3924, %v3925
    %v3927 = vrot.slane %v3926, 2
    %v3928 = vmax.f32 %v3926, %v3927
    %v3929 = vrot.slane %v3928, 1
    %v3930 = vmax.f32 %v3928, %v3929
    %v3931 = vsel %vm2628, %v2080, -inf
    %v3932 = vrot.slane %v3931, 4
    %v3933 = vmax.f32 %v3931, %v3932
    %v3934 = vrot.slane %v3933, 2
    %v3935 = vmax.f32 %v3933, %v3934
    %v3936 = vrot.slane %v3935, 1
    %v3937 = vmax.f32 %v3935, %v3936
    %v3938 = vsel %vm2628, %v2082, -inf
    %v3939 = vrot.slane %v3938, 4
    %v3940 = vmax.f32 %v3938, %v3939
    %v3941 = vrot.slane %v3940, 2
    %v3942 = vmax.f32 %v3940, %v3941
    %v3943 = vrot.slane %v3942, 1
    %v3944 = vmax.f32 %v3942, %v3943
    %v3945 = vsel %vm2628, %v2090, -inf
    %v3946 = vrot.slane %v3945, 4
    %v3947 = vmax.f32 %v3945, %v3946
    %v3948 = vrot.slane %v3947, 2
    %v3949 = vmax.f32 %v3947, %v3948
    %v3950 = vrot.slane %v3949, 1
    %v3951 = vmax.f32 %v3949, %v3950
    %v3952 = vsel %vm2628, %v2098, -inf
    %v3953 = vrot.slane %v3952, 4
    %v3954 = vmax.f32 %v3952, %v3953
    %v3955 = vrot.slane %v3954, 2
    %v3956 = vmax.f32 %v3954, %v3955
    %v3957 = vrot.slane %v3956, 1
    %v3958 = vmax.f32 %v3956, %v3957
    %v3959 = vsel %vm2628, %v2097, -inf
    %v3960 = vrot.slane %v3959, 4
    %v3961 = vmax.f32 %v3959, %v3960
    %v3962 = vrot.slane %v3961, 2
    %v3963 = vmax.f32 %v3961, %v3962
    %v3964 = vrot.slane %v3963, 1
    %v3965 = vmax.f32 %v3963, %v3964
    %v3966 = vsel %vm2628, %v2099, -inf
    %v3967 = vrot.slane %v3966, 4
    %v3968 = vmax.f32 %v3966, %v3967
    %v3969 = vrot.slane %v3968, 2
    %v3970 = vmax.f32 %v3968, %v3969
    %v3971 = vrot.slane %v3970, 1
    %v3972 = vmax.f32 %v3970, %v3971
    %v3973 = vsel %vm2628, %v2107, -inf
    %v3974 = vrot.slane %v3973, 4
    %v3975 = vmax.f32 %v3973, %v3974
    %v3976 = vrot.slane %v3975, 2
    %v3977 = vmax.f32 %v3975, %v3976
    %v3978 = vrot.slane %v3977, 1
    %v3979 = vmax.f32 %v3977, %v3978
    %v3980 = vsel %vm2628, %v2115, -inf
    %v3981 = vrot.slane %v3980, 4
    %v3982 = vmax.f32 %v3980, %v3981
    %v3983 = vrot.slane %v3982, 2
    %v3984 = vmax.f32 %v3982, %v3983
    %v3985 = vrot.slane %v3984, 1
    %v3986 = vmax.f32 %v3984, %v3985
    %v3987 = vsel %vm2628, %v2114, -inf
    %v3988 = vrot.slane %v3987, 4
    %v3989 = vmax.f32 %v3987, %v3988
    %v3990 = vrot.slane %v3989, 2
    %v3991 = vmax.f32 %v3989, %v3990
    %v3992 = vrot.slane %v3991, 1
    %v3993 = vmax.f32 %v3991, %v3992
    %v3994 = vsel %vm2628, %v2116, -inf
    %v3995 = vrot.slane %v3994, 4
    %v3996 = vmax.f32 %v3994, %v3995
    %v3997 = vrot.slane %v3996, 2
    %v3998 = vmax.f32 %v3996, %v3997
    %v3999 = vrot.slane %v3998, 1
    %v4000 = vmax.f32 %v3998, %v3999
    %v4001 = vsel %vm2628, %v2124, -inf
    %v4002 = vrot.slane %v4001, 4
    %v4003 = vmax.f32 %v4001, %v4002
    %v4004 = vrot.slane %v4003, 2
    %v4005 = vmax.f32 %v4003, %v4004
    %v4006 = vrot.slane %v4005, 1
    %v4007 = vmax.f32 %v4005, %v4006
    %v4008 = vsel %vm2628, %v2132, -inf
    %v4009 = vrot.slane %v4008, 4
    %v4010 = vmax.f32 %v4008, %v4009
    %v4011 = vrot.slane %v4010, 2
    %v4012 = vmax.f32 %v4010, %v4011
    %v4013 = vrot.slane %v4012, 1
    %v4014 = vmax.f32 %v4012, %v4013
    %v4015 = vsel %vm2628, %v2131, -inf
    %v4016 = vrot.slane %v4015, 4
    %v4017 = vmax.f32 %v4015, %v4016
    %v4018 = vrot.slane %v4017, 2
    %v4019 = vmax.f32 %v4017, %v4018
    %v4020 = vrot.slane %v4019, 1
    %v4021 = vmax.f32 %v4019, %v4020
    %v4022 = vsel %vm2628, %v2133, -inf
    %v4023 = vrot.slane %v4022, 4
    %v4024 = vmax.f32 %v4022, %v4023
    %v4025 = vrot.slane %v4024, 2
    %v4026 = vmax.f32 %v4024, %v4025
    %v4027 = vrot.slane %v4026, 1
    %v4028 = vmax.f32 %v4026, %v4027
    %v4029 = vsel %vm2628, %v2141, -inf
    %v4030 = vrot.slane %v4029, 4
    %v4031 = vmax.f32 %v4029, %v4030
    %v4032 = vrot.slane %v4031, 2
    %v4033 = vmax.f32 %v4031, %v4032
    %v4034 = vrot.slane %v4033, 1
    %v4035 = vmax.f32 %v4033, %v4034
    %v4036 = vsel %vm2628, %v2149, -inf
    %v4037 = vrot.slane %v4036, 4
    %v4038 = vmax.f32 %v4036, %v4037
    %v4039 = vrot.slane %v4038, 2
    %v4040 = vmax.f32 %v4038, %v4039
    %v4041 = vrot.slane %v4040, 1
    %v4042 = vmax.f32 %v4040, %v4041
    %v4043 = vsel %vm2628, %v2148, -inf
    %v4044 = vrot.slane %v4043, 4
    %v4045 = vmax.f32 %v4043, %v4044
    %v4046 = vrot.slane %v4045, 2
    %v4047 = vmax.f32 %v4045, %v4046
    %v4048 = vrot.slane %v4047, 1
    %v4049 = vmax.f32 %v4047, %v4048
    %v4050 = vsel %vm2628, %v2150, -inf
    %v4051 = vrot.slane %v4050, 4
    %v4052 = vmax.f32 %v4050, %v4051
    %v4053 = vrot.slane %v4052, 2
    %v4054 = vmax.f32 %v4052, %v4053
    %v4055 = vrot.slane %v4054, 1
    %v4056 = vmax.f32 %v4054, %v4055
    %v4057 = vsel %vm2628, %v2158, -inf
    %v4058 = vrot.slane %v4057, 4
    %v4059 = vmax.f32 %v4057, %v4058
    %v4060 = vrot.slane %v4059, 2
    %v4061 = vmax.f32 %v4059, %v4060
    %v4062 = vrot.slane %v4061, 1
    %v4063 = vmax.f32 %v4061, %v4062
    %v4064 = vsel %vm2628, %v2166, -inf
    %v4065 = vrot.slane %v4064, 4
    %v4066 = vmax.f32 %v4064, %v4065
    %v4067 = vrot.slane %v4066, 2
    %v4068 = vmax.f32 %v4066, %v4067
    %v4069 = vrot.slane %v4068, 1
    %v4070 = vmax.f32 %v4068, %v4069
    %v4071 = vsel %vm2628, %v2165, -inf
    %v4072 = vrot.slane %v4071, 4
    %v4073 = vmax.f32 %v4071, %v4072
    %v4074 = vrot.slane %v4073, 2
    %v4075 = vmax.f32 %v4073, %v4074
    %v4076 = vrot.slane %v4075, 1
    %v4077 = vmax.f32 %v4075, %v4076
    %v4078 = vsel %vm2628, %v2167, -inf
    %v4079 = vrot.slane %v4078, 4
    %v4080 = vmax.f32 %v4078, %v4079
    %v4081 = vrot.slane %v4080, 2
    %v4082 = vmax.f32 %v4080, %v4081
    %v4083 = vrot.slane %v4082, 1
    %v4084 = vmax.f32 %v4082, %v4083
    %v4085 = vsel %vm2628, %v2175, -inf
    %v4086 = vrot.slane %v4085, 4
    %v4087 = vmax.f32 %v4085, %v4086
    %v4088 = vrot.slane %v4087, 2
    %v4089 = vmax.f32 %v4087, %v4088
    %v4090 = vrot.slane %v4089, 1
    %v4091 = vmax.f32 %v4089, %v4090
    %v4092 = vsel %vm2628, %v2183, -inf
    %v4093 = vrot.slane %v4092, 4
    %v4094 = vmax.f32 %v4092, %v4093
    %v4095 = vrot.slane %v4094, 2
    %v4096 = vmax.f32 %v4094, %v4095
    %v4097 = vrot.slane %v4096, 1
    %v4098 = vmax.f32 %v4096, %v4097
    %v4099 = vsel %vm2628, %v2182, -inf
    %v4100 = vrot.slane %v4099, 4
    %v4101 = vmax.f32 %v4099, %v4100
    %v4102 = vrot.slane %v4101, 2
    %v4103 = vmax.f32 %v4101, %v4102
    %v4104 = vrot.slane %v4103, 1
    %v4105 = vmax.f32 %v4103, %v4104
    %v4106 = vsel %vm2628, %v2184, -inf
    %v4107 = vrot.slane %v4106, 4
    %v4108 = vmax.f32 %v4106, %v4107
    %v4109 = vrot.slane %v4108, 2
    %v4110 = vmax.f32 %v4108, %v4109
    %v4111 = vrot.slane %v4110, 1
    %v4112 = vmax.f32 %v4110, %v4111
    %v4113 = vsel %vm2628, %v2192, -inf
    %v4114 = vrot.slane %v4113, 4
    %v4115 = vmax.f32 %v4113, %v4114
    %v4116 = vrot.slane %v4115, 2
    %v4117 = vmax.f32 %v4115, %v4116
    %v4118 = vrot.slane %v4117, 1
    %v4119 = vmax.f32 %v4117, %v4118
    %v4120 = vsel %vm2628, %v2200, -inf
    %v4121 = vrot.slane %v4120, 4
    %v4122 = vmax.f32 %v4120, %v4121
    %v4123 = vrot.slane %v4122, 2
    %v4124 = vmax.f32 %v4122, %v4123
    %v4125 = vrot.slane %v4124, 1
    %v4126 = vmax.f32 %v4124, %v4125
    %v4127 = vsel %vm2628, %v2199, -inf
    %v4128 = vrot.slane %v4127, 4
    %v4129 = vmax.f32 %v4127, %v4128
    %v4130 = vrot.slane %v4129, 2
    %v4131 = vmax.f32 %v4129, %v4130
    %v4132 = vrot.slane %v4131, 1
    %v4133 = vmax.f32 %v4131, %v4132
    %v4134 = vsel %vm2628, %v2201, -inf
    %v4135 = vrot.slane %v4134, 4
    %v4136 = vmax.f32 %v4134, %v4135
    %v4137 = vrot.slane %v4136, 2
    %v4138 = vmax.f32 %v4136, %v4137
    %v4139 = vrot.slane %v4138, 1
    %v4140 = vmax.f32 %v4138, %v4139
    %v4141 = vsel %vm2628, %v2209, -inf
    %v4142 = vrot.slane %v4141, 4
    %v4143 = vmax.f32 %v4141, %v4142
    %v4144 = vrot.slane %v4143, 2
    %v4145 = vmax.f32 %v4143, %v4144
    %v4146 = vrot.slane %v4145, 1
    %v4147 = vmax.f32 %v4145, %v4146
    %v4148 = vsel %vm2628, %v2217, -inf
    %v4149 = vrot.slane %v4148, 4
    %v4150 = vmax.f32 %v4148, %v4149
    %v4151 = vrot.slane %v4150, 2
    %v4152 = vmax.f32 %v4150, %v4151
    %v4153 = vrot.slane %v4152, 1
    %v4154 = vmax.f32 %v4152, %v4153
    %v4155 = vsel %vm2628, %v2216, -inf
    %v4156 = vrot.slane %v4155, 4
    %v4157 = vmax.f32 %v4155, %v4156
    %v4158 = vrot.slane %v4157, 2
    %v4159 = vmax.f32 %v4157, %v4158
    %v4160 = vrot.slane %v4159, 1
    %v4161 = vmax.f32 %v4159, %v4160
    %v4162 = vsel %vm2628, %v2218, -inf
    %v4163 = vrot.slane %v4162, 4
    %v4164 = vmax.f32 %v4162, %v4163
    %v4165 = vrot.slane %v4164, 2
    %v4166 = vmax.f32 %v4164, %v4165
    %v4167 = vrot.slane %v4166, 1
    %v4168 = vmax.f32 %v4166, %v4167
    %v4169 = vsel %vm2628, %v2226, -inf
    %v4170 = vrot.slane %v4169, 4
    %v4171 = vmax.f32 %v4169, %v4170
    %v4172 = vrot.slane %v4171, 2
    %v4173 = vmax.f32 %v4171, %v4172
    %v4174 = vrot.slane %v4173, 1
    %v4175 = vmax.f32 %v4173, %v4174
    %v4176 = vsel %vm2628, %v2234, -inf
    %v4177 = vrot.slane %v4176, 4
    %v4178 = vmax.f32 %v4176, %v4177
    %v4179 = vrot.slane %v4178, 2
    %v4180 = vmax.f32 %v4178, %v4179
    %v4181 = vrot.slane %v4180, 1
    %v4182 = vmax.f32 %v4180, %v4181
    %v4183 = vsel %vm2628, %v2233, -inf
    %v4184 = vrot.slane %v4183, 4
    %v4185 = vmax.f32 %v4183, %v4184
    %v4186 = vrot.slane %v4185, 2
    %v4187 = vmax.f32 %v4185, %v4186
    %v4188 = vrot.slane %v4187, 1
    %v4189 = vmax.f32 %v4187, %v4188
    %v4190 = vsel %vm2628, %v2235, -inf
    %v4191 = vrot.slane %v4190, 4
    %v4192 = vmax.f32 %v4190, %v4191
    %v4193 = vrot.slane %v4192, 2
    %v4194 = vmax.f32 %v4192, %v4193
    %v4195 = vrot.slane %v4194, 1
    %v4196 = vmax.f32 %v4194, %v4195
    %v4197 = vsel %vm2628, %v2243, -inf
    %v4198 = vrot.slane %v4197, 4
    %v4199 = vmax.f32 %v4197, %v4198
    %v4200 = vrot.slane %v4199, 2
    %v4201 = vmax.f32 %v4199, %v4200
    %v4202 = vrot.slane %v4201, 1
    %v4203 = vmax.f32 %v4201, %v4202
    %v4204 = vsel %vm2628, %v2251, -inf
    %v4205 = vrot.slane %v4204, 4
    %v4206 = vmax.f32 %v4204, %v4205
    %v4207 = vrot.slane %v4206, 2
    %v4208 = vmax.f32 %v4206, %v4207
    %v4209 = vrot.slane %v4208, 1
    %v4210 = vmax.f32 %v4208, %v4209
    %v4211 = vsel %vm2628, %v2250, -inf
    %v4212 = vrot.slane %v4211, 4
    %v4213 = vmax.f32 %v4211, %v4212
    %v4214 = vrot.slane %v4213, 2
    %v4215 = vmax.f32 %v4213, %v4214
    %v4216 = vrot.slane %v4215, 1
    %v4217 = vmax.f32 %v4215, %v4216
    %v4218 = vsel %vm2628, %v2252, -inf
    %v4219 = vrot.slane %v4218, 4
    %v4220 = vmax.f32 %v4218, %v4219
    %v4221 = vrot.slane %v4220, 2
    %v4222 = vmax.f32 %v4220, %v4221
    %v4223 = vrot.slane %v4222, 1
    %v4224 = vmax.f32 %v4222, %v4223
    %v4225 = vsel %vm2628, %v2260, -inf
    %v4226 = vrot.slane %v4225, 4
    %v4227 = vmax.f32 %v4225, %v4226
    %v4228 = vrot.slane %v4227, 2
    %v4229 = vmax.f32 %v4227, %v4228
    %v4230 = vrot.slane %v4229, 1
    %v4231 = vmax.f32 %v4229, %v4230
    %v4232 = vsel %vm2628, %v2268, -inf
    %v4233 = vrot.slane %v4232, 4
    %v4234 = vmax.f32 %v4232, %v4233
    %v4235 = vrot.slane %v4234, 2
    %v4236 = vmax.f32 %v4234, %v4235
    %v4237 = vrot.slane %v4236, 1
    %v4238 = vmax.f32 %v4236, %v4237
    %v4239 = vsel %vm2628, %v2267, -inf
    %v4240 = vrot.slane %v4239, 4
    %v4241 = vmax.f32 %v4239, %v4240
    %v4242 = vrot.slane %v4241, 2
    %v4243 = vmax.f32 %v4241, %v4242
    %v4244 = vrot.slane %v4243, 1
    %v4245 = vmax.f32 %v4243, %v4244
    %v4246 = vsel %vm2628, %v2269, -inf
    %v4247 = vrot.slane %v4246, 4
    %v4248 = vmax.f32 %v4246, %v4247
    %v4249 = vrot.slane %v4248, 2
    %v4250 = vmax.f32 %v4248, %v4249
    %v4251 = vrot.slane %v4250, 1
    %v4252 = vmax.f32 %v4250, %v4251
    %v4253 = vsel %vm2628, %v2277, -inf
    %v4254 = vrot.slane %v4253, 4
    %v4255 = vmax.f32 %v4253, %v4254
    %v4256 = vrot.slane %v4255, 2
    %v4257 = vmax.f32 %v4255, %v4256
    %v4258 = vrot.slane %v4257, 1
    %v4259 = vmax.f32 %v4257, %v4258
    %v4260 = vsel %vm2628, %v2285, -inf
    %v4261 = vrot.slane %v4260, 4
    %v4262 = vmax.f32 %v4260, %v4261
    %v4263 = vrot.slane %v4262, 2
    %v4264 = vmax.f32 %v4262, %v4263
    %v4265 = vrot.slane %v4264, 1
    %v4266 = vmax.f32 %v4264, %v4265
    %v4267 = vsel %vm2628, %v2284, -inf
    %v4268 = vrot.slane %v4267, 4
    %v4269 = vmax.f32 %v4267, %v4268
    %v4270 = vrot.slane %v4269, 2
    %v4271 = vmax.f32 %v4269, %v4270
    %v4272 = vrot.slane %v4271, 1
    %v4273 = vmax.f32 %v4271, %v4272
    %v4274 = vsel %vm2628, %v2286, -inf
    %v4275 = vrot.slane %v4274, 4
    %v4276 = vmax.f32 %v4274, %v4275
    %v4277 = vrot.slane %v4276, 2
    %v4278 = vmax.f32 %v4276, %v4277
    %v4279 = vrot.slane %v4278, 1
    %v4280 = vmax.f32 %v4278, %v4279
    %v4281 = vsel %vm2628, %v2294, -inf
    %v4282 = vrot.slane %v4281, 4
    %v4283 = vmax.f32 %v4281, %v4282
    %v4284 = vrot.slane %v4283, 2
    %v4285 = vmax.f32 %v4283, %v4284
    %v4286 = vrot.slane %v4285, 1
    %v4287 = vmax.f32 %v4285, %v4286
    %v4288 = vsel %vm2628, %v2302, -inf
    %v4289 = vrot.slane %v4288, 4
    %v4290 = vmax.f32 %v4288, %v4289
    %v4291 = vrot.slane %v4290, 2
    %v4292 = vmax.f32 %v4290, %v4291
    %v4293 = vrot.slane %v4292, 1
    %v4294 = vmax.f32 %v4292, %v4293
    %v4295 = vsel %vm2628, %v2301, -inf
    %v4296 = vrot.slane %v4295, 4
    %v4297 = vmax.f32 %v4295, %v4296
    %v4298 = vrot.slane %v4297, 2
    %v4299 = vmax.f32 %v4297, %v4298
    %v4300 = vrot.slane %v4299, 1
    %v4301 = vmax.f32 %v4299, %v4300
    %v4302 = vsel %vm2628, %v2303, -inf
    %v4303 = vrot.slane %v4302, 4
    %v4304 = vmax.f32 %v4302, %v4303
    %v4305 = vrot.slane %v4304, 2
    %v4306 = vmax.f32 %v4304, %v4305
    %v4307 = vrot.slane %v4306, 1
    %v4308 = vmax.f32 %v4306, %v4307
    %v4309 = vsel %vm2628, %v2311, -inf
    %v4310 = vrot.slane %v4309, 4
    %v4311 = vmax.f32 %v4309, %v4310
    %v4312 = vrot.slane %v4311, 2
    %v4313 = vmax.f32 %v4311, %v4312
    %v4314 = vrot.slane %v4313, 1
    %v4315 = vmax.f32 %v4313, %v4314
    %v4316 = vsel %vm2628, %v2319, -inf
    %v4317 = vrot.slane %v4316, 4
    %v4318 = vmax.f32 %v4316, %v4317
    %v4319 = vrot.slane %v4318, 2
    %v4320 = vmax.f32 %v4318, %v4319
    %v4321 = vrot.slane %v4320, 1
    %v4322 = vmax.f32 %v4320, %v4321
    %v4323 = vsel %vm2628, %v2318, -inf
    %v4324 = vrot.slane %v4323, 4
    %v4325 = vmax.f32 %v4323, %v4324
    %v4326 = vrot.slane %v4325, 2
    %v4327 = vmax.f32 %v4325, %v4326
    %v4328 = vrot.slane %v4327, 1
    %v4329 = vmax.f32 %v4327, %v4328
    %v4330 = vsel %vm2628, %v2320, -inf
    %v4331 = vrot.slane %v4330, 4
    %v4332 = vmax.f32 %v4330, %v4331
    %v4333 = vrot.slane %v4332, 2
    %v4334 = vmax.f32 %v4332, %v4333
    %v4335 = vrot.slane %v4334, 1
    %v4336 = vmax.f32 %v4334, %v4335
    %v4337 = vsel %vm2628, %v2328, -inf
    %v4338 = vrot.slane %v4337, 4
    %v4339 = vmax.f32 %v4337, %v4338
    %v4340 = vrot.slane %v4339, 2
    %v4341 = vmax.f32 %v4339, %v4340
    %v4342 = vrot.slane %v4341, 1
    %v4343 = vmax.f32 %v4341, %v4342
    %v4344 = vsel %vm2628, %v2336, -inf
    %v4345 = vrot.slane %v4344, 4
    %v4346 = vmax.f32 %v4344, %v4345
    %v4347 = vrot.slane %v4346, 2
    %v4348 = vmax.f32 %v4346, %v4347
    %v4349 = vrot.slane %v4348, 1
    %v4350 = vmax.f32 %v4348, %v4349
    %v4351 = vsel %vm2628, %v2335, -inf
    %v4352 = vrot.slane %v4351, 4
    %v4353 = vmax.f32 %v4351, %v4352
    %v4354 = vrot.slane %v4353, 2
    %v4355 = vmax.f32 %v4353, %v4354
    %v4356 = vrot.slane %v4355, 1
    %v4357 = vmax.f32 %v4355, %v4356
    %v4358 = vsel %vm2628, %v2337, -inf
    %v4359 = vrot.slane %v4358, 4
    %v4360 = vmax.f32 %v4358, %v4359
    %v4361 = vrot.slane %v4360, 2
    %v4362 = vmax.f32 %v4360, %v4361
    %v4363 = vrot.slane %v4362, 1
    %v4364 = vmax.f32 %v4362, %v4363
    %v4365 = vsel %vm2628, %v2345, -inf
    %v4366 = vrot.slane %v4365, 4
    %v4367 = vmax.f32 %v4365, %v4366
    %v4368 = vrot.slane %v4367, 2
    %v4369 = vmax.f32 %v4367, %v4368
    %v4370 = vrot.slane %v4369, 1
    %v4371 = vmax.f32 %v4369, %v4370
    %v4372 = vsel %vm2628, %v2353, -inf
    %v4373 = vrot.slane %v4372, 4
    %v4374 = vmax.f32 %v4372, %v4373
    %v4375 = vrot.slane %v4374, 2
    %v4376 = vmax.f32 %v4374, %v4375
    %v4377 = vrot.slane %v4376, 1
    %v4378 = vmax.f32 %v4376, %v4377
    %v4379 = vsel %vm2628, %v2352, -inf
    %v4380 = vrot.slane %v4379, 4
    %v4381 = vmax.f32 %v4379, %v4380
    %v4382 = vrot.slane %v4381, 2
    %v4383 = vmax.f32 %v4381, %v4382
    %v4384 = vrot.slane %v4383, 1
    %v4385 = vmax.f32 %v4383, %v4384
    %v4386 = vsel %vm2628, %v2354, -inf
    %v4387 = vrot.slane %v4386, 4
    %v4388 = vmax.f32 %v4386, %v4387
    %v4389 = vrot.slane %v4388, 2
    %v4390 = vmax.f32 %v4388, %v4389
    %v4391 = vrot.slane %v4390, 1
    %v4392 = vmax.f32 %v4390, %v4391
    %v4393 = vsel %vm2628, %v2362, -inf
    %v4394 = vrot.slane %v4393, 4
    %v4395 = vmax.f32 %v4393, %v4394
    %v4396 = vrot.slane %v4395, 2
    %v4397 = vmax.f32 %v4395, %v4396
    %v4398 = vrot.slane %v4397, 1
    %v4399 = vmax.f32 %v4397, %v4398
    %v4400 = vsel %vm2628, %v2370, -inf
    %v4401 = vrot.slane %v4400, 4
    %v4402 = vmax.f32 %v4400, %v4401
    %v4403 = vrot.slane %v4402, 2
    %v4404 = vmax.f32 %v4402, %v4403
    %v4405 = vrot.slane %v4404, 1
    %v4406 = vmax.f32 %v4404, %v4405
    %v4407 = vsel %vm2628, %v2369, -inf
    %v4408 = vrot.slane %v4407, 4
    %v4409 = vmax.f32 %v4407, %v4408
    %v4410 = vrot.slane %v4409, 2
    %v4411 = vmax.f32 %v4409, %v4410
    %v4412 = vrot.slane %v4411, 1
    %v4413 = vmax.f32 %v4411, %v4412
    %v4414 = vsel %vm2628, %v2371, -inf
    %v4415 = vrot.slane %v4414, 4
    %v4416 = vmax.f32 %v4414, %v4415
    %v4417 = vrot.slane %v4416, 2
    %v4418 = vmax.f32 %v4416, %v4417
    %v4419 = vrot.slane %v4418, 1
    %v4420 = vmax.f32 %v4418, %v4419
    %v4421 = vsel %vm679, %v2635, -inf
    %v4422 = vsel %vm679, %v2691, -inf
    %v4423 = vmax.f32 %v4421, %v4422
    %v4424 = vsel %vm679, %v2642, -inf
    %v4425 = vsel %vm679, %v2698, -inf
    %v4426 = vmax.f32 %v4424, %v4425
    %v4427 = vsel %vm679, %v2649, -inf
    %v4428 = vsel %vm679, %v2705, -inf
    %v4429 = vmax.f32 %v4427, %v4428
    %v4430 = vsel %vm679, %v2656, -inf
    %v4431 = vsel %vm679, %v2712, -inf
    %v4432 = vmax.f32 %v4430, %v4431
    %v4433 = vsel %vm679, %v2663, -inf
    %v4434 = vsel %vm679, %v2719, -inf
    %v4435 = vmax.f32 %v4433, %v4434
    %v4436 = vsel %vm679, %v2670, -inf
    %v4437 = vsel %vm679, %v2726, -inf
    %v4438 = vmax.f32 %v4436, %v4437
    %v4439 = vsel %vm679, %v2677, -inf
    %v4440 = vsel %vm679, %v2733, -inf
    %v4441 = vmax.f32 %v4439, %v4440
    %v4442 = vsel %vm679, %v2684, -inf
    %v4443 = vsel %vm679, %v2740, -inf
    %v4444 = vmax.f32 %v4442, %v4443
    %v4445 = vsel %vm679, %v2747, -inf
    %v4446 = vsel %vm679, %v2803, -inf
    %v4447 = vmax.f32 %v4445, %v4446
    %v4448 = vsel %vm679, %v2754, -inf
    %v4449 = vsel %vm679, %v2810, -inf
    %v4450 = vmax.f32 %v4448, %v4449
    %v4451 = vsel %vm679, %v2761, -inf
    %v4452 = vsel %vm679, %v2817, -inf
    %v4453 = vmax.f32 %v4451, %v4452
    %v4454 = vsel %vm679, %v2768, -inf
    %v4455 = vsel %vm679, %v2824, -inf
    %v4456 = vmax.f32 %v4454, %v4455
    %v4457 = vsel %vm679, %v2775, -inf
    %v4458 = vsel %vm679, %v2831, -inf
    %v4459 = vmax.f32 %v4457, %v4458
    %v4460 = vsel %vm679, %v2782, -inf
    %v4461 = vsel %vm679, %v2838, -inf
    %v4462 = vmax.f32 %v4460, %v4461
    %v4463 = vsel %vm679, %v2789, -inf
    %v4464 = vsel %vm679, %v2845, -inf
    %v4465 = vmax.f32 %v4463, %v4464
    %v4466 = vsel %vm679, %v2796, -inf
    %v4467 = vsel %vm679, %v2852, -inf
    %v4468 = vmax.f32 %v4466, %v4467
    %v4469 = vsel %vm679, %v2859, -inf
    %v4470 = vsel %vm679, %v2915, -inf
    %v4471 = vmax.f32 %v4469, %v4470
    %v4472 = vsel %vm679, %v2866, -inf
    %v4473 = vsel %vm679, %v2922, -inf
    %v4474 = vmax.f32 %v4472, %v4473
    %v4475 = vsel %vm679, %v2873, -inf
    %v4476 = vsel %vm679, %v2929, -inf
    %v4477 = vmax.f32 %v4475, %v4476
    %v4478 = vsel %vm679, %v2880, -inf
    %v4479 = vsel %vm679, %v2936, -inf
    %v4480 = vmax.f32 %v4478, %v4479
    %v4481 = vsel %vm679, %v2887, -inf
    %v4482 = vsel %vm679, %v2943, -inf
    %v4483 = vmax.f32 %v4481, %v4482
    %v4484 = vsel %vm679, %v2894, -inf
    %v4485 = vsel %vm679, %v2950, -inf
    %v4486 = vmax.f32 %v4484, %v4485
    %v4487 = vsel %vm679, %v2901, -inf
    %v4488 = vsel %vm679, %v2957, -inf
    %v4489 = vmax.f32 %v4487, %v4488
    %v4490 = vsel %vm679, %v2908, -inf
    %v4491 = vsel %vm679, %v2964, -inf
    %v4492 = vmax.f32 %v4490, %v4491
    %v4493 = vsel %vm679, %v2971, -inf
    %v4494 = vsel %vm679, %v3027, -inf
    %v4495 = vmax.f32 %v4493, %v4494
    %v4496 = vsel %vm679, %v2978, -inf
    %v4497 = vsel %vm679, %v3034, -inf
    %v4498 = vmax.f32 %v4496, %v4497
    %v4499 = vsel %vm679, %v2985, -inf
    %v4500 = vsel %vm679, %v3041, -inf
    %v4501 = vmax.f32 %v4499, %v4500
    %v4502 = vsel %vm679, %v2992, -inf
    %v4503 = vsel %vm679, %v3048, -inf
    %v4504 = vmax.f32 %v4502, %v4503
    %v4505 = vsel %vm679, %v2999, -inf
    %v4506 = vsel %vm679, %v3055, -inf
    %v4507 = vmax.f32 %v4505, %v4506
    %v4508 = vsel %vm679, %v3006, -inf
    %v4509 = vsel %vm679, %v3062, -inf
    %v4510 = vmax.f32 %v4508, %v4509
    %v4511 = vsel %vm679, %v3013, -inf
    %v4512 = vsel %vm679, %v3069, -inf
    %v4513 = vmax.f32 %v4511, %v4512
    %v4514 = vsel %vm679, %v3020, -inf
    %v4515 = vsel %vm679, %v3076, -inf
    %v4516 = vmax.f32 %v4514, %v4515
    %v4517 = vsel %vm679, %v3083, -inf
    %v4518 = vsel %vm679, %v3139, -inf
    %v4519 = vmax.f32 %v4517, %v4518
    %v4520 = vsel %vm679, %v3090, -inf
    %v4521 = vsel %vm679, %v3146, -inf
    %v4522 = vmax.f32 %v4520, %v4521
    %v4523 = vsel %vm679, %v3097, -inf
    %v4524 = vsel %vm679, %v3153, -inf
    %v4525 = vmax.f32 %v4523, %v4524
    %v4526 = vsel %vm679, %v3104, -inf
    %v4527 = vsel %vm679, %v3160, -inf
    %v4528 = vmax.f32 %v4526, %v4527
    %v4529 = vsel %vm679, %v3111, -inf
    %v4530 = vsel %vm679, %v3167, -inf
    %v4531 = vmax.f32 %v4529, %v4530
    %v4532 = vsel %vm679, %v3118, -inf
    %v4533 = vsel %vm679, %v3174, -inf
    %v4534 = vmax.f32 %v4532, %v4533
    %v4535 = vsel %vm679, %v3125, -inf
    %v4536 = vsel %vm679, %v3181, -inf
    %v4537 = vmax.f32 %v4535, %v4536
    %v4538 = vsel %vm679, %v3132, -inf
    %v4539 = vsel %vm679, %v3188, -inf
    %v4540 = vmax.f32 %v4538, %v4539
    %v4541 = vsel %vm679, %v3195, -inf
    %v4542 = vsel %vm679, %v3251, -inf
    %v4543 = vmax.f32 %v4541, %v4542
    %v4544 = vsel %vm679, %v3202, -inf
    %v4545 = vsel %vm679, %v3258, -inf
    %v4546 = vmax.f32 %v4544, %v4545
    %v4547 = vsel %vm679, %v3209, -inf
    %v4548 = vsel %vm679, %v3265, -inf
    %v4549 = vmax.f32 %v4547, %v4548
    %v4550 = vsel %vm679, %v3216, -inf
    %v4551 = vsel %vm679, %v3272, -inf
    %v4552 = vmax.f32 %v4550, %v4551
    %v4553 = vsel %vm679, %v3223, -inf
    %v4554 = vsel %vm679, %v3279, -inf
    %v4555 = vmax.f32 %v4553, %v4554
    %v4556 = vsel %vm679, %v3230, -inf
    %v4557 = vsel %vm679, %v3286, -inf
    %v4558 = vmax.f32 %v4556, %v4557
    %v4559 = vsel %vm679, %v3237, -inf
    %v4560 = vsel %vm679, %v3293, -inf
    %v4561 = vmax.f32 %v4559, %v4560
    %v4562 = vsel %vm679, %v3244, -inf
    %v4563 = vsel %vm679, %v3300, -inf
    %v4564 = vmax.f32 %v4562, %v4563
    %v4565 = vsel %vm679, %v3307, -inf
    %v4566 = vsel %vm679, %v3363, -inf
    %v4567 = vmax.f32 %v4565, %v4566
    %v4568 = vsel %vm679, %v3314, -inf
    %v4569 = vsel %vm679, %v3370, -inf
    %v4570 = vmax.f32 %v4568, %v4569
    %v4571 = vsel %vm679, %v3321, -inf
    %v4572 = vsel %vm679, %v3377, -inf
    %v4573 = vmax.f32 %v4571, %v4572
    %v4574 = vsel %vm679, %v3328, -inf
    %v4575 = vsel %vm679, %v3384, -inf
    %v4576 = vmax.f32 %v4574, %v4575
    %v4577 = vsel %vm679, %v3335, -inf
    %v4578 = vsel %vm679, %v3391, -inf
    %v4579 = vmax.f32 %v4577, %v4578
    %v4580 = vsel %vm679, %v3342, -inf
    %v4581 = vsel %vm679, %v3398, -inf
    %v4582 = vmax.f32 %v4580, %v4581
    %v4583 = vsel %vm679, %v3349, -inf
    %v4584 = vsel %vm679, %v3405, -inf
    %v4585 = vmax.f32 %v4583, %v4584
    %v4586 = vsel %vm679, %v3356, -inf
    %v4587 = vsel %vm679, %v3412, -inf
    %v4588 = vmax.f32 %v4586, %v4587
    %v4589 = vsel %vm679, %v3419, -inf
    %v4590 = vsel %vm679, %v3475, -inf
    %v4591 = vmax.f32 %v4589, %v4590
    %v4592 = vsel %vm679, %v3426, -inf
    %v4593 = vsel %vm679, %v3482, -inf
    %v4594 = vmax.f32 %v4592, %v4593
    %v4595 = vsel %vm679, %v3433, -inf
    %v4596 = vsel %vm679, %v3489, -inf
    %v4597 = vmax.f32 %v4595, %v4596
    %v4598 = vsel %vm679, %v3440, -inf
    %v4599 = vsel %vm679, %v3496, -inf
    %v4600 = vmax.f32 %v4598, %v4599
    %v4601 = vsel %vm679, %v3447, -inf
    %v4602 = vsel %vm679, %v3503, -inf
    %v4603 = vmax.f32 %v4601, %v4602
    %v4604 = vsel %vm679, %v3454, -inf
    %v4605 = vsel %vm679, %v3510, -inf
    %v4606 = vmax.f32 %v4604, %v4605
    %v4607 = vsel %vm679, %v3461, -inf
    %v4608 = vsel %vm679, %v3517, -inf
    %v4609 = vmax.f32 %v4607, %v4608
    %v4610 = vsel %vm679, %v3468, -inf
    %v4611 = vsel %vm679, %v3524, -inf
    %v4612 = vmax.f32 %v4610, %v4611
    %v4613 = vsel %vm679, %v3531, -inf
    %v4614 = vsel %vm679, %v3587, -inf
    %v4615 = vmax.f32 %v4613, %v4614
    %v4616 = vsel %vm679, %v3538, -inf
    %v4617 = vsel %vm679, %v3594, -inf
    %v4618 = vmax.f32 %v4616, %v4617
    %v4619 = vsel %vm679, %v3545, -inf
    %v4620 = vsel %vm679, %v3601, -inf
    %v4621 = vmax.f32 %v4619, %v4620
    %v4622 = vsel %vm679, %v3552, -inf
    %v4623 = vsel %vm679, %v3608, -inf
    %v4624 = vmax.f32 %v4622, %v4623
    %v4625 = vsel %vm679, %v3559, -inf
    %v4626 = vsel %vm679, %v3615, -inf
    %v4627 = vmax.f32 %v4625, %v4626
    %v4628 = vsel %vm679, %v3566, -inf
    %v4629 = vsel %vm679, %v3622, -inf
    %v4630 = vmax.f32 %v4628, %v4629
    %v4631 = vsel %vm679, %v3573, -inf
    %v4632 = vsel %vm679, %v3629, -inf
    %v4633 = vmax.f32 %v4631, %v4632
    %v4634 = vsel %vm679, %v3580, -inf
    %v4635 = vsel %vm679, %v3636, -inf
    %v4636 = vmax.f32 %v4634, %v4635
    %v4637 = vsel %vm679, %v3643, -inf
    %v4638 = vsel %vm679, %v3699, -inf
    %v4639 = vmax.f32 %v4637, %v4638
    %v4640 = vsel %vm679, %v3650, -inf
    %v4641 = vsel %vm679, %v3706, -inf
    %v4642 = vmax.f32 %v4640, %v4641
    %v4643 = vsel %vm679, %v3657, -inf
    %v4644 = vsel %vm679, %v3713, -inf
    %v4645 = vmax.f32 %v4643, %v4644
    %v4646 = vsel %vm679, %v3664, -inf
    %v4647 = vsel %vm679, %v3720, -inf
    %v4648 = vmax.f32 %v4646, %v4647
    %v4649 = vsel %vm679, %v3671, -inf
    %v4650 = vsel %vm679, %v3727, -inf
    %v4651 = vmax.f32 %v4649, %v4650
    %v4652 = vsel %vm679, %v3678, -inf
    %v4653 = vsel %vm679, %v3734, -inf
    %v4654 = vmax.f32 %v4652, %v4653
    %v4655 = vsel %vm679, %v3685, -inf
    %v4656 = vsel %vm679, %v3741, -inf
    %v4657 = vmax.f32 %v4655, %v4656
    %v4658 = vsel %vm679, %v3692, -inf
    %v4659 = vsel %vm679, %v3748, -inf
    %v4660 = vmax.f32 %v4658, %v4659
    %v4661 = vsel %vm679, %v3755, -inf
    %v4662 = vsel %vm679, %v3811, -inf
    %v4663 = vmax.f32 %v4661, %v4662
    %v4664 = vsel %vm679, %v3762, -inf
    %v4665 = vsel %vm679, %v3818, -inf
    %v4666 = vmax.f32 %v4664, %v4665
    %v4667 = vsel %vm679, %v3769, -inf
    %v4668 = vsel %vm679, %v3825, -inf
    %v4669 = vmax.f32 %v4667, %v4668
    %v4670 = vsel %vm679, %v3776, -inf
    %v4671 = vsel %vm679, %v3832, -inf
    %v4672 = vmax.f32 %v4670, %v4671
    %v4673 = vsel %vm679, %v3783, -inf
    %v4674 = vsel %vm679, %v3839, -inf
    %v4675 = vmax.f32 %v4673, %v4674
    %v4676 = vsel %vm679, %v3790, -inf
    %v4677 = vsel %vm679, %v3846, -inf
    %v4678 = vmax.f32 %v4676, %v4677
    %v4679 = vsel %vm679, %v3797, -inf
    %v4680 = vsel %vm679, %v3853, -inf
    %v4681 = vmax.f32 %v4679, %v4680
    %v4682 = vsel %vm679, %v3804, -inf
    %v4683 = vsel %vm679, %v3860, -inf
    %v4684 = vmax.f32 %v4682, %v4683
    %v4685 = vsel %vm679, %v3867, -inf
    %v4686 = vsel %vm679, %v3923, -inf
    %v4687 = vmax.f32 %v4685, %v4686
    %v4688 = vsel %vm679, %v3874, -inf
    %v4689 = vsel %vm679, %v3930, -inf
    %v4690 = vmax.f32 %v4688, %v4689
    %v4691 = vsel %vm679, %v3881, -inf
    %v4692 = vsel %vm679, %v3937, -inf
    %v4693 = vmax.f32 %v4691, %v4692
    %v4694 = vsel %vm679, %v3888, -inf
    %v4695 = vsel %vm679, %v3944, -inf
    %v4696 = vmax.f32 %v4694, %v4695
    %v4697 = vsel %vm679, %v3895, -inf
    %v4698 = vsel %vm679, %v3951, -inf
    %v4699 = vmax.f32 %v4697, %v4698
    %v4700 = vsel %vm679, %v3902, -inf
    %v4701 = vsel %vm679, %v3958, -inf
    %v4702 = vmax.f32 %v4700, %v4701
    %v4703 = vsel %vm679, %v3909, -inf
    %v4704 = vsel %vm679, %v3965, -inf
    %v4705 = vmax.f32 %v4703, %v4704
    %v4706 = vsel %vm679, %v3916, -inf
    %v4707 = vsel %vm679, %v3972, -inf
    %v4708 = vmax.f32 %v4706, %v4707
    %v4709 = vsel %vm679, %v3979, -inf
    %v4710 = vsel %vm679, %v4035, -inf
    %v4711 = vmax.f32 %v4709, %v4710
    %v4712 = vsel %vm679, %v3986, -inf
    %v4713 = vsel %vm679, %v4042, -inf
    %v4714 = vmax.f32 %v4712, %v4713
    %v4715 = vsel %vm679, %v3993, -inf
    %v4716 = vsel %vm679, %v4049, -inf
    %v4717 = vmax.f32 %v4715, %v4716
    %v4718 = vsel %vm679, %v4000, -inf
    %v4719 = vsel %vm679, %v4056, -inf
    %v4720 = vmax.f32 %v4718, %v4719
    %v4721 = vsel %vm679, %v4007, -inf
    %v4722 = vsel %vm679, %v4063, -inf
    %v4723 = vmax.f32 %v4721, %v4722
    %v4724 = vsel %vm679, %v4014, -inf
    %v4725 = vsel %vm679, %v4070, -inf
    %v4726 = vmax.f32 %v4724, %v4725
    %v4727 = vsel %vm679, %v4021, -inf
    %v4728 = vsel %vm679, %v4077, -inf
    %v4729 = vmax.f32 %v4727, %v4728
    %v4730 = vsel %vm679, %v4028, -inf
    %v4731 = vsel %vm679, %v4084, -inf
    %v4732 = vmax.f32 %v4730, %v4731
    %v4733 = vsel %vm679, %v4091, -inf
    %v4734 = vsel %vm679, %v4147, -inf
    %v4735 = vmax.f32 %v4733, %v4734
    %v4736 = vsel %vm679, %v4098, -inf
    %v4737 = vsel %vm679, %v4154, -inf
    %v4738 = vmax.f32 %v4736, %v4737
    %v4739 = vsel %vm679, %v4105, -inf
    %v4740 = vsel %vm679, %v4161, -inf
    %v4741 = vmax.f32 %v4739, %v4740
    %v4742 = vsel %vm679, %v4112, -inf
    %v4743 = vsel %vm679, %v4168, -inf
    %v4744 = vmax.f32 %v4742, %v4743
    %v4745 = vsel %vm679, %v4119, -inf
    %v4746 = vsel %vm679, %v4175, -inf
    %v4747 = vmax.f32 %v4745, %v4746
    %v4748 = vsel %vm679, %v4126, -inf
    %v4749 = vsel %vm679, %v4182, -inf
    %v4750 = vmax.f32 %v4748, %v4749
    %v4751 = vsel %vm679, %v4133, -inf
    %v4752 = vsel %vm679, %v4189, -inf
    %v4753 = vmax.f32 %v4751, %v4752
    %v4754 = vsel %vm679, %v4140, -inf
    %v4755 = vsel %vm679, %v4196, -inf
    %v4756 = vmax.f32 %v4754, %v4755
    %v4757 = vsel %vm679, %v4203, -inf
    %v4758 = vsel %vm679, %v4259, -inf
    %v4759 = vmax.f32 %v4757, %v4758
    %v4760 = vsel %vm679, %v4210, -inf
    %v4761 = vsel %vm679, %v4266, -inf
    %v4762 = vmax.f32 %v4760, %v4761
    %v4763 = vsel %vm679, %v4217, -inf
    %v4764 = vsel %vm679, %v4273, -inf
    %v4765 = vmax.f32 %v4763, %v4764
    %v4766 = vsel %vm679, %v4224, -inf
    %v4767 = vsel %vm679, %v4280, -inf
    %v4768 = vmax.f32 %v4766, %v4767
    %v4769 = vsel %vm679, %v4231, -inf
    %v4770 = vsel %vm679, %v4287, -inf
    %v4771 = vmax.f32 %v4769, %v4770
    %v4772 = vsel %vm679, %v4238, -inf
    %v4773 = vsel %vm679, %v4294, -inf
    %v4774 = vmax.f32 %v4772, %v4773
    %v4775 = vsel %vm679, %v4245, -inf
    %v4776 = vsel %vm679, %v4301, -inf
    %v4777 = vmax.f32 %v4775, %v4776
    %v4778 = vsel %vm679, %v4252, -inf
    %v4779 = vsel %vm679, %v4308, -inf
    %v4780 = vmax.f32 %v4778, %v4779
    %v4781 = vsel %vm679, %v4315, -inf
    %v4782 = vsel %vm679, %v4371, -inf
    %v4783 = vmax.f32 %v4781, %v4782
    %v4784 = vsel %vm679, %v4322, -inf
    %v4785 = vsel %vm679, %v4378, -inf
    %v4786 = vmax.f32 %v4784, %v4785
    %v4787 = vsel %vm679, %v4329, -inf
    %v4788 = vsel %vm679, %v4385, -inf
    %v4789 = vmax.f32 %v4787, %v4788
    %v4790 = vsel %vm679, %v4336, -inf
    %v4791 = vsel %vm679, %v4392, -inf
    %v4792 = vmax.f32 %v4790, %v4791
    %v4793 = vsel %vm679, %v4343, -inf
    %v4794 = vsel %vm679, %v4399, -inf
    %v4795 = vmax.f32 %v4793, %v4794
    %v4796 = vsel %vm679, %v4350, -inf
    %v4797 = vsel %vm679, %v4406, -inf
    %v4798 = vmax.f32 %v4796, %v4797
    %v4799 = vsel %vm679, %v4357, -inf
    %v4800 = vsel %vm679, %v4413, -inf
    %v4801 = vmax.f32 %v4799, %v4800
    %v4802 = vsel %vm679, %v4364, -inf
    %v4803 = vsel %vm679, %v4420, -inf
    %v4804 = vmax.f32 %v4802, %v4803
    %4805 = vst [vmem:[#allocation2] sm:$0xff] 0.0
    %4806 = vst [vmem:[#allocation2 + $0x8] sm:$0xff] 0.0
    %4807 = vst [vmem:[#allocation2 + $0x10] sm:$0xff] 0.0
    %4808 = vst [vmem:[#allocation2 + $0x18] sm:$0xff] 0.0
    %4809 = vst.msk [vmem:[#allocation2 + $0x20] sm:$0xff] %vm679, 0.0
    %4810 = vst [vmem:[#allocation2 + $0x28] sm:$0xff] 0.0
    %4811 = vst [vmem:[#allocation2 + $0x30] sm:$0xff] 0.0
    %4812 = vst [vmem:[#allocation2 + $0x38] sm:$0xff] 0.0
    %4813 = vst [vmem:[#allocation2 + $0x40] sm:$0xff] 0.0
    %4814 = vst.msk [vmem:[#allocation2 + $0x48] sm:$0xff] %vm679, 0.0
    %4815 = vst [vmem:[#allocation2 + $0x50] sm:$0xff] 0.0
    %4816 = vst [vmem:[#allocation2 + $0x58] sm:$0xff] 0.0
    %4817 = vst [vmem:[#allocation2 + $0x60] sm:$0xff] 0.0
    %4818 = vst [vmem:[#allocation2 + $0x68] sm:$0xff] 0.0
    %4819 = vst.msk [vmem:[#allocation2 + $0x70] sm:$0xff] %vm679, 0.0
    %4820 = vst [vmem:[#allocation2 + $0x78] sm:$0xff] 0.0
    %4821 = vst [vmem:[#allocation2 + $0x80] sm:$0xff] 0.0
    %4822 = vst [vmem:[#allocation2 + $0x88] sm:$0xff] 0.0
    %4823 = vst [vmem:[#allocation2 + $0x90] sm:$0xff] 0.0
    %4824 = vst.msk [vmem:[#allocation2 + $0x98] sm:$0xff] %vm679, 0.0
    %4825 = vst [vmem:[#allocation2 + $0xa0] sm:$0xff] 0.0
    %4826 = vst [vmem:[#allocation2 + $0xa8] sm:$0xff] 0.0
    %4827 = vst [vmem:[#allocation2 + $0xb0] sm:$0xff] 0.0
    %4828 = vst [vmem:[#allocation2 + $0xb8] sm:$0xff] 0.0
    %4829 = vst.msk [vmem:[#allocation2 + $0xc0] sm:$0xff] %vm679, 0.0
    %4830 = vst [vmem:[#allocation2 + $0xc8] sm:$0xff] 0.0
    %4831 = vst [vmem:[#allocation2 + $0xd0] sm:$0xff] 0.0
    %4832 = vst [vmem:[#allocation2 + $0xd8] sm:$0xff] 0.0
    %4833 = vst [vmem:[#allocation2 + $0xe0] sm:$0xff] 0.0
    %4834 = vst.msk [vmem:[#allocation2 + $0xe8] sm:$0xff] %vm679, 0.0
    %4835 = vst [vmem:[#allocation2 + $0xf0] sm:$0xff] 0.0
    %4836 = vst [vmem:[#allocation2 + $0xf8] sm:$0xff] 0.0
    %4837 = vst [vmem:[#allocation2 + $0x100] sm:$0xff] 0.0
    %4838 = vst [vmem:[#allocation2 + $0x108] sm:$0xff] 0.0
    %4839 = vst.msk [vmem:[#allocation2 + $0x110] sm:$0xff] %vm679, 0.0
    %4840 = vst [vmem:[#allocation2 + $0x118] sm:$0xff] 0.0
    %4841 = vst [vmem:[#allocation2 + $0x120] sm:$0xff] 0.0
    %4842 = vst [vmem:[#allocation2 + $0x128] sm:$0xff] 0.0
    %4843 = vst [vmem:[#allocation2 + $0x130] sm:$0xff] 0.0
    %4844 = vst.msk [vmem:[#allocation2 + $0x138] sm:$0xff] %vm679, 0.0
    %4845 = vst [vmem:[#allocation2 + $0x140] sm:$0xff] 0.0
    %4846 = vst [vmem:[#allocation2 + $0x148] sm:$0xff] 0.0
    %4847 = vst [vmem:[#allocation2 + $0x150] sm:$0xff] 0.0
    %4848 = vst [vmem:[#allocation2 + $0x158] sm:$0xff] 0.0
    %4849 = vst.msk [vmem:[#allocation2 + $0x160] sm:$0xff] %vm679, 0.0
    %4850 = vst [vmem:[#allocation2 + $0x168] sm:$0xff] 0.0
    %4851 = vst [vmem:[#allocation2 + $0x170] sm:$0xff] 0.0
    %4852 = vst [vmem:[#allocation2 + $0x178] sm:$0xff] 0.0
    %4853 = vst [vmem:[#allocation2 + $0x180] sm:$0xff] 0.0
    %4854 = vst.msk [vmem:[#allocation2 + $0x188] sm:$0xff] %vm679, 0.0
    %4855 = vst [vmem:[#allocation2 + $0x190] sm:$0xff] 0.0
    %4856 = vst [vmem:[#allocation2 + $0x198] sm:$0xff] 0.0
    %4857 = vst [vmem:[#allocation2 + $0x1a0] sm:$0xff] 0.0
    %4858 = vst [vmem:[#allocation2 + $0x1a8] sm:$0xff] 0.0
    %4859 = vst.msk [vmem:[#allocation2 + $0x1b0] sm:$0xff] %vm679, 0.0
    %4860 = vst [vmem:[#allocation2 + $0x1b8] sm:$0xff] 0.0
    %4861 = vst [vmem:[#allocation2 + $0x1c0] sm:$0xff] 0.0
    %4862 = vst [vmem:[#allocation2 + $0x1c8] sm:$0xff] 0.0
    %4863 = vst [vmem:[#allocation2 + $0x1d0] sm:$0xff] 0.0
    %4864 = vst.msk [vmem:[#allocation2 + $0x1d8] sm:$0xff] %vm679, 0.0
    %4865 = vst [vmem:[#allocation2 + $0x1e0] sm:$0xff] 0.0
    %4866 = vst [vmem:[#allocation2 + $0x1e8] sm:$0xff] 0.0
    %4867 = vst [vmem:[#allocation2 + $0x1f0] sm:$0xff] 0.0
    %4868 = vst [vmem:[#allocation2 + $0x1f8] sm:$0xff] 0.0
    %4869 = vst.msk [vmem:[#allocation2 + $0x200] sm:$0xff] %vm679, 0.0
    %4870 = vst [vmem:[#allocation2 + $0x208] sm:$0xff] 0.0
    %4871 = vst [vmem:[#allocation2 + $0x210] sm:$0xff] 0.0
    %4872 = vst [vmem:[#allocation2 + $0x218] sm:$0xff] 0.0
    %4873 = vst [vmem:[#allocation2 + $0x220] sm:$0xff] 0.0
    %4874 = vst.msk [vmem:[#allocation2 + $0x228] sm:$0xff] %vm679, 0.0
    %4875 = vst [vmem:[#allocation2 + $0x230] sm:$0xff] 0.0
    %4876 = vst [vmem:[#allocation2 + $0x238] sm:$0xff] 0.0
    %4877 = vst [vmem:[#allocation2 + $0x240] sm:$0xff] 0.0
    %4878 = vst [vmem:[#allocation2 + $0x248] sm:$0xff] 0.0
    %4879 = vst.msk [vmem:[#allocation2 + $0x250] sm:$0xff] %vm679, 0.0
    %4880 = vst [vmem:[#allocation2 + $0x258] sm:$0xff] 0.0
    %4881 = vst [vmem:[#allocation2 + $0x260] sm:$0xff] 0.0
    %4882 = vst [vmem:[#allocation2 + $0x268] sm:$0xff] 0.0
    %4883 = vst [vmem:[#allocation2 + $0x270] sm:$0xff] 0.0
    %4884 = vst.msk [vmem:[#allocation2 + $0x278] sm:$0xff] %vm679, 0.0
    %vm4983 = vcmask 1042434
    %v4984 = vsel %vm4983, %v4426, %v4423
    %vm4985 = vcmask 1043459
    %v4986 = vsel %vm4985, %v4429, %v4984
    %vm4987 = vcmask 1044484
    %v4988 = vsel %vm4987, %v4432, %v4986
    %vm4989 = vcmask 1045509
    %v4990 = vsel %vm4989, %v4435, %v4988
    %vm4991 = vcmask 1046534
    %v4992 = vsel %vm4991, %v4438, %v4990
    %vm4993 = vcmask 1047559
    %v4994 = vsel %vm4993, %v4441, %v4992
    %v4995 = vsel %vm4983, %v4450, %v4447
    %v4996 = vsel %vm4985, %v4453, %v4995
    %v4997 = vsel %vm4987, %v4456, %v4996
    %v4998 = vsel %vm4989, %v4459, %v4997
    %v4999 = vsel %vm4991, %v4462, %v4998
    %v5000 = vsel %vm4993, %v4465, %v4999
    %v5001 = vsel %vm4983, %v4474, %v4471
    %v5002 = vsel %vm4985, %v4477, %v5001
    %v5003 = vsel %vm4987, %v4480, %v5002
    %v5004 = vsel %vm4989, %v4483, %v5003
    %v5005 = vsel %vm4991, %v4486, %v5004
    %v5006 = vsel %vm4993, %v4489, %v5005
    %v5007 = vsel %vm4983, %v4498, %v4495
    %v5008 = vsel %vm4985, %v4501, %v5007
    %v5009 = vsel %vm4987, %v4504, %v5008
    %v5010 = vsel %vm4989, %v4507, %v5009
    %v5011 = vsel %vm4991, %v4510, %v5010
    %v5012 = vsel %vm4993, %v4513, %v5011
    %v5013 = vsel %vm4983, %v4522, %v4519
    %v5014 = vsel %vm4985, %v4525, %v5013
    %v5015 = vsel %vm4987, %v4528, %v5014
    %v5016 = vsel %vm4989, %v4531, %v5015
    %v5017 = vsel %vm4991, %v4534, %v5016
    %v5018 = vsel %vm4993, %v4537, %v5017
    %v5019 = vsel %vm4983, %v4546, %v4543
    %v5020 = vsel %vm4985, %v4549, %v5019
    %v5021 = vsel %vm4987, %v4552, %v5020
    %v5022 = vsel %vm4989, %v4555, %v5021
    %v5023 = vsel %vm4991, %v4558, %v5022
    %v5024 = vsel %vm4993, %v4561, %v5023
    %v5025 = vsel %vm4983, %v4570, %v4567
    %v5026 = vsel %vm4985, %v4573, %v5025
    %v5027 = vsel %vm4987, %v4576, %v5026
    %v5028 = vsel %vm4989, %v4579, %v5027
    %v5029 = vsel %vm4991, %v4582, %v5028
    %v5030 = vsel %vm4993, %v4585, %v5029
    %v5031 = vsel %vm4983, %v4618, %v4615
    %v5032 = vsel %vm4985, %v4621, %v5031
    %v5033 = vsel %vm4987, %v4624, %v5032
    %v5034 = vsel %vm4989, %v4627, %v5033
    %v5035 = vsel %vm4991, %v4630, %v5034
    %v5036 = vsel %vm4993, %v4633, %v5035
    %v5037 = vsel %vm4983, %v4642, %v4639
    %v5038 = vsel %vm4985, %v4645, %v5037
    %v5039 = vsel %vm4987, %v4648, %v5038
    %v5040 = vsel %vm4989, %v4651, %v5039
    %v5041 = vsel %vm4991, %v4654, %v5040
    %v5042 = vsel %vm4993, %v4657, %v5041
    %v5043 = vsel %vm4983, %v4666, %v4663
    %v5044 = vsel %vm4985, %v4669, %v5043
    %v5045 = vsel %vm4987, %v4672, %v5044
    %v5046 = vsel %vm4989, %v4675, %v5045
    %v5047 = vsel %vm4991, %v4678, %v5046
    %v5048 = vsel %vm4993, %v4681, %v5047
    %v5049 = vsel %vm4983, %v4690, %v4687
    %v5050 = vsel %vm4985, %v4693, %v5049
    %v5051 = vsel %vm4987, %v4696, %v5050
    %v5052 = vsel %vm4989, %v4699, %v5051
    %v5053 = vsel %vm4991, %v4702, %v5052
    %v5054 = vsel %vm4993, %v4705, %v5053
    %v5055 = vsel %vm4983, %v4714, %v4711
    %v5056 = vsel %vm4985, %v4717, %v5055
    %v5057 = vsel %vm4987, %v4720, %v5056
    %v5058 = vsel %vm4989, %v4723, %v5057
    %v5059 = vsel %vm4991, %v4726, %v5058
    %v5060 = vsel %vm4993, %v4729, %v5059
    %v5061 = vsel %vm4983, %v4738, %v4735
    %v5062 = vsel %vm4985, %v4741, %v5061
    %v5063 = vsel %vm4987, %v4744, %v5062
    %v5064 = vsel %vm4989, %v4747, %v5063
    %v5065 = vsel %vm4991, %v4750, %v5064
    %v5066 = vsel %vm4993, %v4753, %v5065
    %v5067 = vsel %vm4983, %v4762, %v4759
    %v5068 = vsel %vm4985, %v4765, %v5067
    %v5069 = vsel %vm4987, %v4768, %v5068
    %v5070 = vsel %vm4989, %v4771, %v5069
    %v5071 = vsel %vm4991, %v4774, %v5070
    %v5072 = vsel %vm4993, %v4777, %v5071
    %s5087 = scalar_lea.vmem [#allocation2], 40
    %vm5088 = vcmask 523265
    %5089 = vst.msk [vmem:[%s5087] sm:$0xfe] %vm5088, %v4994
    %5090 = vst.msk [vmem:[%s5087 + $0x28] sm:$0xfe] %vm5088, %v5000
    %5091 = vst.msk [vmem:[%s5087 + $0x50] sm:$0xfe] %vm5088, %v5006
    %5092 = vst.msk [vmem:[%s5087 + $0x78] sm:$0xfe] %vm5088, %v5012
    %5093 = vst.msk [vmem:[%s5087 + $0xa0] sm:$0xfe] %vm5088, %v5018
    %5094 = vst.msk [vmem:[%s5087 + $0xc8] sm:$0xfe] %vm5088, %v5024
    %5095 = vst.msk [vmem:[%s5087 + $0xf0] sm:$0xfe] %vm5088, %v5030
    %5096 = vst.msk [vmem:[%s5087 + $0x140] sm:$0xfe] %vm5088, %v5036
    %5097 = vst.msk [vmem:[%s5087 + $0x168] sm:$0xfe] %vm5088, %v5042
    %5098 = vst.msk [vmem:[%s5087 + $0x190] sm:$0xfe] %vm5088, %v5048
    %5099 = vst.msk [vmem:[%s5087 + $0x1b8] sm:$0xfe] %vm5088, %v5054
    %5100 = vst.msk [vmem:[%s5087 + $0x1e0] sm:$0xfe] %vm5088, %v5060
    %5101 = vst.msk [vmem:[%s5087 + $0x208] sm:$0xfe] %vm5088, %v5066
    %5102 = vst.msk [vmem:[%s5087 + $0x230] sm:$0xfe] %vm5088, %v5072
    %vm5117 = vcmask 1041409
    %v5118 = vsel %vm5117, %v4426, %v4423
    %v5119 = vsel %vm4983, %v4429, %v5118
    %v5120 = vsel %vm4985, %v4432, %v5119
    %v5121 = vsel %vm4987, %v4435, %v5120
    %v5122 = vsel %vm4989, %v4438, %v5121
    %v5123 = vsel %vm4991, %v4441, %v5122
    %v5124 = vsel %vm4993, %v4444, %v5123
    %v5125 = vsel %vm5117, %v4450, %v4447
    %v5126 = vsel %vm4983, %v4453, %v5125
    %v5127 = vsel %vm4985, %v4456, %v5126
    %v5128 = vsel %vm4987, %v4459, %v5127
    %v5129 = vsel %vm4989, %v4462, %v5128
    %v5130 = vsel %vm4991, %v4465, %v5129
    %v5131 = vsel %vm4993, %v4468, %v5130
    %v5132 = vsel %vm5117, %v4474, %v4471
    %v5133 = vsel %vm4983, %v4477, %v5132
    %v5134 = vsel %vm4985, %v4480, %v5133
    %v5135 = vsel %vm4987, %v4483, %v5134
    %v5136 = vsel %vm4989, %v4486, %v5135
    %v5137 = vsel %vm4991, %v4489, %v5136
    %v5138 = vsel %vm4993, %v4492, %v5137
    %v5139 = vsel %vm5117, %v4498, %v4495
    %v5140 = vsel %vm4983, %v4501, %v5139
    %v5141 = vsel %vm4985, %v4504, %v5140
    %v5142 = vsel %vm4987, %v4507, %v5141
    %v5143 = vsel %vm4989, %v4510, %v5142
    %v5144 = vsel %vm4991, %v4513, %v5143
    %v5145 = vsel %vm4993, %v4516, %v5144
    %v5146 = vsel %vm5117, %v4522, %v4519
    %v5147 = vsel %vm4983, %v4525, %v5146
    %v5148 = vsel %vm4985, %v4528, %v5147
    %v5149 = vsel %vm4987, %v4531, %v5148
    %v5150 = vsel %vm4989, %v4534, %v5149
    %v5151 = vsel %vm4991, %v4537, %v5150
    %v5152 = vsel %vm4993, %v4540, %v5151
    %v5153 = vsel %vm5117, %v4546, %v4543
    %v5154 = vsel %vm4983, %v4549, %v5153
    %v5155 = vsel %vm4985, %v4552, %v5154
    %v5156 = vsel %vm4987, %v4555, %v5155
    %v5157 = vsel %vm4989, %v4558, %v5156
    %v5158 = vsel %vm4991, %v4561, %v5157
    %v5159 = vsel %vm4993, %v4564, %v5158
    %v5160 = vsel %vm5117, %v4570, %v4567
    %v5161 = vsel %vm4983, %v4573, %v5160
    %v5162 = vsel %vm4985, %v4576, %v5161
    %v5163 = vsel %vm4987, %v4579, %v5162
    %v5164 = vsel %vm4989, %v4582, %v5163
    %v5165 = vsel %vm4991, %v4585, %v5164
    %v5166 = vsel %vm4993, %v4588, %v5165
    %v5167 = vsel %vm5117, %v4618, %v4615
    %v5168 = vsel %vm4983, %v4621, %v5167
    %v5169 = vsel %vm4985, %v4624, %v5168
    %v5170 = vsel %vm4987, %v4627, %v5169
    %v5171 = vsel %vm4989, %v4630, %v5170
    %v5172 = vsel %vm4991, %v4633, %v5171
    %v5173 = vsel %vm4993, %v4636, %v5172
    %v5174 = vsel %vm5117, %v4642, %v4639
    %v5175 = vsel %vm4983, %v4645, %v5174
    %v5176 = vsel %vm4985, %v4648, %v5175
    %v5177 = vsel %vm4987, %v4651, %v5176
    %v5178 = vsel %vm4989, %v4654, %v5177
    %v5179 = vsel %vm4991, %v4657, %v5178
    %v5180 = vsel %vm4993, %v4660, %v5179
    %v5181 = vsel %vm5117, %v4666, %v4663
    %v5182 = vsel %vm4983, %v4669, %v5181
    %v5183 = vsel %vm4985, %v4672, %v5182
    %v5184 = vsel %vm4987, %v4675, %v5183
    %v5185 = vsel %vm4989, %v4678, %v5184
    %v5186 = vsel %vm4991, %v4681, %v5185
    %v5187 = vsel %vm4993, %v4684, %v5186
    %v5188 = vsel %vm5117, %v4690, %v4687
    %v5189 = vsel %vm4983, %v4693, %v5188
    %v5190 = vsel %vm4985, %v4696, %v5189
    %v5191 = vsel %vm4987, %v4699, %v5190
    %v5192 = vsel %vm4989, %v4702, %v5191
    %v5193 = vsel %vm4991, %v4705, %v5192
    %v5194 = vsel %vm4993, %v4708, %v5193
    %v5195 = vsel %vm5117, %v4714, %v4711
    %v5196 = vsel %vm4983, %v4717, %v5195
    %v5197 = vsel %vm4985, %v4720, %v5196
    %v5198 = vsel %vm4987, %v4723, %v5197
    %v5199 = vsel %vm4989, %v4726, %v5198
    %v5200 = vsel %vm4991, %v4729, %v5199
    %v5201 = vsel %vm4993, %v4732, %v5200
    %v5202 = vsel %vm5117, %v4738, %v4735
    %v5203 = vsel %vm4983, %v4741, %v5202
    %v5204 = vsel %vm4985, %v4744, %v5203
    %v5205 = vsel %vm4987, %v4747, %v5204
    %v5206 = vsel %vm4989, %v4750, %v5205
    %v5207 = vsel %vm4991, %v4753, %v5206
    %v5208 = vsel %vm4993, %v4756, %v5207
    %v5209 = vsel %vm5117, %v4762, %v4759
    %v5210 = vsel %vm4983, %v4765, %v5209
    %v5211 = vsel %vm4985, %v4768, %v5210
    %v5212 = vsel %vm4987, %v4771, %v5211
    %v5213 = vsel %vm4989, %v4774, %v5212
    %v5214 = vsel %vm4991, %v4777, %v5213
    %v5215 = vsel %vm4993, %v4780, %v5214
    %5216 = vrot.lane.b32.xlu0 %v5124, 64
    %v5217 = vpop.permute.xlu0 %5216
    %5218 = vrot.lane.b32.xlu0 %v5131, 64
    %v5219 = vpop.permute.xlu0 %5218
    %5220 = vrot.lane.b32.xlu0 %v5138, 64
    %v5221 = vpop.permute.xlu0 %5220
    %5222 = vrot.lane.b32.xlu0 %v5145, 64
    %v5223 = vpop.permute.xlu0 %5222
    %5224 = vrot.lane.b32.xlu0 %v5152, 64
    %v5225 = vpop.permute.xlu0 %5224
    %5226 = vrot.lane.b32.xlu0 %v5159, 64
    %v5227 = vpop.permute.xlu0 %5226
    %5228 = vrot.lane.b32.xlu0 %v5166, 64
    %v5229 = vpop.permute.xlu0 %5228
    %5230 = vrot.lane.b32.xlu0 %v5173, 64
    %v5231 = vpop.permute.xlu0 %5230
    %5232 = vrot.lane.b32.xlu0 %v5180, 64
    %v5233 = vpop.permute.xlu0 %5232
    %5234 = vrot.lane.b32.xlu0 %v5187, 64
    %v5235 = vpop.permute.xlu0 %5234
    %5236 = vrot.lane.b32.xlu0 %v5194, 64
    %v5237 = vpop.permute.xlu0 %5236
    %5238 = vrot.lane.b32.xlu0 %v5201, 64
    %v5239 = vpop.permute.xlu0 %5238
    %5240 = vrot.lane.b32.xlu0 %v5208, 64
    %v5241 = vpop.permute.xlu0 %5240
    %5242 = vrot.lane.b32.xlu0 %v5215, 64
    %v5243 = vpop.permute.xlu0 %5242
    %vm5258 = vcmask 1048064
    %5259 = vst.msk [vmem:[%s5087] sm:$0xff] %vm5258, %v5217
    %5260 = vst.msk [vmem:[%s5087 + $0x28] sm:$0xff] %vm5258, %v5219
    %5261 = vst.msk [vmem:[%s5087 + $0x50] sm:$0xff] %vm5258, %v5221
    %5262 = vst.msk [vmem:[%s5087 + $0x78] sm:$0xff] %vm5258, %v5223
    %5263 = vst.msk [vmem:[%s5087 + $0xa0] sm:$0xff] %vm5258, %v5225
    %5264 = vst.msk [vmem:[%s5087 + $0xc8] sm:$0xff] %vm5258, %v5227
    %5265 = vst.msk [vmem:[%s5087 + $0xf0] sm:$0xff] %vm5258, %v5229
    %5266 = vst.msk [vmem:[%s5087 + $0x140] sm:$0xff] %vm5258, %v5231
    %5267 = vst.msk [vmem:[%s5087 + $0x168] sm:$0xff] %vm5258, %v5233
    %5268 = vst.msk [vmem:[%s5087 + $0x190] sm:$0xff] %vm5258, %v5235
    %5269 = vst.msk [vmem:[%s5087 + $0x1b8] sm:$0xff] %vm5258, %v5237
    %5270 = vst.msk [vmem:[%s5087 + $0x1e0] sm:$0xff] %vm5258, %v5239
    %5271 = vst.msk [vmem:[%s5087 + $0x208] sm:$0xff] %vm5258, %v5241
    %5272 = vst.msk [vmem:[%s5087 + $0x230] sm:$0xff] %vm5258, %v5243
    %v5273 = vsel %vm5117, %v4429, %v4426
    %v5274 = vsel %vm4983, %v4432, %v5273
    %v5275 = vsel %vm4985, %v4435, %v5274
    %v5276 = vsel %vm4987, %v4438, %v5275
    %v5277 = vsel %vm4989, %v4441, %v5276
    %v5278 = vsel %vm4991, %v4444, %v5277
    %v5279 = vsel %vm5117, %v4453, %v4450
    %v5280 = vsel %vm4983, %v4456, %v5279
    %v5281 = vsel %vm4985, %v4459, %v5280
    %v5282 = vsel %vm4987, %v4462, %v5281
    %v5283 = vsel %vm4989, %v4465, %v5282
    %v5284 = vsel %vm4991, %v4468, %v5283
    %v5285 = vsel %vm5117, %v4477, %v4474
    %v5286 = vsel %vm4983, %v4480, %v5285
    %v5287 = vsel %vm4985, %v4483, %v5286
    %v5288 = vsel %vm4987, %v4486, %v5287
    %v5289 = vsel %vm4989, %v4489, %v5288
    %v5290 = vsel %vm4991, %v4492, %v5289
    %v5291 = vsel %vm5117, %v4501, %v4498
    %v5292 = vsel %vm4983, %v4504, %v5291
    %v5293 = vsel %vm4985, %v4507, %v5292
    %v5294 = vsel %vm4987, %v4510, %v5293
    %v5295 = vsel %vm4989, %v4513, %v5294
    %v5296 = vsel %vm4991, %v4516, %v5295
    %v5297 = vsel %vm5117, %v4525, %v4522
    %v5298 = vsel %vm4983, %v4528, %v5297
    %v5299 = vsel %vm4985, %v4531, %v5298
    %v5300 = vsel %vm4987, %v4534, %v5299
    %v5301 = vsel %vm4989, %v4537, %v5300
    %v5302 = vsel %vm4991, %v4540, %v5301
    %v5303 = vsel %vm5117, %v4549, %v4546
    %v5304 = vsel %vm4983, %v4552, %v5303
    %v5305 = vsel %vm4985, %v4555, %v5304
    %v5306 = vsel %vm4987, %v4558, %v5305
    %v5307 = vsel %vm4989, %v4561, %v5306
    %v5308 = vsel %vm4991, %v4564, %v5307
    %v5309 = vsel %vm5117, %v4573, %v4570
    %v5310 = vsel %vm4983, %v4576, %v5309
    %v5311 = vsel %vm4985, %v4579, %v5310
    %v5312 = vsel %vm4987, %v4582, %v5311
    %v5313 = vsel %vm4989, %v4585, %v5312
    %v5314 = vsel %vm4991, %v4588, %v5313
    %v5315 = vsel %vm5117, %v4621, %v4618
    %v5316 = vsel %vm4983, %v4624, %v5315
    %v5317 = vsel %vm4985, %v4627, %v5316
    %v5318 = vsel %vm4987, %v4630, %v5317
    %v5319 = vsel %vm4989, %v4633, %v5318
    %v5320 = vsel %vm4991, %v4636, %v5319
    %v5321 = vsel %vm5117, %v4645, %v4642
    %v5322 = vsel %vm4983, %v4648, %v5321
    %v5323 = vsel %vm4985, %v4651, %v5322
    %v5324 = vsel %vm4987, %v4654, %v5323
    %v5325 = vsel %vm4989, %v4657, %v5324
    %v5326 = vsel %vm4991, %v4660, %v5325
    %v5327 = vsel %vm5117, %v4669, %v4666
    %v5328 = vsel %vm4983, %v4672, %v5327
    %v5329 = vsel %vm4985, %v4675, %v5328
    %v5330 = vsel %vm4987, %v4678, %v5329
    %v5331 = vsel %vm4989, %v4681, %v5330
    %v5332 = vsel %vm4991, %v4684, %v5331
    %v5333 = vsel %vm5117, %v4693, %v4690
    %v5334 = vsel %vm4983, %v4696, %v5333
    %v5335 = vsel %vm4985, %v4699, %v5334
    %v5336 = vsel %vm4987, %v4702, %v5335
    %v5337 = vsel %vm4989, %v4705, %v5336
    %v5338 = vsel %vm4991, %v4708, %v5337
    %v5339 = vsel %vm5117, %v4717, %v4714
    %v5340 = vsel %vm4983, %v4720, %v5339
    %v5341 = vsel %vm4985, %v4723, %v5340
    %v5342 = vsel %vm4987, %v4726, %v5341
    %v5343 = vsel %vm4989, %v4729, %v5342
    %v5344 = vsel %vm4991, %v4732, %v5343
    %v5345 = vsel %vm5117, %v4741, %v4738
    %v5346 = vsel %vm4983, %v4744, %v5345
    %v5347 = vsel %vm4985, %v4747, %v5346
    %v5348 = vsel %vm4987, %v4750, %v5347
    %v5349 = vsel %vm4989, %v4753, %v5348
    %v5350 = vsel %vm4991, %v4756, %v5349
    %v5351 = vsel %vm5117, %v4765, %v4762
    %v5352 = vsel %vm4983, %v4768, %v5351
    %v5353 = vsel %vm4985, %v4771, %v5352
    %v5354 = vsel %vm4987, %v4774, %v5353
    %v5355 = vsel %vm4989, %v4777, %v5354
    %v5356 = vsel %vm4991, %v4780, %v5355
    %vm5371 = vcmask 522240
    %5372 = vst.msk [vmem:[%s5087 + $0x8] sm:$0x7f] %vm5371, %v5278
    %5373 = vst.msk [vmem:[%s5087 + $0x30] sm:$0x7f] %vm5371, %v5284
    %5374 = vst.msk [vmem:[%s5087 + $0x58] sm:$0x7f] %vm5371, %v5290
    %5375 = vst.msk [vmem:[%s5087 + $0x80] sm:$0x7f] %vm5371, %v5296
    %5376 = vst.msk [vmem:[%s5087 + $0xa8] sm:$0x7f] %vm5371, %v5302
    %5377 = vst.msk [vmem:[%s5087 + $0xd0] sm:$0x7f] %vm5371, %v5308
    %5378 = vst.msk [vmem:[%s5087 + $0xf8] sm:$0x7f] %vm5371, %v5314
    %5379 = vst.msk [vmem:[%s5087 + $0x148] sm:$0x7f] %vm5371, %v5320
    %5380 = vst.msk [vmem:[%s5087 + $0x170] sm:$0x7f] %vm5371, %v5326
    %5381 = vst.msk [vmem:[%s5087 + $0x198] sm:$0x7f] %vm5371, %v5332
    %5382 = vst.msk [vmem:[%s5087 + $0x1c0] sm:$0x7f] %vm5371, %v5338
    %5383 = vst.msk [vmem:[%s5087 + $0x1e8] sm:$0x7f] %vm5371, %v5344
    %5384 = vst.msk [vmem:[%s5087 + $0x210] sm:$0x7f] %vm5371, %v5350
    %5385 = vst.msk [vmem:[%s5087 + $0x238] sm:$0x7f] %vm5371, %v5356
    %v5400 = vsel %vm4983, %v4594, %v4591
    %v5401 = vsel %vm4985, %v4597, %v5400
    %v5402 = vsel %vm4987, %v4600, %v5401
    %v5403 = vsel %vm4989, %v4603, %v5402
    %v5404 = vsel %vm4991, %v4606, %v5403
    %v5405 = vsel %vm4993, %v4609, %v5404
    %v5406 = vsel %vm4983, %v4786, %v4783
    %v5407 = vsel %vm4985, %v4789, %v5406
    %v5408 = vsel %vm4987, %v4792, %v5407
    %v5409 = vsel %vm4989, %v4795, %v5408
    %v5410 = vsel %vm4991, %v4798, %v5409
    %v5411 = vsel %vm4993, %v4801, %v5410
    %5412 = vrot.lane.b32.xlu0 %v4994, 64
    %v5413 = vpop.permute.xlu0 %5412
    %5414 = vrot.lane.b32.xlu0 %v5000, 64
    %v5415 = vpop.permute.xlu0 %5414
    %5416 = vrot.lane.b32.xlu0 %v5006, 64
    %v5417 = vpop.permute.xlu0 %5416
    %5418 = vrot.lane.b32.xlu0 %v5012, 64
    %v5419 = vpop.permute.xlu0 %5418
    %5420 = vrot.lane.b32.xlu0 %v5018, 64
    %v5421 = vpop.permute.xlu0 %5420
    %5422 = vrot.lane.b32.xlu0 %v5024, 64
    %v5423 = vpop.permute.xlu0 %5422
    %5424 = vrot.lane.b32.xlu0 %v5030, 64
    %v5425 = vpop.permute.xlu0 %5424
    %5426 = vrot.lane.b32.xlu0 %v5405, 64
    %v5427 = vpop.permute.xlu0 %5426
    %5428 = vrot.lane.b32.xlu0 %v5036, 64
    %v5429 = vpop.permute.xlu0 %5428
    %5430 = vrot.lane.b32.xlu0 %v5042, 64
    %v5431 = vpop.permute.xlu0 %5430
    %5432 = vrot.lane.b32.xlu0 %v5048, 64
    %v5433 = vpop.permute.xlu0 %5432
    %5434 = vrot.lane.b32.xlu0 %v5054, 64
    %v5435 = vpop.permute.xlu0 %5434
    %5436 = vrot.lane.b32.xlu0 %v5060, 64
    %v5437 = vpop.permute.xlu0 %5436
    %5438 = vrot.lane.b32.xlu0 %v5066, 64
    %v5439 = vpop.permute.xlu0 %5438
    %5440 = vrot.lane.b32.xlu0 %v5072, 64
    %v5441 = vpop.permute.xlu0 %5440
    %5442 = vrot.lane.b32.xlu0 %v5411, 64
    %v5443 = vpop.permute.xlu0 %5442
    %vm5460 = vcmask 1048065
    %5461 = vst.msk [vmem:[#allocation2 + $0x8] sm:$0xfe] %vm5460, %v5413
    %5462 = vst.msk [vmem:[#allocation2 + $0x30] sm:$0xfe] %vm5460, %v5415
    %5463 = vst.msk [vmem:[#allocation2 + $0x58] sm:$0xfe] %vm5460, %v5417
    %5464 = vst.msk [vmem:[#allocation2 + $0x80] sm:$0xfe] %vm5460, %v5419
    %5465 = vst.msk [vmem:[#allocation2 + $0xa8] sm:$0xfe] %vm5460, %v5421
    %5466 = vst.msk [vmem:[#allocation2 + $0xd0] sm:$0xfe] %vm5460, %v5423
    %5467 = vst.msk [vmem:[#allocation2 + $0xf8] sm:$0xfe] %vm5460, %v5425
    %5468 = vst.msk [vmem:[#allocation2 + $0x120] sm:$0xfe] %vm5460, %v5427
    %5469 = vst.msk [vmem:[#allocation2 + $0x148] sm:$0xfe] %vm5460, %v5429
    %5470 = vst.msk [vmem:[#allocation2 + $0x170] sm:$0xfe] %vm5460, %v5431
    %5471 = vst.msk [vmem:[#allocation2 + $0x198] sm:$0xfe] %vm5460, %v5433
    %5472 = vst.msk [vmem:[#allocation2 + $0x1c0] sm:$0xfe] %vm5460, %v5435
    %5473 = vst.msk [vmem:[#allocation2 + $0x1e8] sm:$0xfe] %vm5460, %v5437
    %5474 = vst.msk [vmem:[#allocation2 + $0x210] sm:$0xfe] %vm5460, %v5439
    %5475 = vst.msk [vmem:[#allocation2 + $0x238] sm:$0xfe] %vm5460, %v5441
    %5476 = vst.msk [vmem:[#allocation2 + $0x260] sm:$0xfe] %vm5460, %v5443
    %v5479 = vsel %vm5117, %v4594, %v4591
    %v5480 = vsel %vm4983, %v4597, %v5479
    %v5481 = vsel %vm4985, %v4600, %v5480
    %v5482 = vsel %vm4987, %v4603, %v5481
    %v5483 = vsel %vm4989, %v4606, %v5482
    %v5484 = vsel %vm4991, %v4609, %v5483
    %v5485 = vsel %vm4993, %v4612, %v5484
    %v5486 = vsel %vm5117, %v4786, %v4783
    %v5487 = vsel %vm4983, %v4789, %v5486
    %v5488 = vsel %vm4985, %v4792, %v5487
    %v5489 = vsel %vm4987, %v4795, %v5488
    %v5490 = vsel %vm4989, %v4798, %v5489
    %v5491 = vsel %vm4991, %v4801, %v5490
    %v5492 = vsel %vm4993, %v4804, %v5491
    %5509 = vst.msk [vmem:[#allocation2 + $0x10] sm:$0xff] %vm679, %v5124
    %5510 = vst.msk [vmem:[#allocation2 + $0x38] sm:$0xff] %vm679, %v5131
    %5511 = vst.msk [vmem:[#allocation2 + $0x60] sm:$0xff] %vm679, %v5138
    %5512 = vst.msk [vmem:[#allocation2 + $0x88] sm:$0xff] %vm679, %v5145
    %5513 = vst.msk [vmem:[#allocation2 + $0xb0] sm:$0xff] %vm679, %v5152
    %5514 = vst.msk [vmem:[#allocation2 + $0xd8] sm:$0xff] %vm679, %v5159
    %5515 = vst.msk [vmem:[#allocation2 + $0x100] sm:$0xff] %vm679, %v5166
    %5516 = vst.msk [vmem:[#allocation2 + $0x128] sm:$0xff] %vm679, %v5485
    %5517 = vst.msk [vmem:[#allocation2 + $0x150] sm:$0xff] %vm679, %v5173
    %5518 = vst.msk [vmem:[#allocation2 + $0x178] sm:$0xff] %vm679, %v5180
    %5519 = vst.msk [vmem:[#allocation2 + $0x1a0] sm:$0xff] %vm679, %v5187
    %5520 = vst.msk [vmem:[#allocation2 + $0x1c8] sm:$0xff] %vm679, %v5194
    %5521 = vst.msk [vmem:[#allocation2 + $0x1f0] sm:$0xff] %vm679, %v5201
    %5522 = vst.msk [vmem:[#allocation2 + $0x218] sm:$0xff] %vm679, %v5208
    %5523 = vst.msk [vmem:[#allocation2 + $0x240] sm:$0xff] %vm679, %v5215
    %5524 = vst.msk [vmem:[#allocation2 + $0x268] sm:$0xff] %vm679, %v5492
    %v5525 = vsel %vm5117, %v4597, %v4594
    %v5526 = vsel %vm4983, %v4600, %v5525
    %v5527 = vsel %vm4985, %v4603, %v5526
    %v5528 = vsel %vm4987, %v4606, %v5527
    %v5529 = vsel %vm4989, %v4609, %v5528
    %v5530 = vsel %vm4991, %v4612, %v5529
    %v5531 = vsel %vm5117, %v4789, %v4786
    %v5532 = vsel %vm4983, %v4792, %v5531
    %v5533 = vsel %vm4985, %v4795, %v5532
    %v5534 = vsel %vm4987, %v4798, %v5533
    %v5535 = vsel %vm4989, %v4801, %v5534
    %v5536 = vsel %vm4991, %v4804, %v5535
    %5537 = vrot.lane.b32.xlu0 %v5278, 64
    %v5538 = vpop.permute.xlu0 %5537
    %5539 = vrot.lane.b32.xlu0 %v5284, 64
    %v5540 = vpop.permute.xlu0 %5539
    %5541 = vrot.lane.b32.xlu0 %v5290, 64
    %v5542 = vpop.permute.xlu0 %5541
    %5543 = vrot.lane.b32.xlu0 %v5296, 64
    %v5544 = vpop.permute.xlu0 %5543
    %5545 = vrot.lane.b32.xlu0 %v5302, 64
    %v5546 = vpop.permute.xlu0 %5545
    %5547 = vrot.lane.b32.xlu0 %v5308, 64
    %v5548 = vpop.permute.xlu0 %5547
    %5549 = vrot.lane.b32.xlu0 %v5314, 64
    %v5550 = vpop.permute.xlu0 %5549
    %5551 = vrot.lane.b32.xlu0 %v5530, 64
    %v5552 = vpop.permute.xlu0 %5551
    %5553 = vrot.lane.b32.xlu0 %v5320, 64
    %v5554 = vpop.permute.xlu0 %5553
    %5555 = vrot.lane.b32.xlu0 %v5326, 64
    %v5556 = vpop.permute.xlu0 %5555
    %5557 = vrot.lane.b32.xlu0 %v5332, 64
    %v5558 = vpop.permute.xlu0 %5557
    %5559 = vrot.lane.b32.xlu0 %v5338, 64
    %v5560 = vpop.permute.xlu0 %5559
    %5561 = vrot.lane.b32.xlu0 %v5344, 64
    %v5562 = vpop.permute.xlu0 %5561
    %5563 = vrot.lane.b32.xlu0 %v5350, 64
    %v5564 = vpop.permute.xlu0 %5563
    %5565 = vrot.lane.b32.xlu0 %v5356, 64
    %v5566 = vpop.permute.xlu0 %5565
    %5567 = vrot.lane.b32.xlu0 %v5536, 64
    %v5568 = vpop.permute.xlu0 %5567
    %vm5585 = vcmask 1047040
    %5586 = vst.msk [vmem:[#allocation2 + $0x10] sm:$0x7f] %vm5585, %v5538
    %5587 = vst.msk [vmem:[#allocation2 + $0x38] sm:$0x7f] %vm5585, %v5540
    %5588 = vst.msk [vmem:[#allocation2 + $0x60] sm:$0x7f] %vm5585, %v5542
    %5589 = vst.msk [vmem:[#allocation2 + $0x88] sm:$0x7f] %vm5585, %v5544
    %5590 = vst.msk [vmem:[#allocation2 + $0xb0] sm:$0x7f] %vm5585, %v5546
    %5591 = vst.msk [vmem:[#allocation2 + $0xd8] sm:$0x7f] %vm5585, %v5548
    %5592 = vst.msk [vmem:[#allocation2 + $0x100] sm:$0x7f] %vm5585, %v5550
    %5593 = vst.msk [vmem:[#allocation2 + $0x128] sm:$0x7f] %vm5585, %v5552
    %5594 = vst.msk [vmem:[#allocation2 + $0x150] sm:$0x7f] %vm5585, %v5554
    %5595 = vst.msk [vmem:[#allocation2 + $0x178] sm:$0x7f] %vm5585, %v5556
    %5596 = vst.msk [vmem:[#allocation2 + $0x1a0] sm:$0x7f] %vm5585, %v5558
    %5597 = vst.msk [vmem:[#allocation2 + $0x1c8] sm:$0x7f] %vm5585, %v5560
    %5598 = vst.msk [vmem:[#allocation2 + $0x1f0] sm:$0x7f] %vm5585, %v5562
    %5599 = vst.msk [vmem:[#allocation2 + $0x218] sm:$0x7f] %vm5585, %v5564
    %5600 = vst.msk [vmem:[#allocation2 + $0x240] sm:$0x7f] %vm5585, %v5566
    %5601 = vst.msk [vmem:[#allocation2 + $0x268] sm:$0x7f] %vm5585, %v5568
    %5604 = vst.msk [vmem:[#allocation2 + $0x18] sm:$0xfe] %vm5088, %v5000
    %5605 = vst.msk [vmem:[#allocation2 + $0x40] sm:$0xfe] %vm5088, %v5006
    %5606 = vst.msk [vmem:[#allocation2 + $0x68] sm:$0xfe] %vm5088, %v5012
    %5607 = vst.msk [vmem:[#allocation2 + $0x90] sm:$0xfe] %vm5088, %v5018
    %5608 = vst.msk [vmem:[#allocation2 + $0xb8] sm:$0xfe] %vm5088, %v5024
    %5609 = vst.msk [vmem:[#allocation2 + $0xe0] sm:$0xfe] %vm5088, %v5030
    %5610 = vst.msk [vmem:[#allocation2 + $0x108] sm:$0xfe] %vm5088, %v5405
    %5611 = vst.msk [vmem:[#allocation2 + $0x158] sm:$0xfe] %vm5088, %v5042
    %5612 = vst.msk [vmem:[#allocation2 + $0x180] sm:$0xfe] %vm5088, %v5048
    %5613 = vst.msk [vmem:[#allocation2 + $0x1a8] sm:$0xfe] %vm5088, %v5054
    %5614 = vst.msk [vmem:[#allocation2 + $0x1d0] sm:$0xfe] %vm5088, %v5060
    %5615 = vst.msk [vmem:[#allocation2 + $0x1f8] sm:$0xfe] %vm5088, %v5066
    %5616 = vst.msk [vmem:[#allocation2 + $0x220] sm:$0xfe] %vm5088, %v5072
    %5617 = vst.msk [vmem:[#allocation2 + $0x248] sm:$0xfe] %vm5088, %v5411
    %5618 = vrot.lane.b32.xlu0 %v5485, 64
    %v5619 = vpop.permute.xlu0 %5618
    %5620 = vrot.lane.b32.xlu0 %v5492, 64
    %v5621 = vpop.permute.xlu0 %5620
    %5624 = vst.msk [vmem:[#allocation2 + $0x18] sm:$0xff] %vm5258, %v5219
    %5625 = vst.msk [vmem:[#allocation2 + $0x40] sm:$0xff] %vm5258, %v5221
    %5626 = vst.msk [vmem:[#allocation2 + $0x68] sm:$0xff] %vm5258, %v5223
    %5627 = vst.msk [vmem:[#allocation2 + $0x90] sm:$0xff] %vm5258, %v5225
    %5628 = vst.msk [vmem:[#allocation2 + $0xb8] sm:$0xff] %vm5258, %v5227
    %5629 = vst.msk [vmem:[#allocation2 + $0xe0] sm:$0xff] %vm5258, %v5229
    %5630 = vst.msk [vmem:[#allocation2 + $0x108] sm:$0xff] %vm5258, %v5619
    %5631 = vst.msk [vmem:[#allocation2 + $0x158] sm:$0xff] %vm5258, %v5233
    %5632 = vst.msk [vmem:[#allocation2 + $0x180] sm:$0xff] %vm5258, %v5235
    %5633 = vst.msk [vmem:[#allocation2 + $0x1a8] sm:$0xff] %vm5258, %v5237
    %5634 = vst.msk [vmem:[#allocation2 + $0x1d0] sm:$0xff] %vm5258, %v5239
    %5635 = vst.msk [vmem:[#allocation2 + $0x1f8] sm:$0xff] %vm5258, %v5241
    %5636 = vst.msk [vmem:[#allocation2 + $0x220] sm:$0xff] %vm5258, %v5243
    %5637 = vst.msk [vmem:[#allocation2 + $0x248] sm:$0xff] %vm5258, %v5621
    %5640 = vst.msk [vmem:[#allocation2 + $0x20] sm:$0x7f] %vm5371, %v5284
    %5641 = vst.msk [vmem:[#allocation2 + $0x48] sm:$0x7f] %vm5371, %v5290
    %5642 = vst.msk [vmem:[#allocation2 + $0x70] sm:$0x7f] %vm5371, %v5296
    %5643 = vst.msk [vmem:[#allocation2 + $0x98] sm:$0x7f] %vm5371, %v5302
    %5644 = vst.msk [vmem:[#allocation2 + $0xc0] sm:$0x7f] %vm5371, %v5308
    %5645 = vst.msk [vmem:[#allocation2 + $0xe8] sm:$0x7f] %vm5371, %v5314
    %5646 = vst.msk [vmem:[#allocation2 + $0x110] sm:$0x7f] %vm5371, %v5530
    %5647 = vst.msk [vmem:[#allocation2 + $0x160] sm:$0x7f] %vm5371, %v5326
    %5648 = vst.msk [vmem:[#allocation2 + $0x188] sm:$0x7f] %vm5371, %v5332
    %5649 = vst.msk [vmem:[#allocation2 + $0x1b0] sm:$0x7f] %vm5371, %v5338
    %5650 = vst.msk [vmem:[#allocation2 + $0x1d8] sm:$0x7f] %vm5371, %v5344
    %5651 = vst.msk [vmem:[#allocation2 + $0x200] sm:$0x7f] %vm5371, %v5350
    %5652 = vst.msk [vmem:[#allocation2 + $0x228] sm:$0x7f] %vm5371, %v5356
    %5653 = vst.msk [vmem:[#allocation2 + $0x250] sm:$0x7f] %vm5371, %v5536
    %v5654 = vld [vmem:[#allocation2] sm:$0xff]
    %v5655 = vld [vmem:[#allocation2 + $0x8] sm:$0xff]
    %v5656 = vld [vmem:[#allocation2 + $0x10] sm:$0xff]
    %v5657 = vld [vmem:[#allocation2 + $0x18] sm:$0xff]
    %v5658 = vld [vmem:[#allocation2 + $0x20] sm:$0xff]
    %v5659 = vld [vmem:[#allocation2 + $0x28] sm:$0xff]
    %v5660 = vld [vmem:[#allocation2 + $0x30] sm:$0xff]
    %v5661 = vld [vmem:[#allocation2 + $0x38] sm:$0xff]
    %v5662 = vld [vmem:[#allocation2 + $0x40] sm:$0xff]
    %v5663 = vld [vmem:[#allocation2 + $0x48] sm:$0xff]
    %v5664 = vld [vmem:[#allocation2 + $0x50] sm:$0xff]
    %v5665 = vld [vmem:[#allocation2 + $0x58] sm:$0xff]
    %v5666 = vld [vmem:[#allocation2 + $0x60] sm:$0xff]
    %v5667 = vld [vmem:[#allocation2 + $0x68] sm:$0xff]
    %v5668 = vld [vmem:[#allocation2 + $0x70] sm:$0xff]
    %v5669 = vld [vmem:[#allocation2 + $0x78] sm:$0xff]
    %v5670 = vld [vmem:[#allocation2 + $0x80] sm:$0xff]
    %v5671 = vld [vmem:[#allocation2 + $0x88] sm:$0xff]
    %v5672 = vld [vmem:[#allocation2 + $0x90] sm:$0xff]
    %v5673 = vld [vmem:[#allocation2 + $0x98] sm:$0xff]
    %v5674 = vld [vmem:[#allocation2 + $0xa0] sm:$0xff]
    %v5675 = vld [vmem:[#allocation2 + $0xa8] sm:$0xff]
    %v5676 = vld [vmem:[#allocation2 + $0xb0] sm:$0xff]
    %v5677 = vld [vmem:[#allocation2 + $0xb8] sm:$0xff]
    %v5678 = vld [vmem:[#allocation2 + $0xc0] sm:$0xff]
    %v5679 = vld [vmem:[#allocation2 + $0xc8] sm:$0xff]
    %v5680 = vld [vmem:[#allocation2 + $0xd0] sm:$0xff]
    %v5681 = vld [vmem:[#allocation2 + $0xd8] sm:$0xff]
    %v5682 = vld [vmem:[#allocation2 + $0xe0] sm:$0xff]
    %v5683 = vld [vmem:[#allocation2 + $0xe8] sm:$0xff]
    %v5684 = vld [vmem:[#allocation2 + $0xf0] sm:$0xff]
    %v5685 = vld [vmem:[#allocation2 + $0xf8] sm:$0xff]
    %v5686 = vld [vmem:[#allocation2 + $0x100] sm:$0xff]
    %v5687 = vld [vmem:[#allocation2 + $0x108] sm:$0xff]
    %v5688 = vld [vmem:[#allocation2 + $0x110] sm:$0xff]
    %v5689 = vld [vmem:[#allocation2 + $0x118] sm:$0xff]
    %v5690 = vld [vmem:[#allocation2 + $0x120] sm:$0xff]
    %v5691 = vld [vmem:[#allocation2 + $0x128] sm:$0xff]
    %v5692 = vld [vmem:[#allocation2 + $0x130] sm:$0xff]
    %v5693 = vld [vmem:[#allocation2 + $0x138] sm:$0xff]
    %v5694 = vld [vmem:[#allocation2 + $0x140] sm:$0xff]
    %v5695 = vld [vmem:[#allocation2 + $0x148] sm:$0xff]
    %v5696 = vld [vmem:[#allocation2 + $0x150] sm:$0xff]
    %v5697 = vld [vmem:[#allocation2 + $0x158] sm:$0xff]
    %v5698 = vld [vmem:[#allocation2 + $0x160] sm:$0xff]
    %v5699 = vld [vmem:[#allocation2 + $0x168] sm:$0xff]
    %v5700 = vld [vmem:[#allocation2 + $0x170] sm:$0xff]
    %v5701 = vld [vmem:[#allocation2 + $0x178] sm:$0xff]
    %v5702 = vld [vmem:[#allocation2 + $0x180] sm:$0xff]
    %v5703 = vld [vmem:[#allocation2 + $0x188] sm:$0xff]
    %v5704 = vld [vmem:[#allocation2 + $0x190] sm:$0xff]
    %v5705 = vld [vmem:[#allocation2 + $0x198] sm:$0xff]
    %v5706 = vld [vmem:[#allocation2 + $0x1a0] sm:$0xff]
    %v5707 = vld [vmem:[#allocation2 + $0x1a8] sm:$0xff]
    %v5708 = vld [vmem:[#allocation2 + $0x1b0] sm:$0xff]
    %v5709 = vld [vmem:[#allocation2 + $0x1b8] sm:$0xff]
    %v5710 = vld [vmem:[#allocation2 + $0x1c0] sm:$0xff]
    %v5711 = vld [vmem:[#allocation2 + $0x1c8] sm:$0xff]
    %v5712 = vld [vmem:[#allocation2 + $0x1d0] sm:$0xff]
    %v5713 = vld [vmem:[#allocation2 + $0x1d8] sm:$0xff]
    %v5714 = vld [vmem:[#allocation2 + $0x1e0] sm:$0xff]
    %v5715 = vld [vmem:[#allocation2 + $0x1e8] sm:$0xff]
    %v5716 = vld [vmem:[#allocation2 + $0x1f0] sm:$0xff]
    %v5717 = vld [vmem:[#allocation2 + $0x1f8] sm:$0xff]
    %v5718 = vld [vmem:[#allocation2 + $0x200] sm:$0xff]
    %v5719 = vld [vmem:[#allocation2 + $0x208] sm:$0xff]
    %v5720 = vld [vmem:[#allocation2 + $0x210] sm:$0xff]
    %v5721 = vld [vmem:[#allocation2 + $0x218] sm:$0xff]
    %v5722 = vld [vmem:[#allocation2 + $0x220] sm:$0xff]
    %v5723 = vld [vmem:[#allocation2 + $0x228] sm:$0xff]
    %v5724 = vld [vmem:[#allocation2 + $0x230] sm:$0xff]
    %v5725 = vld [vmem:[#allocation2 + $0x238] sm:$0xff]
    %v5726 = vld [vmem:[#allocation2 + $0x240] sm:$0xff]
    %v5727 = vld [vmem:[#allocation2 + $0x248] sm:$0xff]
    %v5728 = vld [vmem:[#allocation2 + $0x250] sm:$0xff]
    %v5729 = vld [vmem:[#allocation2 + $0x258] sm:$0xff]
    %v5730 = vld [vmem:[#allocation2 + $0x260] sm:$0xff]
    %v5731 = vld [vmem:[#allocation2 + $0x268] sm:$0xff]
    %v5732 = vld [vmem:[#allocation2 + $0x270] sm:$0xff]
    %v5733 = vld [vmem:[#allocation2 + $0x278] sm:$0xff]
    %v5734 = vld [vmem:[%s2] sm:$0xff]
    %v5735 = vld [vmem:[%s2 + $0x8] sm:$0xff]
    %v5736 = vld [vmem:[%s2 + $0x10] sm:$0xff]
    %v5737 = vld [vmem:[%s2 + $0x18] sm:$0xff]
    %v5738 = vld [vmem:[%s2 + $0x20] sm:$0xff]
    %v5739 = vld [vmem:[%s2 + $0x28] sm:$0xff]
    %v5740 = vld [vmem:[%s2 + $0x30] sm:$0xff]
    %v5741 = vld [vmem:[%s2 + $0x38] sm:$0xff]
    %v5742 = vld [vmem:[%s2 + $0x40] sm:$0xff]
    %v5743 = vld [vmem:[%s2 + $0x48] sm:$0xff]
    %v5744 = vld [vmem:[%s2 + $0x50] sm:$0xff]
    %v5745 = vld [vmem:[%s2 + $0x58] sm:$0xff]
    %v5746 = vld [vmem:[%s2 + $0x60] sm:$0xff]
    %v5747 = vld [vmem:[%s2 + $0x68] sm:$0xff]
    %v5748 = vld [vmem:[%s2 + $0x70] sm:$0xff]
    %v5749 = vld [vmem:[%s2 + $0x78] sm:$0xff]
    %v5750 = vld [vmem:[%s2 + $0x80] sm:$0xff]
    %v5751 = vld [vmem:[%s2 + $0x88] sm:$0xff]
    %v5752 = vld [vmem:[%s2 + $0x90] sm:$0xff]
    %v5753 = vld [vmem:[%s2 + $0x98] sm:$0xff]
    %v5754 = vld [vmem:[%s2 + $0xa0] sm:$0xff]
    %v5755 = vld [vmem:[%s2 + $0xa8] sm:$0xff]
    %v5756 = vld [vmem:[%s2 + $0xb0] sm:$0xff]
    %v5757 = vld [vmem:[%s2 + $0xb8] sm:$0xff]
    %v5758 = vld [vmem:[%s2 + $0xc0] sm:$0xff]
    %v5759 = vld [vmem:[%s2 + $0xc8] sm:$0xff]
    %v5760 = vld [vmem:[%s2 + $0xd0] sm:$0xff]
    %v5761 = vld [vmem:[%s2 + $0xd8] sm:$0xff]
    %v5762 = vld [vmem:[%s2 + $0xe0] sm:$0xff]
    %v5763 = vld [vmem:[%s2 + $0xe8] sm:$0xff]
    %v5764 = vld [vmem:[%s2 + $0xf0] sm:$0xff]
    %v5765 = vld [vmem:[%s2 + $0xf8] sm:$0xff]
    %v5766 = vld [vmem:[%s2 + $0x100] sm:$0xff]
    %v5767 = vld [vmem:[%s2 + $0x108] sm:$0xff]
    %v5768 = vld [vmem:[%s2 + $0x110] sm:$0xff]
    %v5769 = vld [vmem:[%s2 + $0x118] sm:$0xff]
    %v5770 = vld [vmem:[%s2 + $0x120] sm:$0xff]
    %v5771 = vld [vmem:[%s2 + $0x128] sm:$0xff]
    %v5772 = vld [vmem:[%s2 + $0x130] sm:$0xff]
    %v5773 = vld [vmem:[%s2 + $0x138] sm:$0xff]
    %v5774 = vld [vmem:[%s2 + $0x140] sm:$0xff]
    %v5775 = vld [vmem:[%s2 + $0x148] sm:$0xff]
    %v5776 = vld [vmem:[%s2 + $0x150] sm:$0xff]
    %v5777 = vld [vmem:[%s2 + $0x158] sm:$0xff]
    %v5778 = vld [vmem:[%s2 + $0x160] sm:$0xff]
    %v5779 = vld [vmem:[%s2 + $0x168] sm:$0xff]
    %v5780 = vld [vmem:[%s2 + $0x170] sm:$0xff]
    %v5781 = vld [vmem:[%s2 + $0x178] sm:$0xff]
    %v5782 = vld [vmem:[%s2 + $0x180] sm:$0xff]
    %v5783 = vld [vmem:[%s2 + $0x188] sm:$0xff]
    %v5784 = vld [vmem:[%s2 + $0x190] sm:$0xff]
    %v5785 = vld [vmem:[%s2 + $0x198] sm:$0xff]
    %v5786 = vld [vmem:[%s2 + $0x1a0] sm:$0xff]
    %v5787 = vld [vmem:[%s2 + $0x1a8] sm:$0xff]
    %v5788 = vld [vmem:[%s2 + $0x1b0] sm:$0xff]
    %v5789 = vld [vmem:[%s2 + $0x1b8] sm:$0xff]
    %v5790 = vld [vmem:[%s2 + $0x1c0] sm:$0xff]
    %v5791 = vld [vmem:[%s2 + $0x1c8] sm:$0xff]
    %v5792 = vld [vmem:[%s2 + $0x1d0] sm:$0xff]
    %v5793 = vld [vmem:[%s2 + $0x1d8] sm:$0xff]
    %v5794 = vld [vmem:[%s2 + $0x1e0] sm:$0xff]
    %v5795 = vld [vmem:[%s2 + $0x1e8] sm:$0xff]
    %v5796 = vld [vmem:[%s2 + $0x1f0] sm:$0xff]
    %v5797 = vld [vmem:[%s2 + $0x1f8] sm:$0xff]
    %v5798 = vld [vmem:[%s2 + $0x200] sm:$0xff]
    %v5799 = vld [vmem:[%s2 + $0x208] sm:$0xff]
    %v5800 = vld [vmem:[%s2 + $0x210] sm:$0xff]
    %v5801 = vld [vmem:[%s2 + $0x218] sm:$0xff]
    %v5802 = vld [vmem:[%s2 + $0x220] sm:$0xff]
    %v5803 = vld [vmem:[%s2 + $0x228] sm:$0xff]
    %v5804 = vld [vmem:[%s2 + $0x230] sm:$0xff]
    %v5805 = vld [vmem:[%s2 + $0x238] sm:$0xff]
    %v5807 = vsel %vm679, %v5658, 0
    %v5810 = vsel %vm679, %v5663, 0
    %v5813 = vsel %vm679, %v5668, 0
    %v5816 = vsel %vm679, %v5673, 0
    %v5819 = vsel %vm679, %v5678, 0
    %v5822 = vsel %vm679, %v5683, 0
    %v5825 = vsel %vm679, %v5688, 0
    %v5828 = vsel %vm679, %v5693, 0
    %v5831 = vsel %vm679, %v5698, 0
    %v5834 = vsel %vm679, %v5703, 0
    %v5837 = vsel %vm679, %v5708, 0
    %v5840 = vsel %vm679, %v5713, 0
    %v5843 = vsel %vm679, %v5718, 0
    %v5846 = vsel %vm679, %v5723, 0
    %v5849 = vsel %vm679, %v5728, 0
    %v5852 = vsel %vm679, %v5733, 0
    %5854 = vmatprep.subr.mxu0 0.0
    %5855 = vmatpush1.msra.mxu0 %v5734
    %5856 = vmatprep.subr.mxu0 0.0
    %5857 = vmatpush1.msra.mxu0 %v5735
    %5858 = vmatprep.subr.mxu0 0.0
    %5859 = vmatpush1.msra.mxu0 %v5736
    %5860 = vmatprep.subr.mxu0 0.0
    %5861 = vmatpush1.msra.mxu0 %v5737
    %5862 = vmatprep.subr.mxu0 0.0
    %5863 = vmatpush1.msra.mxu0 %v5738
    %5864 = vmatprep.subr.mxu0 0.0
    %5865 = vmatpush1.msra.mxu0 %v5739
    %5866 = vmatprep.subr.mxu0 0.0
    %5867 = vmatpush1.msra.mxu0 %v5740
    %5868 = vmatprep.subr.mxu0 0.0
    %5869 = vmatpush1.msra.mxu0 %v5741
    %5870 = vmatprep.subr.mxu0 0.0
    %5871 = vmatpush1.msra.mxu0 %v5742
    %5872 = vmatprep.subr.mxu0 0.0
    %5873 = vmatpush1.msra.mxu0 %v5743
    %5874 = vmatprep.subr.mxu0 0.0
    %5875 = vmatpush1.msra.mxu0 %v5744
    %5876 = vmatprep.subr.mxu0 0.0
    %5877 = vmatpush1.msra.mxu0 %v5745
    %5878 = vmatprep.subr.mxu0 0.0
    %5879 = vmatpush1.msra.mxu0 %v5746
    %5880 = vmatprep.subr.mxu0 0.0
    %5881 = vmatpush1.msra.mxu0 %v5747
    %5882 = vmatprep.subr.mxu0 0.0
    %5883 = vmatpush1.msra.mxu0 %v5748
    %5884 = vmatprep.subr.mxu0 0.0
    %5885 = vmatpush1.msra.mxu0 %v5749
    %5886 = vmatprep.subr.mxu0 0.0
    %5887 = vmatpush1.msra.mxu0 %v5750
    %5888 = vmatprep.subr.mxu0 0.0
    %5889 = vmatpush1.msra.mxu0 %v5751
    %5890 = vmatprep.subr.mxu0 0.0
    %5891 = vmatpush1.msra.mxu0 %v5752
    %5892 = vmatprep.subr.mxu0 0.0
    %5893 = vmatpush1.msra.mxu0 %v5753
    %5894 = vmatprep.subr.mxu0 0.0
    %5895 = vmatpush1.msra.mxu0 %v5754
    %5896 = vmatprep.subr.mxu0 0.0
    %5897 = vmatpush1.msra.mxu0 %v5755
    %5898 = vmatprep.subr.mxu0 0.0
    %5899 = vmatpush1.msra.mxu0 %v5756
    %5900 = vmatprep.subr.mxu0 0.0
    %5901 = vmatpush1.msra.mxu0 %v5757
    %5902 = vmatprep.subr.mxu0 0.0
    %5903 = vmatpush1.msra.mxu0 %v5758
    %5904 = vmatprep.subr.mxu0 0.0
    %5905 = vmatpush1.msra.mxu0 %v5759
    %5906 = vmatprep.subr.mxu0 0.0
    %5907 = vmatpush1.msra.mxu0 %v5760
    %5908 = vmatprep.subr.mxu0 0.0
    %5909 = vmatpush1.msra.mxu0 %v5761
    %5910 = vmatprep.subr.mxu0 0.0
    %5911 = vmatpush1.msra.mxu0 %v5762
    %5912 = vmatprep.subr.mxu0 0.0
    %5913 = vmatpush1.msra.mxu0 %v5763
    %5914 = vmatprep.subr.mxu0 0.0
    %5915 = vmatpush1.msra.mxu0 %v5764
    %5916 = vmatprep.subr.mxu0 0.0
    %5917 = vmatpush1.msra.mxu0 %v5765
    %5918 = vmatprep.mubr.f32.mxu0 %v5655
    %5919 = vmatmul.mubr.f32.gmra.mrb[0].mxu0 %v5654
    %v5920 = vpop.f32.mrb[0].mxu0
    %v5921 = vadd.f32 0.0, %v5920
    %v5922 = vpop.f32.mrb[0].mxu0
    %5923 = vmatprep.mubr.f32.mxu0 %v5660
    %5924 = vmatmul.mubr.f32.gmra.mrb[0].mxu0 %v5659
    %v5925 = vpop.f32.mrb[0].mxu0
    %v5926 = vadd.f32 0.0, %v5925
    %v5927 = vpop.f32.mrb[0].mxu0
    %5928 = vmatprep.mubr.f32.mxu0 %v5665
    %5929 = vmatmul.mubr.f32.gmra.mrb[0].mxu0 %v5664
    %v5930 = vpop.f32.mrb[0].mxu0
    %v5931 = vadd.f32 0.0, %v5930
    %v5932 = vpop.f32.mrb[0].mxu0
    %5933 = vmatprep.mubr.f32.mxu0 %v5670
    %5934 = vmatmul.mubr.f32.gmra.mrb[0].mxu0 %v5669
    %v5935 = vpop.f32.mrb[0].mxu0
    %v5936 = vadd.f32 0.0, %v5935
    %v5937 = vpop.f32.mrb[0].mxu0
    %5938 = vmatprep.mubr.f32.mxu0 %v5675
    %5939 = vmatmul.mubr.f32.gmra.mrb[0].mxu0 %v5674
    %v5940 = vpop.f32.mrb[0].mxu0
    %v5941 = vadd.f32 0.0, %v5940
    %v5942 = vpop.f32.mrb[0].mxu0
    %5943 = vmatprep.mubr.f32.mxu0 %v5680
    %5944 = vmatmul.mubr.f32.gmra.mrb[0].mxu0 %v5679
    %v5945 = vpop.f32.mrb[0].mxu0
    %v5946 = vadd.f32 0.0, %v5945
    %v5947 = vpop.f32.mrb[0].mxu0
    %5948 = vmatprep.mubr.f32.mxu0 %v5685
    %5949 = vmatmul.mubr.f32.gmra.mrb[0].mxu0 %v5684
    %v5950 = vpop.f32.mrb[0].mxu0
    %v5951 = vadd.f32 0.0, %v5950
    %v5952 = vpop.f32.mrb[0].mxu0
    %5953 = vmatprep.mubr.f32.mxu0 %v5690
    %5954 = vmatmul.mubr.f32.gmra.mrb[0].mxu0 %v5689
    %v5955 = vpop.f32.mrb[0].mxu0
    %v5956 = vadd.f32 0.0, %v5955
    %v5957 = vpop.f32.mrb[0].mxu0
    %5958 = vmatprep.mubr.f32.mxu0 %v5695
    %5959 = vmatmul.mubr.f32.gmra.mrb[0].mxu0 %v5694
    %v5960 = vpop.f32.mrb[0].mxu0
    %v5961 = vadd.f32 0.0, %v5960
    %v5962 = vpop.f32.mrb[0].mxu0
    %5963 = vmatprep.mubr.f32.mxu0 %v5700
    %5964 = vmatmul.mubr.f32.gmra.mrb[0].mxu0 %v5699
    %v5965 = vpop.f32.mrb[0].mxu0
    %v5966 = vadd.f32 0.0, %v5965
    %v5967 = vpop.f32.mrb[0].mxu0
    %5968 = vmatprep.mubr.f32.mxu0 %v5705
    %5969 = vmatmul.mubr.f32.gmra.mrb[0].mxu0 %v5704
    %v5970 = vpop.f32.mrb[0].mxu0
    %v5971 = vadd.f32 0.0, %v5970
    %v5972 = vpop.f32.mrb[0].mxu0
    %5973 = vmatprep.mubr.f32.mxu0 %v5710
    %5974 = vmatmul.mubr.f32.gmra.mrb[0].mxu0 %v5709
    %v5975 = vpop.f32.mrb[0].mxu0
    %v5976 = vadd.f32 0.0, %v5975
    %v5977 = vpop.f32.mrb[0].mxu0
    %5978 = vmatprep.mubr.f32.mxu0 %v5715
    %5979 = vmatmul.mubr.f32.gmra.mrb[0].mxu0 %v5714
    %v5980 = vpop.f32.mrb[0].mxu0
    %v5981 = vadd.f32 0.0, %v5980
    %v5982 = vpop.f32.mrb[0].mxu0
    %5983 = vmatprep.mubr.f32.mxu0 %v5720
    %5984 = vmatmul.mubr.f32.gmra.mrb[0].mxu0 %v5719
    %v5985 = vpop.f32.mrb[0].mxu0
    %v5986 = vadd.f32 0.0, %v5985
    %v5987 = vpop.f32.mrb[0].mxu0
    %5988 = vmatprep.mubr.f32.mxu0 %v5725
    %5989 = vmatmul.mubr.f32.gmra.mrb[0].mxu0 %v5724
    %v5990 = vpop.f32.mrb[0].mxu0
    %v5991 = vadd.f32 0.0, %v5990
    %v5992 = vpop.f32.mrb[0].mxu0
    %5993 = vmatprep.mubr.f32.mxu0 %v5730
    %5994 = vmatmul.mubr.f32.gmra.mrb[0].mxu0 %v5729
    %v5995 = vpop.f32.mrb[0].mxu0
    %v5996 = vadd.f32 0.0, %v5995
    %v5997 = vpop.f32.mrb[0].mxu0
    %5998 = vdwg.mxu0
    %5999 = vmatprep.subr.mxu0 0.0
    %6000 = vmatpush1.msra.mxu0 %v5766
    %6001 = vmatprep.subr.mxu0 0.0
    %6002 = vmatpush1.msra.mxu0 %v5767
    %6003 = vmatprep.subr.mxu0 0.0
    %6004 = vmatpush1.msra.mxu0 %v5768
    %6005 = vmatprep.subr.mxu0 0.0
    %6006 = vmatpush1.msra.mxu0 %v5769
    %6007 = vmatprep.subr.mxu0 0.0
    %6008 = vmatpush1.msra.mxu0 %v5770
    %6009 = vmatprep.subr.mxu0 0.0
    %6010 = vmatpush1.msra.mxu0 %v5771
    %6011 = vmatprep.subr.mxu0 0.0
    %6012 = vmatpush1.msra.mxu0 %v5772
    %6013 = vmatprep.subr.mxu0 0.0
    %6014 = vmatpush1.msra.mxu0 %v5773
    %6015 = vmatprep.subr.mxu0 0.0
    %6016 = vmatpush1.msra.mxu0 %v5774
    %6017 = vmatprep.subr.mxu0 0.0
    %6018 = vmatpush1.msra.mxu0 %v5775
    %6019 = vmatprep.subr.mxu0 0.0
    %6020 = vmatpush1.msra.mxu0 %v5776
    %6021 = vmatprep.subr.mxu0 0.0
    %6022 = vmatpush1.msra.mxu0 %v5777
    %6023 = vmatprep.subr.mxu0 0.0
    %6024 = vmatpush1.msra.mxu0 %v5778
    %6025 = vmatprep.subr.mxu0 0.0
    %6026 = vmatpush1.msra.mxu0 %v5779
    %6027 = vmatprep.subr.mxu0 0.0
    %6028 = vmatpush1.msra.mxu0 %v5780
    %6029 = vmatprep.subr.mxu0 0.0
    %6030 = vmatpush1.msra.mxu0 %v5781
    %6031 = vmatprep.subr.mxu0 0.0
    %6032 = vmatpush1.msra.mxu0 %v5782
    %6033 = vmatprep.subr.mxu0 0.0
    %6034 = vmatpush1.msra.mxu0 %v5783
    %6035 = vmatprep.subr.mxu0 0.0
    %6036 = vmatpush1.msra.mxu0 %v5784
    %6037 = vmatprep.subr.mxu0 0.0
    %6038 = vmatpush1.msra.mxu0 %v5785
    %6039 = vmatprep.subr.mxu0 0.0
    %6040 = vmatpush1.msra.mxu0 %v5786
    %6041 = vmatprep.subr.mxu0 0.0
    %6042 = vmatpush1.msra.mxu0 %v5787
    %6043 = vmatprep.subr.mxu0 0.0
    %6044 = vmatpush1.msra.mxu0 %v5788
    %6045 = vmatprep.subr.mxu0 0.0
    %6046 = vmatpush1.msra.mxu0 %v5789
    %6047 = vmatprep.subr.mxu0 0.0
    %6048 = vmatpush1.msra.mxu0 %v5790
    %6049 = vmatprep.subr.mxu0 0.0
    %6050 = vmatpush1.msra.mxu0 %v5791
    %6051 = vmatprep.subr.mxu0 0.0
    %6052 = vmatpush1.msra.mxu0 %v5792
    %6053 = vmatprep.subr.mxu0 0.0
    %6054 = vmatpush1.msra.mxu0 %v5793
    %6055 = vmatprep.subr.mxu0 0.0
    %6056 = vmatpush1.msra.mxu0 %v5794
    %6057 = vmatprep.subr.mxu0 0.0
    %6058 = vmatpush1.msra.mxu0 %v5795
    %6059 = vmatprep.subr.mxu0 0.0
    %6060 = vmatpush1.msra.mxu0 %v5796
    %6061 = vmatprep.subr.mxu0 0.0
    %6062 = vmatpush1.msra.mxu0 %v5797
    %6063 = vmatprep.mubr.f32.mxu0 %v5657
    %6064 = vmatmul.mubr.f32.gmra.mrb[0].mxu0 %v5656
    %v6065 = vpop.f32.mrb[0].mxu0
    %v6066 = vadd.f32 %v5921, %v6065
    %v6067 = vpop.f32.mrb[0].mxu0
    %6068 = vmatprep.mubr.f32.mxu0 %v5662
    %6069 = vmatmul.mubr.f32.gmra.mrb[0].mxu0 %v5661
    %v6070 = vpop.f32.mrb[0].mxu0
    %v6071 = vadd.f32 %v5926, %v6070
    %v6072 = vpop.f32.mrb[0].mxu0
    %6073 = vmatprep.mubr.f32.mxu0 %v5667
    %6074 = vmatmul.mubr.f32.gmra.mrb[0].mxu0 %v5666
    %v6075 = vpop.f32.mrb[0].mxu0
    %v6076 = vadd.f32 %v5931, %v6075
    %v6077 = vpop.f32.mrb[0].mxu0
    %6078 = vmatprep.mubr.f32.mxu0 %v5672
    %6079 = vmatmul.mubr.f32.gmra.mrb[0].mxu0 %v5671
    %v6080 = vpop.f32.mrb[0].mxu0
    %v6081 = vadd.f32 %v5936, %v6080
    %v6082 = vpop.f32.mrb[0].mxu0
    %6083 = vmatprep.mubr.f32.mxu0 %v5677
    %6084 = vmatmul.mubr.f32.gmra.mrb[0].mxu0 %v5676
    %v6085 = vpop.f32.mrb[0].mxu0
    %v6086 = vadd.f32 %v5941, %v6085
    %v6087 = vpop.f32.mrb[0].mxu0
    %6088 = vmatprep.mubr.f32.mxu0 %v5682
    %6089 = vmatmul.mubr.f32.gmra.mrb[0].mxu0 %v5681
    %v6090 = vpop.f32.mrb[0].mxu0
    %v6091 = vadd.f32 %v5946, %v6090
    %v6092 = vpop.f32.mrb[0].mxu0
    %6093 = vmatprep.mubr.f32.mxu0 %v5687
    %6094 = vmatmul.mubr.f32.gmra.mrb[0].mxu0 %v5686
    %v6095 = vpop.f32.mrb[0].mxu0
    %v6096 = vadd.f32 %v5951, %v6095
    %v6097 = vpop.f32.mrb[0].mxu0
    %6098 = vmatprep.mubr.f32.mxu0 %v5692
    %6099 = vmatmul.mubr.f32.gmra.mrb[0].mxu0 %v5691
    %v6100 = vpop.f32.mrb[0].mxu0
    %v6101 = vadd.f32 %v5956, %v6100
    %v6102 = vpop.f32.mrb[0].mxu0
    %6103 = vmatprep.mubr.f32.mxu0 %v5697
    %6104 = vmatmul.mubr.f32.gmra.mrb[0].mxu0 %v5696
    %v6105 = vpop.f32.mrb[0].mxu0
    %v6106 = vadd.f32 %v5961, %v6105
    %v6107 = vpop.f32.mrb[0].mxu0
    %6108 = vmatprep.mubr.f32.mxu0 %v5702
    %6109 = vmatmul.mubr.f32.gmra.mrb[0].mxu0 %v5701
    %v6110 = vpop.f32.mrb[0].mxu0
    %v6111 = vadd.f32 %v5966, %v6110
    %v6112 = vpop.f32.mrb[0].mxu0
    %6113 = vmatprep.mubr.f32.mxu0 %v5707
    %6114 = vmatmul.mubr.f32.gmra.mrb[0].mxu0 %v5706
    %v6115 = vpop.f32.mrb[0].mxu0
    %v6116 = vadd.f32 %v5971, %v6115
    %v6117 = vpop.f32.mrb[0].mxu0
    %6118 = vmatprep.mubr.f32.mxu0 %v5712
    %6119 = vmatmul.mubr.f32.gmra.mrb[0].mxu0 %v5711
    %v6120 = vpop.f32.mrb[0].mxu0
    %v6121 = vadd.f32 %v5976, %v6120
    %v6122 = vpop.f32.mrb[0].mxu0
    %6123 = vmatprep.mubr.f32.mxu0 %v5717
    %6124 = vmatmul.mubr.f32.gmra.mrb[0].mxu0 %v5716
    %v6125 = vpop.f32.mrb[0].mxu0
    %v6126 = vadd.f32 %v5981, %v6125
    %v6127 = vpop.f32.mrb[0].mxu0
    %6128 = vmatprep.mubr.f32.mxu0 %v5722
    %6129 = vmatmul.mubr.f32.gmra.mrb[0].mxu0 %v5721
    %v6130 = vpop.f32.mrb[0].mxu0
    %v6131 = vadd.f32 %v5986, %v6130
    %v6132 = vpop.f32.mrb[0].mxu0
    %6133 = vmatprep.mubr.f32.mxu0 %v5727
    %6134 = vmatmul.mubr.f32.gmra.mrb[0].mxu0 %v5726
    %v6135 = vpop.f32.mrb[0].mxu0
    %v6136 = vadd.f32 %v5991, %v6135
    %v6137 = vpop.f32.mrb[0].mxu0
    %6138 = vmatprep.mubr.f32.mxu0 %v5732
    %6139 = vmatmul.mubr.f32.gmra.mrb[0].mxu0 %v5731
    %v6140 = vpop.f32.mrb[0].mxu0
    %v6141 = vadd.f32 %v5996, %v6140
    %v6142 = vpop.f32.mrb[0].mxu0
    %6143 = vdwg.mxu0
    %6144 = vmatprep.subr.mxu0 0.0
    %6145 = vmatpush1.msra.mxu0 %v5798
    %6146 = vmatprep.subr.mxu0 0.0
    %6147 = vmatpush1.msra.mxu0 %v5799
    %6148 = vmatprep.subr.mxu0 0.0
    %6149 = vmatpush1.msra.mxu0 %v5800
    %6150 = vmatprep.subr.mxu0 0.0
    %6151 = vmatpush1.msra.mxu0 %v5801
    %6152 = vmatprep.subr.mxu0 0.0
    %6153 = vmatpush1.msra.mxu0 %v5802
    %6154 = vmatprep.subr.mxu0 0.0
    %6155 = vmatpush1.msra.mxu0 %v5803
    %6156 = vmatprep.subr.mxu0 0.0
    %6157 = vmatpush1.msra.mxu0 %v5804
    %6158 = vmatprep.subr.mxu0 0.0
    %6159 = vmatpush1.msra.mxu0 %v5805
    %6160 = vmatprep.subr.mxu0 0.0
    %6161 = vmatpush1.msra.mxu0 0.0
    %6162 = vmatprep.subr.mxu0 0.0
    %6163 = vmatpush1.msra.mxu0 0.0
    %6164 = vmatprep.subr.mxu0 0.0
    %6165 = vmatpush1.msra.mxu0 0.0
    %6166 = vmatprep.subr.mxu0 0.0
    %6167 = vmatpush1.msra.mxu0 0.0
    %6168 = vmatprep.subr.mxu0 0.0
    %6169 = vmatpush1.msra.mxu0 0.0
    %6170 = vmatprep.subr.mxu0 0.0
    %6171 = vmatpush1.msra.mxu0 0.0
    %6172 = vmatprep.subr.mxu0 0.0
    %6173 = vmatpush1.msra.mxu0 0.0
    %6174 = vmatprep.subr.mxu0 0.0
    %6175 = vmatpush1.msra.mxu0 0.0
    %6176 = vmatprep.subr.mxu0 0.0
    %6177 = vmatpush1.msra.mxu0 0.0
    %6178 = vmatprep.subr.mxu0 0.0
    %6179 = vmatpush1.msra.mxu0 0.0
    %6180 = vmatprep.subr.mxu0 0.0
    %6181 = vmatpush1.msra.mxu0 0.0
    %6182 = vmatprep.subr.mxu0 0.0
    %6183 = vmatpush1.msra.mxu0 0.0
    %6184 = vmatprep.subr.mxu0 0.0
    %6185 = vmatpush1.msra.mxu0 0.0
    %6186 = vmatprep.subr.mxu0 0.0
    %6187 = vmatpush1.msra.mxu0 0.0
    %6188 = vmatprep.subr.mxu0 0.0
    %6189 = vmatpush1.msra.mxu0 0.0
    %6190 = vmatprep.subr.mxu0 0.0
    %6191 = vmatpush1.msra.mxu0 0.0
    %6192 = vmatprep.subr.mxu0 0.0
    %6193 = vmatpush1.msra.mxu0 0.0
    %6194 = vmatprep.subr.mxu0 0.0
    %6195 = vmatpush1.msra.mxu0 0.0
    %6196 = vmatprep.subr.mxu0 0.0
    %6197 = vmatpush1.msra.mxu0 0.0
    %6198 = vmatprep.subr.mxu0 0.0
    %6199 = vmatpush1.msra.mxu0 0.0
    %6200 = vmatprep.subr.mxu0 0.0
    %6201 = vmatpush1.msra.mxu0 0.0
    %6202 = vmatprep.subr.mxu0 0.0
    %6203 = vmatpush1.msra.mxu0 0.0
    %6204 = vmatprep.subr.mxu0 0.0
    %6205 = vmatpush1.msra.mxu0 0.0
    %6206 = vmatprep.subr.mxu0 0.0
    %6207 = vmatpush1.msra.mxu0 0.0
    %6208 = vmatprep.mubr.f32.mxu0 0.0
    %6209 = vmatmul.mubr.f32.gmra.mrb[0].mxu0 %v5807
    %v6210 = vpop.f32.mrb[0].mxu0
    %v6211 = vadd.f32 %v6066, %v6210
    %v6212 = vpop.f32.mrb[0].mxu0
    %6213 = vmatprep.mubr.f32.mxu0 0.0
    %6214 = vmatmul.mubr.f32.gmra.mrb[0].mxu0 %v5810
    %v6215 = vpop.f32.mrb[0].mxu0
    %v6216 = vadd.f32 %v6071, %v6215
    %v6217 = vpop.f32.mrb[0].mxu0
    %6218 = vmatprep.mubr.f32.mxu0 0.0
    %6219 = vmatmul.mubr.f32.gmra.mrb[0].mxu0 %v5813
    %v6220 = vpop.f32.mrb[0].mxu0
    %v6221 = vadd.f32 %v6076, %v6220
    %v6222 = vpop.f32.mrb[0].mxu0
    %6223 = vmatprep.mubr.f32.mxu0 0.0
    %6224 = vmatmul.mubr.f32.gmra.mrb[0].mxu0 %v5816
    %v6225 = vpop.f32.mrb[0].mxu0
    %v6226 = vadd.f32 %v6081, %v6225
    %v6227 = vpop.f32.mrb[0].mxu0
    %6228 = vmatprep.mubr.f32.mxu0 0.0
    %6229 = vmatmul.mubr.f32.gmra.mrb[0].mxu0 %v5819
    %v6230 = vpop.f32.mrb[0].mxu0
    %v6231 = vadd.f32 %v6086, %v6230
    %v6232 = vpop.f32.mrb[0].mxu0
    %6233 = vmatprep.mubr.f32.mxu0 0.0
    %6234 = vmatmul.mubr.f32.gmra.mrb[0].mxu0 %v5822
    %v6235 = vpop.f32.mrb[0].mxu0
    %v6236 = vadd.f32 %v6091, %v6235
    %v6237 = vpop.f32.mrb[0].mxu0
    %6238 = vmatprep.mubr.f32.mxu0 0.0
    %6239 = vmatmul.mubr.f32.gmra.mrb[0].mxu0 %v5825
    %v6240 = vpop.f32.mrb[0].mxu0
    %v6241 = vadd.f32 %v6096, %v6240
    %v6242 = vpop.f32.mrb[0].mxu0
    %6243 = vmatprep.mubr.f32.mxu0 0.0
    %6244 = vmatmul.mubr.f32.gmra.mrb[0].mxu0 %v5828
    %v6245 = vpop.f32.mrb[0].mxu0
    %v6246 = vadd.f32 %v6101, %v6245
    %v6247 = vpop.f32.mrb[0].mxu0
    %6248 = vmatprep.mubr.f32.mxu0 0.0
    %6249 = vmatmul.mubr.f32.gmra.mrb[0].mxu0 %v5831
    %v6250 = vpop.f32.mrb[0].mxu0
    %v6251 = vadd.f32 %v6106, %v6250
    %v6252 = vpop.f32.mrb[0].mxu0
    %6253 = vmatprep.mubr.f32.mxu0 0.0
    %6254 = vmatmul.mubr.f32.gmra.mrb[0].mxu0 %v5834
    %v6255 = vpop.f32.mrb[0].mxu0
    %v6256 = vadd.f32 %v6111, %v6255
    %v6257 = vpop.f32.mrb[0].mxu0
    %6258 = vmatprep.mubr.f32.mxu0 0.0
    %6259 = vmatmul.mubr.f32.gmra.mrb[0].mxu0 %v5837
    %v6260 = vpop.f32.mrb[0].mxu0
    %v6261 = vadd.f32 %v6116, %v6260
    %v6262 = vpop.f32.mrb[0].mxu0
    %6263 = vmatprep.mubr.f32.mxu0 0.0
    %6264 = vmatmul.mubr.f32.gmra.mrb[0].mxu0 %v5840
    %v6265 = vpop.f32.mrb[0].mxu0
    %v6266 = vadd.f32 %v6121, %v6265
    %v6267 = vpop.f32.mrb[0].mxu0
    %6268 = vmatprep.mubr.f32.mxu0 0.0
    %6269 = vmatmul.mubr.f32.gmra.mrb[0].mxu0 %v5843
    %v6270 = vpop.f32.mrb[0].mxu0
    %v6271 = vadd.f32 %v6126, %v6270
    %v6272 = vpop.f32.mrb[0].mxu0
    %6273 = vmatprep.mubr.f32.mxu0 0.0
    %6274 = vmatmul.mubr.f32.gmra.mrb[0].mxu0 %v5846
    %v6275 = vpop.f32.mrb[0].mxu0
    %v6276 = vadd.f32 %v6131, %v6275
    %v6277 = vpop.f32.mrb[0].mxu0
    %6278 = vmatprep.mubr.f32.mxu0 0.0
    %6279 = vmatmul.mubr.f32.gmra.mrb[0].mxu0 %v5849
    %v6280 = vpop.f32.mrb[0].mxu0
    %v6281 = vadd.f32 %v6136, %v6280
    %v6282 = vpop.f32.mrb[0].mxu0
    %6283 = vmatprep.mubr.f32.mxu0 0.0
    %6284 = vmatmul.mubr.f32.gmra.mrb[0].mxu0 %v5852
    %v6285 = vpop.f32.mrb[0].mxu0
    %v6286 = vadd.f32 %v6141, %v6285
    %v6287 = vpop.f32.mrb[0].mxu0
    %6288 = vdwg.mxu0
    %v6289 = vld [vmem:[%s6] sm:$0x1]
    %v6290 = vld [vmem:[%s6 + $0x1] sm:$0x1]
    %v6291 = vsel %vm679, %v6211, 0.0
    %v6292 = vsel %vm679, %v6216, 0.0
    %v6293 = vadd.f32 %v6291, %v6292
    %v6294 = vsel %vm679, %v6221, 0.0
    %v6295 = vadd.f32 %v6293, %v6294
    %v6296 = vsel %vm679, %v6226, 0.0
    %v6297 = vadd.f32 %v6295, %v6296
    %v6298 = vsel %vm679, %v6231, 0.0
    %v6299 = vadd.f32 %v6297, %v6298
    %v6300 = vsel %vm679, %v6236, 0.0
    %v6301 = vadd.f32 %v6299, %v6300
    %v6302 = vsel %vm679, %v6241, 0.0
    %v6303 = vadd.f32 %v6301, %v6302
    %v6304 = vsel %vm679, %v6246, 0.0
    %v6305 = vadd.f32 %v6303, %v6304
    %v6306 = vsel %vm679, %v6251, 0.0
    %v6307 = vadd.f32 %v6305, %v6306
    %v6308 = vsel %vm679, %v6256, 0.0
    %v6309 = vadd.f32 %v6307, %v6308
    %v6310 = vsel %vm679, %v6261, 0.0
    %v6311 = vadd.f32 %v6309, %v6310
    %v6312 = vsel %vm679, %v6266, 0.0
    %v6313 = vadd.f32 %v6311, %v6312
    %v6314 = vsel %vm679, %v6271, 0.0
    %v6315 = vadd.f32 %v6313, %v6314
    %v6316 = vsel %vm679, %v6276, 0.0
    %v6317 = vadd.f32 %v6315, %v6316
    %v6318 = vsel %vm679, %v6281, 0.0
    %v6319 = vadd.f32 %v6317, %v6318
    %v6320 = vsel %vm679, %v6286, 0.0
    %v6321 = vadd.f32 %v6319, %v6320
    %v6322 = vrot.slane %v6321, 4
    %v6323 = vadd.f32 %v6321, %v6322
    %v6324 = vrot.slane %v6323, 2
    %v6325 = vadd.f32 %v6323, %v6324
    %v6326 = vrot.slane %v6325, 1
    %v6327 = vadd.f32 %v6325, %v6326
    %v6328 = vmul.f32 %v6211, %v6211
    %v6329 = vmul.f32 %v6216, %v6216
    %v6330 = vmul.f32 %v6221, %v6221
    %v6331 = vmul.f32 %v6226, %v6226
    %v6332 = vmul.f32 %v6231, %v6231
    %v6333 = vmul.f32 %v6236, %v6236
    %v6334 = vmul.f32 %v6241, %v6241
    %v6335 = vmul.f32 %v6246, %v6246
    %v6336 = vmul.f32 %v6251, %v6251
    %v6337 = vmul.f32 %v6256, %v6256
    %v6338 = vmul.f32 %v6261, %v6261
    %v6339 = vmul.f32 %v6266, %v6266
    %v6340 = vmul.f32 %v6271, %v6271
    %v6341 = vmul.f32 %v6276, %v6276
    %v6342 = vmul.f32 %v6281, %v6281
    %v6343 = vmul.f32 %v6286, %v6286
    %v6344 = vsel %vm679, %v6328, 0.0
    %v6345 = vsel %vm679, %v6329, 0.0
    %v6346 = vadd.f32 %v6344, %v6345
    %v6347 = vsel %vm679, %v6330, 0.0
    %v6348 = vadd.f32 %v6346, %v6347
    %v6349 = vsel %vm679, %v6331, 0.0
    %v6350 = vadd.f32 %v6348, %v6349
    %v6351 = vsel %vm679, %v6332, 0.0
    %v6352 = vadd.f32 %v6350, %v6351
    %v6353 = vsel %vm679, %v6333, 0.0
    %v6354 = vadd.f32 %v6352, %v6353
    %v6355 = vsel %vm679, %v6334, 0.0
    %v6356 = vadd.f32 %v6354, %v6355
    %v6357 = vsel %vm679, %v6335, 0.0
    %v6358 = vadd.f32 %v6356, %v6357
    %v6359 = vsel %vm679, %v6336, 0.0
    %v6360 = vadd.f32 %v6358, %v6359
    %v6361 = vsel %vm679, %v6337, 0.0
    %v6362 = vadd.f32 %v6360, %v6361
    %v6363 = vsel %vm679, %v6338, 0.0
    %v6364 = vadd.f32 %v6362, %v6363
    %v6365 = vsel %vm679, %v6339, 0.0
    %v6366 = vadd.f32 %v6364, %v6365
    %v6367 = vsel %vm679, %v6340, 0.0
    %v6368 = vadd.f32 %v6366, %v6367
    %v6369 = vsel %vm679, %v6341, 0.0
    %v6370 = vadd.f32 %v6368, %v6369
    %v6371 = vsel %vm679, %v6342, 0.0
    %v6372 = vadd.f32 %v6370, %v6371
    %v6373 = vsel %vm679, %v6343, 0.0
    %v6374 = vadd.f32 %v6372, %v6373
    %v6375 = vrot.slane %v6374, 4
    %v6376 = vadd.f32 %v6374, %v6375
    %v6377 = vrot.slane %v6376, 2
    %v6378 = vadd.f32 %v6376, %v6377
    %v6379 = vrot.slane %v6378, 1
    %v6380 = vadd.f32 %v6378, %v6379
    %v6381 = vmul.f32 %v6327, 0.0078125
    %v6382 = vmul.f32 %v6380, 0.0078125
    %v6383 = vmul.f32 %v6381, %v6381
    %v6384 = vsub.f32 %v6382, %v6383
    %v6385 = vmax.f32 %v6384, 0.0
    %v6386 = vadd.f32 %v6385, 1e-05
    %v6387 = vrsqrt.pop %v6386
    %v6388 = vmul.f32 %v6289, %v6387
    %v6389 = vmul.f32 %v6381, %v6388
    %v6390 = vsub.f32 %v6290, %v6389
    %v6391 = vlaneseq
    %v6392 = vshrl.u32 %v6391, 7
    %v6393 = vsub.s32 0, %v6392
    %v6394 = vrot.slane %v6388, %v6393
    %v6395 = vmul.f32 %v6211, %v6394
    %v6396 = vmul.f32 %v6216, %v6394
    %v6397 = vmul.f32 %v6221, %v6394
    %v6398 = vmul.f32 %v6226, %v6394
    %v6399 = vmul.f32 %v6231, %v6394
    %v6400 = vmul.f32 %v6236, %v6394
    %v6401 = vmul.f32 %v6241, %v6394
    %v6402 = vmul.f32 %v6246, %v6394
    %v6403 = vmul.f32 %v6251, %v6394
    %v6404 = vmul.f32 %v6256, %v6394
    %v6405 = vmul.f32 %v6261, %v6394
    %v6406 = vmul.f32 %v6266, %v6394
    %v6407 = vmul.f32 %v6271, %v6394
    %v6408 = vmul.f32 %v6276, %v6394
    %v6409 = vmul.f32 %v6281, %v6394
    %v6410 = vmul.f32 %v6286, %v6394
    %v6411 = vlaneseq
    %v6412 = vshrl.u32 %v6411, 7
    %v6413 = vsub.s32 0, %v6412
    %v6414 = vrot.slane %v6390, %v6413
    %v6415 = vadd.f32 %v6395, %v6414
    %v6416 = vadd.f32 %v6396, %v6414
    %v6417 = vadd.f32 %v6397, %v6414
    %v6418 = vadd.f32 %v6398, %v6414
    %v6419 = vadd.f32 %v6399, %v6414
    %v6420 = vadd.f32 %v6400, %v6414
    %v6421 = vadd.f32 %v6401, %v6414
    %v6422 = vadd.f32 %v6402, %v6414
    %v6423 = vadd.f32 %v6403, %v6414
    %v6424 = vadd.f32 %v6404, %v6414
    %v6425 = vadd.f32 %v6405, %v6414
    %v6426 = vadd.f32 %v6406, %v6414
    %v6427 = vadd.f32 %v6407, %v6414
    %v6428 = vadd.f32 %v6408, %v6414
    %v6429 = vadd.f32 %v6409, %v6414
    %v6430 = vadd.f32 %v6410, %v6414
    %v6431 = vmax.f32 %v6415, 0.0
    %v6432 = vmax.f32 %v6416, 0.0
    %v6433 = vmax.f32 %v6417, 0.0
    %v6434 = vmax.f32 %v6418, 0.0
    %v6435 = vmax.f32 %v6419, 0.0
    %v6436 = vmax.f32 %v6420, 0.0
    %v6437 = vmax.f32 %v6421, 0.0
    %v6438 = vmax.f32 %v6422, 0.0
    %v6439 = vmax.f32 %v6423, 0.0
    %v6440 = vmax.f32 %v6424, 0.0
    %v6441 = vmax.f32 %v6425, 0.0
    %v6442 = vmax.f32 %v6426, 0.0
    %v6443 = vmax.f32 %v6427, 0.0
    %v6444 = vmax.f32 %v6428, 0.0
    %v6445 = vmax.f32 %v6429, 0.0
    %v6446 = vmax.f32 %v6430, 0.0
    %v6463 = vcombine.high %v6431, %v6431
    %v6465 = vunpack.c.l.s4 1983009808
    %v6466 = vunpack.c.0.s8 %v6465
    %v6467 = vlaneseq
    %v6468 = vshrl.u32 %v6467, 7
    %v6469 = vsub.s32 %v6466, %v6468
    %v6470 = vrot.slane %v6431, %v6469
    %v6472 = vunpack.c.l.s4 1983009808
    %v6473 = vunpack.c.0.s8 %v6472
    %v6474 = vlaneseq
    %v6475 = vshrl.u32 %v6474, 7
    %v6476 = vsub.s32 %v6473, %v6475
    %v6477 = vrot.slane %v6463, %v6476
    %v6478 = vcombine.high %v6470, %v6470
    %v6479 = vcombine.high %v6477, %v6477
    %v6480 = vcombine.high %v6432, %v6432
    %v6482 = vunpack.c.l.s4 1983009808
    %v6483 = vunpack.c.0.s8 %v6482
    %v6484 = vlaneseq
    %v6485 = vshrl.u32 %v6484, 7
    %v6486 = vsub.s32 %v6483, %v6485
    %v6487 = vrot.slane %v6432, %v6486
    %v6489 = vunpack.c.l.s4 1983009808
    %v6490 = vunpack.c.0.s8 %v6489
    %v6491 = vlaneseq
    %v6492 = vshrl.u32 %v6491, 7
    %v6493 = vsub.s32 %v6490, %v6492
    %v6494 = vrot.slane %v6480, %v6493
    %v6495 = vcombine.high %v6487, %v6487
    %v6496 = vcombine.high %v6494, %v6494
    %v6497 = vcombine.high %v6433, %v6433
    %v6499 = vunpack.c.l.s4 1983009808
    %v6500 = vunpack.c.0.s8 %v6499
    %v6501 = vlaneseq
    %v6502 = vshrl.u32 %v6501, 7
    %v6503 = vsub.s32 %v6500, %v6502
    %v6504 = vrot.slane %v6433, %v6503
    %v6506 = vunpack.c.l.s4 1983009808
    %v6507 = vunpack.c.0.s8 %v6506
    %v6508 = vlaneseq
    %v6509 = vshrl.u32 %v6508, 7
    %v6510 = vsub.s32 %v6507, %v6509
    %v6511 = vrot.slane %v6497, %v6510
    %v6512 = vcombine.high %v6504, %v6504
    %v6513 = vcombine.high %v6511, %v6511
    %v6514 = vcombine.high %v6434, %v6434
    %v6516 = vunpack.c.l.s4 1983009808
    %v6517 = vunpack.c.0.s8 %v6516
    %v6518 = vlaneseq
    %v6519 = vshrl.u32 %v6518, 7
    %v6520 = vsub.s32 %v6517, %v6519
    %v6521 = vrot.slane %v6434, %v6520
    %v6523 = vunpack.c.l.s4 1983009808
    %v6524 = vunpack.c.0.s8 %v6523
    %v6525 = vlaneseq
    %v6526 = vshrl.u32 %v6525, 7
    %v6527 = vsub.s32 %v6524, %v6526
    %v6528 = vrot.slane %v6514, %v6527
    %v6529 = vcombine.high %v6521, %v6521
    %v6530 = vcombine.high %v6528, %v6528
    %v6531 = vcombine.high %v6435, %v6435
    %v6533 = vunpack.c.l.s4 1983009808
    %v6534 = vunpack.c.0.s8 %v6533
    %v6535 = vlaneseq
    %v6536 = vshrl.u32 %v6535, 7
    %v6537 = vsub.s32 %v6534, %v6536
    %v6538 = vrot.slane %v6435, %v6537
    %v6540 = vunpack.c.l.s4 1983009808
    %v6541 = vunpack.c.0.s8 %v6540
    %v6542 = vlaneseq
    %v6543 = vshrl.u32 %v6542, 7
    %v6544 = vsub.s32 %v6541, %v6543
    %v6545 = vrot.slane %v6531, %v6544
    %v6546 = vcombine.high %v6538, %v6538
    %v6547 = vcombine.high %v6545, %v6545
    %v6548 = vcombine.high %v6436, %v6436
    %v6550 = vunpack.c.l.s4 1983009808
    %v6551 = vunpack.c.0.s8 %v6550
    %v6552 = vlaneseq
    %v6553 = vshrl.u32 %v6552, 7
    %v6554 = vsub.s32 %v6551, %v6553
    %v6555 = vrot.slane %v6436, %v6554
    %v6557 = vunpack.c.l.s4 1983009808
    %v6558 = vunpack.c.0.s8 %v6557
    %v6559 = vlaneseq
    %v6560 = vshrl.u32 %v6559, 7
    %v6561 = vsub.s32 %v6558, %v6560
    %v6562 = vrot.slane %v6548, %v6561
    %v6563 = vcombine.high %v6555, %v6555
    %v6564 = vcombine.high %v6562, %v6562
    %v6565 = vcombine.high %v6437, %v6437
    %v6567 = vunpack.c.l.s4 1983009808
    %v6568 = vunpack.c.0.s8 %v6567
    %v6569 = vlaneseq
    %v6570 = vshrl.u32 %v6569, 7
    %v6571 = vsub.s32 %v6568, %v6570
    %v6572 = vrot.slane %v6437, %v6571
    %v6574 = vunpack.c.l.s4 1983009808
    %v6575 = vunpack.c.0.s8 %v6574
    %v6576 = vlaneseq
    %v6577 = vshrl.u32 %v6576, 7
    %v6578 = vsub.s32 %v6575, %v6577
    %v6579 = vrot.slane %v6565, %v6578
    %v6580 = vcombine.high %v6572, %v6572
    %v6581 = vcombine.high %v6579, %v6579
    %v6582 = vcombine.high %v6438, %v6438
    %v6584 = vunpack.c.l.s4 1983009808
    %v6585 = vunpack.c.0.s8 %v6584
    %v6586 = vlaneseq
    %v6587 = vshrl.u32 %v6586, 7
    %v6588 = vsub.s32 %v6585, %v6587
    %v6589 = vrot.slane %v6438, %v6588
    %v6591 = vunpack.c.l.s4 1983009808
    %v6592 = vunpack.c.0.s8 %v6591
    %v6593 = vlaneseq
    %v6594 = vshrl.u32 %v6593, 7
    %v6595 = vsub.s32 %v6592, %v6594
    %v6596 = vrot.slane %v6582, %v6595
    %v6597 = vcombine.high %v6589, %v6589
    %v6598 = vcombine.high %v6596, %v6596
    %v6599 = vcombine.high %v6439, %v6439
    %v6601 = vunpack.c.l.s4 1983009808
    %v6602 = vunpack.c.0.s8 %v6601
    %v6603 = vlaneseq
    %v6604 = vshrl.u32 %v6603, 7
    %v6605 = vsub.s32 %v6602, %v6604
    %v6606 = vrot.slane %v6439, %v6605
    %v6608 = vunpack.c.l.s4 1983009808
    %v6609 = vunpack.c.0.s8 %v6608
    %v6610 = vlaneseq
    %v6611 = vshrl.u32 %v6610, 7
    %v6612 = vsub.s32 %v6609, %v6611
    %v6613 = vrot.slane %v6599, %v6612
    %v6614 = vcombine.high %v6606, %v6606
    %v6615 = vcombine.high %v6613, %v6613
    %v6616 = vcombine.high %v6440, %v6440
    %v6618 = vunpack.c.l.s4 1983009808
    %v6619 = vunpack.c.0.s8 %v6618
    %v6620 = vlaneseq
    %v6621 = vshrl.u32 %v6620, 7
    %v6622 = vsub.s32 %v6619, %v6621
    %v6623 = vrot.slane %v6440, %v6622
    %v6625 = vunpack.c.l.s4 1983009808
    %v6626 = vunpack.c.0.s8 %v6625
    %v6627 = vlaneseq
    %v6628 = vshrl.u32 %v6627, 7
    %v6629 = vsub.s32 %v6626, %v6628
    %v6630 = vrot.slane %v6616, %v6629
    %v6631 = vcombine.high %v6623, %v6623
    %v6632 = vcombine.high %v6630, %v6630
    %v6633 = vcombine.high %v6441, %v6441
    %v6635 = vunpack.c.l.s4 1983009808
    %v6636 = vunpack.c.0.s8 %v6635
    %v6637 = vlaneseq
    %v6638 = vshrl.u32 %v6637, 7
    %v6639 = vsub.s32 %v6636, %v6638
    %v6640 = vrot.slane %v6441, %v6639
    %v6642 = vunpack.c.l.s4 1983009808
    %v6643 = vunpack.c.0.s8 %v6642
    %v6644 = vlaneseq
    %v6645 = vshrl.u32 %v6644, 7
    %v6646 = vsub.s32 %v6643, %v6645
    %v6647 = vrot.slane %v6633, %v6646
    %v6648 = vcombine.high %v6640, %v6640
    %v6649 = vcombine.high %v6647, %v6647
    %v6650 = vcombine.high %v6442, %v6442
    %v6652 = vunpack.c.l.s4 1983009808
    %v6653 = vunpack.c.0.s8 %v6652
    %v6654 = vlaneseq
    %v6655 = vshrl.u32 %v6654, 7
    %v6656 = vsub.s32 %v6653, %v6655
    %v6657 = vrot.slane %v6442, %v6656
    %v6659 = vunpack.c.l.s4 1983009808
    %v6660 = vunpack.c.0.s8 %v6659
    %v6661 = vlaneseq
    %v6662 = vshrl.u32 %v6661, 7
    %v6663 = vsub.s32 %v6660, %v6662
    %v6664 = vrot.slane %v6650, %v6663
    %v6665 = vcombine.high %v6657, %v6657
    %v6666 = vcombine.high %v6664, %v6664
    %v6667 = vcombine.high %v6443, %v6443
    %v6669 = vunpack.c.l.s4 1983009808
    %v6670 = vunpack.c.0.s8 %v6669
    %v6671 = vlaneseq
    %v6672 = vshrl.u32 %v6671, 7
    %v6673 = vsub.s32 %v6670, %v6672
    %v6674 = vrot.slane %v6443, %v6673
    %v6676 = vunpack.c.l.s4 1983009808
    %v6677 = vunpack.c.0.s8 %v6676
    %v6678 = vlaneseq
    %v6679 = vshrl.u32 %v6678, 7
    %v6680 = vsub.s32 %v6677, %v6679
    %v6681 = vrot.slane %v6667, %v6680
    %v6682 = vcombine.high %v6674, %v6674
    %v6683 = vcombine.high %v6681, %v6681
    %v6684 = vcombine.high %v6444, %v6444
    %v6686 = vunpack.c.l.s4 1983009808
    %v6687 = vunpack.c.0.s8 %v6686
    %v6688 = vlaneseq
    %v6689 = vshrl.u32 %v6688, 7
    %v6690 = vsub.s32 %v6687, %v6689
    %v6691 = vrot.slane %v6444, %v6690
    %v6693 = vunpack.c.l.s4 1983009808
    %v6694 = vunpack.c.0.s8 %v6693
    %v6695 = vlaneseq
    %v6696 = vshrl.u32 %v6695, 7
    %v6697 = vsub.s32 %v6694, %v6696
    %v6698 = vrot.slane %v6684, %v6697
    %v6699 = vcombine.high %v6691, %v6691
    %v6700 = vcombine.high %v6698, %v6698
    %v6701 = vcombine.high %v6445, %v6445
    %v6703 = vunpack.c.l.s4 1983009808
    %v6704 = vunpack.c.0.s8 %v6703
    %v6705 = vlaneseq
    %v6706 = vshrl.u32 %v6705, 7
    %v6707 = vsub.s32 %v6704, %v6706
    %v6708 = vrot.slane %v6445, %v6707
    %v6710 = vunpack.c.l.s4 1983009808
    %v6711 = vunpack.c.0.s8 %v6710
    %v6712 = vlaneseq
    %v6713 = vshrl.u32 %v6712, 7
    %v6714 = vsub.s32 %v6711, %v6713
    %v6715 = vrot.slane %v6701, %v6714
    %v6716 = vcombine.high %v6708, %v6708
    %v6717 = vcombine.high %v6715, %v6715
    %v6718 = vcombine.high %v6446, %v6446
    %v6720 = vunpack.c.l.s4 1983009808
    %v6721 = vunpack.c.0.s8 %v6720
    %v6722 = vlaneseq
    %v6723 = vshrl.u32 %v6722, 7
    %v6724 = vsub.s32 %v6721, %v6723
    %v6725 = vrot.slane %v6446, %v6724
    %v6727 = vunpack.c.l.s4 1983009808
    %v6728 = vunpack.c.0.s8 %v6727
    %v6729 = vlaneseq
    %v6730 = vshrl.u32 %v6729, 7
    %v6731 = vsub.s32 %v6728, %v6730
    %v6732 = vrot.slane %v6718, %v6731
    %v6733 = vcombine.high %v6725, %v6725
    %v6734 = vcombine.high %v6732, %v6732
    %v6799 = vsel %vm2628, %v6470, -inf
    %v6800 = vrot.slane %v6799, 4
    %v6801 = vmax.f32 %v6799, %v6800
    %v6802 = vrot.slane %v6801, 2
    %v6803 = vmax.f32 %v6801, %v6802
    %v6804 = vrot.slane %v6803, 1
    %v6805 = vmax.f32 %v6803, %v6804
    %v6806 = vsel %vm2628, %v6478, -inf
    %v6807 = vrot.slane %v6806, 4
    %v6808 = vmax.f32 %v6806, %v6807
    %v6809 = vrot.slane %v6808, 2
    %v6810 = vmax.f32 %v6808, %v6809
    %v6811 = vrot.slane %v6810, 1
    %v6812 = vmax.f32 %v6810, %v6811
    %v6813 = vsel %vm2628, %v6477, -inf
    %v6814 = vrot.slane %v6813, 4
    %v6815 = vmax.f32 %v6813, %v6814
    %v6816 = vrot.slane %v6815, 2
    %v6817 = vmax.f32 %v6815, %v6816
    %v6818 = vrot.slane %v6817, 1
    %v6819 = vmax.f32 %v6817, %v6818
    %v6820 = vsel %vm2628, %v6479, -inf
    %v6821 = vrot.slane %v6820, 4
    %v6822 = vmax.f32 %v6820, %v6821
    %v6823 = vrot.slane %v6822, 2
    %v6824 = vmax.f32 %v6822, %v6823
    %v6825 = vrot.slane %v6824, 1
    %v6826 = vmax.f32 %v6824, %v6825
    %v6827 = vsel %vm2628, %v6487, -inf
    %v6828 = vrot.slane %v6827, 4
    %v6829 = vmax.f32 %v6827, %v6828
    %v6830 = vrot.slane %v6829, 2
    %v6831 = vmax.f32 %v6829, %v6830
    %v6832 = vrot.slane %v6831, 1
    %v6833 = vmax.f32 %v6831, %v6832
    %v6834 = vsel %vm2628, %v6495, -inf
    %v6835 = vrot.slane %v6834, 4
    %v6836 = vmax.f32 %v6834, %v6835
    %v6837 = vrot.slane %v6836, 2
    %v6838 = vmax.f32 %v6836, %v6837
    %v6839 = vrot.slane %v6838, 1
    %v6840 = vmax.f32 %v6838, %v6839
    %v6841 = vsel %vm2628, %v6494, -inf
    %v6842 = vrot.slane %v6841, 4
    %v6843 = vmax.f32 %v6841, %v6842
    %v6844 = vrot.slane %v6843, 2
    %v6845 = vmax.f32 %v6843, %v6844
    %v6846 = vrot.slane %v6845, 1
    %v6847 = vmax.f32 %v6845, %v6846
    %v6848 = vsel %vm2628, %v6496, -inf
    %v6849 = vrot.slane %v6848, 4
    %v6850 = vmax.f32 %v6848, %v6849
    %v6851 = vrot.slane %v6850, 2
    %v6852 = vmax.f32 %v6850, %v6851
    %v6853 = vrot.slane %v6852, 1
    %v6854 = vmax.f32 %v6852, %v6853
    %v6855 = vsel %vm2628, %v6504, -inf
    %v6856 = vrot.slane %v6855, 4
    %v6857 = vmax.f32 %v6855, %v6856
    %v6858 = vrot.slane %v6857, 2
    %v6859 = vmax.f32 %v6857, %v6858
    %v6860 = vrot.slane %v6859, 1
    %v6861 = vmax.f32 %v6859, %v6860
    %v6862 = vsel %vm2628, %v6512, -inf
    %v6863 = vrot.slane %v6862, 4
    %v6864 = vmax.f32 %v6862, %v6863
    %v6865 = vrot.slane %v6864, 2
    %v6866 = vmax.f32 %v6864, %v6865
    %v6867 = vrot.slane %v6866, 1
    %v6868 = vmax.f32 %v6866, %v6867
    %v6869 = vsel %vm2628, %v6511, -inf
    %v6870 = vrot.slane %v6869, 4
    %v6871 = vmax.f32 %v6869, %v6870
    %v6872 = vrot.slane %v6871, 2
    %v6873 = vmax.f32 %v6871, %v6872
    %v6874 = vrot.slane %v6873, 1
    %v6875 = vmax.f32 %v6873, %v6874
    %v6876 = vsel %vm2628, %v6513, -inf
    %v6877 = vrot.slane %v6876, 4
    %v6878 = vmax.f32 %v6876, %v6877
    %v6879 = vrot.slane %v6878, 2
    %v6880 = vmax.f32 %v6878, %v6879
    %v6881 = vrot.slane %v6880, 1
    %v6882 = vmax.f32 %v6880, %v6881
    %v6883 = vsel %vm2628, %v6521, -inf
    %v6884 = vrot.slane %v6883, 4
    %v6885 = vmax.f32 %v6883, %v6884
    %v6886 = vrot.slane %v6885, 2
    %v6887 = vmax.f32 %v6885, %v6886
    %v6888 = vrot.slane %v6887, 1
    %v6889 = vmax.f32 %v6887, %v6888
    %v6890 = vsel %vm2628, %v6529, -inf
    %v6891 = vrot.slane %v6890, 4
    %v6892 = vmax.f32 %v6890, %v6891
    %v6893 = vrot.slane %v6892, 2
    %v6894 = vmax.f32 %v6892, %v6893
    %v6895 = vrot.slane %v6894, 1
    %v6896 = vmax.f32 %v6894, %v6895
    %v6897 = vsel %vm2628, %v6528, -inf
    %v6898 = vrot.slane %v6897, 4
    %v6899 = vmax.f32 %v6897, %v6898
    %v6900 = vrot.slane %v6899, 2
    %v6901 = vmax.f32 %v6899, %v6900
    %v6902 = vrot.slane %v6901, 1
    %v6903 = vmax.f32 %v6901, %v6902
    %v6904 = vsel %vm2628, %v6530, -inf
    %v6905 = vrot.slane %v6904, 4
    %v6906 = vmax.f32 %v6904, %v6905
    %v6907 = vrot.slane %v6906, 2
    %v6908 = vmax.f32 %v6906, %v6907
    %v6909 = vrot.slane %v6908, 1
    %v6910 = vmax.f32 %v6908, %v6909
    %v6911 = vsel %vm2628, %v6538, -inf
    %v6912 = vrot.slane %v6911, 4
    %v6913 = vmax.f32 %v6911, %v6912
    %v6914 = vrot.slane %v6913, 2
    %v6915 = vmax.f32 %v6913, %v6914
    %v6916 = vrot.slane %v6915, 1
    %v6917 = vmax.f32 %v6915, %v6916
    %v6918 = vsel %vm2628, %v6546, -inf
    %v6919 = vrot.slane %v6918, 4
    %v6920 = vmax.f32 %v6918, %v6919
    %v6921 = vrot.slane %v6920, 2
    %v6922 = vmax.f32 %v6920, %v6921
    %v6923 = vrot.slane %v6922, 1
    %v6924 = vmax.f32 %v6922, %v6923
    %v6925 = vsel %vm2628, %v6545, -inf
    %v6926 = vrot.slane %v6925, 4
    %v6927 = vmax.f32 %v6925, %v6926
    %v6928 = vrot.slane %v6927, 2
    %v6929 = vmax.f32 %v6927, %v6928
    %v6930 = vrot.slane %v6929, 1
    %v6931 = vmax.f32 %v6929, %v6930
    %v6932 = vsel %vm2628, %v6547, -inf
    %v6933 = vrot.slane %v6932, 4
    %v6934 = vmax.f32 %v6932, %v6933
    %v6935 = vrot.slane %v6934, 2
    %v6936 = vmax.f32 %v6934, %v6935
    %v6937 = vrot.slane %v6936, 1
    %v6938 = vmax.f32 %v6936, %v6937
    %v6939 = vsel %vm2628, %v6555, -inf
    %v6940 = vrot.slane %v6939, 4
    %v6941 = vmax.f32 %v6939, %v6940
    %v6942 = vrot.slane %v6941, 2
    %v6943 = vmax.f32 %v6941, %v6942
    %v6944 = vrot.slane %v6943, 1
    %v6945 = vmax.f32 %v6943, %v6944
    %v6946 = vsel %vm2628, %v6563, -inf
    %v6947 = vrot.slane %v6946, 4
    %v6948 = vmax.f32 %v6946, %v6947
    %v6949 = vrot.slane %v6948, 2
    %v6950 = vmax.f32 %v6948, %v6949
    %v6951 = vrot.slane %v6950, 1
    %v6952 = vmax.f32 %v6950, %v6951
    %v6953 = vsel %vm2628, %v6562, -inf
    %v6954 = vrot.slane %v6953, 4
    %v6955 = vmax.f32 %v6953, %v6954
    %v6956 = vrot.slane %v6955, 2
    %v6957 = vmax.f32 %v6955, %v6956
    %v6958 = vrot.slane %v6957, 1
    %v6959 = vmax.f32 %v6957, %v6958
    %v6960 = vsel %vm2628, %v6564, -inf
    %v6961 = vrot.slane %v6960, 4
    %v6962 = vmax.f32 %v6960, %v6961
    %v6963 = vrot.slane %v6962, 2
    %v6964 = vmax.f32 %v6962, %v6963
    %v6965 = vrot.slane %v6964, 1
    %v6966 = vmax.f32 %v6964, %v6965
    %v6967 = vsel %vm2628, %v6572, -inf
    %v6968 = vrot.slane %v6967, 4
    %v6969 = vmax.f32 %v6967, %v6968
    %v6970 = vrot.slane %v6969, 2
    %v6971 = vmax.f32 %v6969, %v6970
    %v6972 = vrot.slane %v6971, 1
    %v6973 = vmax.f32 %v6971, %v6972
    %v6974 = vsel %vm2628, %v6580, -inf
    %v6975 = vrot.slane %v6974, 4
    %v6976 = vmax.f32 %v6974, %v6975
    %v6977 = vrot.slane %v6976, 2
    %v6978 = vmax.f32 %v6976, %v6977
    %v6979 = vrot.slane %v6978, 1
    %v6980 = vmax.f32 %v6978, %v6979
    %v6981 = vsel %vm2628, %v6579, -inf
    %v6982 = vrot.slane %v6981, 4
    %v6983 = vmax.f32 %v6981, %v6982
    %v6984 = vrot.slane %v6983, 2
    %v6985 = vmax.f32 %v6983, %v6984
    %v6986 = vrot.slane %v6985, 1
    %v6987 = vmax.f32 %v6985, %v6986
    %v6988 = vsel %vm2628, %v6581, -inf
    %v6989 = vrot.slane %v6988, 4
    %v6990 = vmax.f32 %v6988, %v6989
    %v6991 = vrot.slane %v6990, 2
    %v6992 = vmax.f32 %v6990, %v6991
    %v6993 = vrot.slane %v6992, 1
    %v6994 = vmax.f32 %v6992, %v6993
    %v6995 = vsel %vm2628, %v6589, -inf
    %v6996 = vrot.slane %v6995, 4
    %v6997 = vmax.f32 %v6995, %v6996
    %v6998 = vrot.slane %v6997, 2
    %v6999 = vmax.f32 %v6997, %v6998
    %v7000 = vrot.slane %v6999, 1
    %v7001 = vmax.f32 %v6999, %v7000
    %v7002 = vsel %vm2628, %v6597, -inf
    %v7003 = vrot.slane %v7002, 4
    %v7004 = vmax.f32 %v7002, %v7003
    %v7005 = vrot.slane %v7004, 2
    %v7006 = vmax.f32 %v7004, %v7005
    %v7007 = vrot.slane %v7006, 1
    %v7008 = vmax.f32 %v7006, %v7007
    %v7009 = vsel %vm2628, %v6596, -inf
    %v7010 = vrot.slane %v7009, 4
    %v7011 = vmax.f32 %v7009, %v7010
    %v7012 = vrot.slane %v7011, 2
    %v7013 = vmax.f32 %v7011, %v7012
    %v7014 = vrot.slane %v7013, 1
    %v7015 = vmax.f32 %v7013, %v7014
    %v7016 = vsel %vm2628, %v6598, -inf
    %v7017 = vrot.slane %v7016, 4
    %v7018 = vmax.f32 %v7016, %v7017
    %v7019 = vrot.slane %v7018, 2
    %v7020 = vmax.f32 %v7018, %v7019
    %v7021 = vrot.slane %v7020, 1
    %v7022 = vmax.f32 %v7020, %v7021
    %v7023 = vsel %vm2628, %v6606, -inf
    %v7024 = vrot.slane %v7023, 4
    %v7025 = vmax.f32 %v7023, %v7024
    %v7026 = vrot.slane %v7025, 2
    %v7027 = vmax.f32 %v7025, %v7026
    %v7028 = vrot.slane %v7027, 1
    %v7029 = vmax.f32 %v7027, %v7028
    %v7030 = vsel %vm2628, %v6614, -inf
    %v7031 = vrot.slane %v7030, 4
    %v7032 = vmax.f32 %v7030, %v7031
    %v7033 = vrot.slane %v7032, 2
    %v7034 = vmax.f32 %v7032, %v7033
    %v7035 = vrot.slane %v7034, 1
    %v7036 = vmax.f32 %v7034, %v7035
    %v7037 = vsel %vm2628, %v6613, -inf
    %v7038 = vrot.slane %v7037, 4
    %v7039 = vmax.f32 %v7037, %v7038
    %v7040 = vrot.slane %v7039, 2
    %v7041 = vmax.f32 %v7039, %v7040
    %v7042 = vrot.slane %v7041, 1
    %v7043 = vmax.f32 %v7041, %v7042
    %v7044 = vsel %vm2628, %v6615, -inf
    %v7045 = vrot.slane %v7044, 4
    %v7046 = vmax.f32 %v7044, %v7045
    %v7047 = vrot.slane %v7046, 2
    %v7048 = vmax.f32 %v7046, %v7047
    %v7049 = vrot.slane %v7048, 1
    %v7050 = vmax.f32 %v7048, %v7049
    %v7051 = vsel %vm2628, %v6623, -inf
    %v7052 = vrot.slane %v7051, 4
    %v7053 = vmax.f32 %v7051, %v7052
    %v7054 = vrot.slane %v7053, 2
    %v7055 = vmax.f32 %v7053, %v7054
    %v7056 = vrot.slane %v7055, 1
    %v7057 = vmax.f32 %v7055, %v7056
    %v7058 = vsel %vm2628, %v6631, -inf
    %v7059 = vrot.slane %v7058, 4
    %v7060 = vmax.f32 %v7058, %v7059
    %v7061 = vrot.slane %v7060, 2
    %v7062 = vmax.f32 %v7060, %v7061
    %v7063 = vrot.slane %v7062, 1
    %v7064 = vmax.f32 %v7062, %v7063
    %v7065 = vsel %vm2628, %v6630, -inf
    %v7066 = vrot.slane %v7065, 4
    %v7067 = vmax.f32 %v7065, %v7066
    %v7068 = vrot.slane %v7067, 2
    %v7069 = vmax.f32 %v7067, %v7068
    %v7070 = vrot.slane %v7069, 1
    %v7071 = vmax.f32 %v7069, %v7070
    %v7072 = vsel %vm2628, %v6632, -inf
    %v7073 = vrot.slane %v7072, 4
    %v7074 = vmax.f32 %v7072, %v7073
    %v7075 = vrot.slane %v7074, 2
    %v7076 = vmax.f32 %v7074, %v7075
    %v7077 = vrot.slane %v7076, 1
    %v7078 = vmax.f32 %v7076, %v7077
    %v7079 = vsel %vm2628, %v6640, -inf
    %v7080 = vrot.slane %v7079, 4
    %v7081 = vmax.f32 %v7079, %v7080
    %v7082 = vrot.slane %v7081, 2
    %v7083 = vmax.f32 %v7081, %v7082
    %v7084 = vrot.slane %v7083, 1
    %v7085 = vmax.f32 %v7083, %v7084
    %v7086 = vsel %vm2628, %v6648, -inf
    %v7087 = vrot.slane %v7086, 4
    %v7088 = vmax.f32 %v7086, %v7087
    %v7089 = vrot.slane %v7088, 2
    %v7090 = vmax.f32 %v7088, %v7089
    %v7091 = vrot.slane %v7090, 1
    %v7092 = vmax.f32 %v7090, %v7091
    %v7093 = vsel %vm2628, %v6647, -inf
    %v7094 = vrot.slane %v7093, 4
    %v7095 = vmax.f32 %v7093, %v7094
    %v7096 = vrot.slane %v7095, 2
    %v7097 = vmax.f32 %v7095, %v7096
    %v7098 = vrot.slane %v7097, 1
    %v7099 = vmax.f32 %v7097, %v7098
    %v7100 = vsel %vm2628, %v6649, -inf
    %v7101 = vrot.slane %v7100, 4
    %v7102 = vmax.f32 %v7100, %v7101
    %v7103 = vrot.slane %v7102, 2
    %v7104 = vmax.f32 %v7102, %v7103
    %v7105 = vrot.slane %v7104, 1
    %v7106 = vmax.f32 %v7104, %v7105
    %v7107 = vsel %vm2628, %v6657, -inf
    %v7108 = vrot.slane %v7107, 4
    %v7109 = vmax.f32 %v7107, %v7108
    %v7110 = vrot.slane %v7109, 2
    %v7111 = vmax.f32 %v7109, %v7110
    %v7112 = vrot.slane %v7111, 1
    %v7113 = vmax.f32 %v7111, %v7112
    %v7114 = vsel %vm2628, %v6665, -inf
    %v7115 = vrot.slane %v7114, 4
    %v7116 = vmax.f32 %v7114, %v7115
    %v7117 = vrot.slane %v7116, 2
    %v7118 = vmax.f32 %v7116, %v7117
    %v7119 = vrot.slane %v7118, 1
    %v7120 = vmax.f32 %v7118, %v7119
    %v7121 = vsel %vm2628, %v6664, -inf
    %v7122 = vrot.slane %v7121, 4
    %v7123 = vmax.f32 %v7121, %v7122
    %v7124 = vrot.slane %v7123, 2
    %v7125 = vmax.f32 %v7123, %v7124
    %v7126 = vrot.slane %v7125, 1
    %v7127 = vmax.f32 %v7125, %v7126
    %v7128 = vsel %vm2628, %v6666, -inf
    %v7129 = vrot.slane %v7128, 4
    %v7130 = vmax.f32 %v7128, %v7129
    %v7131 = vrot.slane %v7130, 2
    %v7132 = vmax.f32 %v7130, %v7131
    %v7133 = vrot.slane %v7132, 1
    %v7134 = vmax.f32 %v7132, %v7133
    %v7135 = vsel %vm2628, %v6674, -inf
    %v7136 = vrot.slane %v7135, 4
    %v7137 = vmax.f32 %v7135, %v7136
    %v7138 = vrot.slane %v7137, 2
    %v7139 = vmax.f32 %v7137, %v7138
    %v7140 = vrot.slane %v7139, 1
    %v7141 = vmax.f32 %v7139, %v7140
    %v7142 = vsel %vm2628, %v6682, -inf
    %v7143 = vrot.slane %v7142, 4
    %v7144 = vmax.f32 %v7142, %v7143
    %v7145 = vrot.slane %v7144, 2
    %v7146 = vmax.f32 %v7144, %v7145
    %v7147 = vrot.slane %v7146, 1
    %v7148 = vmax.f32 %v7146, %v7147
    %v7149 = vsel %vm2628, %v6681, -inf
    %v7150 = vrot.slane %v7149, 4
    %v7151 = vmax.f32 %v7149, %v7150
    %v7152 = vrot.slane %v7151, 2
    %v7153 = vmax.f32 %v7151, %v7152
    %v7154 = vrot.slane %v7153, 1
    %v7155 = vmax.f32 %v7153, %v7154
    %v7156 = vsel %vm2628, %v6683, -inf
    %v7157 = vrot.slane %v7156, 4
    %v7158 = vmax.f32 %v7156, %v7157
    %v7159 = vrot.slane %v7158, 2
    %v7160 = vmax.f32 %v7158, %v7159
    %v7161 = vrot.slane %v7160, 1
    %v7162 = vmax.f32 %v7160, %v7161
    %v7163 = vsel %vm2628, %v6691, -inf
    %v7164 = vrot.slane %v7163, 4
    %v7165 = vmax.f32 %v7163, %v7164
    %v7166 = vrot.slane %v7165, 2
    %v7167 = vmax.f32 %v7165, %v7166
    %v7168 = vrot.slane %v7167, 1
    %v7169 = vmax.f32 %v7167, %v7168
    %v7170 = vsel %vm2628, %v6699, -inf
    %v7171 = vrot.slane %v7170, 4
    %v7172 = vmax.f32 %v7170, %v7171
    %v7173 = vrot.slane %v7172, 2
    %v7174 = vmax.f32 %v7172, %v7173
    %v7175 = vrot.slane %v7174, 1
    %v7176 = vmax.f32 %v7174, %v7175
    %v7177 = vsel %vm2628, %v6698, -inf
    %v7178 = vrot.slane %v7177, 4
    %v7179 = vmax.f32 %v7177, %v7178
    %v7180 = vrot.slane %v7179, 2
    %v7181 = vmax.f32 %v7179, %v7180
    %v7182 = vrot.slane %v7181, 1
    %v7183 = vmax.f32 %v7181, %v7182
    %v7184 = vsel %vm2628, %v6700, -inf
    %v7185 = vrot.slane %v7184, 4
    %v7186 = vmax.f32 %v7184, %v7185
    %v7187 = vrot.slane %v7186, 2
    %v7188 = vmax.f32 %v7186, %v7187
    %v7189 = vrot.slane %v7188, 1
    %v7190 = vmax.f32 %v7188, %v7189
    %v7191 = vsel %vm2628, %v6708, -inf
    %v7192 = vrot.slane %v7191, 4
    %v7193 = vmax.f32 %v7191, %v7192
    %v7194 = vrot.slane %v7193, 2
    %v7195 = vmax.f32 %v7193, %v7194
    %v7196 = vrot.slane %v7195, 1
    %v7197 = vmax.f32 %v7195, %v7196
    %v7198 = vsel %vm2628, %v6716, -inf
    %v7199 = vrot.slane %v7198, 4
    %v7200 = vmax.f32 %v7198, %v7199
    %v7201 = vrot.slane %v7200, 2
    %v7202 = vmax.f32 %v7200, %v7201
    %v7203 = vrot.slane %v7202, 1
    %v7204 = vmax.f32 %v7202, %v7203
    %v7205 = vsel %vm2628, %v6715, -inf
    %v7206 = vrot.slane %v7205, 4
    %v7207 = vmax.f32 %v7205, %v7206
    %v7208 = vrot.slane %v7207, 2
    %v7209 = vmax.f32 %v7207, %v7208
    %v7210 = vrot.slane %v7209, 1
    %v7211 = vmax.f32 %v7209, %v7210
    %v7212 = vsel %vm2628, %v6717, -inf
    %v7213 = vrot.slane %v7212, 4
    %v7214 = vmax.f32 %v7212, %v7213
    %v7215 = vrot.slane %v7214, 2
    %v7216 = vmax.f32 %v7214, %v7215
    %v7217 = vrot.slane %v7216, 1
    %v7218 = vmax.f32 %v7216, %v7217
    %v7219 = vsel %vm2628, %v6725, -inf
    %v7220 = vrot.slane %v7219, 4
    %v7221 = vmax.f32 %v7219, %v7220
    %v7222 = vrot.slane %v7221, 2
    %v7223 = vmax.f32 %v7221, %v7222
    %v7224 = vrot.slane %v7223, 1
    %v7225 = vmax.f32 %v7223, %v7224
    %v7226 = vsel %vm2628, %v6733, -inf
    %v7227 = vrot.slane %v7226, 4
    %v7228 = vmax.f32 %v7226, %v7227
    %v7229 = vrot.slane %v7228, 2
    %v7230 = vmax.f32 %v7228, %v7229
    %v7231 = vrot.slane %v7230, 1
    %v7232 = vmax.f32 %v7230, %v7231
    %v7233 = vsel %vm2628, %v6732, -inf
    %v7234 = vrot.slane %v7233, 4
    %v7235 = vmax.f32 %v7233, %v7234
    %v7236 = vrot.slane %v7235, 2
    %v7237 = vmax.f32 %v7235, %v7236
    %v7238 = vrot.slane %v7237, 1
    %v7239 = vmax.f32 %v7237, %v7238
    %v7240 = vsel %vm2628, %v6734, -inf
    %v7241 = vrot.slane %v7240, 4
    %v7242 = vmax.f32 %v7240, %v7241
    %v7243 = vrot.slane %v7242, 2
    %v7244 = vmax.f32 %v7242, %v7243
    %v7245 = vrot.slane %v7244, 1
    %v7246 = vmax.f32 %v7244, %v7245
    %v7247 = vsel %vm679, %v6805, -inf
    %v7248 = vsel %vm679, %v6833, -inf
    %v7249 = vmax.f32 %v7247, %v7248
    %v7250 = vsel %vm679, %v6812, -inf
    %v7251 = vsel %vm679, %v6840, -inf
    %v7252 = vmax.f32 %v7250, %v7251
    %v7253 = vsel %vm679, %v6819, -inf
    %v7254 = vsel %vm679, %v6847, -inf
    %v7255 = vmax.f32 %v7253, %v7254
    %v7256 = vsel %vm679, %v6826, -inf
    %v7257 = vsel %vm679, %v6854, -inf
    %v7258 = vmax.f32 %v7256, %v7257
    %v7259 = vsel %vm679, %v6861, -inf
    %v7260 = vsel %vm679, %v6889, -inf
    %v7261 = vmax.f32 %v7259, %v7260
    %v7262 = vsel %vm679, %v6868, -inf
    %v7263 = vsel %vm679, %v6896, -inf
    %v7264 = vmax.f32 %v7262, %v7263
    %v7265 = vsel %vm679, %v6875, -inf
    %v7266 = vsel %vm679, %v6903, -inf
    %v7267 = vmax.f32 %v7265, %v7266
    %v7268 = vsel %vm679, %v6882, -inf
    %v7269 = vsel %vm679, %v6910, -inf
    %v7270 = vmax.f32 %v7268, %v7269
    %v7271 = vsel %vm679, %v6917, -inf
    %v7272 = vsel %vm679, %v6945, -inf
    %v7273 = vmax.f32 %v7271, %v7272
    %v7274 = vsel %vm679, %v6924, -inf
    %v7275 = vsel %vm679, %v6952, -inf
    %v7276 = vmax.f32 %v7274, %v7275
    %v7277 = vsel %vm679, %v6931, -inf
    %v7278 = vsel %vm679, %v6959, -inf
    %v7279 = vmax.f32 %v7277, %v7278
    %v7280 = vsel %vm679, %v6938, -inf
    %v7281 = vsel %vm679, %v6966, -inf
    %v7282 = vmax.f32 %v7280, %v7281
    %v7283 = vsel %vm679, %v6973, -inf
    %v7284 = vsel %vm679, %v7001, -inf
    %v7285 = vmax.f32 %v7283, %v7284
    %v7286 = vsel %vm679, %v6980, -inf
    %v7287 = vsel %vm679, %v7008, -inf
    %v7288 = vmax.f32 %v7286, %v7287
    %v7289 = vsel %vm679, %v6987, -inf
    %v7290 = vsel %vm679, %v7015, -inf
    %v7291 = vmax.f32 %v7289, %v7290
    %v7292 = vsel %vm679, %v6994, -inf
    %v7293 = vsel %vm679, %v7022, -inf
    %v7294 = vmax.f32 %v7292, %v7293
    %v7295 = vsel %vm679, %v7029, -inf
    %v7296 = vsel %vm679, %v7057, -inf
    %v7297 = vmax.f32 %v7295, %v7296
    %v7298 = vsel %vm679, %v7036, -inf
    %v7299 = vsel %vm679, %v7064, -inf
    %v7300 = vmax.f32 %v7298, %v7299
    %v7301 = vsel %vm679, %v7043, -inf
    %v7302 = vsel %vm679, %v7071, -inf
    %v7303 = vmax.f32 %v7301, %v7302
    %v7304 = vsel %vm679, %v7050, -inf
    %v7305 = vsel %vm679, %v7078, -inf
    %v7306 = vmax.f32 %v7304, %v7305
    %v7307 = vsel %vm679, %v7085, -inf
    %v7308 = vsel %vm679, %v7113, -inf
    %v7309 = vmax.f32 %v7307, %v7308
    %v7310 = vsel %vm679, %v7092, -inf
    %v7311 = vsel %vm679, %v7120, -inf
    %v7312 = vmax.f32 %v7310, %v7311
    %v7313 = vsel %vm679, %v7099, -inf
    %v7314 = vsel %vm679, %v7127, -inf
    %v7315 = vmax.f32 %v7313, %v7314
    %v7316 = vsel %vm679, %v7106, -inf
    %v7317 = vsel %vm679, %v7134, -inf
    %v7318 = vmax.f32 %v7316, %v7317
    %v7319 = vsel %vm679, %v7141, -inf
    %v7320 = vsel %vm679, %v7169, -inf
    %v7321 = vmax.f32 %v7319, %v7320
    %v7322 = vsel %vm679, %v7148, -inf
    %v7323 = vsel %vm679, %v7176, -inf
    %v7324 = vmax.f32 %v7322, %v7323
    %v7325 = vsel %vm679, %v7155, -inf
    %v7326 = vsel %vm679, %v7183, -inf
    %v7327 = vmax.f32 %v7325, %v7326
    %v7328 = vsel %vm679, %v7162, -inf
    %v7329 = vsel %vm679, %v7190, -inf
    %v7330 = vmax.f32 %v7328, %v7329
    %v7331 = vsel %vm679, %v7197, -inf
    %v7332 = vsel %vm679, %v7225, -inf
    %v7333 = vmax.f32 %v7331, %v7332
    %v7334 = vsel %vm679, %v7204, -inf
    %v7335 = vsel %vm679, %v7232, -inf
    %v7336 = vmax.f32 %v7334, %v7335
    %v7337 = vsel %vm679, %v7211, -inf
    %v7338 = vsel %vm679, %v7239, -inf
    %v7339 = vmax.f32 %v7337, %v7338
    %v7340 = vsel %vm679, %v7218, -inf
    %v7341 = vsel %vm679, %v7246, -inf
    %v7342 = vmax.f32 %v7340, %v7341
    %7343 = vst [vmem:[#allocation3] sm:$0xff] 0.0
    %7344 = vst [vmem:[#allocation3 + $0x8] sm:$0xff] 0.0
    %vm7345 = vcmask 519168
    %7346 = vst.msk [vmem:[#allocation3 + $0x10] sm:$0xf] %vm7345, 0.0
    %7347 = vst [vmem:[#allocation3 + $0x14] sm:$0xff] 0.0
    %7348 = vst [vmem:[#allocation3 + $0x1c] sm:$0xff] 0.0
    %7349 = vst.msk [vmem:[#allocation3 + $0x24] sm:$0xf] %vm7345, 0.0
    %7350 = vst [vmem:[#allocation3 + $0x28] sm:$0xff] 0.0
    %7351 = vst [vmem:[#allocation3 + $0x30] sm:$0xff] 0.0
    %7352 = vst.msk [vmem:[#allocation3 + $0x38] sm:$0xf] %vm7345, 0.0
    %7353 = vst [vmem:[#allocation3 + $0x3c] sm:$0xff] 0.0
    %7354 = vst [vmem:[#allocation3 + $0x44] sm:$0xff] 0.0
    %7355 = vst.msk [vmem:[#allocation3 + $0x4c] sm:$0xf] %vm7345, 0.0
    %7356 = vst [vmem:[#allocation3 + $0x50] sm:$0xff] 0.0
    %7357 = vst [vmem:[#allocation3 + $0x58] sm:$0xff] 0.0
    %7358 = vst.msk [vmem:[#allocation3 + $0x60] sm:$0xf] %vm7345, 0.0
    %7359 = vst [vmem:[#allocation3 + $0x64] sm:$0xff] 0.0
    %7360 = vst [vmem:[#allocation3 + $0x6c] sm:$0xff] 0.0
    %7361 = vst.msk [vmem:[#allocation3 + $0x74] sm:$0xf] %vm7345, 0.0
    %7362 = vst [vmem:[#allocation3 + $0x78] sm:$0xff] 0.0
    %7363 = vst [vmem:[#allocation3 + $0x80] sm:$0xff] 0.0
    %7364 = vst.msk [vmem:[#allocation3 + $0x88] sm:$0xf] %vm7345, 0.0
    %7365 = vst [vmem:[#allocation3 + $0x8c] sm:$0xff] 0.0
    %7366 = vst [vmem:[#allocation3 + $0x94] sm:$0xff] 0.0
    %7367 = vst.msk [vmem:[#allocation3 + $0x9c] sm:$0xf] %vm7345, 0.0
    %v7386 = vrot.slane %v7249, 7
    %v7387 = vrot.slane %v7252, 6
    %v7388 = vsel %vm4983, %v7387, %v7386
    %v7389 = vsel %vm4991, %v7387, %v7388
    %v7390 = vrot.slane %v7255, 5
    %v7391 = vsel %vm4985, %v7390, %v7389
    %v7392 = vsel %vm4993, %v7390, %v7391
    %v7393 = vrot.slane %v7261, 7
    %v7394 = vrot.slane %v7264, 6
    %v7395 = vsel %vm4983, %v7394, %v7393
    %v7396 = vsel %vm4991, %v7394, %v7395
    %v7397 = vrot.slane %v7267, 5
    %v7398 = vsel %vm4985, %v7397, %v7396
    %v7399 = vsel %vm4993, %v7397, %v7398
    %v7400 = vrot.slane %v7273, 7
    %v7401 = vrot.slane %v7276, 6
    %v7402 = vsel %vm4983, %v7401, %v7400
    %v7403 = vsel %vm4991, %v7401, %v7402
    %v7404 = vrot.slane %v7279, 5
    %v7405 = vsel %vm4985, %v7404, %v7403
    %v7406 = vsel %vm4993, %v7404, %v7405
    %v7407 = vrot.slane %v7297, 7
    %v7408 = vrot.slane %v7300, 6
    %v7409 = vsel %vm4983, %v7408, %v7407
    %v7410 = vsel %vm4991, %v7408, %v7409
    %v7411 = vrot.slane %v7303, 5
    %v7412 = vsel %vm4985, %v7411, %v7410
    %v7413 = vsel %vm4993, %v7411, %v7412
    %v7414 = vrot.slane %v7309, 7
    %v7415 = vrot.slane %v7312, 6
    %v7416 = vsel %vm4983, %v7415, %v7414
    %v7417 = vsel %vm4991, %v7415, %v7416
    %v7418 = vrot.slane %v7315, 5
    %v7419 = vsel %vm4985, %v7418, %v7417
    %v7420 = vsel %vm4993, %v7418, %v7419
    %v7421 = vrot.slane %v7321, 7
    %v7422 = vrot.slane %v7324, 6
    %v7423 = vsel %vm4983, %v7422, %v7421
    %v7424 = vsel %vm4991, %v7422, %v7423
    %v7425 = vrot.slane %v7327, 5
    %v7426 = vsel %vm4985, %v7425, %v7424
    %v7427 = vsel %vm4993, %v7425, %v7426
    %s7434 = scalar_lea.vmem [#allocation3], 20
    %vm7435 = vcmask 519169
    %7436 = vst.msk [vmem:[%s7434] sm:$0xe] %vm7435, %v7392
    %7437 = vst.msk [vmem:[%s7434 + $0x14] sm:$0xe] %vm7435, %v7399
    %7438 = vst.msk [vmem:[%s7434 + $0x28] sm:$0xe] %vm7435, %v7406
    %7439 = vst.msk [vmem:[%s7434 + $0x50] sm:$0xe] %vm7435, %v7413
    %7440 = vst.msk [vmem:[%s7434 + $0x64] sm:$0xe] %vm7435, %v7420
    %7441 = vst.msk [vmem:[%s7434 + $0x78] sm:$0xe] %vm7435, %v7427
    %v7448 = vrot.slane %v7252, 7
    %v7449 = vsel %vm5117, %v7448, %v7249
    %v7450 = vsel %vm4989, %v7448, %v7449
    %v7451 = vrot.slane %v7255, 6
    %v7452 = vsel %vm4983, %v7451, %v7450
    %v7453 = vsel %vm4991, %v7451, %v7452
    %v7454 = vrot.slane %v7258, 5
    %v7455 = vsel %vm4985, %v7454, %v7453
    %v7456 = vsel %vm4993, %v7454, %v7455
    %v7457 = vrot.slane %v7264, 7
    %v7458 = vsel %vm5117, %v7457, %v7261
    %v7459 = vsel %vm4989, %v7457, %v7458
    %v7460 = vrot.slane %v7267, 6
    %v7461 = vsel %vm4983, %v7460, %v7459
    %v7462 = vsel %vm4991, %v7460, %v7461
    %v7463 = vrot.slane %v7270, 5
    %v7464 = vsel %vm4985, %v7463, %v7462
    %v7465 = vsel %vm4993, %v7463, %v7464
    %v7466 = vrot.slane %v7276, 7
    %v7467 = vsel %vm5117, %v7466, %v7273
    %v7468 = vsel %vm4989, %v7466, %v7467
    %v7469 = vrot.slane %v7279, 6
    %v7470 = vsel %vm4983, %v7469, %v7468
    %v7471 = vsel %vm4991, %v7469, %v7470
    %v7472 = vrot.slane %v7282, 5
    %v7473 = vsel %vm4985, %v7472, %v7471
    %v7474 = vsel %vm4993, %v7472, %v7473
    %v7475 = vrot.slane %v7300, 7
    %v7476 = vsel %vm5117, %v7475, %v7297
    %v7477 = vsel %vm4989, %v7475, %v7476
    %v7478 = vrot.slane %v7303, 6
    %v7479 = vsel %vm4983, %v7478, %v7477
    %v7480 = vsel %vm4991, %v7478, %v7479
    %v7481 = vrot.slane %v7306, 5
    %v7482 = vsel %vm4985, %v7481, %v7480
    %v7483 = vsel %vm4993, %v7481, %v7482
    %v7484 = vrot.slane %v7312, 7
    %v7485 = vsel %vm5117, %v7484, %v7309
    %v7486 = vsel %vm4989, %v7484, %v7485
    %v7487 = vrot.slane %v7315, 6
    %v7488 = vsel %vm4983, %v7487, %v7486
    %v7489 = vsel %vm4991, %v7487, %v7488
    %v7490 = vrot.slane %v7318, 5
    %v7491 = vsel %vm4985, %v7490, %v7489
    %v7492 = vsel %vm4993, %v7490, %v7491
    %v7493 = vrot.slane %v7324, 7
    %v7494 = vsel %vm5117, %v7493, %v7321
    %v7495 = vsel %vm4989, %v7493, %v7494
    %v7496 = vrot.slane %v7327, 6
    %v7497 = vsel %vm4983, %v7496, %v7495
    %v7498 = vsel %vm4991, %v7496, %v7497
    %v7499 = vrot.slane %v7330, 5
    %v7500 = vsel %vm4985, %v7499, %v7498
    %v7501 = vsel %vm4993, %v7499, %v7500
    %7502 = vrot.lane.b32.xlu0 %v7456, 64
    %v7503 = vpop.permute.xlu0 %7502
    %7504 = vrot.lane.b32.xlu0 %v7465, 64
    %v7505 = vpop.permute.xlu0 %7504
    %7506 = vrot.lane.b32.xlu0 %v7474, 64
    %v7507 = vpop.permute.xlu0 %7506
    %7508 = vrot.lane.b32.xlu0 %v7483, 64
    %v7509 = vpop.permute.xlu0 %7508
    %7510 = vrot.lane.b32.xlu0 %v7492, 64
    %v7511 = vpop.permute.xlu0 %7510
    %7512 = vrot.lane.b32.xlu0 %v7501, 64
    %v7513 = vpop.permute.xlu0 %7512
    %vm7520 = vcmask 1043968
    %7521 = vst.msk [vmem:[%s7434] sm:$0xf] %vm7520, %v7503
    %7522 = vst.msk [vmem:[%s7434 + $0x14] sm:$0xf] %vm7520, %v7505
    %7523 = vst.msk [vmem:[%s7434 + $0x28] sm:$0xf] %vm7520, %v7507
    %7524 = vst.msk [vmem:[%s7434 + $0x50] sm:$0xf] %vm7520, %v7509
    %7525 = vst.msk [vmem:[%s7434 + $0x64] sm:$0xf] %vm7520, %v7511
    %7526 = vst.msk [vmem:[%s7434 + $0x78] sm:$0xf] %vm7520, %v7513
    %v7527 = vrot.slane %v7255, 7
    %v7528 = vsel %vm5117, %v7527, %v7252
    %v7529 = vsel %vm4989, %v7527, %v7528
    %v7530 = vrot.slane %v7258, 6
    %v7531 = vsel %vm4983, %v7530, %v7529
    %v7532 = vsel %vm4991, %v7530, %v7531
    %v7533 = vrot.slane %v7267, 7
    %v7534 = vsel %vm5117, %v7533, %v7264
    %v7535 = vsel %vm4989, %v7533, %v7534
    %v7536 = vrot.slane %v7270, 6
    %v7537 = vsel %vm4983, %v7536, %v7535
    %v7538 = vsel %vm4991, %v7536, %v7537
    %v7539 = vrot.slane %v7279, 7
    %v7540 = vsel %vm5117, %v7539, %v7276
    %v7541 = vsel %vm4989, %v7539, %v7540
    %v7542 = vrot.slane %v7282, 6
    %v7543 = vsel %vm4983, %v7542, %v7541
    %v7544 = vsel %vm4991, %v7542, %v7543
    %v7545 = vrot.slane %v7303, 7
    %v7546 = vsel %vm5117, %v7545, %v7300
    %v7547 = vsel %vm4989, %v7545, %v7546
    %v7548 = vrot.slane %v7306, 6
    %v7549 = vsel %vm4983, %v7548, %v7547
    %v7550 = vsel %vm4991, %v7548, %v7549
    %v7551 = vrot.slane %v7315, 7
    %v7552 = vsel %vm5117, %v7551, %v7312
    %v7553 = vsel %vm4989, %v7551, %v7552
    %v7554 = vrot.slane %v7318, 6
    %v7555 = vsel %vm4983, %v7554, %v7553
    %v7556 = vsel %vm4991, %v7554, %v7555
    %v7557 = vrot.slane %v7327, 7
    %v7558 = vsel %vm5117, %v7557, %v7324
    %v7559 = vsel %vm4989, %v7557, %v7558
    %v7560 = vrot.slane %v7330, 6
    %v7561 = vsel %vm4983, %v7560, %v7559
    %v7562 = vsel %vm4991, %v7560, %v7561
    %vm7569 = vcmask 518144
    %7570 = vst.msk [vmem:[%s7434 + $0x4] sm:$0x7] %vm7569, %v7532
    %7571 = vst.msk [vmem:[%s7434 + $0x18] sm:$0x7] %vm7569, %v7538
    %7572 = vst.msk [vmem:[%s7434 + $0x2c] sm:$0x7] %vm7569, %v7544
    %7573 = vst.msk [vmem:[%s7434 + $0x54] sm:$0x7] %vm7569, %v7550
    %7574 = vst.msk [vmem:[%s7434 + $0x68] sm:$0x7] %vm7569, %v7556
    %7575 = vst.msk [vmem:[%s7434 + $0x7c] sm:$0x7] %vm7569, %v7562
    %v7582 = vrot.slane %v7285, 7
    %v7583 = vrot.slane %v7288, 6
    %v7584 = vsel %vm4983, %v7583, %v7582
    %v7585 = vsel %vm4991, %v7583, %v7584
    %v7586 = vrot.slane %v7291, 5
    %v7587 = vsel %vm4985, %v7586, %v7585
    %v7588 = vsel %vm4993, %v7586, %v7587
    %v7589 = vrot.slane %v7333, 7
    %v7590 = vrot.slane %v7336, 6
    %v7591 = vsel %vm4983, %v7590, %v7589
    %v7592 = vsel %vm4991, %v7590, %v7591
    %v7593 = vrot.slane %v7339, 5
    %v7594 = vsel %vm4985, %v7593, %v7592
    %v7595 = vsel %vm4993, %v7593, %v7594
    %7596 = vrot.lane.b32.xlu0 %v7392, 64
    %v7597 = vpop.permute.xlu0 %7596
    %7598 = vrot.lane.b32.xlu0 %v7399, 64
    %v7599 = vpop.permute.xlu0 %7598
    %7600 = vrot.lane.b32.xlu0 %v7406, 64
    %v7601 = vpop.permute.xlu0 %7600
    %7602 = vrot.lane.b32.xlu0 %v7588, 64
    %v7603 = vpop.permute.xlu0 %7602
    %7604 = vrot.lane.b32.xlu0 %v7413, 64
    %v7605 = vpop.permute.xlu0 %7604
    %7606 = vrot.lane.b32.xlu0 %v7420, 64
    %v7607 = vpop.permute.xlu0 %7606
    %7608 = vrot.lane.b32.xlu0 %v7427, 64
    %v7609 = vpop.permute.xlu0 %7608
    %7610 = vrot.lane.b32.xlu0 %v7595, 64
    %v7611 = vpop.permute.xlu0 %7610
    %vm7620 = vcmask 1043969
    %7621 = vst.msk [vmem:[#allocation3 + $0x4] sm:$0xe] %vm7620, %v7597
    %7622 = vst.msk [vmem:[#allocation3 + $0x18] sm:$0xe] %vm7620, %v7599
    %7623 = vst.msk [vmem:[#allocation3 + $0x2c] sm:$0xe] %vm7620, %v7601
    %7624 = vst.msk [vmem:[#allocation3 + $0x40] sm:$0xe] %vm7620, %v7603
    %7625 = vst.msk [vmem:[#allocation3 + $0x54] sm:$0xe] %vm7620, %v7605
    %7626 = vst.msk [vmem:[#allocation3 + $0x68] sm:$0xe] %vm7620, %v7607
    %7627 = vst.msk [vmem:[#allocation3 + $0x7c] sm:$0xe] %vm7620, %v7609
    %7628 = vst.msk [vmem:[#allocation3 + $0x90] sm:$0xe] %vm7620, %v7611
    %v7631 = vrot.slane %v7288, 7
    %v7632 = vsel %vm5117, %v7631, %v7285
    %v7633 = vsel %vm4989, %v7631, %v7632
    %v7634 = vrot.slane %v7291, 6
    %v7635 = vsel %vm4983, %v7634, %v7633
    %v7636 = vsel %vm4991, %v7634, %v7635
    %v7637 = vrot.slane %v7294, 5
    %v7638 = vsel %vm4985, %v7637, %v7636
    %v7639 = vsel %vm4993, %v7637, %v7638
    %v7640 = vrot.slane %v7336, 7
    %v7641 = vsel %vm5117, %v7640, %v7333
    %v7642 = vsel %vm4989, %v7640, %v7641
    %v7643 = vrot.slane %v7339, 6
    %v7644 = vsel %vm4983, %v7643, %v7642
    %v7645 = vsel %vm4991, %v7643, %v7644
    %v7646 = vrot.slane %v7342, 5
    %v7647 = vsel %vm4985, %v7646, %v7645
    %v7648 = vsel %vm4993, %v7646, %v7647
    %7657 = vst.msk [vmem:[#allocation3 + $0x8] sm:$0xf] %vm7345, %v7456
    %7658 = vst.msk [vmem:[#allocation3 + $0x1c] sm:$0xf] %vm7345, %v7465
    %7659 = vst.msk [vmem:[#allocation3 + $0x30] sm:$0xf] %vm7345, %v7474
    %7660 = vst.msk [vmem:[#allocation3 + $0x44] sm:$0xf] %vm7345, %v7639
    %7661 = vst.msk [vmem:[#allocation3 + $0x58] sm:$0xf] %vm7345, %v7483
    %7662 = vst.msk [vmem:[#allocation3 + $0x6c] sm:$0xf] %vm7345, %v7492
    %7663 = vst.msk [vmem:[#allocation3 + $0x80] sm:$0xf] %vm7345, %v7501
    %7664 = vst.msk [vmem:[#allocation3 + $0x94] sm:$0xf] %vm7345, %v7648
    %v7665 = vrot.slane %v7291, 7
    %v7666 = vsel %vm5117, %v7665, %v7288
    %v7667 = vsel %vm4989, %v7665, %v7666
    %v7668 = vrot.slane %v7294, 6
    %v7669 = vsel %vm4983, %v7668, %v7667
    %v7670 = vsel %vm4991, %v7668, %v7669
    %v7671 = vrot.slane %v7339, 7
    %v7672 = vsel %vm5117, %v7671, %v7336
    %v7673 = vsel %vm4989, %v7671, %v7672
    %v7674 = vrot.slane %v7342, 6
    %v7675 = vsel %vm4983, %v7674, %v7673
    %v7676 = vsel %vm4991, %v7674, %v7675
    %7677 = vrot.lane.b32.xlu0 %v7532, 64
    %v7678 = vpop.permute.xlu0 %7677
    %7679 = vrot.lane.b32.xlu0 %v7538, 64
    %v7680 = vpop.permute.xlu0 %7679
    %7681 = vrot.lane.b32.xlu0 %v7544, 64
    %v7682 = vpop.permute.xlu0 %7681
    %7683 = vrot.lane.b32.xlu0 %v7670, 64
    %v7684 = vpop.permute.xlu0 %7683
    %7685 = vrot.lane.b32.xlu0 %v7550, 64
    %v7686 = vpop.permute.xlu0 %7685
    %7687 = vrot.lane.b32.xlu0 %v7556, 64
    %v7688 = vpop.permute.xlu0 %7687
    %7689 = vrot.lane.b32.xlu0 %v7562, 64
    %v7690 = vpop.permute.xlu0 %7689
    %7691 = vrot.lane.b32.xlu0 %v7676, 64
    %v7692 = vpop.permute.xlu0 %7691
    %vm7701 = vcmask 1042944
    %7702 = vst.msk [vmem:[#allocation3 + $0x8] sm:$0x7] %vm7701, %v7678
    %7703 = vst.msk [vmem:[#allocation3 + $0x1c] sm:$0x7] %vm7701, %v7680
    %7704 = vst.msk [vmem:[#allocation3 + $0x30] sm:$0x7] %vm7701, %v7682
    %7705 = vst.msk [vmem:[#allocation3 + $0x44] sm:$0x7] %vm7701, %v7684
    %7706 = vst.msk [vmem:[#allocation3 + $0x58] sm:$0x7] %vm7701, %v7686
    %7707 = vst.msk [vmem:[#allocation3 + $0x6c] sm:$0x7] %vm7701, %v7688
    %7708 = vst.msk [vmem:[#allocation3 + $0x80] sm:$0x7] %vm7701, %v7690
    %7709 = vst.msk [vmem:[#allocation3 + $0x94] sm:$0x7] %vm7701, %v7692
    %7712 = vst.msk [vmem:[#allocation3 + $0xc] sm:$0xe] %vm7435, %v7399
    %7713 = vst.msk [vmem:[#allocation3 + $0x20] sm:$0xe] %vm7435, %v7406
    %7714 = vst.msk [vmem:[#allocation3 + $0x34] sm:$0xe] %vm7435, %v7588
    %7715 = vst.msk [vmem:[#allocation3 + $0x5c] sm:$0xe] %vm7435, %v7420
    %7716 = vst.msk [vmem:[#allocation3 + $0x70] sm:$0xe] %vm7435, %v7427
    %7717 = vst.msk [vmem:[#allocation3 + $0x84] sm:$0xe] %vm7435, %v7595
    %7718 = vrot.lane.b32.xlu0 %v7639, 64
    %v7719 = vpop.permute.xlu0 %7718
    %7720 = vrot.lane.b32.xlu0 %v7648, 64
    %v7721 = vpop.permute.xlu0 %7720
    %7724 = vst.msk [vmem:[#allocation3 + $0xc] sm:$0xf] %vm7520, %v7505
    %7725 = vst.msk [vmem:[#allocation3 + $0x20] sm:$0xf] %vm7520, %v7507
    %7726 = vst.msk [vmem:[#allocation3 + $0x34] sm:$0xf] %vm7520, %v7719
    %7727 = vst.msk [vmem:[#allocation3 + $0x5c] sm:$0xf] %vm7520, %v7511
    %7728 = vst.msk [vmem:[#allocation3 + $0x70] sm:$0xf] %vm7520, %v7513
    %7729 = vst.msk [vmem:[#allocation3 + $0x84] sm:$0xf] %vm7520, %v7721
    %7732 = vst.msk [vmem:[#allocation3 + $0x10] sm:$0x7] %vm7569, %v7538
    %7733 = vst.msk [vmem:[#allocation3 + $0x24] sm:$0x7] %vm7569, %v7544
    %7734 = vst.msk [vmem:[#allocation3 + $0x38] sm:$0x7] %vm7569, %v7670
    %7735 = vst.msk [vmem:[#allocation3 + $0x60] sm:$0x7] %vm7569, %v7556
    %7736 = vst.msk [vmem:[#allocation3 + $0x74] sm:$0x7] %vm7569, %v7562
    %7737 = vst.msk [vmem:[#allocation3 + $0x88] sm:$0x7] %vm7569, %v7676
    %v7738 = vld [vmem:[#allocation3] sm:$0xff]
    %v7739 = vld [vmem:[#allocation3 + $0x8] sm:$0xff]
    %v7740 = vld [vmem:[#allocation3 + $0x10] sm:$0xf]
    %v7741 = vld [vmem:[#allocation3 + $0x14] sm:$0xff]
    %v7742 = vld [vmem:[#allocation3 + $0x1c] sm:$0xff]
    %v7743 = vld [vmem:[#allocation3 + $0x24] sm:$0xf]
    %v7744 = vld [vmem:[#allocation3 + $0x28] sm:$0xff]
    %v7745 = vld [vmem:[#allocation3 + $0x30] sm:$0xff]
    %v7746 = vld [vmem:[#allocation3 + $0x38] sm:$0xf]
    %v7747 = vld [vmem:[#allocation3 + $0x3c] sm:$0xff]
    %v7748 = vld [vmem:[#allocation3 + $0x44] sm:$0xff]
    %v7749 = vld [vmem:[#allocation3 + $0x4c] sm:$0xf]
    %v7750 = vld [vmem:[#allocation3 + $0x50] sm:$0xff]
    %v7751 = vld [vmem:[#allocation3 + $0x58] sm:$0xff]
    %v7752 = vld [vmem:[#allocation3 + $0x60] sm:$0xf]
    %v7753 = vld [vmem:[#allocation3 + $0x64] sm:$0xff]
    %v7754 = vld [vmem:[#allocation3 + $0x6c] sm:$0xff]
    %v7755 = vld [vmem:[#allocation3 + $0x74] sm:$0xf]
    %v7756 = vld [vmem:[#allocation3 + $0x78] sm:$0xff]
    %v7757 = vld [vmem:[#allocation3 + $0x80] sm:$0xff]
    %v7758 = vld [vmem:[#allocation3 + $0x88] sm:$0xf]
    %v7759 = vld [vmem:[#allocation3 + $0x8c] sm:$0xff]
    %v7760 = vld [vmem:[#allocation3 + $0x94] sm:$0xff]
    %v7761 = vld [vmem:[#allocation3 + $0x9c] sm:$0xf]
    %v7762 = vld [vmem:[%s3] sm:$0xff]
    %v7763 = vld [vmem:[%s3 + $0x8] sm:$0xff]
    %v7764 = vld [vmem:[%s3 + $0x10] sm:$0xff]
    %v7765 = vld [vmem:[%s3 + $0x18] sm:$0xff]
    %v7766 = vld [vmem:[%s3 + $0x20] sm:$0xff]
    %v7767 = vld [vmem:[%s3 + $0x28] sm:$0xff]
    %v7768 = vld [vmem:[%s3 + $0x30] sm:$0xff]
    %v7769 = vld [vmem:[%s3 + $0x38] sm:$0xff]
    %v7770 = vld [vmem:[%s3 + $0x40] sm:$0xff]
    %v7771 = vld [vmem:[%s3 + $0x48] sm:$0xff]
    %v7772 = vld [vmem:[%s3 + $0x50] sm:$0xff]
    %v7773 = vld [vmem:[%s3 + $0x58] sm:$0xff]
    %v7774 = vld [vmem:[%s3 + $0x60] sm:$0xff]
    %v7775 = vld [vmem:[%s3 + $0x68] sm:$0xff]
    %v7776 = vld [vmem:[%s3 + $0x70] sm:$0xff]
    %v7777 = vld [vmem:[%s3 + $0x78] sm:$0xff]
    %v7778 = vld [vmem:[%s3 + $0x80] sm:$0xff]
    %v7779 = vld [vmem:[%s3 + $0x88] sm:$0xff]
    %v7780 = vld [vmem:[%s3 + $0x90] sm:$0xff]
    %v7781 = vld [vmem:[%s3 + $0x98] sm:$0xff]
    %v7782 = vld [vmem:[%s3 + $0xa0] sm:$0xff]
    %v7783 = vld [vmem:[%s3 + $0xa8] sm:$0xff]
    %v7784 = vld [vmem:[%s3 + $0xb0] sm:$0xff]
    %v7785 = vld [vmem:[%s3 + $0xb8] sm:$0xff]
    %v7786 = vld [vmem:[%s3 + $0xc0] sm:$0xff]
    %v7787 = vld [vmem:[%s3 + $0xc8] sm:$0xff]
    %v7788 = vld [vmem:[%s3 + $0xd0] sm:$0xff]
    %v7789 = vld [vmem:[%s3 + $0xd8] sm:$0xff]
    %v7790 = vld [vmem:[%s3 + $0xe0] sm:$0xff]
    %v7791 = vld [vmem:[%s3 + $0xe8] sm:$0xff]
    %v7792 = vld [vmem:[%s3 + $0xf0] sm:$0xff]
    %v7793 = vld [vmem:[%s3 + $0xf8] sm:$0xff]
    %v7794 = vld [vmem:[%s3 + $0x100] sm:$0xff]
    %v7795 = vld [vmem:[%s3 + $0x108] sm:$0xff]
    %v7796 = vld [vmem:[%s3 + $0x110] sm:$0xff]
    %v7797 = vld [vmem:[%s3 + $0x118] sm:$0xff]
    %v7798 = vld [vmem:[%s3 + $0x120] sm:$0xff]
    %v7799 = vld [vmem:[%s3 + $0x128] sm:$0xff]
    %v7800 = vld [vmem:[%s3 + $0x130] sm:$0xff]
    %v7801 = vld [vmem:[%s3 + $0x138] sm:$0xff]
    %v7802 = vld [vmem:[%s3 + $0x140] sm:$0xff]
    %v7803 = vld [vmem:[%s3 + $0x148] sm:$0xff]
    %v7804 = vld [vmem:[%s3 + $0x150] sm:$0xff]
    %v7805 = vld [vmem:[%s3 + $0x158] sm:$0xff]
    %v7806 = vld [vmem:[%s3 + $0x160] sm:$0xff]
    %v7807 = vld [vmem:[%s3 + $0x168] sm:$0xff]
    %v7808 = vld [vmem:[%s3 + $0x170] sm:$0xff]
    %v7809 = vld [vmem:[%s3 + $0x178] sm:$0xff]
    %v7810 = vld [vmem:[%s3 + $0x180] sm:$0xff]
    %v7811 = vld [vmem:[%s3 + $0x188] sm:$0xff]
    %v7812 = vld [vmem:[%s3 + $0x190] sm:$0xff]
    %v7813 = vld [vmem:[%s3 + $0x198] sm:$0xff]
    %v7814 = vld [vmem:[%s3 + $0x1a0] sm:$0xff]
    %v7815 = vld [vmem:[%s3 + $0x1a8] sm:$0xff]
    %v7816 = vld [vmem:[%s3 + $0x1b0] sm:$0xff]
    %v7817 = vld [vmem:[%s3 + $0x1b8] sm:$0xff]
    %v7818 = vld [vmem:[%s3 + $0x1c0] sm:$0xff]
    %v7819 = vld [vmem:[%s3 + $0x1c8] sm:$0xff]
    %v7820 = vld [vmem:[%s3 + $0x1d0] sm:$0xff]
    %v7821 = vld [vmem:[%s3 + $0x1d8] sm:$0xff]
    %v7822 = vld [vmem:[%s3 + $0x1e0] sm:$0xff]
    %v7823 = vld [vmem:[%s3 + $0x1e8] sm:$0xff]
    %v7824 = vld [vmem:[%s3 + $0x1f0] sm:$0xff]
    %v7825 = vld [vmem:[%s3 + $0x1f8] sm:$0xff]
    %v7826 = vld [vmem:[%s3 + $0x200] sm:$0xff]
    %v7827 = vld [vmem:[%s3 + $0x208] sm:$0xff]
    %v7828 = vld [vmem:[%s3 + $0x210] sm:$0xff]
    %v7829 = vld [vmem:[%s3 + $0x218] sm:$0xff]
    %v7830 = vld [vmem:[%s3 + $0x220] sm:$0xff]
    %v7831 = vld [vmem:[%s3 + $0x228] sm:$0xff]
    %v7832 = vld [vmem:[%s3 + $0x230] sm:$0xff]
    %v7833 = vld [vmem:[%s3 + $0x238] sm:$0xff]
    %v7858 = vcombine.low %v7738, %v7741
    %v7859 = vcombine.high %v7738, %v7741
    %v7860 = vcombine.low %v7739, %v7742
    %v7861 = vcombine.high %v7739, %v7742
    %v7862 = vcombine.low %v7740, %v7743
    %v7863 = vcombine.low %v7744, %v7747
    %v7864 = vcombine.high %v7744, %v7747
    %v7865 = vcombine.low %v7745, %v7748
    %v7866 = vcombine.high %v7745, %v7748
    %v7867 = vcombine.low %v7746, %v7749
    %v7868 = vcombine.low %v7750, %v7753
    %v7869 = vcombine.high %v7750, %v7753
    %v7870 = vcombine.low %v7751, %v7754
    %v7871 = vcombine.high %v7751, %v7754
    %v7872 = vcombine.low %v7752, %v7755
    %v7873 = vcombine.low %v7756, %v7759
    %v7874 = vcombine.high %v7756, %v7759
    %v7875 = vcombine.low %v7757, %v7760
    %v7876 = vcombine.high %v7757, %v7760
    %v7877 = vcombine.low %v7758, %v7761
    %v7894 = vsel %vm679, %v7862, 0
    %v7896 = vsel %vm679, %v7867, 0
    %v7898 = vsel %vm679, %v7872, 0
    %v7900 = vsel %vm679, %v7877, 0
    %7902 = vmatprep.subr.mxu0 0.0
    %7903 = vmatpush1.msra.mxu0 %v7762
    %7904 = vmatprep.subr.mxu0 0.0
    %7905 = vmatpush1.msra.mxu0 %v7763
    %7906 = vmatprep.subr.mxu0 0.0
    %7907 = vmatpush1.msra.mxu0 %v7764
    %7908 = vmatprep.subr.mxu0 0.0
    %7909 = vmatpush1.msra.mxu0 %v7765
    %7910 = vmatprep.subr.mxu0 0.0
    %7911 = vmatpush1.msra.mxu0 %v7766
    %7912 = vmatprep.subr.mxu0 0.0
    %7913 = vmatpush1.msra.mxu0 %v7767
    %7914 = vmatprep.subr.mxu0 0.0
    %7915 = vmatpush1.msra.mxu0 %v7768
    %7916 = vmatprep.subr.mxu0 0.0
    %7917 = vmatpush1.msra.mxu0 %v7769
    %7918 = vmatprep.subr.mxu0 0.0
    %7919 = vmatpush1.msra.mxu0 %v7770
    %7920 = vmatprep.subr.mxu0 0.0
    %7921 = vmatpush1.msra.mxu0 %v7771
    %7922 = vmatprep.subr.mxu0 0.0
    %7923 = vmatpush1.msra.mxu0 %v7772
    %7924 = vmatprep.subr.mxu0 0.0
    %7925 = vmatpush1.msra.mxu0 %v7773
    %7926 = vmatprep.subr.mxu0 0.0
    %7927 = vmatpush1.msra.mxu0 %v7774
    %7928 = vmatprep.subr.mxu0 0.0
    %7929 = vmatpush1.msra.mxu0 %v7775
    %7930 = vmatprep.subr.mxu0 0.0
    %7931 = vmatpush1.msra.mxu0 %v7776
    %7932 = vmatprep.subr.mxu0 0.0
    %7933 = vmatpush1.msra.mxu0 %v7777
    %7934 = vmatprep.subr.mxu0 0.0
    %7935 = vmatpush1.msra.mxu0 %v7778
    %7936 = vmatprep.subr.mxu0 0.0
    %7937 = vmatpush1.msra.mxu0 %v7779
    %7938 = vmatprep.subr.mxu0 0.0
    %7939 = vmatpush1.msra.mxu0 %v7780
    %7940 = vmatprep.subr.mxu0 0.0
    %7941 = vmatpush1.msra.mxu0 %v7781
    %7942 = vmatprep.subr.mxu0 0.0
    %7943 = vmatpush1.msra.mxu0 %v7782
    %7944 = vmatprep.subr.mxu0 0.0
    %7945 = vmatpush1.msra.mxu0 %v7783
    %7946 = vmatprep.subr.mxu0 0.0
    %7947 = vmatpush1.msra.mxu0 %v7784
    %7948 = vmatprep.subr.mxu0 0.0
    %7949 = vmatpush1.msra.mxu0 %v7785
    %7950 = vmatprep.subr.mxu0 0.0
    %7951 = vmatpush1.msra.mxu0 %v7786
    %7952 = vmatprep.subr.mxu0 0.0
    %7953 = vmatpush1.msra.mxu0 %v7787
    %7954 = vmatprep.subr.mxu0 0.0
    %7955 = vmatpush1.msra.mxu0 %v7788
    %7956 = vmatprep.subr.mxu0 0.0
    %7957 = vmatpush1.msra.mxu0 %v7789
    %7958 = vmatprep.subr.mxu0 0.0
    %7959 = vmatpush1.msra.mxu0 %v7790
    %7960 = vmatprep.subr.mxu0 0.0
    %7961 = vmatpush1.msra.mxu0 %v7791
    %7962 = vmatprep.subr.mxu0 0.0
    %7963 = vmatpush1.msra.mxu0 %v7792
    %7964 = vmatprep.subr.mxu0 0.0
    %7965 = vmatpush1.msra.mxu0 %v7793
    %7966 = vmatprep.mubr.f32.mxu0 %v7859
    %7967 = vmatmul.mubr.f32.gmra.mrb[0].mxu0 %v7858
    %v7968 = vpop.f32.mrb[0].mxu0
    %v7969 = vadd.f32 0.0, %v7968
    %v7970 = vpop.f32.mrb[0].mxu0
    %7971 = vmatprep.mubr.f32.mxu0 %v7864
    %7972 = vmatmul.mubr.f32.gmra.mrb[0].mxu0 %v7863
    %v7973 = vpop.f32.mrb[0].mxu0
    %v7974 = vadd.f32 0.0, %v7973
    %v7975 = vpop.f32.mrb[0].mxu0
    %7976 = vmatprep.mubr.f32.mxu0 %v7869
    %7977 = vmatmul.mubr.f32.gmra.mrb[0].mxu0 %v7868
    %v7978 = vpop.f32.mrb[0].mxu0
    %v7979 = vadd.f32 0.0, %v7978
    %v7980 = vpop.f32.mrb[0].mxu0
    %7981 = vmatprep.mubr.f32.mxu0 %v7874
    %7982 = vmatmul.mubr.f32.gmra.mrb[0].mxu0 %v7873
    %v7983 = vpop.f32.mrb[0].mxu0
    %v7984 = vadd.f32 0.0, %v7983
    %v7985 = vpop.f32.mrb[0].mxu0
    %7986 = vdwg.mxu0
    %7987 = vmatprep.subr.mxu0 0.0
    %7988 = vmatpush1.msra.mxu0 %v7794
    %7989 = vmatprep.subr.mxu0 0.0
    %7990 = vmatpush1.msra.mxu0 %v7795
    %7991 = vmatprep.subr.mxu0 0.0
    %7992 = vmatpush1.msra.mxu0 %v7796
    %7993 = vmatprep.subr.mxu0 0.0
    %7994 = vmatpush1.msra.mxu0 %v7797
    %7995 = vmatprep.subr.mxu0 0.0
    %7996 = vmatpush1.msra.mxu0 %v7798
    %7997 = vmatprep.subr.mxu0 0.0
    %7998 = vmatpush1.msra.mxu0 %v7799
    %7999 = vmatprep.subr.mxu0 0.0
    %8000 = vmatpush1.msra.mxu0 %v7800
    %8001 = vmatprep.subr.mxu0 0.0
    %8002 = vmatpush1.msra.mxu0 %v7801
    %8003 = vmatprep.subr.mxu0 0.0
    %8004 = vmatpush1.msra.mxu0 %v7802
    %8005 = vmatprep.subr.mxu0 0.0
    %8006 = vmatpush1.msra.mxu0 %v7803
    %8007 = vmatprep.subr.mxu0 0.0
    %8008 = vmatpush1.msra.mxu0 %v7804
    %8009 = vmatprep.subr.mxu0 0.0
    %8010 = vmatpush1.msra.mxu0 %v7805
    %8011 = vmatprep.subr.mxu0 0.0
    %8012 = vmatpush1.msra.mxu0 %v7806
    %8013 = vmatprep.subr.mxu0 0.0
    %8014 = vmatpush1.msra.mxu0 %v7807
    %8015 = vmatprep.subr.mxu0 0.0
    %8016 = vmatpush1.msra.mxu0 %v7808
    %8017 = vmatprep.subr.mxu0 0.0
    %8018 = vmatpush1.msra.mxu0 %v7809
    %8019 = vmatprep.subr.mxu0 0.0
    %8020 = vmatpush1.msra.mxu0 %v7810
    %8021 = vmatprep.subr.mxu0 0.0
    %8022 = vmatpush1.msra.mxu0 %v7811
    %8023 = vmatprep.subr.mxu0 0.0
    %8024 = vmatpush1.msra.mxu0 %v7812
    %8025 = vmatprep.subr.mxu0 0.0
    %8026 = vmatpush1.msra.mxu0 %v7813
    %8027 = vmatprep.subr.mxu0 0.0
    %8028 = vmatpush1.msra.mxu0 %v7814
    %8029 = vmatprep.subr.mxu0 0.0
    %8030 = vmatpush1.msra.mxu0 %v7815
    %8031 = vmatprep.subr.mxu0 0.0
    %8032 = vmatpush1.msra.mxu0 %v7816
    %8033 = vmatprep.subr.mxu0 0.0
    %8034 = vmatpush1.msra.mxu0 %v7817
    %8035 = vmatprep.subr.mxu0 0.0
    %8036 = vmatpush1.msra.mxu0 %v7818
    %8037 = vmatprep.subr.mxu0 0.0
    %8038 = vmatpush1.msra.mxu0 %v7819
    %8039 = vmatprep.subr.mxu0 0.0
    %8040 = vmatpush1.msra.mxu0 %v7820
    %8041 = vmatprep.subr.mxu0 0.0
    %8042 = vmatpush1.msra.mxu0 %v7821
    %8043 = vmatprep.subr.mxu0 0.0
    %8044 = vmatpush1.msra.mxu0 %v7822
    %8045 = vmatprep.subr.mxu0 0.0
    %8046 = vmatpush1.msra.mxu0 %v7823
    %8047 = vmatprep.subr.mxu0 0.0
    %8048 = vmatpush1.msra.mxu0 %v7824
    %8049 = vmatprep.subr.mxu0 0.0
    %8050 = vmatpush1.msra.mxu0 %v7825
    %8051 = vmatprep.mubr.f32.mxu0 %v7861
    %8052 = vmatmul.mubr.f32.gmra.mrb[0].mxu0 %v7860
    %v8053 = vpop.f32.mrb[0].mxu0
    %v8054 = vadd.f32 %v7969, %v8053
    %v8055 = vpop.f32.mrb[0].mxu0
    %8056 = vmatprep.mubr.f32.mxu0 %v7866
    %8057 = vmatmul.mubr.f32.gmra.mrb[0].mxu0 %v7865
    %v8058 = vpop.f32.mrb[0].mxu0
    %v8059 = vadd.f32 %v7974, %v8058
    %v8060 = vpop.f32.mrb[0].mxu0
    %8061 = vmatprep.mubr.f32.mxu0 %v7871
    %8062 = vmatmul.mubr.f32.gmra.mrb[0].mxu0 %v7870
    %v8063 = vpop.f32.mrb[0].mxu0
    %v8064 = vadd.f32 %v7979, %v8063
    %v8065 = vpop.f32.mrb[0].mxu0
    %8066 = vmatprep.mubr.f32.mxu0 %v7876
    %8067 = vmatmul.mubr.f32.gmra.mrb[0].mxu0 %v7875
    %v8068 = vpop.f32.mrb[0].mxu0
    %v8069 = vadd.f32 %v7984, %v8068
    %v8070 = vpop.f32.mrb[0].mxu0
    %8071 = vdwg.mxu0
    %8072 = vmatprep.subr.mxu0 0.0
    %8073 = vmatpush1.msra.mxu0 %v7826
    %8074 = vmatprep.subr.mxu0 0.0
    %8075 = vmatpush1.msra.mxu0 %v7827
    %8076 = vmatprep.subr.mxu0 0.0
    %8077 = vmatpush1.msra.mxu0 %v7828
    %8078 = vmatprep.subr.mxu0 0.0
    %8079 = vmatpush1.msra.mxu0 %v7829
    %8080 = vmatprep.subr.mxu0 0.0
    %8081 = vmatpush1.msra.mxu0 %v7830
    %8082 = vmatprep.subr.mxu0 0.0
    %8083 = vmatpush1.msra.mxu0 %v7831
    %8084 = vmatprep.subr.mxu0 0.0
    %8085 = vmatpush1.msra.mxu0 %v7832
    %8086 = vmatprep.subr.mxu0 0.0
    %8087 = vmatpush1.msra.mxu0 %v7833
    %8088 = vmatprep.subr.mxu0 0.0
    %8089 = vmatpush1.msra.mxu0 0.0
    %8090 = vmatprep.subr.mxu0 0.0
    %8091 = vmatpush1.msra.mxu0 0.0
    %8092 = vmatprep.subr.mxu0 0.0
    %8093 = vmatpush1.msra.mxu0 0.0
    %8094 = vmatprep.subr.mxu0 0.0
    %8095 = vmatpush1.msra.mxu0 0.0
    %8096 = vmatprep.subr.mxu0 0.0
    %8097 = vmatpush1.msra.mxu0 0.0
    %8098 = vmatprep.subr.mxu0 0.0
    %8099 = vmatpush1.msra.mxu0 0.0
    %8100 = vmatprep.subr.mxu0 0.0
    %8101 = vmatpush1.msra.mxu0 0.0
    %8102 = vmatprep.subr.mxu0 0.0
    %8103 = vmatpush1.msra.mxu0 0.0
    %8104 = vmatprep.subr.mxu0 0.0
    %8105 = vmatpush1.msra.mxu0 0.0
    %8106 = vmatprep.subr.mxu0 0.0
    %8107 = vmatpush1.msra.mxu0 0.0
    %8108 = vmatprep.subr.mxu0 0.0
    %8109 = vmatpush1.msra.mxu0 0.0
    %8110 = vmatprep.subr.mxu0 0.0
    %8111 = vmatpush1.msra.mxu0 0.0
    %8112 = vmatprep.subr.mxu0 0.0
    %8113 = vmatpush1.msra.mxu0 0.0
    %8114 = vmatprep.subr.mxu0 0.0
    %8115 = vmatpush1.msra.mxu0 0.0
    %8116 = vmatprep.subr.mxu0 0.0
    %8117 = vmatpush1.msra.mxu0 0.0
    %8118 = vmatprep.subr.mxu0 0.0
    %8119 = vmatpush1.msra.mxu0 0.0
    %8120 = vmatprep.subr.mxu0 0.0
    %8121 = vmatpush1.msra.mxu0 0.0
    %8122 = vmatprep.subr.mxu0 0.0
    %8123 = vmatpush1.msra.mxu0 0.0
    %8124 = vmatprep.subr.mxu0 0.0
    %8125 = vmatpush1.msra.mxu0 0.0
    %8126 = vmatprep.subr.mxu0 0.0
    %8127 = vmatpush1.msra.mxu0 0.0
    %8128 = vmatprep.subr.mxu0 0.0
    %8129 = vmatpush1.msra.mxu0 0.0
    %8130 = vmatprep.subr.mxu0 0.0
    %8131 = vmatpush1.msra.mxu0 0.0
    %8132 = vmatprep.subr.mxu0 0.0
    %8133 = vmatpush1.msra.mxu0 0.0
    %8134 = vmatprep.subr.mxu0 0.0
    %8135 = vmatpush1.msra.mxu0 0.0
    %8136 = vmatprep.mubr.f32.mxu0 0.0
    %8137 = vmatmul.mubr.f32.gmra.mrb[0].mxu0 %v7894
    %v8138 = vpop.f32.mrb[0].mxu0
    %v8139 = vadd.f32 %v8054, %v8138
    %v8140 = vpop.f32.mrb[0].mxu0
    %8141 = vmatprep.mubr.f32.mxu0 0.0
    %8142 = vmatmul.mubr.f32.gmra.mrb[0].mxu0 %v7896
    %v8143 = vpop.f32.mrb[0].mxu0
    %v8144 = vadd.f32 %v8059, %v8143
    %v8145 = vpop.f32.mrb[0].mxu0
    %8146 = vmatprep.mubr.f32.mxu0 0.0
    %8147 = vmatmul.mubr.f32.gmra.mrb[0].mxu0 %v7898
    %v8148 = vpop.f32.mrb[0].mxu0
    %v8149 = vadd.f32 %v8064, %v8148
    %v8150 = vpop.f32.mrb[0].mxu0
    %8151 = vmatprep.mubr.f32.mxu0 0.0
    %8152 = vmatmul.mubr.f32.gmra.mrb[0].mxu0 %v7900
    %v8153 = vpop.f32.mrb[0].mxu0
    %v8154 = vadd.f32 %v8069, %v8153
    %v8155 = vpop.f32.mrb[0].mxu0
    %8156 = vdwg.mxu0
    %v8157 = vld [vmem:[%s7] sm:$0x1]
    %v8158 = vld [vmem:[%s7 + $0x1] sm:$0x1]
    %v8159 = vsel %vm679, %v8139, 0.0
    %v8160 = vsel %vm679, %v8144, 0.0
    %v8161 = vadd.f32 %v8159, %v8160
    %v8162 = vsel %vm679, %v8149, 0.0
    %v8163 = vadd.f32 %v8161, %v8162
    %v8164 = vsel %vm679, %v8154, 0.0
    %v8165 = vadd.f32 %v8163, %v8164
    %v8166 = vrot.slane %v8165, 4
    %v8167 = vadd.f32 %v8165, %v8166
    %v8168 = vrot.slane %v8167, 2
    %v8169 = vadd.f32 %v8167, %v8168
    %v8170 = vrot.slane %v8169, 1
    %v8171 = vadd.f32 %v8169, %v8170
    %v8172 = vmul.f32 %v8139, %v8139
    %v8173 = vmul.f32 %v8144, %v8144
    %v8174 = vmul.f32 %v8149, %v8149
    %v8175 = vmul.f32 %v8154, %v8154
    %v8176 = vsel %vm679, %v8172, 0.0
    %v8177 = vsel %vm679, %v8173, 0.0
    %v8178 = vadd.f32 %v8176, %v8177
    %v8179 = vsel %vm679, %v8174, 0.0
    %v8180 = vadd.f32 %v8178, %v8179
    %v8181 = vsel %vm679, %v8175, 0.0
    %v8182 = vadd.f32 %v8180, %v8181
    %v8183 = vrot.slane %v8182, 4
    %v8184 = vadd.f32 %v8182, %v8183
    %v8185 = vrot.slane %v8184, 2
    %v8186 = vadd.f32 %v8184, %v8185
    %v8187 = vrot.slane %v8186, 1
    %v8188 = vadd.f32 %v8186, %v8187
    %v8189 = vmul.f32 %v8171, 0.03125
    %v8190 = vmul.f32 %v8188, 0.03125
    %v8191 = vmul.f32 %v8189, %v8189
    %v8192 = vsub.f32 %v8190, %v8191
    %v8193 = vmax.f32 %v8192, 0.0
    %v8194 = vadd.f32 %v8193, 1e-05
    %v8195 = vrsqrt.pop %v8194
    %v8196 = vmul.f32 %v8157, %v8195
    %v8197 = vmul.f32 %v8189, %v8196
    %v8198 = vsub.f32 %v8158, %v8197
    %v8199 = vlaneseq
    %v8200 = vshrl.u32 %v8199, 7
    %v8201 = vsub.s32 0, %v8200
    %v8202 = vrot.slane %v8196, %v8201
    %v8203 = vmul.f32 %v8139, %v8202
    %v8204 = vmul.f32 %v8144, %v8202
    %v8205 = vmul.f32 %v8149, %v8202
    %v8206 = vmul.f32 %v8154, %v8202
    %v8207 = vlaneseq
    %v8208 = vshrl.u32 %v8207, 7
    %v8209 = vsub.s32 0, %v8208
    %v8210 = vrot.slane %v8198, %v8209
    %v8211 = vadd.f32 %v8203, %v8210
    %v8212 = vadd.f32 %v8204, %v8210
    %v8213 = vadd.f32 %v8205, %v8210
    %v8214 = vadd.f32 %v8206, %v8210
    %v8215 = vmax.f32 %v8211, 0.0
    %v8216 = vmax.f32 %v8212, 0.0
    %v8217 = vmax.f32 %v8213, 0.0
    %v8218 = vmax.f32 %v8214, 0.0
    %v8223 = vcombine.high %v8215, %v8215
    %v8225 = vunpack.c.l.s4 1983009808
    %v8226 = vunpack.c.0.s8 %v8225
    %v8227 = vlaneseq
    %v8228 = vshrl.u32 %v8227, 7
    %v8229 = vsub.s32 %v8226, %v8228
    %v8230 = vrot.slane %v8215, %v8229
    %v8232 = vunpack.c.l.s4 1983009808
    %v8233 = vunpack.c.0.s8 %v8232
    %v8234 = vlaneseq
    %v8235 = vshrl.u32 %v8234, 7
    %v8236 = vsub.s32 %v8233, %v8235
    %v8237 = vrot.slane %v8223, %v8236
    %v8238 = vcombine.high %v8230, %v8230
    %v8239 = vcombine.high %v8237, %v8237
    %v8240 = vcombine.high %v8216, %v8216
    %v8242 = vunpack.c.l.s4 1983009808
    %v8243 = vunpack.c.0.s8 %v8242
    %v8244 = vlaneseq
    %v8245 = vshrl.u32 %v8244, 7
    %v8246 = vsub.s32 %v8243, %v8245
    %v8247 = vrot.slane %v8216, %v8246
    %v8249 = vunpack.c.l.s4 1983009808
    %v8250 = vunpack.c.0.s8 %v8249
    %v8251 = vlaneseq
    %v8252 = vshrl.u32 %v8251, 7
    %v8253 = vsub.s32 %v8250, %v8252
    %v8254 = vrot.slane %v8240, %v8253
    %v8255 = vcombine.high %v8247, %v8247
    %v8256 = vcombine.high %v8254, %v8254
    %v8257 = vcombine.high %v8217, %v8217
    %v8259 = vunpack.c.l.s4 1983009808
    %v8260 = vunpack.c.0.s8 %v8259
    %v8261 = vlaneseq
    %v8262 = vshrl.u32 %v8261, 7
    %v8263 = vsub.s32 %v8260, %v8262
    %v8264 = vrot.slane %v8217, %v8263
    %v8266 = vunpack.c.l.s4 1983009808
    %v8267 = vunpack.c.0.s8 %v8266
    %v8268 = vlaneseq
    %v8269 = vshrl.u32 %v8268, 7
    %v8270 = vsub.s32 %v8267, %v8269
    %v8271 = vrot.slane %v8257, %v8270
    %v8272 = vcombine.high %v8264, %v8264
    %v8273 = vcombine.high %v8271, %v8271
    %v8274 = vcombine.high %v8218, %v8218
    %v8276 = vunpack.c.l.s4 1983009808
    %v8277 = vunpack.c.0.s8 %v8276
    %v8278 = vlaneseq
    %v8279 = vshrl.u32 %v8278, 7
    %v8280 = vsub.s32 %v8277, %v8279
    %v8281 = vrot.slane %v8218, %v8280
    %v8283 = vunpack.c.l.s4 1983009808
    %v8284 = vunpack.c.0.s8 %v8283
    %v8285 = vlaneseq
    %v8286 = vshrl.u32 %v8285, 7
    %v8287 = vsub.s32 %v8284, %v8286
    %v8288 = vrot.slane %v8274, %v8287
    %v8289 = vcombine.high %v8281, %v8281
    %v8290 = vcombine.high %v8288, %v8288
    %v8307 = vsel %vm2628, %v8230, -inf
    %v8308 = vrot.slane %v8307, 4
    %v8309 = vmax.f32 %v8307, %v8308
    %v8310 = vrot.slane %v8309, 2
    %v8311 = vmax.f32 %v8309, %v8310
    %v8312 = vrot.slane %v8311, 1
    %v8313 = vmax.f32 %v8311, %v8312
    %v8314 = vsel %vm2628, %v8238, -inf
    %v8315 = vrot.slane %v8314, 4
    %v8316 = vmax.f32 %v8314, %v8315
    %v8317 = vrot.slane %v8316, 2
    %v8318 = vmax.f32 %v8316, %v8317
    %v8319 = vrot.slane %v8318, 1
    %v8320 = vmax.f32 %v8318, %v8319
    %v8321 = vsel %vm2628, %v8237, -inf
    %v8322 = vrot.slane %v8321, 4
    %v8323 = vmax.f32 %v8321, %v8322
    %v8324 = vrot.slane %v8323, 2
    %v8325 = vmax.f32 %v8323, %v8324
    %v8326 = vrot.slane %v8325, 1
    %v8327 = vmax.f32 %v8325, %v8326
    %v8328 = vsel %vm2628, %v8239, -inf
    %v8329 = vrot.slane %v8328, 4
    %v8330 = vmax.f32 %v8328, %v8329
    %v8331 = vrot.slane %v8330, 2
    %v8332 = vmax.f32 %v8330, %v8331
    %v8333 = vrot.slane %v8332, 1
    %v8334 = vmax.f32 %v8332, %v8333
    %v8335 = vsel %vm2628, %v8247, -inf
    %v8336 = vrot.slane %v8335, 4
    %v8337 = vmax.f32 %v8335, %v8336
    %v8338 = vrot.slane %v8337, 2
    %v8339 = vmax.f32 %v8337, %v8338
    %v8340 = vrot.slane %v8339, 1
    %v8341 = vmax.f32 %v8339, %v8340
    %v8342 = vsel %vm2628, %v8255, -inf
    %v8343 = vrot.slane %v8342, 4
    %v8344 = vmax.f32 %v8342, %v8343
    %v8345 = vrot.slane %v8344, 2
    %v8346 = vmax.f32 %v8344, %v8345
    %v8347 = vrot.slane %v8346, 1
    %v8348 = vmax.f32 %v8346, %v8347
    %v8349 = vsel %vm2628, %v8254, -inf
    %v8350 = vrot.slane %v8349, 4
    %v8351 = vmax.f32 %v8349, %v8350
    %v8352 = vrot.slane %v8351, 2
    %v8353 = vmax.f32 %v8351, %v8352
    %v8354 = vrot.slane %v8353, 1
    %v8355 = vmax.f32 %v8353, %v8354
    %v8356 = vsel %vm2628, %v8256, -inf
    %v8357 = vrot.slane %v8356, 4
    %v8358 = vmax.f32 %v8356, %v8357
    %v8359 = vrot.slane %v8358, 2
    %v8360 = vmax.f32 %v8358, %v8359
    %v8361 = vrot.slane %v8360, 1
    %v8362 = vmax.f32 %v8360, %v8361
    %v8363 = vsel %vm2628, %v8264, -inf
    %v8364 = vrot.slane %v8363, 4
    %v8365 = vmax.f32 %v8363, %v8364
    %v8366 = vrot.slane %v8365, 2
    %v8367 = vmax.f32 %v8365, %v8366
    %v8368 = vrot.slane %v8367, 1
    %v8369 = vmax.f32 %v8367, %v8368
    %v8370 = vsel %vm2628, %v8272, -inf
    %v8371 = vrot.slane %v8370, 4
    %v8372 = vmax.f32 %v8370, %v8371
    %v8373 = vrot.slane %v8372, 2
    %v8374 = vmax.f32 %v8372, %v8373
    %v8375 = vrot.slane %v8374, 1
    %v8376 = vmax.f32 %v8374, %v8375
    %v8377 = vsel %vm2628, %v8271, -inf
    %v8378 = vrot.slane %v8377, 4
    %v8379 = vmax.f32 %v8377, %v8378
    %v8380 = vrot.slane %v8379, 2
    %v8381 = vmax.f32 %v8379, %v8380
    %v8382 = vrot.slane %v8381, 1
    %v8383 = vmax.f32 %v8381, %v8382
    %v8384 = vsel %vm2628, %v8273, -inf
    %v8385 = vrot.slane %v8384, 4
    %v8386 = vmax.f32 %v8384, %v8385
    %v8387 = vrot.slane %v8386, 2
    %v8388 = vmax.f32 %v8386, %v8387
    %v8389 = vrot.slane %v8388, 1
    %v8390 = vmax.f32 %v8388, %v8389
    %v8391 = vsel %vm2628, %v8281, -inf
    %v8392 = vrot.slane %v8391, 4
    %v8393 = vmax.f32 %v8391, %v8392
    %v8394 = vrot.slane %v8393, 2
    %v8395 = vmax.f32 %v8393, %v8394
    %v8396 = vrot.slane %v8395, 1
    %v8397 = vmax.f32 %v8395, %v8396
    %v8398 = vsel %vm2628, %v8289, -inf
    %v8399 = vrot.slane %v8398, 4
    %v8400 = vmax.f32 %v8398, %v8399
    %v8401 = vrot.slane %v8400, 2
    %v8402 = vmax.f32 %v8400, %v8401
    %v8403 = vrot.slane %v8402, 1
    %v8404 = vmax.f32 %v8402, %v8403
    %v8405 = vsel %vm2628, %v8288, -inf
    %v8406 = vrot.slane %v8405, 4
    %v8407 = vmax.f32 %v8405, %v8406
    %v8408 = vrot.slane %v8407, 2
    %v8409 = vmax.f32 %v8407, %v8408
    %v8410 = vrot.slane %v8409, 1
    %v8411 = vmax.f32 %v8409, %v8410
    %v8412 = vsel %vm2628, %v8290, -inf
    %v8413 = vrot.slane %v8412, 4
    %v8414 = vmax.f32 %v8412, %v8413
    %v8415 = vrot.slane %v8414, 2
    %v8416 = vmax.f32 %v8414, %v8415
    %v8417 = vrot.slane %v8416, 1
    %v8418 = vmax.f32 %v8416, %v8417
    %v8419 = vsel %vm679, %v8313, -inf
    %v8420 = vsel %vm679, %v8327, -inf
    %v8421 = vmax.f32 %v8419, %v8420
    %v8422 = vsel %vm679, %v8320, -inf
    %v8423 = vsel %vm679, %v8334, -inf
    %v8424 = vmax.f32 %v8422, %v8423
    %v8425 = vsel %vm679, %v8341, -inf
    %v8426 = vsel %vm679, %v8355, -inf
    %v8427 = vmax.f32 %v8425, %v8426
    %v8428 = vsel %vm679, %v8348, -inf
    %v8429 = vsel %vm679, %v8362, -inf
    %v8430 = vmax.f32 %v8428, %v8429
    %v8431 = vsel %vm679, %v8369, -inf
    %v8432 = vsel %vm679, %v8383, -inf
    %v8433 = vmax.f32 %v8431, %v8432
    %v8434 = vsel %vm679, %v8376, -inf
    %v8435 = vsel %vm679, %v8390, -inf
    %v8436 = vmax.f32 %v8434, %v8435
    %v8437 = vsel %vm679, %v8397, -inf
    %v8438 = vsel %vm679, %v8411, -inf
    %v8439 = vmax.f32 %v8437, %v8438
    %v8440 = vsel %vm679, %v8404, -inf
    %v8441 = vsel %vm679, %v8418, -inf
    %v8442 = vmax.f32 %v8440, %v8441
    %8443 = vst [vmem:[#allocation4] sm:$0xff] 0.0
    %8444 = vst.msk [vmem:[#allocation4 + $0x8] sm:$0x3] %vm2628, 0.0
    %8445 = vst [vmem:[#allocation4 + $0xa] sm:$0xff] 0.0
    %8446 = vst.msk [vmem:[#allocation4 + $0x12] sm:$0x3] %vm2628, 0.0
    %8447 = vst [vmem:[#allocation4 + $0x14] sm:$0xff] 0.0
    %8448 = vst.msk [vmem:[#allocation4 + $0x1c] sm:$0x3] %vm2628, 0.0
    %8449 = vst [vmem:[#allocation4 + $0x1e] sm:$0xff] 0.0
    %8450 = vst.msk [vmem:[#allocation4 + $0x26] sm:$0x3] %vm2628, 0.0
    %s8451 = scalar_lea.vmem [#allocation4], 10
    %vm8452 = vcmask 516096
    %8453 = vst.msk [vmem:[%s8451 + $0x1] sm:$0x1] %vm8452, %v8421
    %8454 = vst.msk [vmem:[%s8451 + $0x15] sm:$0x1] %vm8452, %v8433
    %v8460 = vunpack.c.l.s4 1983009808
    %v8461 = vunpack.c.0.s8 %v8460
    %v8462 = vlaneseq
    %v8463 = vshrl.u32 %v8462, 7
    %v8464 = vsub.s32 %v8461, %v8463
    %v8465 = vrot.slane %v8421, %v8464
    %v8467 = vunpack.c.l.s4 1983009808
    %v8468 = vunpack.c.0.s8 %v8467
    %v8469 = vlaneseq
    %v8470 = vshrl.u32 %v8469, 7
    %v8471 = vsub.s32 %v8468, %v8470
    %v8472 = vrot.slane %v8424, %v8471
    %v8474 = vunpack.c.l.s4 1983009808
    %v8475 = vunpack.c.0.s8 %v8474
    %v8476 = vlaneseq
    %v8477 = vshrl.u32 %v8476, 7
    %v8478 = vsub.s32 %v8475, %v8477
    %v8479 = vrot.slane %v8433, %v8478
    %v8481 = vunpack.c.l.s4 1983009808
    %v8482 = vunpack.c.0.s8 %v8481
    %v8483 = vlaneseq
    %v8484 = vshrl.u32 %v8483, 7
    %v8485 = vsub.s32 %v8482, %v8484
    %v8486 = vrot.slane %v8436, %v8485
    %v8487 = vsel %vm4987, %v8465, %v8465
    %v8488 = vsel %vm4991, %v8465, %v8487
    %v8489 = vrot.slane %v8472, 7
    %v8490 = vsel %vm5117, %v8489, %v8488
    %v8491 = vsel %vm4985, %v8489, %v8490
    %v8492 = vsel %vm4989, %v8489, %v8491
    %v8493 = vsel %vm4993, %v8489, %v8492
    %v8494 = vsel %vm4987, %v8479, %v8479
    %v8495 = vsel %vm4991, %v8479, %v8494
    %v8496 = vrot.slane %v8486, 7
    %v8497 = vsel %vm5117, %v8496, %v8495
    %v8498 = vsel %vm4985, %v8496, %v8497
    %v8499 = vsel %vm4989, %v8496, %v8498
    %v8500 = vsel %vm4993, %v8496, %v8499
    %8501 = vrot.lane.b32.xlu0 %v8493, 64
    %v8502 = vpop.permute.xlu0 %8501
    %8503 = vrot.lane.b32.xlu0 %v8500, 64
    %v8504 = vpop.permute.xlu0 %8503
    %vm8507 = vcmask 1041920
    %8508 = vst.msk [vmem:[%s8451] sm:$0x3] %vm8507, %v8502
    %8509 = vst.msk [vmem:[%s8451 + $0x14] sm:$0x3] %vm8507, %v8504
    %8510 = vst.msk [vmem:[%s8451 + $0x2] sm:$0x1] %vm8452, %v8424
    %8511 = vst.msk [vmem:[%s8451 + $0x16] sm:$0x1] %vm8452, %v8436
    %v8515 = vunpack.c.l.s4 1983009808
    %v8516 = vunpack.c.0.s8 %v8515
    %v8517 = vlaneseq
    %v8518 = vshrl.u32 %v8517, 7
    %v8519 = vsub.s32 %v8516, %v8518
    %v8520 = vrot.slane %v8427, %v8519
    %v8522 = vunpack.c.l.s4 1983009808
    %v8523 = vunpack.c.0.s8 %v8522
    %v8524 = vlaneseq
    %v8525 = vshrl.u32 %v8524, 7
    %v8526 = vsub.s32 %v8523, %v8525
    %v8527 = vrot.slane %v8439, %v8526
    %8528 = vrot.lane.b32.xlu0 %v8465, 64
    %v8529 = vpop.permute.xlu0 %8528
    %8530 = vrot.lane.b32.xlu0 %v8520, 64
    %v8531 = vpop.permute.xlu0 %8530
    %8532 = vrot.lane.b32.xlu0 %v8479, 64
    %v8533 = vpop.permute.xlu0 %8532
    %8534 = vrot.lane.b32.xlu0 %v8527, 64
    %v8535 = vpop.permute.xlu0 %8534
    %vm8540 = vcmask 1040896
    %8541 = vst.msk [vmem:[#allocation4 + $0x3] sm:$0x1] %vm8540, %v8529
    %8542 = vst.msk [vmem:[#allocation4 + $0xd] sm:$0x1] %vm8540, %v8531
    %8543 = vst.msk [vmem:[#allocation4 + $0x17] sm:$0x1] %vm8540, %v8533
    %8544 = vst.msk [vmem:[#allocation4 + $0x21] sm:$0x1] %vm8540, %v8535
    %v8548 = vunpack.c.l.s4 1983009808
    %v8549 = vunpack.c.0.s8 %v8548
    %v8550 = vlaneseq
    %v8551 = vshrl.u32 %v8550, 7
    %v8552 = vsub.s32 %v8549, %v8551
    %v8553 = vrot.slane %v8430, %v8552
    %v8555 = vunpack.c.l.s4 1983009808
    %v8556 = vunpack.c.0.s8 %v8555
    %v8557 = vlaneseq
    %v8558 = vshrl.u32 %v8557, 7
    %v8559 = vsub.s32 %v8556, %v8558
    %v8560 = vrot.slane %v8442, %v8559
    %v8561 = vsel %vm4987, %v8520, %v8520
    %v8562 = vsel %vm4991, %v8520, %v8561
    %v8563 = vrot.slane %v8553, 7
    %v8564 = vsel %vm5117, %v8563, %v8562
    %v8565 = vsel %vm4985, %v8563, %v8564
    %v8566 = vsel %vm4989, %v8563, %v8565
    %v8567 = vsel %vm4993, %v8563, %v8566
    %v8568 = vsel %vm4987, %v8527, %v8527
    %v8569 = vsel %vm4991, %v8527, %v8568
    %v8570 = vrot.slane %v8560, 7
    %v8571 = vsel %vm5117, %v8570, %v8569
    %v8572 = vsel %vm4985, %v8570, %v8571
    %v8573 = vsel %vm4989, %v8570, %v8572
    %v8574 = vsel %vm4993, %v8570, %v8573
    %8579 = vst.msk [vmem:[#allocation4 + $0x4] sm:$0x3] %vm2628, %v8493
    %8580 = vst.msk [vmem:[#allocation4 + $0xe] sm:$0x3] %vm2628, %v8567
    %8581 = vst.msk [vmem:[#allocation4 + $0x18] sm:$0x3] %vm2628, %v8500
    %8582 = vst.msk [vmem:[#allocation4 + $0x22] sm:$0x3] %vm2628, %v8574
    %8583 = vrot.lane.b32.xlu0 %v8472, 64
    %v8584 = vpop.permute.xlu0 %8583
    %8585 = vrot.lane.b32.xlu0 %v8553, 64
    %v8586 = vpop.permute.xlu0 %8585
    %8587 = vrot.lane.b32.xlu0 %v8486, 64
    %v8588 = vpop.permute.xlu0 %8587
    %8589 = vrot.lane.b32.xlu0 %v8560, 64
    %v8590 = vpop.permute.xlu0 %8589
    %8595 = vst.msk [vmem:[#allocation4 + $0x4] sm:$0x1] %vm8540, %v8584
    %8596 = vst.msk [vmem:[#allocation4 + $0xe] sm:$0x1] %vm8540, %v8586
    %8597 = vst.msk [vmem:[#allocation4 + $0x18] sm:$0x1] %vm8540, %v8588
    %8598 = vst.msk [vmem:[#allocation4 + $0x22] sm:$0x1] %vm8540, %v8590
    %8599 = vst.msk [vmem:[#allocation4 + $0x7] sm:$0x1] %vm8452, %v8427
    %8600 = vst.msk [vmem:[#allocation4 + $0x1b] sm:$0x1] %vm8452, %v8439
    %8601 = vrot.lane.b32.xlu0 %v8567, 64
    %v8602 = vpop.permute.xlu0 %8601
    %8603 = vrot.lane.b32.xlu0 %v8574, 64
    %v8604 = vpop.permute.xlu0 %8603
    %8607 = vst.msk [vmem:[#allocation4 + $0x6] sm:$0x3] %vm8507, %v8602
    %8608 = vst.msk [vmem:[#allocation4 + $0x1a] sm:$0x3] %vm8507, %v8604
    %8609 = vst.msk [vmem:[#allocation4 + $0x8] sm:$0x1] %vm8452, %v8430
    %8610 = vst.msk [vmem:[#allocation4 + $0x1c] sm:$0x1] %vm8452, %v8442
    %v8611 = vld [vmem:[#allocation4] sm:$0xff]
    %v8612 = vld [vmem:[#allocation4 + $0x8] sm:$0x3]
    %v8613 = vld [vmem:[#allocation4 + $0xa] sm:$0xff]
    %v8614 = vld [vmem:[#allocation4 + $0x12] sm:$0x3]
    %v8615 = vld [vmem:[#allocation4 + $0x14] sm:$0xff]
    %v8616 = vld [vmem:[#allocation4 + $0x1c] sm:$0x3]
    %v8617 = vld [vmem:[#allocation4 + $0x1e] sm:$0xff]
    %v8618 = vld [vmem:[#allocation4 + $0x26] sm:$0x3]
    %v8619 = vld [vmem:[%s4] sm:$0xff]
    %v8620 = vld [vmem:[%s4 + $0x8] sm:$0xff]
    %v8621 = vld [vmem:[%s4 + $0x10] sm:$0xff]
    %v8622 = vld [vmem:[%s4 + $0x18] sm:$0xff]
    %v8623 = vld [vmem:[%s4 + $0x20] sm:$0xff]
    %v8624 = vld [vmem:[%s4 + $0x28] sm:$0xff]
    %v8625 = vld [vmem:[%s4 + $0x30] sm:$0xff]
    %v8626 = vld [vmem:[%s4 + $0x38] sm:$0xff]
    %v8627 = vld [vmem:[%s4 + $0x40] sm:$0xff]
    %v8628 = vld [vmem:[%s4 + $0x48] sm:$0xff]
    %v8629 = vld [vmem:[%s4 + $0x50] sm:$0xff]
    %v8630 = vld [vmem:[%s4 + $0x58] sm:$0xff]
    %v8631 = vld [vmem:[%s4 + $0x60] sm:$0xff]
    %v8632 = vld [vmem:[%s4 + $0x68] sm:$0xff]
    %v8633 = vld [vmem:[%s4 + $0x70] sm:$0xff]
    %v8634 = vld [vmem:[%s4 + $0x78] sm:$0xff]
    %v8635 = vld [vmem:[%s4 + $0x80] sm:$0xff]
    %v8636 = vld [vmem:[%s4 + $0x88] sm:$0xff]
    %v8637 = vld [vmem:[%s4 + $0x90] sm:$0xff]
    %v8638 = vld [vmem:[%s4 + $0x98] sm:$0xff]
    %v8639 = vld [vmem:[%s4 + $0xa0] sm:$0xff]
    %v8640 = vld [vmem:[%s4 + $0xa8] sm:$0xff]
    %v8641 = vld [vmem:[%s4 + $0xb0] sm:$0xff]
    %v8642 = vld [vmem:[%s4 + $0xb8] sm:$0xff]
    %v8643 = vld [vmem:[%s4 + $0xc0] sm:$0xff]
    %v8644 = vld [vmem:[%s4 + $0xc8] sm:$0xff]
    %v8645 = vld [vmem:[%s4 + $0xd0] sm:$0xff]
    %v8646 = vld [vmem:[%s4 + $0xd8] sm:$0xff]
    %v8647 = vld [vmem:[%s4 + $0xe0] sm:$0xff]
    %v8648 = vld [vmem:[%s4 + $0xe8] sm:$0xff]
    %v8649 = vld [vmem:[%s4 + $0xf0] sm:$0xff]
    %v8650 = vld [vmem:[%s4 + $0xf8] sm:$0xff]
    %v8651 = vld [vmem:[%s4 + $0x100] sm:$0xff]
    %v8652 = vld [vmem:[%s4 + $0x108] sm:$0xff]
    %v8653 = vld [vmem:[%s4 + $0x110] sm:$0xff]
    %v8654 = vld [vmem:[%s4 + $0x118] sm:$0xff]
    %v8655 = vld [vmem:[%s4 + $0x120] sm:$0xff]
    %v8656 = vld [vmem:[%s4 + $0x128] sm:$0xff]
    %v8657 = vld [vmem:[%s4 + $0x130] sm:$0xff]
    %v8658 = vld [vmem:[%s4 + $0x138] sm:$0xff]
    %v8659 = vld [vmem:[%s4 + $0x140] sm:$0xff]
    %v8660 = vld [vmem:[%s4 + $0x148] sm:$0xff]
    %v8661 = vld [vmem:[%s4 + $0x150] sm:$0xff]
    %v8662 = vld [vmem:[%s4 + $0x158] sm:$0xff]
    %v8663 = vld [vmem:[%s4 + $0x160] sm:$0xff]
    %v8664 = vld [vmem:[%s4 + $0x168] sm:$0xff]
    %v8665 = vld [vmem:[%s4 + $0x170] sm:$0xff]
    %v8666 = vld [vmem:[%s4 + $0x178] sm:$0xff]
    %v8667 = vld [vmem:[%s4 + $0x180] sm:$0xff]
    %v8668 = vld [vmem:[%s4 + $0x188] sm:$0xff]
    %v8669 = vld [vmem:[%s4 + $0x190] sm:$0xff]
    %v8670 = vld [vmem:[%s4 + $0x198] sm:$0xff]
    %v8671 = vld [vmem:[%s4 + $0x1a0] sm:$0xff]
    %v8672 = vld [vmem:[%s4 + $0x1a8] sm:$0xff]
    %v8673 = vld [vmem:[%s4 + $0x1b0] sm:$0xff]
    %v8674 = vld [vmem:[%s4 + $0x1b8] sm:$0xff]
    %v8675 = vld [vmem:[%s4 + $0x1c0] sm:$0xff]
    %v8676 = vld [vmem:[%s4 + $0x1c8] sm:$0xff]
    %v8677 = vld [vmem:[%s4 + $0x1d0] sm:$0xff]
    %v8678 = vld [vmem:[%s4 + $0x1d8] sm:$0xff]
    %v8679 = vld [vmem:[%s4 + $0x1e0] sm:$0xff]
    %v8680 = vld [vmem:[%s4 + $0x1e8] sm:$0xff]
    %v8681 = vld [vmem:[%s4 + $0x1f0] sm:$0xff]
    %v8682 = vld [vmem:[%s4 + $0x1f8] sm:$0xff]
    %v8683 = vld [vmem:[%s4 + $0x200] sm:$0xff]
    %v8684 = vld [vmem:[%s4 + $0x208] sm:$0xff]
    %v8685 = vld [vmem:[%s4 + $0x210] sm:$0xff]
    %v8686 = vld [vmem:[%s4 + $0x218] sm:$0xff]
    %v8687 = vld [vmem:[%s4 + $0x220] sm:$0xff]
    %v8688 = vld [vmem:[%s4 + $0x228] sm:$0xff]
    %v8689 = vld [vmem:[%s4 + $0x230] sm:$0xff]
    %v8690 = vld [vmem:[%s4 + $0x238] sm:$0xff]
    %v8699 = vcombine.low %v8611, %v8613
    %v8700 = vcombine.high %v8611, %v8613
    %v8701 = vcombine.low %v8615, %v8617
    %v8702 = vcombine.high %v8615, %v8617
    %v8704 = vunpack.c.l.s4 1983009808
    %v8705 = vunpack.c.0.s8 %v8704
    %v8706 = vlaneseq
    %v8707 = vshrl.u32 %v8706, 7
    %v8708 = vsub.s32 %v8705, %v8707
    %v8709 = vrot.slane %v8699, %v8708
    %v8711 = vunpack.c.l.s4 1983009808
    %v8712 = vunpack.c.0.s8 %v8711
    %v8713 = vlaneseq
    %v8714 = vshrl.u32 %v8713, 7
    %v8715 = vsub.s32 %v8712, %v8714
    %v8716 = vrot.slane %v8700, %v8715
    %v8718 = vunpack.c.l.s4 1983009808
    %v8719 = vunpack.c.0.s8 %v8718
    %v8720 = vlaneseq
    %v8721 = vshrl.u32 %v8720, 7
    %v8722 = vsub.s32 %v8719, %v8721
    %v8723 = vrot.slane %v8701, %v8722
    %v8725 = vunpack.c.l.s4 1983009808
    %v8726 = vunpack.c.0.s8 %v8725
    %v8727 = vlaneseq
    %v8728 = vshrl.u32 %v8727, 7
    %v8729 = vsub.s32 %v8726, %v8728
    %v8730 = vrot.slane %v8702, %v8729
    %v8731 = vcombine.low %v8709, %v8723
    %v8732 = vcombine.high %v8709, %v8723
    %v8733 = vcombine.low %v8716, %v8730
    %v8734 = vcombine.high %v8716, %v8730
    %v8735 = vcombine.low %v8612, %v8614
    %v8736 = vcombine.low %v8616, %v8618
    %v8738 = vunpack.c.l.s4 1983009808
    %v8739 = vunpack.c.0.s8 %v8738
    %v8740 = vlaneseq
    %v8741 = vshrl.u32 %v8740, 7
    %v8742 = vsub.s32 %v8739, %v8741
    %v8743 = vrot.slane %v8735, %v8742
    %v8745 = vunpack.c.l.s4 1983009808
    %v8746 = vunpack.c.0.s8 %v8745
    %v8747 = vlaneseq
    %v8748 = vshrl.u32 %v8747, 7
    %v8749 = vsub.s32 %v8746, %v8748
    %v8750 = vrot.slane %v8736, %v8749
    %v8751 = vcombine.low %v8743, %v8750
    %v8756 = vsel %vm679, %v8751, 0
    %8758 = vmatprep.subr.mxu0 0.0
    %8759 = vmatpush1.msra.mxu0 %v8619
    %8760 = vmatprep.subr.mxu0 0.0
    %8761 = vmatpush1.msra.mxu0 %v8620
    %8762 = vmatprep.subr.mxu0 0.0
    %8763 = vmatpush1.msra.mxu0 %v8621
    %8764 = vmatprep.subr.mxu0 0.0
    %8765 = vmatpush1.msra.mxu0 %v8622
    %8766 = vmatprep.subr.mxu0 0.0
    %8767 = vmatpush1.msra.mxu0 %v8623
    %8768 = vmatprep.subr.mxu0 0.0
    %8769 = vmatpush1.msra.mxu0 %v8624
    %8770 = vmatprep.subr.mxu0 0.0
    %8771 = vmatpush1.msra.mxu0 %v8625
    %8772 = vmatprep.subr.mxu0 0.0
    %8773 = vmatpush1.msra.mxu0 %v8626
    %8774 = vmatprep.subr.mxu0 0.0
    %8775 = vmatpush1.msra.mxu0 %v8627
    %8776 = vmatprep.subr.mxu0 0.0
    %8777 = vmatpush1.msra.mxu0 %v8628
    %8778 = vmatprep.subr.mxu0 0.0
    %8779 = vmatpush1.msra.mxu0 %v8629
    %8780 = vmatprep.subr.mxu0 0.0
    %8781 = vmatpush1.msra.mxu0 %v8630
    %8782 = vmatprep.subr.mxu0 0.0
    %8783 = vmatpush1.msra.mxu0 %v8631
    %8784 = vmatprep.subr.mxu0 0.0
    %8785 = vmatpush1.msra.mxu0 %v8632
    %8786 = vmatprep.subr.mxu0 0.0
    %8787 = vmatpush1.msra.mxu0 %v8633
    %8788 = vmatprep.subr.mxu0 0.0
    %8789 = vmatpush1.msra.mxu0 %v8634
    %8790 = vmatprep.subr.mxu0 0.0
    %8791 = vmatpush1.msra.mxu0 %v8635
    %8792 = vmatprep.subr.mxu0 0.0
    %8793 = vmatpush1.msra.mxu0 %v8636
    %8794 = vmatprep.subr.mxu0 0.0
    %8795 = vmatpush1.msra.mxu0 %v8637
    %8796 = vmatprep.subr.mxu0 0.0
    %8797 = vmatpush1.msra.mxu0 %v8638
    %8798 = vmatprep.subr.mxu0 0.0
    %8799 = vmatpush1.msra.mxu0 %v8639
    %8800 = vmatprep.subr.mxu0 0.0
    %8801 = vmatpush1.msra.mxu0 %v8640
    %8802 = vmatprep.subr.mxu0 0.0
    %8803 = vmatpush1.msra.mxu0 %v8641
    %8804 = vmatprep.subr.mxu0 0.0
    %8805 = vmatpush1.msra.mxu0 %v8642
    %8806 = vmatprep.subr.mxu0 0.0
    %8807 = vmatpush1.msra.mxu0 %v8643
    %8808 = vmatprep.subr.mxu0 0.0
    %8809 = vmatpush1.msra.mxu0 %v8644
    %8810 = vmatprep.subr.mxu0 0.0
    %8811 = vmatpush1.msra.mxu0 %v8645
    %8812 = vmatprep.subr.mxu0 0.0
    %8813 = vmatpush1.msra.mxu0 %v8646
    %8814 = vmatprep.subr.mxu0 0.0
    %8815 = vmatpush1.msra.mxu0 %v8647
    %8816 = vmatprep.subr.mxu0 0.0
    %8817 = vmatpush1.msra.mxu0 %v8648
    %8818 = vmatprep.subr.mxu0 0.0
    %8819 = vmatpush1.msra.mxu0 %v8649
    %8820 = vmatprep.subr.mxu0 0.0
    %8821 = vmatpush1.msra.mxu0 %v8650
    %8822 = vmatprep.mubr.f32.mxu0 %v8732
    %8823 = vmatmul.mubr.f32.gmra.mrb[0].mxu0 %v8731
    %v8824 = vpop.f32.mrb[0].mxu0
    %v8825 = vadd.f32 0.0, %v8824
    %v8826 = vpop.f32.mrb[0].mxu0
    %8827 = vdwg.mxu0
    %8828 = vmatprep.subr.mxu0 0.0
    %8829 = vmatpush1.msra.mxu0 %v8651
    %8830 = vmatprep.subr.mxu0 0.0
    %8831 = vmatpush1.msra.mxu0 %v8652
    %8832 = vmatprep.subr.mxu0 0.0
    %8833 = vmatpush1.msra.mxu0 %v8653
    %8834 = vmatprep.subr.mxu0 0.0
    %8835 = vmatpush1.msra.mxu0 %v8654
    %8836 = vmatprep.subr.mxu0 0.0
    %8837 = vmatpush1.msra.mxu0 %v8655
    %8838 = vmatprep.subr.mxu0 0.0
    %8839 = vmatpush1.msra.mxu0 %v8656
    %8840 = vmatprep.subr.mxu0 0.0
    %8841 = vmatpush1.msra.mxu0 %v8657
    %8842 = vmatprep.subr.mxu0 0.0
    %8843 = vmatpush1.msra.mxu0 %v8658
    %8844 = vmatprep.subr.mxu0 0.0
    %8845 = vmatpush1.msra.mxu0 %v8659
    %8846 = vmatprep.subr.mxu0 0.0
    %8847 = vmatpush1.msra.mxu0 %v8660
    %8848 = vmatprep.subr.mxu0 0.0
    %8849 = vmatpush1.msra.mxu0 %v8661
    %8850 = vmatprep.subr.mxu0 0.0
    %8851 = vmatpush1.msra.mxu0 %v8662
    %8852 = vmatprep.subr.mxu0 0.0
    %8853 = vmatpush1.msra.mxu0 %v8663
    %8854 = vmatprep.subr.mxu0 0.0
    %8855 = vmatpush1.msra.mxu0 %v8664
    %8856 = vmatprep.subr.mxu0 0.0
    %8857 = vmatpush1.msra.mxu0 %v8665
    %8858 = vmatprep.subr.mxu0 0.0
    %8859 = vmatpush1.msra.mxu0 %v8666
    %8860 = vmatprep.subr.mxu0 0.0
    %8861 = vmatpush1.msra.mxu0 %v8667
    %8862 = vmatprep.subr.mxu0 0.0
    %8863 = vmatpush1.msra.mxu0 %v8668
    %8864 = vmatprep.subr.mxu0 0.0
    %8865 = vmatpush1.msra.mxu0 %v8669
    %8866 = vmatprep.subr.mxu0 0.0
    %8867 = vmatpush1.msra.mxu0 %v8670
    %8868 = vmatprep.subr.mxu0 0.0
    %8869 = vmatpush1.msra.mxu0 %v8671
    %8870 = vmatprep.subr.mxu0 0.0
    %8871 = vmatpush1.msra.mxu0 %v8672
    %8872 = vmatprep.subr.mxu0 0.0
    %8873 = vmatpush1.msra.mxu0 %v8673
    %8874 = vmatprep.subr.mxu0 0.0
    %8875 = vmatpush1.msra.mxu0 %v8674
    %8876 = vmatprep.subr.mxu0 0.0
    %8877 = vmatpush1.msra.mxu0 %v8675
    %8878 = vmatprep.subr.mxu0 0.0
    %8879 = vmatpush1.msra.mxu0 %v8676
    %8880 = vmatprep.subr.mxu0 0.0
    %8881 = vmatpush1.msra.mxu0 %v8677
    %8882 = vmatprep.subr.mxu0 0.0
    %8883 = vmatpush1.msra.mxu0 %v8678
    %8884 = vmatprep.subr.mxu0 0.0
    %8885 = vmatpush1.msra.mxu0 %v8679
    %8886 = vmatprep.subr.mxu0 0.0
    %8887 = vmatpush1.msra.mxu0 %v8680
    %8888 = vmatprep.subr.mxu0 0.0
    %8889 = vmatpush1.msra.mxu0 %v8681
    %8890 = vmatprep.subr.mxu0 0.0
    %8891 = vmatpush1.msra.mxu0 %v8682
    %8892 = vmatprep.mubr.f32.mxu0 %v8734
    %8893 = vmatmul.mubr.f32.gmra.mrb[0].mxu0 %v8733
    %v8894 = vpop.f32.mrb[0].mxu0
    %v8895 = vadd.f32 %v8825, %v8894
    %v8896 = vpop.f32.mrb[0].mxu0
    %8897 = vdwg.mxu0
    %8898 = vmatprep.subr.mxu0 0.0
    %8899 = vmatpush1.msra.mxu0 %v8683
    %8900 = vmatprep.subr.mxu0 0.0
    %8901 = vmatpush1.msra.mxu0 %v8684
    %8902 = vmatprep.subr.mxu0 0.0
    %8903 = vmatpush1.msra.mxu0 %v8685
    %8904 = vmatprep.subr.mxu0 0.0
    %8905 = vmatpush1.msra.mxu0 %v8686
    %8906 = vmatprep.subr.mxu0 0.0
    %8907 = vmatpush1.msra.mxu0 %v8687
    %8908 = vmatprep.subr.mxu0 0.0
    %8909 = vmatpush1.msra.mxu0 %v8688
    %8910 = vmatprep.subr.mxu0 0.0
    %8911 = vmatpush1.msra.mxu0 %v8689
    %8912 = vmatprep.subr.mxu0 0.0
    %8913 = vmatpush1.msra.mxu0 %v8690
    %8914 = vmatprep.subr.mxu0 0.0
    %8915 = vmatpush1.msra.mxu0 0.0
    %8916 = vmatprep.subr.mxu0 0.0
    %8917 = vmatpush1.msra.mxu0 0.0
    %8918 = vmatprep.subr.mxu0 0.0
    %8919 = vmatpush1.msra.mxu0 0.0
    %8920 = vmatprep.subr.mxu0 0.0
    %8921 = vmatpush1.msra.mxu0 0.0
    %8922 = vmatprep.subr.mxu0 0.0
    %8923 = vmatpush1.msra.mxu0 0.0
    %8924 = vmatprep.subr.mxu0 0.0
    %8925 = vmatpush1.msra.mxu0 0.0
    %8926 = vmatprep.subr.mxu0 0.0
    %8927 = vmatpush1.msra.mxu0 0.0
    %8928 = vmatprep.subr.mxu0 0.0
    %8929 = vmatpush1.msra.mxu0 0.0
    %8930 = vmatprep.subr.mxu0 0.0
    %8931 = vmatpush1.msra.mxu0 0.0
    %8932 = vmatprep.subr.mxu0 0.0
    %8933 = vmatpush1.msra.mxu0 0.0
    %8934 = vmatprep.subr.mxu0 0.0
    %8935 = vmatpush1.msra.mxu0 0.0
    %8936 = vmatprep.subr.mxu0 0.0
    %8937 = vmatpush1.msra.mxu0 0.0
    %8938 = vmatprep.subr.mxu0 0.0
    %8939 = vmatpush1.msra.mxu0 0.0
    %8940 = vmatprep.subr.mxu0 0.0
    %8941 = vmatpush1.msra.mxu0 0.0
    %8942 = vmatprep.subr.mxu0 0.0
    %8943 = vmatpush1.msra.mxu0 0.0
    %8944 = vmatprep.subr.mxu0 0.0
    %8945 = vmatpush1.msra.mxu0 0.0
    %8946 = vmatprep.subr.mxu0 0.0
    %8947 = vmatpush1.msra.mxu0 0.0
    %8948 = vmatprep.subr.mxu0 0.0
    %8949 = vmatpush1.msra.mxu0 0.0
    %8950 = vmatprep.subr.mxu0 0.0
    %8951 = vmatpush1.msra.mxu0 0.0
    %8952 = vmatprep.subr.mxu0 0.0
    %8953 = vmatpush1.msra.mxu0 0.0
    %8954 = vmatprep.subr.mxu0 0.0
    %8955 = vmatpush1.msra.mxu0 0.0
    %8956 = vmatprep.subr.mxu0 0.0
    %8957 = vmatpush1.msra.mxu0 0.0
    %8958 = vmatprep.subr.mxu0 0.0
    %8959 = vmatpush1.msra.mxu0 0.0
    %8960 = vmatprep.subr.mxu0 0.0
    %8961 = vmatpush1.msra.mxu0 0.0
    %8962 = vmatprep.mubr.f32.mxu0 0.0
    %8963 = vmatmul.mubr.f32.gmra.mrb[0].mxu0 %v8756
    %v8964 = vpop.f32.mrb[0].mxu0
    %v8965 = vadd.f32 %v8895, %v8964
    %v8966 = vpop.f32.mrb[0].mxu0
    %8967 = vdwg.mxu0
    %v8968 = vld [vmem:[%s8] sm:$0x1]
    %v8969 = vld [vmem:[%s8 + $0x1] sm:$0x1]
    %v8970 = vsel %vm679, %v8965, 0.0
    %v8971 = vrot.slane %v8970, 4
    %v8972 = vadd.f32 %v8970, %v8971
    %v8973 = vrot.slane %v8972, 2
    %v8974 = vadd.f32 %v8972, %v8973
    %v8975 = vrot.slane %v8974, 1
    %v8976 = vadd.f32 %v8974, %v8975
    %v8977 = vmul.f32 %v8965, %v8965
    %v8978 = vsel %vm679, %v8977, 0.0
    %v8979 = vrot.slane %v8978, 4
    %v8980 = vadd.f32 %v8978, %v8979
    %v8981 = vrot.slane %v8980, 2
    %v8982 = vadd.f32 %v8980, %v8981
    %v8983 = vrot.slane %v8982, 1
    %v8984 = vadd.f32 %v8982, %v8983
    %v8985 = vmul.f32 %v8976, 0.125
    %v8986 = vmul.f32 %v8984, 0.125
    %v8987 = vmul.f32 %v8985, %v8985
    %v8988 = vsub.f32 %v8986, %v8987
    %v8989 = vmax.f32 %v8988, 0.0
    %v8990 = vadd.f32 %v8989, 1e-05
    %v8991 = vrsqrt.pop %v8990
    %v8992 = vmul.f32 %v8968, %v8991
    %v8993 = vmul.f32 %v8985, %v8992
    %v8994 = vsub.f32 %v8969, %v8993
    %v8995 = vlaneseq
    %v8996 = vshrl.u32 %v8995, 7
    %v8997 = vsub.s32 0, %v8996
    %v8998 = vrot.slane %v8992, %v8997
    %v8999 = vmul.f32 %v8965, %v8998
    %v9000 = vlaneseq
    %v9001 = vshrl.u32 %v9000, 7
    %v9002 = vsub.s32 0, %v9001
    %v9003 = vrot.slane %v8994, %v9002
    %v9004 = vadd.f32 %v8999, %v9003
    %v9005 = vmax.f32 %v9004, 0.0
    %v9007 = vcombine.high %v9005, %v9005
    %v9009 = vunpack.c.l.s4 1983009808
    %v9010 = vunpack.c.0.s8 %v9009
    %v9011 = vlaneseq
    %v9012 = vshrl.u32 %v9011, 7
    %v9013 = vsub.s32 %v9010, %v9012
    %v9014 = vrot.slane %v9005, %v9013
    %v9016 = vunpack.c.l.s4 1983009808
    %v9017 = vunpack.c.0.s8 %v9016
    %v9018 = vlaneseq
    %v9019 = vshrl.u32 %v9018, 7
    %v9020 = vsub.s32 %v9017, %v9019
    %v9021 = vrot.slane %v9007, %v9020
    %v9022 = vcombine.high %v9014, %v9014
    %v9023 = vcombine.high %v9021, %v9021
    %v9028 = vsel %vm2628, %v9014, -inf
    %v9029 = vrot.slane %v9028, 4
    %v9030 = vmax.f32 %v9028, %v9029
    %v9031 = vrot.slane %v9030, 2
    %v9032 = vmax.f32 %v9030, %v9031
    %v9033 = vrot.slane %v9032, 1
    %v9034 = vmax.f32 %v9032, %v9033
    %v9035 = vsel %vm2628, %v9022, -inf
    %v9036 = vrot.slane %v9035, 4
    %v9037 = vmax.f32 %v9035, %v9036
    %v9038 = vrot.slane %v9037, 2
    %v9039 = vmax.f32 %v9037, %v9038
    %v9040 = vrot.slane %v9039, 1
    %v9041 = vmax.f32 %v9039, %v9040
    %v9042 = vsel %vm2628, %v9021, -inf
    %v9043 = vrot.slane %v9042, 4
    %v9044 = vmax.f32 %v9042, %v9043
    %v9045 = vrot.slane %v9044, 2
    %v9046 = vmax.f32 %v9044, %v9045
    %v9047 = vrot.slane %v9046, 1
    %v9048 = vmax.f32 %v9046, %v9047
    %v9049 = vsel %vm2628, %v9023, -inf
    %v9050 = vrot.slane %v9049, 4
    %v9051 = vmax.f32 %v9049, %v9050
    %v9052 = vrot.slane %v9051, 2
    %v9053 = vmax.f32 %v9051, %v9052
    %v9054 = vrot.slane %v9053, 1
    %v9055 = vmax.f32 %v9053, %v9054
    %v9056 = vsel %vm679, %v9034, -inf
    %v9057 = vsel %vm679, %v9041, -inf
    %v9058 = vmax.f32 %v9056, %v9057
    %v9059 = vsel %vm679, %v9048, -inf
    %v9060 = vsel %vm679, %v9055, -inf
    %v9061 = vmax.f32 %v9059, %v9060
    %9062 = vst.msk [vmem:[#allocation5] sm:$0x1] %vm8452, %v9058
    %9063 = vst.msk [vmem:[#allocation5 + $0x1] sm:$0x1] %vm8452, %v9061
    // Predicated region
    $region38: #{prototypical_network.1} parent=1 // pred_check
      _
    $region39: #{prototypical_network.1} parent=1 // pred_check_branch
      %9065 = sbr.rel (0) target = $region41
    $region40: #{prototypical_network.1} parent=1 // pred_region
      %s9067 = ssub.s32 32, 32
      %9068 = vsyncadd [#allocation6], %s9067
      %s9069 = sshll.u32 [#allocation5], 4
      %s9070 = int_to_ptr.vmem [resolvable:$true] %s9069
      %9075 = dma.vmem_to_hbm [thread:$0]  %s9070, 32, %s9, [#allocation6], 16, 16, 1
    $region41: #{prototypical_network.1} parent=1 // pred_fallthru
      _
    // Predicated region
    $region42: #{prototypical_network.1} parent=1 // pred_check
      _
    $region43: #{prototypical_network.1} parent=1 // pred_check_branch
      %9077 = sbr.rel (0) target = $region45
    $region44: #{prototypical_network.1} parent=1 // pred_region
      %9078 = dma.done [#allocation6], 32
    $region45: #{prototypical_network.1} parent=1 // pred_fallthru
      _
    %9079 = vsyncpa [#allocation6], 1

</llo_original>
